<compile_context>
chip_gen: v7x
topology: tpu7x:2x2x1
jax: 0.10.0
libtpu: 0.0.40
codegen_flags: <defaults>
</compile_context>

<pallas_src>
import jax
import jax.numpy as jnp
from jax.experimental import pallas as pl
from jax.experimental.pallas import tpu as pltpu

# PyTorch nn.GELU default is the exact (erf) form.  A narrow capability probe
# (see _erf_probe) decides once whether erf lowers on this Mosaic version;
# only then do we fall back to the tanh approximation.
_GELU_APPROX = [False]


def _gelu(x):
    return jax.nn.gelu(x, approximate=_GELU_APPROX[0])


def _sigmoid(x):
    return 1.0 / (1.0 + jnp.exp(-x))


def _layernorm(x, g, b, eps=1e-5):
    mu = jnp.mean(x, axis=-1, keepdims=True)
    xc = x - mu
    var = jnp.mean(xc * xc, axis=-1, keepdims=True)
    return xc * jax.lax.rsqrt(var + eps) * g + b


def _tile_and_pad(n, target=256):
    """Pick a sublane-aligned (multiple of 8) row tile and padded extent."""
    n8 = ((n + 7) // 8) * 8
    if n8 <= target:
        return n8, n8
    npad = ((n8 + target - 1) // target) * target
    return target, npad


def _cspec(shape):
    # Constant (grid-invariant) weight block.  TODO(synk): could use
    # pipeline_mode=pl.Buffered(1) to drop the second weight buffer; Pallas
    # already skips re-DMA of revisited blocks so the win is marginal here.
    return pl.BlockSpec(shape, lambda i, _r=len(shape): (0,) * _r)


def _smem_spec():
    return pl.BlockSpec(memory_space=pltpu.MemorySpace.SMEM)


def _erf_probe():
    """Tiny standalone kernel that only checks whether lax.erf lowers."""
    def k(x_ref, o_ref):
        o_ref[...] = jax.lax.erf(x_ref[...])
    try:
        x = jnp.linspace(-2.0, 2.0, 8 * 128, dtype=jnp.float32).reshape(8, 128)
        jax.block_until_ready(
            pl.pallas_call(k, out_shape=jax.ShapeDtypeStruct((8, 128), jnp.float32))(x))
        return True
    except Exception:   # narrow probe: only this erf kernel's lowering/compile
        return False


# ---------------------------------------------------------------------------
# PathModel kernel: TB paths per grid step, channel-major (C, TB, D) blocks.
# Emits p_st (channel 0 after final LN) and the sigmoid-gated p_bw channels.
# ---------------------------------------------------------------------------
def path_model_kernel(x_ref, m_ref,
                      ln1g, ln1b, ln2g, ln2b, ln3g, ln3b,
                      lw1, lb1, lw2, lb2, pw_w,
                      cw1, cb1, cw2, cb2, pw_b,
                      o_st_ref, o_bw_ref):
    C, TB, D = x_ref.shape
    CI = cw1.shape[0]
    x = x_ref[...]                                   # (C, TB, D)
    m = m_ref[...]                                   # (C, TB, 1)

    # chan_update: LN -> Conv1d(1x1) -> GELU -> Conv1d(1x1), residual.
    # The channel contractions (C, CI compile-time tiny) are unrolled VPU FMAs
    # with scalar weights read from SMEM -- no small MXU matmuls.
    h = _layernorm(x * m, ln1g[...], ln1b[...])
    hs = [h[c] for c in range(C)]
    gs = []
    for i in range(CI):
        acc = cw1[i, 0] * hs[0]
        for c in range(1, C):
            acc = acc + cw1[i, c] * hs[c]
        gs.append(_gelu(acc + cb1[i, 0]))
    ys = []
    for c in range(C):
        acc = cw2[c, 0] * gs[0]
        for i in range(1, CI):
            acc = acc + cw2[c, i] * gs[i]
        ys.append(x[c] + acc + cb2[c, 0])
    x1 = jnp.stack(ys, axis=0)                       # (C, TB, D)

    # inner_update: LN -> Linear -> GELU -> Linear, residual.
    # Flatten (C, TB, D) -> (C*TB, D) so the MXU sees one large matmul.
    h2 = _layernorm(x1 * m, ln2g[...], ln2b[...]).reshape(C * TB, D)
    h2 = _gelu(jnp.dot(h2, lw1[...], preferred_element_type=jnp.float32) + lb1[...])
    h2 = jnp.dot(h2, lw2[...], preferred_element_type=jnp.float32) + lb2[...]
    x2 = x1 + h2.reshape(C, TB, D)

    xn = _layernorm(x2, ln3g[...], ln3b[...])        # (C, TB, D)
    st = xn[0]                                       # (TB, D)
    # fused path_w sigmoid gate (VPU mul + XLU lane reduce, no extra HBM pass)
    gate = _sigmoid(jnp.sum(st * pw_w[...], axis=-1, keepdims=True) + pw_b[0, 0])
    o_st_ref[...] = st.astype(o_st_ref.dtype)
    o_bw_ref[...] = (gate[None, :, :] * xn[1:]).astype(o_bw_ref.dtype)


def path_model_apply(p, pw_w, pw_b, path_cm, mask_cm, tile=256):
    C, N, D = path_cm.shape
    S = C - 1
    Di = p['lw1'].shape[1]
    tb, npad = _tile_and_pad(N, tile)
    if npad != N:
        path_cm = jnp.pad(path_cm, ((0, 0), (0, npad - N), (0, 0)))
        mask_cm = jnp.pad(mask_cm, ((0, 0), (0, npad - N), (0, 0)))
    grid = (npad // tb,)

    out_st, out_bw = pl.pallas_call(
        path_model_kernel,
        out_shape=(jax.ShapeDtypeStruct((npad, D), path_cm.dtype),
                   jax.ShapeDtypeStruct((S, npad, D), path_cm.dtype)),
        grid=grid,
        in_specs=[
            pl.BlockSpec((C, tb, D), lambda i: (0, i, 0)),
            pl.BlockSpec((C, tb, 1), lambda i: (0, i, 0)),
            _cspec((1, D)), _cspec((1, D)),
            _cspec((1, D)), _cspec((1, D)),
            _cspec((1, D)), _cspec((1, D)),
            _cspec((D, Di)), _cspec((1, Di)),
            _cspec((Di, D)), _cspec((1, D)),
            _cspec((1, D)),
            _smem_spec(), _smem_spec(), _smem_spec(), _smem_spec(), _smem_spec(),
        ],
        out_specs=(pl.BlockSpec((tb, D), lambda i: (i, 0)),
                   pl.BlockSpec((S, tb, D), lambda i: (0, i, 0))),
        compiler_params=pltpu.CompilerParams(dimension_semantics=("parallel",)),
    )(path_cm, mask_cm,
      p['ln1g'], p['ln1b'], p['ln2g'], p['ln2b'], p['ln3g'], p['ln3b'],
      p['lw1'], p['lb1'], p['lw2'], p['lb2'], pw_w,
      p['cw1'], p['cb1'], p['cw2'], p['cb2'], pw_b)
    if npad != N:
        out_st = out_st[:N]
        out_bw = out_bw[:, :N, :]
    return out_st, out_bw


# ---------------------------------------------------------------------------
# LinkModel kernel: channel-major (n_links, batch_tile, dim) blocks.
# Fuses: outer LayerNorm on `link`, lane-concat of (l_st, link), chan_update,
# inner_update, final LN and MaxPool1d(2).
# ---------------------------------------------------------------------------
def link_model_kernel(l_ref, k_ref,
                      nog, nob,
                      ln1g, ln1b, ln2g, ln2b, ln3g, ln3b,
                      lw1, lb1, lw2, lb2,
                      cw1, cb1, cw2, cb2,
                      o_ref):
    NL, TB, D = l_ref.shape
    IC = cw1.shape[0]
    D2 = 2 * D
    l = l_ref[...]
    kn = _layernorm(k_ref[...], nog[...], nob[...])     # NewModel.norm (fused)
    x = jnp.concatenate([l, kn], axis=-1)               # (NL, TB, D2) lane concat

    h = _layernorm(x, ln1g[...], ln1b[...])
    hs = [h[c] for c in range(NL)]
    gs = []
    for i in range(IC):
        acc = cw1[i, 0] * hs[0]
        for c in range(1, NL):
            acc = acc + cw1[i, c] * hs[c]
        gs.append(_gelu(acc + cb1[i, 0]))
    ys = []
    for c in range(NL):
        acc = cw2[c, 0] * gs[0]
        for i in range(1, IC):
            acc = acc + cw2[c, i] * gs[i]
        ys.append(x[c] + acc + cb2[c, 0])
    x1 = jnp.stack(ys, axis=0)                          # (NL, TB, D2)

    h2 = _layernorm(x1, ln2g[...], ln2b[...]).reshape(NL * TB, D2)
    h2 = _gelu(jnp.dot(h2, lw1[...], preferred_element_type=jnp.float32) + lb1[...])
    h2 = jnp.dot(h2, lw2[...], preferred_element_type=jnp.float32) + lb2[...]
    x2 = x1 + h2.reshape(NL, TB, D2)

    xn = _layernorm(x2, ln3g[...], ln3b[...]).reshape(NL * TB, D2)
    # MaxPool1d(2) over the feature axis: even/odd compaction via in-kernel
    # generated 0/1 selectors (nothing DMA'd from HBM), then elementwise max.
    rr = jax.lax.broadcasted_iota(jnp.int32, (D2, D), 0)
    cc = jax.lax.broadcasted_iota(jnp.int32, (D2, D), 1)
    sel_e = (rr == 2 * cc).astype(xn.dtype)
    sel_o = (rr == 2 * cc + 1).astype(xn.dtype)
    pooled = jnp.maximum(
        jnp.dot(xn, sel_e, preferred_element_type=jnp.float32),
        jnp.dot(xn, sel_o, preferred_element_type=jnp.float32))
    o_ref[...] = pooled.reshape(NL, TB, D).astype(o_ref.dtype)


def link_model_apply(p, norm_g, norm_b, l_st, link, batch, tile=256):
    N, dim = l_st.shape
    nl = N // batch
    D2 = 2 * dim
    idim = p['lw1'].shape[1]
    l_cm = l_st.reshape(batch, nl, dim).transpose(1, 0, 2)    # (nl, b, dim)
    k_cm = link.reshape(batch, nl, dim).transpose(1, 0, 2)
    tb, bpad = _tile_and_pad(batch, tile)
    if bpad != batch:
        pad = ((0, 0), (0, bpad - batch), (0, 0))
        l_cm = jnp.pad(l_cm, pad)
        k_cm = jnp.pad(k_cm, pad)
    grid = (bpad // tb,)

    out_cm = pl.pallas_call(
        link_model_kernel,
        out_shape=jax.ShapeDtypeStruct((nl, bpad, dim), l_st.dtype),
        grid=grid,
        in_specs=[
            pl.BlockSpec((nl, tb, dim), lambda i: (0, i, 0)),
            pl.BlockSpec((nl, tb, dim), lambda i: (0, i, 0)),
            _cspec((1, dim)), _cspec((1, dim)),
            _cspec((1, D2)), _cspec((1, D2)),
            _cspec((1, D2)), _cspec((1, D2)),
            _cspec((1, D2)), _cspec((1, D2)),
            _cspec((D2, idim)), _cspec((1, idim)),
            _cspec((idim, D2)), _cspec((1, D2)),
            _smem_spec(), _smem_spec(), _smem_spec(), _smem_spec(),
        ],
        out_specs=pl.BlockSpec((nl, tb, dim), lambda i: (0, i, 0)),
        compiler_params=pltpu.CompilerParams(dimension_semantics=("parallel",)),
    )(l_cm, k_cm, norm_g, norm_b,
      p['ln1g'], p['ln1b'], p['ln2g'], p['ln2b'], p['ln3g'], p['ln3b'],
      p['lw1'], p['lb1'], p['lw2'], p['lb2'],
      p['cw1'], p['cb1'], p['cw2'], p['cb2'])
    return out_cm[:, :batch, :].transpose(1, 0, 2).reshape(N, dim)


# ---------------------------------------------------------------------------
# mlp_head kernel, tiled over rows.
# ---------------------------------------------------------------------------
def mlp_head_kernel(x_ref, lng, lnb, w1, b1, w2, b2, w3, b3, o_ref):
    h = _layernorm(x_ref[...], lng[...], lnb[...])
    h = _gelu(jnp.dot(h, w1[...], preferred_element_type=jnp.float32) + b1[...])
    h = _gelu(jnp.dot(h, w2[...], preferred_element_type=jnp.float32) + b2[...])
    # TODO(synk): the (TB, 1) store is a masked single-lane vst; a lane-major
    # (1, TB) output would be denser but needs an in-kernel transpose.
    o_ref[...] = (jnp.dot(h, w3[...], preferred_element_type=jnp.float32)
                  + b3[...]).astype(o_ref.dtype)


def mlp_head_apply(p, x, tile=512):
    N, D = x.shape
    M1 = p['w1'].shape[1]
    tb, npad = _tile_and_pad(N, tile)
    if npad != N:
        x = jnp.pad(x, ((0, npad - N), (0, 0)))
    grid = (npad // tb,)
    out = pl.pallas_call(
        mlp_head_kernel,
        out_shape=jax.ShapeDtypeStruct((npad, 1), x.dtype),
        grid=grid,
        in_specs=[
            pl.BlockSpec((tb, D), lambda i: (i, 0)),
            _cspec((1, D)), _cspec((1, D)),
            _cspec((D, M1)), _cspec((1, M1)),
            _cspec((M1, M1)), _cspec((1, M1)),
            _cspec((M1, 1)), _cspec((1, 1)),
        ],
        out_specs=pl.BlockSpec((tb, 1), lambda i: (i, 0)),
        compiler_params=pltpu.CompilerParams(dimension_semantics=("parallel",)),
    )(x, p['lng'], p['lnb'], p['w1'], p['b1'], p['w2'], p['b2'], p['w3'], p['b3'])
    return out[:N, 0]


# ---------------------------------------------------------------------------
# Parameter init (deterministic, synthetic)
# ---------------------------------------------------------------------------
class KeyGen:
    def __init__(self, key):
        self._key = key

    def __call__(self):
        self._key, k = jax.random.split(self._key)
        return k


def init_block_params(kg, channel, dim, exp_rate):
    ic = int(channel * exp_rate)
    idim = int(dim * exp_rate)
    nrm = lambda shape, s=0.1: s * jax.random.normal(kg(), shape, dtype=jnp.float32)
    return dict(
        ln1g=jnp.ones((1, dim), jnp.float32), ln1b=jnp.zeros((1, dim), jnp.float32),
        cw1=nrm((ic, channel)), cb1=nrm((ic, 1), 0.01),
        cw2=nrm((channel, ic)), cb2=nrm((channel, 1), 0.01),
        ln2g=jnp.ones((1, dim), jnp.float32), ln2b=jnp.zeros((1, dim), jnp.float32),
        lw1=nrm((dim, idim)), lb1=nrm((1, idim), 0.01),
        lw2=nrm((idim, dim)), lb2=nrm((1, dim), 0.01),
        ln3g=jnp.ones((1, dim), jnp.float32), ln3b=jnp.zeros((1, dim), jnp.float32),
    )


def init_params(key, dim, mlp_dim, depth, max_len, n_links):
    kg = KeyGen(key)
    nrm = lambda shape, s=0.1: s * jax.random.normal(kg(), shape, dtype=jnp.float32)
    params = dict(
        bw_w=nrm((dim,)), bw_b=nrm((dim,), 0.01),
        tr_w=nrm((dim,)), tr_b=nrm((dim,), 0.01),
        # pos_emb exists in the PyTorch module but is never used in forward()
        bw_pad=nrm((1, dim)),
        path_w_w=nrm((dim, 1)), path_w_b=nrm((), 0.01),
        norm_g=jnp.ones((1, dim), jnp.float32), norm_b=jnp.zeros((1, dim), jnp.float32),
        update=[],
        head=dict(
            lng=jnp.ones((1, dim), jnp.float32), lnb=jnp.zeros((1, dim), jnp.float32),
            w1=nrm((dim, mlp_dim)), b1=nrm((1, mlp_dim), 0.01),
            w2=nrm((mlp_dim, mlp_dim)), b2=nrm((1, mlp_dim), 0.01),
            w3=nrm((mlp_dim, 1)), b3=nrm((1, 1), 0.01),
        ),
    )
    for _ in range(depth):
        params['update'].append(dict(
            path=init_block_params(kg, max_len + 1, dim, 0.5),   # PathModel
            link=init_block_params(kg, n_links, dim * 2, 2),     # LinkModel
        ))
    return params


# ---------------------------------------------------------------------------
# NewModel forward
# ---------------------------------------------------------------------------
def new_model_forward(params, bw, tr, p_lidx, mask):
    b, n = bw.shape                       # n == n_links
    dim = params['bw_w'].shape[0]
    max_len = mask.shape[2] - 1
    N = b * n

    bw_e = bw[..., None] * params['bw_w'] + params['bw_b']     # (b, n, dim)
    tr_e = tr[..., None] * params['tr_w'] + params['tr_b']     # (b, n, dim)

    # channel-major ("s-major") gather order so the path tensor is produced
    # directly in the (C, N, D) layout the Pallas kernel consumes.
    idx_sm = p_lidx.reshape(N, max_len).T.reshape(-1)          # (max_len*N,)
    mask_cm = mask.reshape(N, max_len + 1).T[:, :, None].astype(jnp.float32)  # (C, N, 1)

    p_st = tr_e.reshape(N, dim)                                # (N, dim)
    l_st = jnp.concatenate([params['bw_pad'], bw_e.reshape(N, dim)], axis=0)
    pw_w = params['path_w_w'].reshape(1, dim)
    pw_b = params['path_w_b'].reshape(1, 1)

    for layer in params['update']:
        # TODO(synk): the data-dependent gather / scatter-add over l_st rows
        # stays in XLA; fusing it into the Pallas calls needs a manual-DMA
        # row gather (indices not expressible via BlockSpec) and is not done.
        p_bw = l_st[idx_sm].reshape(max_len, N, dim)           # (S, N, dim)
        path_cm = jnp.concatenate([p_st[None], p_bw], axis=0)  # (C, N, dim)
        p_st, p_bw_g = path_model_apply(layer['path'], pw_w, pw_b,
                                        path_cm, mask_cm)      # Pallas kernel
        link = jnp.zeros((N + 1, dim), p_bw_g.dtype).at[idx_sm].add(
            p_bw_g.reshape(max_len * N, dim))                  # scatter-add (glue)
        link = link_model_apply(layer['link'], params['norm_g'], params['norm_b'],
                                l_st[1:], link[1:], b)         # Pallas kernel
        l_st = jnp.concatenate([params['bw_pad'], link], axis=0)

    return mlp_head_apply(params['head'], p_st)                # Pallas kernel


if __name__ == "__main__":
    dim, mlp_dim, depth = 32, 32, 2
    max_len, n_links = 8, 4
    batch = 2

    # Decide GELU flavor once via a narrow erf-lowering probe (PyTorch default
    # nn.GELU is exact erf); this does not mask unrelated kernel failures.
    _GELU_APPROX[0] = not _erf_probe()

    params = init_params(jax.random.PRNGKey(0), dim, mlp_dim, depth, max_len, n_links)

    kd = jax.random.split(jax.random.PRNGKey(0), 5)
    bw = jax.random.normal(kd[1], (batch, n_links), dtype=jnp.float32)
    tr = jax.random.normal(kd[2], (batch, n_links), dtype=jnp.float32)
    p_lidx = jax.random.randint(kd[3], (batch, n_links, max_len), 0, batch * n_links + 1)
    mask = (jax.random.uniform(kd[4], (batch, n_links, max_len + 1)) > 0.3).astype(jnp.float32)

    fwd = jax.jit(new_model_forward)
    out = jax.block_until_ready(fwd(params, bw, tr, p_lidx, mask))

    assert out.shape == (batch * n_links,)
    assert bool(jnp.all(jnp.isfinite(out)))
    print("KERNEL_OK")
</pallas_src>

<mosaic_0001>
module attributes {stable_mosaic.version = 11 : i64} {
  func.func @k(%arg0: memref<8x128xf32, #tpu.memory_space<vmem>>, %arg1: memref<8x128xf32, #tpu.memory_space<vmem>>) attributes {dimension_semantics = [], scalar_prefetch = 0 : i64, scratch_operands = 0 : i64, tpu.core_type = #tpu.core_type<tc>} {
    %c0 = arith.constant 0 : index
    %c0_0 = arith.constant 0 : index
    %0 = vector.load %arg0[%c0, %c0_0] : memref<8x128xf32, #tpu.memory_space<vmem>>, vector<8x128xf32>
    %1 = math.erf %0 : vector<8x128xf32>
    %c0_1 = arith.constant 0 : index
    %c0_2 = arith.constant 0 : index
    %2 = vector.load %arg1[%c0_1, %c0_2] : memref<8x128xf32, #tpu.memory_space<vmem>>, vector<8x128xf32>
    tpu.vector_store %arg1[%c0_1, %c0_2], %1 {strides = array<i32>} : memref<8x128xf32, #tpu.memory_space<vmem>>, vector<8x128xf32>,
    return
  }
}

module attributes {stable_mosaic.version = 11 : i64} {
  func.func @path_model_kernel(%arg0: i32, %arg1: memref<9x8x32xf32, #tpu.memory_space<vmem>>, %arg2: memref<9x8x1xf32, #tpu.memory_space<vmem>>, %arg3: memref<1x32xf32, #tpu.memory_space<vmem>>, %arg4: memref<1x32xf32, #tpu.memory_space<vmem>>, %arg5: memref<1x32xf32, #tpu.memory_space<vmem>>, %arg6: memref<1x32xf32, #tpu.memory_space<vmem>>, %arg7: memref<1x32xf32, #tpu.memory_space<vmem>>, %arg8: memref<1x32xf32, #tpu.memory_space<vmem>>, %arg9: memref<32x16xf32, #tpu.memory_space<vmem>>, %arg10: memref<1x16xf32, #tpu.memory_space<vmem>>, %arg11: memref<16x32xf32, #tpu.memory_space<vmem>>, %arg12: memref<1x32xf32, #tpu.memory_space<vmem>>, %arg13: memref<1x32xf32, #tpu.memory_space<vmem>>, %arg14: memref<4x9xf32, #tpu.memory_space<smem>>, %arg15: memref<4x1xf32, #tpu.memory_space<smem>>, %arg16: memref<9x4xf32, #tpu.memory_space<smem>>, %arg17: memref<9x1xf32, #tpu.memory_space<smem>>, %arg18: memref<1x1xf32, #tpu.memory_space<smem>>, %arg19: memref<8x32xf32, #tpu.memory_space<vmem>>, %arg20: memref<8x8x32xf32, #tpu.memory_space<vmem>>) attributes {dimension_semantics = [#tpu.dimension_semantics<parallel>], iteration_bounds = array<i64: 1>, scalar_prefetch = 0 : i64, scratch_operands = 0 : i64, tpu.core_type = #tpu.core_type<tc>, window_params = [{transform_indices = @transform_0, window_bounds = array<i64: 9, 8, 32>}, {transform_indices = @transform_1, window_bounds = array<i64: 9, 8, 1>}, {pipeline_mode = #tpu.pipeline_mode<synchronous>, transform_indices = @transform_2, window_bounds = array<i64: 1, 32>}, {pipeline_mode = #tpu.pipeline_mode<synchronous>, transform_indices = @transform_3, window_bounds = array<i64: 1, 32>}, {pipeline_mode = #tpu.pipeline_mode<synchronous>, transform_indices = @transform_4, window_bounds = array<i64: 1, 32>}, {pipeline_mode = #tpu.pipeline_mode<synchronous>, transform_indices = @transform_5, window_bounds = array<i64: 1, 32>}, {pipeline_mode = #tpu.pipeline_mode<synchronous>, transform_indices = @transform_6, window_bounds = array<i64: 1, 32>}, {pipeline_mode = #tpu.pipeline_mode<synchronous>, transform_indices = @transform_7, window_bounds = array<i64: 1, 32>}, {pipeline_mode = #tpu.pipeline_mode<synchronous>, transform_indices = @transform_8, window_bounds = array<i64: 32, 16>}, {pipeline_mode = #tpu.pipeline_mode<synchronous>, transform_indices = @transform_9, window_bounds = array<i64: 1, 16>}, {pipeline_mode = #tpu.pipeline_mode<synchronous>, transform_indices = @transform_10, window_bounds = array<i64: 16, 32>}, {pipeline_mode = #tpu.pipeline_mode<synchronous>, transform_indices = @transform_11, window_bounds = array<i64: 1, 32>}, {pipeline_mode = #tpu.pipeline_mode<synchronous>, transform_indices = @transform_12, window_bounds = array<i64: 1, 32>}, {transform_indices = @transform_13, window_bounds = array<i64: 4, 9>}, {transform_indices = @transform_14, window_bounds = array<i64: 4, 1>}, {transform_indices = @transform_15, window_bounds = array<i64: 9, 4>}, {transform_indices = @transform_16, window_bounds = array<i64: 9, 1>}, {transform_indices = @transform_17, window_bounds = array<i64: 1, 1>}, {transform_indices = @transform_18, window_bounds = array<i64: 8, 32>}, {transform_indices = @transform_19, window_bounds = array<i64: 8, 8, 32>}]} {
    %c0 = arith.constant 0 : index
    %c0_0 = arith.constant 0 : index
    %c0_1 = arith.constant 0 : index
    %0 = vector.load %arg1[%c0, %c0_0, %c0_1] : memref<9x8x32xf32, #tpu.memory_space<vmem>>, vector<9x8x32xf32>
    %c0_2 = arith.constant 0 : index
    %c0_3 = arith.constant 0 : index
    %c0_4 = arith.constant 0 : index
    %1 = vector.load %arg2[%c0_2, %c0_3, %c0_4] : memref<9x8x1xf32, #tpu.memory_space<vmem>>, vector<9x8x1xf32>
    %2 = vector.broadcast %1 : vector<9x8x1xf32> to vector<9x8x32xf32>
    %3 = arith.mulf %0, %2 : vector<9x8x32xf32>
    %c0_5 = arith.constant 0 : index
    %c0_6 = arith.constant 0 : index
    %4 = vector.load %arg3[%c0_5, %c0_6] : memref<1x32xf32, #tpu.memory_space<vmem>>, vector<1x32xf32>
    %c0_7 = arith.constant 0 : index
    %c0_8 = arith.constant 0 : index
    %5 = vector.load %arg4[%c0_7, %c0_8] : memref<1x32xf32, #tpu.memory_space<vmem>>, vector<1x32xf32>
    %cst = arith.constant dense<0.000000e+00> : vector<9x8xf32>
    %6 = vector.multi_reduction <add>, %3, %cst [2] : vector<9x8x32xf32> to vector<9x8xf32>
    %7 = vector.shape_cast %6 : vector<9x8xf32> to vector<9x8x1xf32>
    %cst_9 = arith.constant 3.200000e+01 : f32
    %8 = vector.broadcast %cst_9 : f32 to vector<9x8x1xf32>
    %9 = arith.divf %7, %8 : vector<9x8x1xf32>
    %10 = vector.broadcast %9 : vector<9x8x1xf32> to vector<9x8x32xf32>
    %11 = arith.subf %3, %10 : vector<9x8x32xf32>
    %12 = arith.mulf %11, %11 : vector<9x8x32xf32>
    %cst_10 = arith.constant dense<0.000000e+00> : vector<9x8xf32>
    %13 = vector.multi_reduction <add>, %12, %cst_10 [2] : vector<9x8x32xf32> to vector<9x8xf32>
    %14 = vector.shape_cast %13 : vector<9x8xf32> to vector<9x8x1xf32>
    %cst_11 = arith.constant 3.200000e+01 : f32
    %15 = vector.broadcast %cst_11 : f32 to vector<9x8x1xf32>
    %16 = arith.divf %14, %15 : vector<9x8x1xf32>
    %cst_12 = arith.constant 9.99999974E-6 : f32
    %17 = vector.broadcast %cst_12 : f32 to vector<9x8x1xf32>
    %18 = arith.addf %16, %17 : vector<9x8x1xf32>
    %19 = math.rsqrt %18 : vector<9x8x1xf32>
    %20 = vector.broadcast %19 : vector<9x8x1xf32> to vector<9x8x32xf32>
    %21 = arith.mulf %11, %20 : vector<9x8x32xf32>
    %22 = vector.shape_cast %4 : vector<1x32xf32> to vector<1x1x32xf32>
    %23 = vector.broadcast %22 : vector<1x1x32xf32> to vector<9x8x32xf32>
    %24 = arith.mulf %21, %23 : vector<9x8x32xf32>
    %25 = vector.shape_cast %5 : vector<1x32xf32> to vector<1x1x32xf32>
    %26 = vector.broadcast %25 : vector<1x1x32xf32> to vector<9x8x32xf32>
    %27 = arith.addf %24, %26 : vector<9x8x32xf32>
    %28 = vector.extract_strided_slice %27 {offsets = [0, 0, 0], sizes = [1, 8, 32], strides = [1, 1, 1]} : vector<9x8x32xf32> to vector<1x8x32xf32>
    %29 = vector.shape_cast %28 : vector<1x8x32xf32> to vector<8x32xf32>
    %30 = vector.extract_strided_slice %27 {offsets = [1, 0, 0], sizes = [1, 8, 32], strides = [1, 1, 1]} : vector<9x8x32xf32> to vector<1x8x32xf32>
    %31 = vector.shape_cast %30 : vector<1x8x32xf32> to vector<8x32xf32>
    %32 = vector.extract_strided_slice %27 {offsets = [2, 0, 0], sizes = [1, 8, 32], strides = [1, 1, 1]} : vector<9x8x32xf32> to vector<1x8x32xf32>
    %33 = vector.shape_cast %32 : vector<1x8x32xf32> to vector<8x32xf32>
    %34 = vector.extract_strided_slice %27 {offsets = [3, 0, 0], sizes = [1, 8, 32], strides = [1, 1, 1]} : vector<9x8x32xf32> to vector<1x8x32xf32>
    %35 = vector.shape_cast %34 : vector<1x8x32xf32> to vector<8x32xf32>
    %36 = vector.extract_strided_slice %27 {offsets = [4, 0, 0], sizes = [1, 8, 32], strides = [1, 1, 1]} : vector<9x8x32xf32> to vector<1x8x32xf32>
    %37 = vector.shape_cast %36 : vector<1x8x32xf32> to vector<8x32xf32>
    %38 = vector.extract_strided_slice %27 {offsets = [5, 0, 0], sizes = [1, 8, 32], strides = [1, 1, 1]} : vector<9x8x32xf32> to vector<1x8x32xf32>
    %39 = vector.shape_cast %38 : vector<1x8x32xf32> to vector<8x32xf32>
    %40 = vector.extract_strided_slice %27 {offsets = [6, 0, 0], sizes = [1, 8, 32], strides = [1, 1, 1]} : vector<9x8x32xf32> to vector<1x8x32xf32>
    %41 = vector.shape_cast %40 : vector<1x8x32xf32> to vector<8x32xf32>
    %42 = vector.extract_strided_slice %27 {offsets = [7, 0, 0], sizes = [1, 8, 32], strides = [1, 1, 1]} : vector<9x8x32xf32> to vector<1x8x32xf32>
    %43 = vector.shape_cast %42 : vector<1x8x32xf32> to vector<8x32xf32>
    %44 = vector.extract_strided_slice %27 {offsets = [8, 0, 0], sizes = [1, 8, 32], strides = [1, 1, 1]} : vector<9x8x32xf32> to vector<1x8x32xf32>
    %45 = vector.shape_cast %44 : vector<1x8x32xf32> to vector<8x32xf32>
    %c0_13 = arith.constant 0 : index
    %c0_14 = arith.constant 0 : index
    %46 = memref.load %arg14[%c0_13, %c0_14] : memref<4x9xf32, #tpu.memory_space<smem>>
    %47 = vector.broadcast %46 : f32 to vector<8x32xf32>
    %48 = arith.mulf %47, %29 : vector<8x32xf32>
    %c0_15 = arith.constant 0 : index
    %c1 = arith.constant 1 : index
    %49 = memref.load %arg14[%c0_15, %c1] : memref<4x9xf32, #tpu.memory_space<smem>>
    %50 = vector.broadcast %49 : f32 to vector<8x32xf32>
    %51 = arith.mulf %50, %31 : vector<8x32xf32>
    %52 = arith.addf %48, %51 : vector<8x32xf32>
    %c0_16 = arith.constant 0 : index
    %c2 = arith.constant 2 : index
    %53 = memref.load %arg14[%c0_16, %c2] : memref<4x9xf32, #tpu.memory_space<smem>>
    %54 = vector.broadcast %53 : f32 to vector<8x32xf32>
    %55 = arith.mulf %54, %33 : vector<8x32xf32>
    %56 = arith.addf %52, %55 : vector<8x32xf32>
    %c0_17 = arith.constant 0 : index
    %c3 = arith.constant 3 : index
    %57 = memref.load %arg14[%c0_17, %c3] : memref<4x9xf32, #tpu.memory_space<smem>>
    %58 = vector.broadcast %57 : f32 to vector<8x32xf32>
    %59 = arith.mulf %58, %35 : vector<8x32xf32>
    %60 = arith.addf %56, %59 : vector<8x32xf32>
    %c0_18 = arith.constant 0 : index
    %c4 = arith.constant 4 : index
    %61 = memref.load %arg14[%c0_18, %c4] : memref<4x9xf32, #tpu.memory_space<smem>>
    %62 = vector.broadcast %61 : f32 to vector<8x32xf32>
    %63 = arith.mulf %62, %37 : vector<8x32xf32>
    %64 = arith.addf %60, %63 : vector<8x32xf32>
    %c0_19 = arith.constant 0 : index
    %c5 = arith.constant 5 : index
    %65 = memref.load %arg14[%c0_19, %c5] : memref<4x9xf32, #tpu.memory_space<smem>>
    %66 = vector.broadcast %65 : f32 to vector<8x32xf32>
    %67 = arith.mulf %66, %39 : vector<8x32xf32>
    %68 = arith.addf %64, %67 : vector<8x32xf32>
    %c0_20 = arith.constant 0 : index
    %c6 = arith.constant 6 : index
    %69 = memref.load %arg14[%c0_20, %c6] : memref<4x9xf32, #tpu.memory_space<smem>>
    %70 = vector.broadcast %69 : f32 to vector<8x32xf32>
    %71 = arith.mulf %70, %41 : vector<8x32xf32>
    %72 = arith.addf %68, %71 : vector<8x32xf32>
    %c0_21 = arith.constant 0 : index
    %c7 = arith.constant 7 : index
    %73 = memref.load %arg14[%c0_21, %c7] : memref<4x9xf32, #tpu.memory_space<smem>>
    %74 = vector.broadcast %73 : f32 to vector<8x32xf32>
    %75 = arith.mulf %74, %43 : vector<8x32xf32>
    %76 = arith.addf %72, %75 : vector<8x32xf32>
    %c0_22 = arith.constant 0 : index
    %c8 = arith.constant 8 : index
    %77 = memref.load %arg14[%c0_22, %c8] : memref<4x9xf32, #tpu.memory_space<smem>>
    %78 = vector.broadcast %77 : f32 to vector<8x32xf32>
    %79 = arith.mulf %78, %45 : vector<8x32xf32>
    %80 = arith.addf %76, %79 : vector<8x32xf32>
    %c0_23 = arith.constant 0 : index
    %c0_24 = arith.constant 0 : index
    %81 = memref.load %arg15[%c0_23, %c0_24] : memref<4x1xf32, #tpu.memory_space<smem>>
    %82 = vector.broadcast %81 : f32 to vector<8x32xf32>
    %83 = arith.addf %80, %82 : vector<8x32xf32>
    %84 = arith.mulf %83, %83 : vector<8x32xf32>
    %85 = arith.mulf %83, %84 : vector<8x32xf32>
    %cst_25 = arith.constant 4.471500e-02 : f32
    %86 = vector.broadcast %cst_25 : f32 to vector<8x32xf32>
    %87 = arith.mulf %86, %85 : vector<8x32xf32>
    %88 = arith.addf %83, %87 : vector<8x32xf32>
    %cst_26 = arith.constant 0.797884583 : f32
    %89 = vector.broadcast %cst_26 : f32 to vector<8x32xf32>
    %90 = arith.mulf %89, %88 : vector<8x32xf32>
    %91 = math.tanh %90 : vector<8x32xf32>
    %cst_27 = arith.constant 1.000000e+00 : f32
    %92 = vector.broadcast %cst_27 : f32 to vector<8x32xf32>
    %93 = arith.addf %92, %91 : vector<8x32xf32>
    %cst_28 = arith.constant 5.000000e-01 : f32
    %94 = vector.broadcast %cst_28 : f32 to vector<8x32xf32>
    %95 = arith.mulf %94, %93 : vector<8x32xf32>
    %96 = arith.mulf %83, %95 : vector<8x32xf32>
    %c1_29 = arith.constant 1 : index
    %c0_30 = arith.constant 0 : index
    %97 = memref.load %arg14[%c1_29, %c0_30] : memref<4x9xf32, #tpu.memory_space<smem>>
    %98 = vector.broadcast %97 : f32 to vector<8x32xf32>
    %99 = arith.mulf %98, %29 : vector<8x32xf32>
    %c1_31 = arith.constant 1 : index
    %c1_32 = arith.constant 1 : index
    %100 = memref.load %arg14[%c1_31, %c1_32] : memref<4x9xf32, #tpu.memory_space<smem>>
    %101 = vector.broadcast %100 : f32 to vector<8x32xf32>
    %102 = arith.mulf %101, %31 : vector<8x32xf32>
    %103 = arith.addf %99, %102 : vector<8x32xf32>
    %c1_33 = arith.constant 1 : index
    %c2_34 = arith.constant 2 : index
    %104 = memref.load %arg14[%c1_33, %c2_34] : memref<4x9xf32, #tpu.memory_space<smem>>
    %105 = vector.broadcast %104 : f32 to vector<8x32xf32>
    %106 = arith.mulf %105, %33 : vector<8x32xf32>
    %107 = arith.addf %103, %106 : vector<8x32xf32>
    %c1_35 = arith.constant 1 : index
    %c3_36 = arith.constant 3 : index
    %108 = memref.load %arg14[%c1_35, %c3_36] : memref<4x9xf32, #tpu.memory_space<smem>>
    %109 = vector.broadcast %108 : f32 to vector<8x32xf32>
    %110 = arith.mulf %109, %35 : vector<8x32xf32>
    %111 = arith.addf %107, %110 : vector<8x32xf32>
    %c1_37 = arith.constant 1 : index
    %c4_38 = arith.constant 4 : index
    %112 = memref.load %arg14[%c1_37, %c4_38] : memref<4x9xf32, #tpu.memory_space<smem>>
    %113 = vector.broadcast %112 : f32 to vector<8x32xf32>
    %114 = arith.mulf %113, %37 : vector<8x32xf32>
    %115 = arith.addf %111, %114 : vector<8x32xf32>
    %c1_39 = arith.constant 1 : index
    %c5_40 = arith.constant 5 : index
    %116 = memref.load %arg14[%c1_39, %c5_40] : memref<4x9xf32, #tpu.memory_space<smem>>
    %117 = vector.broadcast %116 : f32 to vector<8x32xf32>
    %118 = arith.mulf %117, %39 : vector<8x32xf32>
    %119 = arith.addf %115, %118 : vector<8x32xf32>
    %c1_41 = arith.constant 1 : index
    %c6_42 = arith.constant 6 : index
    %120 = memref.load %arg14[%c1_41, %c6_42] : memref<4x9xf32, #tpu.memory_space<smem>>
    %121 = vector.broadcast %120 : f32 to vector<8x32xf32>
    %122 = arith.mulf %121, %41 : vector<8x32xf32>
    %123 = arith.addf %119, %122 : vector<8x32xf32>
    %c1_43 = arith.constant 1 : index
    %c7_44 = arith.constant 7 : index
    %124 = memref.load %arg14[%c1_43, %c7_44] : memref<4x9xf32, #tpu.memory_space<smem>>
    %125 = vector.broadcast %124 : f32 to vector<8x32xf32>
    %126 = arith.mulf %125, %43 : vector<8x32xf32>
    %127 = arith.addf %123, %126 : vector<8x32xf32>
    %c1_45 = arith.constant 1 : index
    %c8_46 = arith.constant 8 : index
    %128 = memref.load %arg14[%c1_45, %c8_46] : memref<4x9xf32, #tpu.memory_space<smem>>
    %129 = vector.broadcast %128 : f32 to vector<8x32xf32>
    %130 = arith.mulf %129, %45 : vector<8x32xf32>
    %131 = arith.addf %127, %130 : vector<8x32xf32>
    %c1_47 = arith.constant 1 : index
    %c0_48 = arith.constant 0 : index
    %132 = memref.load %arg15[%c1_47, %c0_48] : memref<4x1xf32, #tpu.memory_space<smem>>
    %133 = vector.broadcast %132 : f32 to vector<8x32xf32>
    %134 = arith.addf %131, %133 : vector<8x32xf32>
    %135 = arith.mulf %134, %134 : vector<8x32xf32>
    %136 = arith.mulf %134, %135 : vector<8x32xf32>
    %cst_49 = arith.constant 4.471500e-02 : f32
    %137 = vector.broadcast %cst_49 : f32 to vector<8x32xf32>
    %138 = arith.mulf %137, %136 : vector<8x32xf32>
    %139 = arith.addf %134, %138 : vector<8x32xf32>
    %cst_50 = arith.constant 0.797884583 : f32
    %140 = vector.broadcast %cst_50 : f32 to vector<8x32xf32>
    %141 = arith.mulf %140, %139 : vector<8x32xf32>
    %142 = math.tanh %141 : vector<8x32xf32>
    %cst_51 = arith.constant 1.000000e+00 : f32
    %143 = vector.broadcast %cst_51 : f32 to vector<8x32xf32>
    %144 = arith.addf %143, %142 : vector<8x32xf32>
    %cst_52 = arith.constant 5.000000e-01 : f32
    %145 = vector.broadcast %cst_52 : f32 to vector<8x32xf32>
    %146 = arith.mulf %145, %144 : vector<8x32xf32>
    %147 = arith.mulf %134, %146 : vector<8x32xf32>
    %c2_53 = arith.constant 2 : index
    %c0_54 = arith.constant 0 : index
    %148 = memref.load %arg14[%c2_53, %c0_54] : memref<4x9xf32, #tpu.memory_space<smem>>
    %149 = vector.broadcast %148 : f32 to vector<8x32xf32>
    %150 = arith.mulf %149, %29 : vector<8x32xf32>
    %c2_55 = arith.constant 2 : index
    %c1_56 = arith.constant 1 : index
    %151 = memref.load %arg14[%c2_55, %c1_56] : memref<4x9xf32, #tpu.memory_space<smem>>
    %152 = vector.broadcast %151 : f32 to vector<8x32xf32>
    %153 = arith.mulf %152, %31 : vector<8x32xf32>
    %154 = arith.addf %150, %153 : vector<8x32xf32>
    %c2_57 = arith.constant 2 : index
    %c2_58 = arith.constant 2 : index
    %155 = memref.load %arg14[%c2_57, %c2_58] : memref<4x9xf32, #tpu.memory_space<smem>>
    %156 = vector.broadcast %155 : f32 to vector<8x32xf32>
    %157 = arith.mulf %156, %33 : vector<8x32xf32>
    %158 = arith.addf %154, %157 : vector<8x32xf32>
    %c2_59 = arith.constant 2 : index
    %c3_60 = arith.constant 3 : index
    %159 = memref.load %arg14[%c2_59, %c3_60] : memref<4x9xf32, #tpu.memory_space<smem>>
    %160 = vector.broadcast %159 : f32 to vector<8x32xf32>
    %161 = arith.mulf %160, %35 : vector<8x32xf32>
    %162 = arith.addf %158, %161 : vector<8x32xf32>
    %c2_61 = arith.constant 2 : index
    %c4_62 = arith.constant 4 : index
    %163 = memref.load %arg14[%c2_61, %c4_62] : memref<4x9xf32, #tpu.memory_space<smem>>
    %164 = vector.broadcast %163 : f32 to vector<8x32xf32>
    %165 = arith.mulf %164, %37 : vector<8x32xf32>
    %166 = arith.addf %162, %165 : vector<8x32xf32>
    %c2_63 = arith.constant 2 : index
    %c5_64 = arith.constant 5 : index
    %167 = memref.load %arg14[%c2_63, %c5_64] : memref<4x9xf32, #tpu.memory_space<smem>>
    %168 = vector.broadcast %167 : f32 to vector<8x32xf32>
    %169 = arith.mulf %168, %39 : vector<8x32xf32>
    %170 = arith.addf %166, %169 : vector<8x32xf32>
    %c2_65 = arith.constant 2 : index
    %c6_66 = arith.constant 6 : index
    %171 = memref.load %arg14[%c2_65, %c6_66] : memref<4x9xf32, #tpu.memory_space<smem>>
    %172 = vector.broadcast %171 : f32 to vector<8x32xf32>
    %173 = arith.mulf %172, %41 : vector<8x32xf32>
    %174 = arith.addf %170, %173 : vector<8x32xf32>
    %c2_67 = arith.constant 2 : index
    %c7_68 = arith.constant 7 : index
    %175 = memref.load %arg14[%c2_67, %c7_68] : memref<4x9xf32, #tpu.memory_space<smem>>
    %176 = vector.broadcast %175 : f32 to vector<8x32xf32>
    %177 = arith.mulf %176, %43 : vector<8x32xf32>
    %178 = arith.addf %174, %177 : vector<8x32xf32>
    %c2_69 = arith.constant 2 : index
    %c8_70 = arith.constant 8 : index
    %179 = memref.load %arg14[%c2_69, %c8_70] : memref<4x9xf32, #tpu.memory_space<smem>>
    %180 = vector.broadcast %179 : f32 to vector<8x32xf32>
    %181 = arith.mulf %180, %45 : vector<8x32xf32>
    %182 = arith.addf %178, %181 : vector<8x32xf32>
    %c2_71 = arith.constant 2 : index
    %c0_72 = arith.constant 0 : index
    %183 = memref.load %arg15[%c2_71, %c0_72] : memref<4x1xf32, #tpu.memory_space<smem>>
    %184 = vector.broadcast %183 : f32 to vector<8x32xf32>
    %185 = arith.addf %182, %184 : vector<8x32xf32>
    %186 = arith.mulf %185, %185 : vector<8x32xf32>
    %187 = arith.mulf %185, %186 : vector<8x32xf32>
    %cst_73 = arith.constant 4.471500e-02 : f32
    %188 = vector.broadcast %cst_73 : f32 to vector<8x32xf32>
    %189 = arith.mulf %188, %187 : vector<8x32xf32>
    %190 = arith.addf %185, %189 : vector<8x32xf32>
    %cst_74 = arith.constant 0.797884583 : f32
    %191 = vector.broadcast %cst_74 : f32 to vector<8x32xf32>
    %192 = arith.mulf %191, %190 : vector<8x32xf32>
    %193 = math.tanh %192 : vector<8x32xf32>
    %cst_75 = arith.constant 1.000000e+00 : f32
    %194 = vector.broadcast %cst_75 : f32 to vector<8x32xf32>
    %195 = arith.addf %194, %193 : vector<8x32xf32>
    %cst_76 = arith.constant 5.000000e-01 : f32
    %196 = vector.broadcast %cst_76 : f32 to vector<8x32xf32>
    %197 = arith.mulf %196, %195 : vector<8x32xf32>
    %198 = arith.mulf %185, %197 : vector<8x32xf32>
    %c3_77 = arith.constant 3 : index
    %c0_78 = arith.constant 0 : index
    %199 = memref.load %arg14[%c3_77, %c0_78] : memref<4x9xf32, #tpu.memory_space<smem>>
    %200 = vector.broadcast %199 : f32 to vector<8x32xf32>
    %201 = arith.mulf %200, %29 : vector<8x32xf32>
    %c3_79 = arith.constant 3 : index
    %c1_80 = arith.constant 1 : index
    %202 = memref.load %arg14[%c3_79, %c1_80] : memref<4x9xf32, #tpu.memory_space<smem>>
    %203 = vector.broadcast %202 : f32 to vector<8x32xf32>
    %204 = arith.mulf %203, %31 : vector<8x32xf32>
    %205 = arith.addf %201, %204 : vector<8x32xf32>
    %c3_81 = arith.constant 3 : index
    %c2_82 = arith.constant 2 : index
    %206 = memref.load %arg14[%c3_81, %c2_82] : memref<4x9xf32, #tpu.memory_space<smem>>
    %207 = vector.broadcast %206 : f32 to vector<8x32xf32>
    %208 = arith.mulf %207, %33 : vector<8x32xf32>
    %209 = arith.addf %205, %208 : vector<8x32xf32>
    %c3_83 = arith.constant 3 : index
    %c3_84 = arith.constant 3 : index
    %210 = memref.load %arg14[%c3_83, %c3_84] : memref<4x9xf32, #tpu.memory_space<smem>>
    %211 = vector.broadcast %210 : f32 to vector<8x32xf32>
    %212 = arith.mulf %211, %35 : vector<8x32xf32>
    %213 = arith.addf %209, %212 : vector<8x32xf32>
    %c3_85 = arith.constant 3 : index
    %c4_86 = arith.constant 4 : index
    %214 = memref.load %arg14[%c3_85, %c4_86] : memref<4x9xf32, #tpu.memory_space<smem>>
    %215 = vector.broadcast %214 : f32 to vector<8x32xf32>
    %216 = arith.mulf %215, %37 : vector<8x32xf32>
    %217 = arith.addf %213, %216 : vector<8x32xf32>
    %c3_87 = arith.constant 3 : index
    %c5_88 = arith.constant 5 : index
    %218 = memref.load %arg14[%c3_87, %c5_88] : memref<4x9xf32, #tpu.memory_space<smem>>
    %219 = vector.broadcast %218 : f32 to vector<8x32xf32>
    %220 = arith.mulf %219, %39 : vector<8x32xf32>
    %221 = arith.addf %217, %220 : vector<8x32xf32>
    %c3_89 = arith.constant 3 : index
    %c6_90 = arith.constant 6 : index
    %222 = memref.load %arg14[%c3_89, %c6_90] : memref<4x9xf32, #tpu.memory_space<smem>>
    %223 = vector.broadcast %222 : f32 to vector<8x32xf32>
    %224 = arith.mulf %223, %41 : vector<8x32xf32>
    %225 = arith.addf %221, %224 : vector<8x32xf32>
    %c3_91 = arith.constant 3 : index
    %c7_92 = arith.constant 7 : index
    %226 = memref.load %arg14[%c3_91, %c7_92] : memref<4x9xf32, #tpu.memory_space<smem>>
    %227 = vector.broadcast %226 : f32 to vector<8x32xf32>
    %228 = arith.mulf %227, %43 : vector<8x32xf32>
    %229 = arith.addf %225, %228 : vector<8x32xf32>
    %c3_93 = arith.constant 3 : index
    %c8_94 = arith.constant 8 : index
    %230 = memref.load %arg14[%c3_93, %c8_94] : memref<4x9xf32, #tpu.memory_space<smem>>
    %231 = vector.broadcast %230 : f32 to vector<8x32xf32>
    %232 = arith.mulf %231, %45 : vector<8x32xf32>
    %233 = arith.addf %229, %232 : vector<8x32xf32>
    %c3_95 = arith.constant 3 : index
    %c0_96 = arith.constant 0 : index
    %234 = memref.load %arg15[%c3_95, %c0_96] : memref<4x1xf32, #tpu.memory_space<smem>>
    %235 = vector.broadcast %234 : f32 to vector<8x32xf32>
    %236 = arith.addf %233, %235 : vector<8x32xf32>
    %237 = arith.mulf %236, %236 : vector<8x32xf32>
    %238 = arith.mulf %236, %237 : vector<8x32xf32>
    %cst_97 = arith.constant 4.471500e-02 : f32
    %239 = vector.broadcast %cst_97 : f32 to vector<8x32xf32>
    %240 = arith.mulf %239, %238 : vector<8x32xf32>
    %241 = arith.addf %236, %240 : vector<8x32xf32>
    %cst_98 = arith.constant 0.797884583 : f32
    %242 = vector.broadcast %cst_98 : f32 to vector<8x32xf32>
    %243 = arith.mulf %242, %241 : vector<8x32xf32>
    %244 = math.tanh %243 : vector<8x32xf32>
    %cst_99 = arith.constant 1.000000e+00 : f32
    %245 = vector.broadcast %cst_99 : f32 to vector<8x32xf32>
    %246 = arith.addf %245, %244 : vector<8x32xf32>
    %cst_100 = arith.constant 5.000000e-01 : f32
    %247 = vector.broadcast %cst_100 : f32 to vector<8x32xf32>
    %248 = arith.mulf %247, %246 : vector<8x32xf32>
    %249 = arith.mulf %236, %248 : vector<8x32xf32>
    %c0_101 = arith.constant 0 : index
    %c0_102 = arith.constant 0 : index
    %250 = memref.load %arg16[%c0_101, %c0_102] : memref<9x4xf32, #tpu.memory_space<smem>>
    %251 = vector.broadcast %250 : f32 to vector<8x32xf32>
    %252 = arith.mulf %251, %96 : vector<8x32xf32>
    %c0_103 = arith.constant 0 : index
    %c1_104 = arith.constant 1 : index
    %253 = memref.load %arg16[%c0_103, %c1_104] : memref<9x4xf32, #tpu.memory_space<smem>>
    %254 = vector.broadcast %253 : f32 to vector<8x32xf32>
    %255 = arith.mulf %254, %147 : vector<8x32xf32>
    %256 = arith.addf %252, %255 : vector<8x32xf32>
    %c0_105 = arith.constant 0 : index
    %c2_106 = arith.constant 2 : index
    %257 = memref.load %arg16[%c0_105, %c2_106] : memref<9x4xf32, #tpu.memory_space<smem>>
    %258 = vector.broadcast %257 : f32 to vector<8x32xf32>
    %259 = arith.mulf %258, %198 : vector<8x32xf32>
    %260 = arith.addf %256, %259 : vector<8x32xf32>
    %c0_107 = arith.constant 0 : index
    %c3_108 = arith.constant 3 : index
    %261 = memref.load %arg16[%c0_107, %c3_108] : memref<9x4xf32, #tpu.memory_space<smem>>
    %262 = vector.broadcast %261 : f32 to vector<8x32xf32>
    %263 = arith.mulf %262, %249 : vector<8x32xf32>
    %264 = arith.addf %260, %263 : vector<8x32xf32>
    %265 = vector.extract_strided_slice %0 {offsets = [0, 0, 0], sizes = [1, 8, 32], strides = [1, 1, 1]} : vector<9x8x32xf32> to vector<1x8x32xf32>
    %266 = vector.shape_cast %265 : vector<1x8x32xf32> to vector<8x32xf32>
    %267 = arith.addf %266, %264 : vector<8x32xf32>
    %c0_109 = arith.constant 0 : index
    %c0_110 = arith.constant 0 : index
    %268 = memref.load %arg17[%c0_109, %c0_110] : memref<9x1xf32, #tpu.memory_space<smem>>
    %269 = vector.broadcast %268 : f32 to vector<8x32xf32>
    %270 = arith.addf %267, %269 : vector<8x32xf32>
    %c1_111 = arith.constant 1 : index
    %c0_112 = arith.constant 0 : index
    %271 = memref.load %arg16[%c1_111, %c0_112] : memref<9x4xf32, #tpu.memory_space<smem>>
    %272 = vector.broadcast %271 : f32 to vector<8x32xf32>
    %273 = arith.mulf %272, %96 : vector<8x32xf32>
    %c1_113 = arith.constant 1 : index
    %c1_114 = arith.constant 1 : index
    %274 = memref.load %arg16[%c1_113, %c1_114] : memref<9x4xf32, #tpu.memory_space<smem>>
    %275 = vector.broadcast %274 : f32 to vector<8x32xf32>
    %276 = arith.mulf %275, %147 : vector<8x32xf32>
    %277 = arith.addf %273, %276 : vector<8x32xf32>
    %c1_115 = arith.constant 1 : index
    %c2_116 = arith.constant 2 : index
    %278 = memref.load %arg16[%c1_115, %c2_116] : memref<9x4xf32, #tpu.memory_space<smem>>
    %279 = vector.broadcast %278 : f32 to vector<8x32xf32>
    %280 = arith.mulf %279, %198 : vector<8x32xf32>
    %281 = arith.addf %277, %280 : vector<8x32xf32>
    %c1_117 = arith.constant 1 : index
    %c3_118 = arith.constant 3 : index
    %282 = memref.load %arg16[%c1_117, %c3_118] : memref<9x4xf32, #tpu.memory_space<smem>>
    %283 = vector.broadcast %282 : f32 to vector<8x32xf32>
    %284 = arith.mulf %283, %249 : vector<8x32xf32>
    %285 = arith.addf %281, %284 : vector<8x32xf32>
    %286 = vector.extract_strided_slice %0 {offsets = [1, 0, 0], sizes = [1, 8, 32], strides = [1, 1, 1]} : vector<9x8x32xf32> to vector<1x8x32xf32>
    %287 = vector.shape_cast %286 : vector<1x8x32xf32> to vector<8x32xf32>
    %288 = arith.addf %287, %285 : vector<8x32xf32>
    %c1_119 = arith.constant 1 : index
    %c0_120 = arith.constant 0 : index
    %289 = memref.load %arg17[%c1_119, %c0_120] : memref<9x1xf32, #tpu.memory_space<smem>>
    %290 = vector.broadcast %289 : f32 to vector<8x32xf32>
    %291 = arith.addf %288, %290 : vector<8x32xf32>
    %c2_121 = arith.constant 2 : index
    %c0_122 = arith.constant 0 : index
    %292 = memref.load %arg16[%c2_121, %c0_122] : memref<9x4xf32, #tpu.memory_space<smem>>
    %293 = vector.broadcast %292 : f32 to vector<8x32xf32>
    %294 = arith.mulf %293, %96 : vector<8x32xf32>
    %c2_123 = arith.constant 2 : index
    %c1_124 = arith.constant 1 : index
    %295 = memref.load %arg16[%c2_123, %c1_124] : memref<9x4xf32, #tpu.memory_space<smem>>
    %296 = vector.broadcast %295 : f32 to vector<8x32xf32>
    %297 = arith.mulf %296, %147 : vector<8x32xf32>
    %298 = arith.addf %294, %297 : vector<8x32xf32>
    %c2_125 = arith.constant 2 : index
    %c2_126 = arith.constant 2 : index
    %299 = memref.load %arg16[%c2_125, %c2_126] : memref<9x4xf32, #tpu.memory_space<smem>>
    %300 = vector.broadcast %299 : f32 to vector<8x32xf32>
    %301 = arith.mulf %300, %198 : vector<8x32xf32>
    %302 = arith.addf %298, %301 : vector<8x32xf32>
    %c2_127 = arith.constant 2 : index
    %c3_128 = arith.constant 3 : index
    %303 = memref.load %arg16[%c2_127, %c3_128] : memref<9x4xf32, #tpu.memory_space<smem>>
    %304 = vector.broadcast %303 : f32 to vector<8x32xf32>
    %305 = arith.mulf %304, %249 : vector<8x32xf32>
    %306 = arith.addf %302, %305 : vector<8x32xf32>
    %307 = vector.extract_strided_slice %0 {offsets = [2, 0, 0], sizes = [1, 8, 32], strides = [1, 1, 1]} : vector<9x8x32xf32> to vector<1x8x32xf32>
    %308 = vector.shape_cast %307 : vector<1x8x32xf32> to vector<8x32xf32>
    %309 = arith.addf %308, %306 : vector<8x32xf32>
    %c2_129 = arith.constant 2 : index
    %c0_130 = arith.constant 0 : index
    %310 = memref.load %arg17[%c2_129, %c0_130] : memref<9x1xf32, #tpu.memory_space<smem>>
    %311 = vector.broadcast %310 : f32 to vector<8x32xf32>
    %312 = arith.addf %309, %311 : vector<8x32xf32>
    %c3_131 = arith.constant 3 : index
    %c0_132 = arith.constant 0 : index
    %313 = memref.load %arg16[%c3_131, %c0_132] : memref<9x4xf32, #tpu.memory_space<smem>>
    %314 = vector.broadcast %313 : f32 to vector<8x32xf32>
    %315 = arith.mulf %314, %96 : vector<8x32xf32>
    %c3_133 = arith.constant 3 : index
    %c1_134 = arith.constant 1 : index
    %316 = memref.load %arg16[%c3_133, %c1_134] : memref<9x4xf32, #tpu.memory_space<smem>>
    %317 = vector.broadcast %316 : f32 to vector<8x32xf32>
    %318 = arith.mulf %317, %147 : vector<8x32xf32>
    %319 = arith.addf %315, %318 : vector<8x32xf32>
    %c3_135 = arith.constant 3 : index
    %c2_136 = arith.constant 2 : index
    %320 = memref.load %arg16[%c3_135, %c2_136] : memref<9x4xf32, #tpu.memory_space<smem>>
    %321 = vector.broadcast %320 : f32 to vector<8x32xf32>
    %322 = arith.mulf %321, %198 : vector<8x32xf32>
    %323 = arith.addf %319, %322 : vector<8x32xf32>
    %c3_137 = arith.constant 3 : index
    %c3_138 = arith.constant 3 : index
    %324 = memref.load %arg16[%c3_137, %c3_138] : memref<9x4xf32, #tpu.memory_space<smem>>
    %325 = vector.broadcast %324 : f32 to vector<8x32xf32>
    %326 = arith.mulf %325, %249 : vector<8x32xf32>
    %327 = arith.addf %323, %326 : vector<8x32xf32>
    %328 = vector.extract_strided_slice %0 {offsets = [3, 0, 0], sizes = [1, 8, 32], strides = [1, 1, 1]} : vector<9x8x32xf32> to vector<1x8x32xf32>
    %329 = vector.shape_cast %328 : vector<1x8x32xf32> to vector<8x32xf32>
    %330 = arith.addf %329, %327 : vector<8x32xf32>
    %c3_139 = arith.constant 3 : index
    %c0_140 = arith.constant 0 : index
    %331 = memref.load %arg17[%c3_139, %c0_140] : memref<9x1xf32, #tpu.memory_space<smem>>
    %332 = vector.broadcast %331 : f32 to vector<8x32xf32>
    %333 = arith.addf %330, %332 : vector<8x32xf32>
    %c4_141 = arith.constant 4 : index
    %c0_142 = arith.constant 0 : index
    %334 = memref.load %arg16[%c4_141, %c0_142] : memref<9x4xf32, #tpu.memory_space<smem>>
    %335 = vector.broadcast %334 : f32 to vector<8x32xf32>
    %336 = arith.mulf %335, %96 : vector<8x32xf32>
    %c4_143 = arith.constant 4 : index
    %c1_144 = arith.constant 1 : index
    %337 = memref.load %arg16[%c4_143, %c1_144] : memref<9x4xf32, #tpu.memory_space<smem>>
    %338 = vector.broadcast %337 : f32 to vector<8x32xf32>
    %339 = arith.mulf %338, %147 : vector<8x32xf32>
    %340 = arith.addf %336, %339 : vector<8x32xf32>
    %c4_145 = arith.constant 4 : index
    %c2_146 = arith.constant 2 : index
    %341 = memref.load %arg16[%c4_145, %c2_146] : memref<9x4xf32, #tpu.memory_space<smem>>
    %342 = vector.broadcast %341 : f32 to vector<8x32xf32>
    %343 = arith.mulf %342, %198 : vector<8x32xf32>
    %344 = arith.addf %340, %343 : vector<8x32xf32>
    %c4_147 = arith.constant 4 : index
    %c3_148 = arith.constant 3 : index
    %345 = memref.load %arg16[%c4_147, %c3_148] : memref<9x4xf32, #tpu.memory_space<smem>>
    %346 = vector.broadcast %345 : f32 to vector<8x32xf32>
    %347 = arith.mulf %346, %249 : vector<8x32xf32>
    %348 = arith.addf %344, %347 : vector<8x32xf32>
    %349 = vector.extract_strided_slice %0 {offsets = [4, 0, 0], sizes = [1, 8, 32], strides = [1, 1, 1]} : vector<9x8x32xf32> to vector<1x8x32xf32>
    %350 = vector.shape_cast %349 : vector<1x8x32xf32> to vector<8x32xf32>
    %351 = arith.addf %350, %348 : vector<8x32xf32>
    %c4_149 = arith.constant 4 : index
    %c0_150 = arith.constant 0 : index
    %352 = memref.load %arg17[%c4_149, %c0_150] : memref<9x1xf32, #tpu.memory_space<smem>>
    %353 = vector.broadcast %352 : f32 to vector<8x32xf32>
    %354 = arith.addf %351, %353 : vector<8x32xf32>
    %c5_151 = arith.constant 5 : index
    %c0_152 = arith.constant 0 : index
    %355 = memref.load %arg16[%c5_151, %c0_152] : memref<9x4xf32, #tpu.memory_space<smem>>
    %356 = vector.broadcast %355 : f32 to vector<8x32xf32>
    %357 = arith.mulf %356, %96 : vector<8x32xf32>
    %c5_153 = arith.constant 5 : index
    %c1_154 = arith.constant 1 : index
    %358 = memref.load %arg16[%c5_153, %c1_154] : memref<9x4xf32, #tpu.memory_space<smem>>
    %359 = vector.broadcast %358 : f32 to vector<8x32xf32>
    %360 = arith.mulf %359, %147 : vector<8x32xf32>
    %361 = arith.addf %357, %360 : vector<8x32xf32>
    %c5_155 = arith.constant 5 : index
    %c2_156 = arith.constant 2 : index
    %362 = memref.load %arg16[%c5_155, %c2_156] : memref<9x4xf32, #tpu.memory_space<smem>>
    %363 = vector.broadcast %362 : f32 to vector<8x32xf32>
    %364 = arith.mulf %363, %198 : vector<8x32xf32>
    %365 = arith.addf %361, %364 : vector<8x32xf32>
    %c5_157 = arith.constant 5 : index
    %c3_158 = arith.constant 3 : index
    %366 = memref.load %arg16[%c5_157, %c3_158] : memref<9x4xf32, #tpu.memory_space<smem>>
    %367 = vector.broadcast %366 : f32 to vector<8x32xf32>
    %368 = arith.mulf %367, %249 : vector<8x32xf32>
    %369 = arith.addf %365, %368 : vector<8x32xf32>
    %370 = vector.extract_strided_slice %0 {offsets = [5, 0, 0], sizes = [1, 8, 32], strides = [1, 1, 1]} : vector<9x8x32xf32> to vector<1x8x32xf32>
    %371 = vector.shape_cast %370 : vector<1x8x32xf32> to vector<8x32xf32>
    %372 = arith.addf %371, %369 : vector<8x32xf32>
    %c5_159 = arith.constant 5 : index
    %c0_160 = arith.constant 0 : index
    %373 = memref.load %arg17[%c5_159, %c0_160] : memref<9x1xf32, #tpu.memory_space<smem>>
    %374 = vector.broadcast %373 : f32 to vector<8x32xf32>
    %375 = arith.addf %372, %374 : vector<8x32xf32>
    %c6_161 = arith.constant 6 : index
    %c0_162 = arith.constant 0 : index
    %376 = memref.load %arg16[%c6_161, %c0_162] : memref<9x4xf32, #tpu.memory_space<smem>>
    %377 = vector.broadcast %376 : f32 to vector<8x32xf32>
    %378 = arith.mulf %377, %96 : vector<8x32xf32>
    %c6_163 = arith.constant 6 : index
    %c1_164 = arith.constant 1 : index
    %379 = memref.load %arg16[%c6_163, %c1_164] : memref<9x4xf32, #tpu.memory_space<smem>>
    %380 = vector.broadcast %379 : f32 to vector<8x32xf32>
    %381 = arith.mulf %380, %147 : vector<8x32xf32>
    %382 = arith.addf %378, %381 : vector<8x32xf32>
    %c6_165 = arith.constant 6 : index
    %c2_166 = arith.constant 2 : index
    %383 = memref.load %arg16[%c6_165, %c2_166] : memref<9x4xf32, #tpu.memory_space<smem>>
    %384 = vector.broadcast %383 : f32 to vector<8x32xf32>
    %385 = arith.mulf %384, %198 : vector<8x32xf32>
    %386 = arith.addf %382, %385 : vector<8x32xf32>
    %c6_167 = arith.constant 6 : index
    %c3_168 = arith.constant 3 : index
    %387 = memref.load %arg16[%c6_167, %c3_168] : memref<9x4xf32, #tpu.memory_space<smem>>
    %388 = vector.broadcast %387 : f32 to vector<8x32xf32>
    %389 = arith.mulf %388, %249 : vector<8x32xf32>
    %390 = arith.addf %386, %389 : vector<8x32xf32>
    %391 = vector.extract_strided_slice %0 {offsets = [6, 0, 0], sizes = [1, 8, 32], strides = [1, 1, 1]} : vector<9x8x32xf32> to vector<1x8x32xf32>
    %392 = vector.shape_cast %391 : vector<1x8x32xf32> to vector<8x32xf32>
    %393 = arith.addf %392, %390 : vector<8x32xf32>
    %c6_169 = arith.constant 6 : index
    %c0_170 = arith.constant 0 : index
    %394 = memref.load %arg17[%c6_169, %c0_170] : memref<9x1xf32, #tpu.memory_space<smem>>
    %395 = vector.broadcast %394 : f32 to vector<8x32xf32>
    %396 = arith.addf %393, %395 : vector<8x32xf32>
    %c7_171 = arith.constant 7 : index
    %c0_172 = arith.constant 0 : index
    %397 = memref.load %arg16[%c7_171, %c0_172] : memref<9x4xf32, #tpu.memory_space<smem>>
    %398 = vector.broadcast %397 : f32 to vector<8x32xf32>
    %399 = arith.mulf %398, %96 : vector<8x32xf32>
    %c7_173 = arith.constant 7 : index
    %c1_174 = arith.constant 1 : index
    %400 = memref.load %arg16[%c7_173, %c1_174] : memref<9x4xf32, #tpu.memory_space<smem>>
    %401 = vector.broadcast %400 : f32 to vector<8x32xf32>
    %402 = arith.mulf %401, %147 : vector<8x32xf32>
    %403 = arith.addf %399, %402 : vector<8x32xf32>
    %c7_175 = arith.constant 7 : index
    %c2_176 = arith.constant 2 : index
    %404 = memref.load %arg16[%c7_175, %c2_176] : memref<9x4xf32, #tpu.memory_space<smem>>
    %405 = vector.broadcast %404 : f32 to vector<8x32xf32>
    %406 = arith.mulf %405, %198 : vector<8x32xf32>
    %407 = arith.addf %403, %406 : vector<8x32xf32>
    %c7_177 = arith.constant 7 : index
    %c3_178 = arith.constant 3 : index
    %408 = memref.load %arg16[%c7_177, %c3_178] : memref<9x4xf32, #tpu.memory_space<smem>>
    %409 = vector.broadcast %408 : f32 to vector<8x32xf32>
    %410 = arith.mulf %409, %249 : vector<8x32xf32>
    %411 = arith.addf %407, %410 : vector<8x32xf32>
    %412 = vector.extract_strided_slice %0 {offsets = [7, 0, 0], sizes = [1, 8, 32], strides = [1, 1, 1]} : vector<9x8x32xf32> to vector<1x8x32xf32>
    %413 = vector.shape_cast %412 : vector<1x8x32xf32> to vector<8x32xf32>
    %414 = arith.addf %413, %411 : vector<8x32xf32>
    %c7_179 = arith.constant 7 : index
    %c0_180 = arith.constant 0 : index
    %415 = memref.load %arg17[%c7_179, %c0_180] : memref<9x1xf32, #tpu.memory_space<smem>>
    %416 = vector.broadcast %415 : f32 to vector<8x32xf32>
    %417 = arith.addf %414, %416 : vector<8x32xf32>
    %c8_181 = arith.constant 8 : index
    %c0_182 = arith.constant 0 : index
    %418 = memref.load %arg16[%c8_181, %c0_182] : memref<9x4xf32, #tpu.memory_space<smem>>
    %419 = vector.broadcast %418 : f32 to vector<8x32xf32>
    %420 = arith.mulf %419, %96 : vector<8x32xf32>
    %c8_183 = arith.constant 8 : index
    %c1_184 = arith.constant 1 : index
    %421 = memref.load %arg16[%c8_183, %c1_184] : memref<9x4xf32, #tpu.memory_space<smem>>
    %422 = vector.broadcast %421 : f32 to vector<8x32xf32>
    %423 = arith.mulf %422, %147 : vector<8x32xf32>
    %424 = arith.addf %420, %423 : vector<8x32xf32>
    %c8_185 = arith.constant 8 : index
    %c2_186 = arith.constant 2 : index
    %425 = memref.load %arg16[%c8_185, %c2_186] : memref<9x4xf32, #tpu.memory_space<smem>>
    %426 = vector.broadcast %425 : f32 to vector<8x32xf32>
    %427 = arith.mulf %426, %198 : vector<8x32xf32>
    %428 = arith.addf %424, %427 : vector<8x32xf32>
    %c8_187 = arith.constant 8 : index
    %c3_188 = arith.constant 3 : index
    %429 = memref.load %arg16[%c8_187, %c3_188] : memref<9x4xf32, #tpu.memory_space<smem>>
    %430 = vector.broadcast %429 : f32 to vector<8x32xf32>
    %431 = arith.mulf %430, %249 : vector<8x32xf32>
    %432 = arith.addf %428, %431 : vector<8x32xf32>
    %433 = vector.extract_strided_slice %0 {offsets = [8, 0, 0], sizes = [1, 8, 32], strides = [1, 1, 1]} : vector<9x8x32xf32> to vector<1x8x32xf32>
    %434 = vector.shape_cast %433 : vector<1x8x32xf32> to vector<8x32xf32>
    %435 = arith.addf %434, %432 : vector<8x32xf32>
    %c8_189 = arith.constant 8 : index
    %c0_190 = arith.constant 0 : index
    %436 = memref.load %arg17[%c8_189, %c0_190] : memref<9x1xf32, #tpu.memory_space<smem>>
    %437 = vector.broadcast %436 : f32 to vector<8x32xf32>
    %438 = arith.addf %435, %437 : vector<8x32xf32>
    %439 = vector.shape_cast %270 : vector<8x32xf32> to vector<1x8x32xf32>
    %440 = vector.shape_cast %291 : vector<8x32xf32> to vector<1x8x32xf32>
    %441 = vector.shape_cast %312 : vector<8x32xf32> to vector<1x8x32xf32>
    %442 = vector.shape_cast %333 : vector<8x32xf32> to vector<1x8x32xf32>
    %443 = vector.shape_cast %354 : vector<8x32xf32> to vector<1x8x32xf32>
    %444 = vector.shape_cast %375 : vector<8x32xf32> to vector<1x8x32xf32>
    %445 = vector.shape_cast %396 : vector<8x32xf32> to vector<1x8x32xf32>
    %446 = vector.shape_cast %417 : vector<8x32xf32> to vector<1x8x32xf32>
    %447 = vector.shape_cast %438 : vector<8x32xf32> to vector<1x8x32xf32>
    %448 = tpu.concatenate %439, %440, %441, %442, %443, %444, %445, %446, %447 in 0 : vector<1x8x32xf32>, vector<1x8x32xf32>, vector<1x8x32xf32>, vector<1x8x32xf32>, vector<1x8x32xf32>, vector<1x8x32xf32>, vector<1x8x32xf32>, vector<1x8x32xf32>, vector<1x8x32xf32> -> vector<9x8x32xf32>
    %449 = vector.broadcast %1 : vector<9x8x1xf32> to vector<9x8x32xf32>
    %450 = arith.mulf %448, %449 : vector<9x8x32xf32>
    %c0_191 = arith.constant 0 : index
    %c0_192 = arith.constant 0 : index
    %451 = vector.load %arg5[%c0_191, %c0_192] : memref<1x32xf32, #tpu.memory_space<vmem>>, vector<1x32xf32>
    %c0_193 = arith.constant 0 : index
    %c0_194 = arith.constant 0 : index
    %452 = vector.load %arg6[%c0_193, %c0_194] : memref<1x32xf32, #tpu.memory_space<vmem>>, vector<1x32xf32>
    %cst_195 = arith.constant dense<0.000000e+00> : vector<9x8xf32>
    %453 = vector.multi_reduction <add>, %450, %cst_195 [2] : vector<9x8x32xf32> to vector<9x8xf32>
    %454 = vector.shape_cast %453 : vector<9x8xf32> to vector<9x8x1xf32>
    %cst_196 = arith.constant 3.200000e+01 : f32
    %455 = vector.broadcast %cst_196 : f32 to vector<9x8x1xf32>
    %456 = arith.divf %454, %455 : vector<9x8x1xf32>
    %457 = vector.broadcast %456 : vector<9x8x1xf32> to vector<9x8x32xf32>
    %458 = arith.subf %450, %457 : vector<9x8x32xf32>
    %459 = arith.mulf %458, %458 : vector<9x8x32xf32>
    %cst_197 = arith.constant dense<0.000000e+00> : vector<9x8xf32>
    %460 = vector.multi_reduction <add>, %459, %cst_197 [2] : vector<9x8x32xf32> to vector<9x8xf32>
    %461 = vector.shape_cast %460 : vector<9x8xf32> to vector<9x8x1xf32>
    %cst_198 = arith.constant 3.200000e+01 : f32
    %462 = vector.broadcast %cst_198 : f32 to vector<9x8x1xf32>
    %463 = arith.divf %461, %462 : vector<9x8x1xf32>
    %cst_199 = arith.constant 9.99999974E-6 : f32
    %464 = vector.broadcast %cst_199 : f32 to vector<9x8x1xf32>
    %465 = arith.addf %463, %464 : vector<9x8x1xf32>
    %466 = math.rsqrt %465 : vector<9x8x1xf32>
    %467 = vector.broadcast %466 : vector<9x8x1xf32> to vector<9x8x32xf32>
    %468 = arith.mulf %458, %467 : vector<9x8x32xf32>
    %469 = vector.shape_cast %451 : vector<1x32xf32> to vector<1x1x32xf32>
    %470 = vector.broadcast %469 : vector<1x1x32xf32> to vector<9x8x32xf32>
    %471 = arith.mulf %468, %470 : vector<9x8x32xf32>
    %472 = vector.shape_cast %452 : vector<1x32xf32> to vector<1x1x32xf32>
    %473 = vector.broadcast %472 : vector<1x1x32xf32> to vector<9x8x32xf32>
    %474 = arith.addf %471, %473 : vector<9x8x32xf32>
    %475 = vector.shape_cast %474 : vector<9x8x32xf32> to vector<72x32xf32>
    %c0_200 = arith.constant 0 : index
    %c0_201 = arith.constant 0 : index
    %476 = vector.load %arg9[%c0_200, %c0_201] : memref<32x16xf32, #tpu.memory_space<vmem>>, vector<32x16xf32>
    %cst_202 = arith.constant dense<0.000000e+00> : vector<72x16xf32>
    %477 = tpu.matmul %475, %476, %cst_202 {dimension_numbers = #tpu.dot_dimension_numbers<[1], [0], [0], [1], [0, 0, 1, 1], [], []>} : vector<72x32xf32>, vector<32x16xf32>, vector<72x16xf32> -> vector<72x16xf32>
    %c0_203 = arith.constant 0 : index
    %c0_204 = arith.constant 0 : index
    %478 = vector.load %arg10[%c0_203, %c0_204] : memref<1x16xf32, #tpu.memory_space<vmem>>, vector<1x16xf32>
    %479 = vector.broadcast %478 : vector<1x16xf32> to vector<72x16xf32>
    %480 = arith.addf %477, %479 : vector<72x16xf32>
    %481 = arith.mulf %480, %480 : vector<72x16xf32>
    %482 = arith.mulf %480, %481 : vector<72x16xf32>
    %cst_205 = arith.constant 4.471500e-02 : f32
    %483 = vector.broadcast %cst_205 : f32 to vector<72x16xf32>
    %484 = arith.mulf %483, %482 : vector<72x16xf32>
    %485 = arith.addf %480, %484 : vector<72x16xf32>
    %cst_206 = arith.constant 0.797884583 : f32
    %486 = vector.broadcast %cst_206 : f32 to vector<72x16xf32>
    %487 = arith.mulf %486, %485 : vector<72x16xf32>
    %488 = math.tanh %487 : vector<72x16xf32>
    %cst_207 = arith.constant 1.000000e+00 : f32
    %489 = vector.broadcast %cst_207 : f32 to vector<72x16xf32>
    %490 = arith.addf %489, %488 : vector<72x16xf32>
    %cst_208 = arith.constant 5.000000e-01 : f32
    %491 = vector.broadcast %cst_208 : f32 to vector<72x16xf32>
    %492 = arith.mulf %491, %490 : vector<72x16xf32>
    %493 = arith.mulf %480, %492 : vector<72x16xf32>
    %c0_209 = arith.constant 0 : index
    %c0_210 = arith.constant 0 : index
    %494 = vector.load %arg11[%c0_209, %c0_210] : memref<16x32xf32, #tpu.memory_space<vmem>>, vector<16x32xf32>
    %cst_211 = arith.constant dense<0.000000e+00> : vector<72x32xf32>
    %495 = tpu.matmul %493, %494, %cst_211 {dimension_numbers = #tpu.dot_dimension_numbers<[1], [0], [0], [1], [0, 0, 1, 1], [], []>} : vector<72x16xf32>, vector<16x32xf32>, vector<72x32xf32> -> vector<72x32xf32>
    %c0_212 = arith.constant 0 : index
    %c0_213 = arith.constant 0 : index
    %496 = vector.load %arg12[%c0_212, %c0_213] : memref<1x32xf32, #tpu.memory_space<vmem>>, vector<1x32xf32>
    %497 = vector.broadcast %496 : vector<1x32xf32> to vector<72x32xf32>
    %498 = arith.addf %495, %497 : vector<72x32xf32>
    %499 = vector.shape_cast %498 : vector<72x32xf32> to vector<9x8x32xf32>
    %500 = arith.addf %448, %499 : vector<9x8x32xf32>
    %c0_214 = arith.constant 0 : index
    %c0_215 = arith.constant 0 : index
    %501 = vector.load %arg7[%c0_214, %c0_215] : memref<1x32xf32, #tpu.memory_space<vmem>>, vector<1x32xf32>
    %c0_216 = arith.constant 0 : index
    %c0_217 = arith.constant 0 : index
    %502 = vector.load %arg8[%c0_216, %c0_217] : memref<1x32xf32, #tpu.memory_space<vmem>>, vector<1x32xf32>
    %cst_218 = arith.constant dense<0.000000e+00> : vector<9x8xf32>
    %503 = vector.multi_reduction <add>, %500, %cst_218 [2] : vector<9x8x32xf32> to vector<9x8xf32>
    %504 = vector.shape_cast %503 : vector<9x8xf32> to vector<9x8x1xf32>
    %cst_219 = arith.constant 3.200000e+01 : f32
    %505 = vector.broadcast %cst_219 : f32 to vector<9x8x1xf32>
    %506 = arith.divf %504, %505 : vector<9x8x1xf32>
    %507 = vector.broadcast %506 : vector<9x8x1xf32> to vector<9x8x32xf32>
    %508 = arith.subf %500, %507 : vector<9x8x32xf32>
    %509 = arith.mulf %508, %508 : vector<9x8x32xf32>
    %cst_220 = arith.constant dense<0.000000e+00> : vector<9x8xf32>
    %510 = vector.multi_reduction <add>, %509, %cst_220 [2] : vector<9x8x32xf32> to vector<9x8xf32>
    %511 = vector.shape_cast %510 : vector<9x8xf32> to vector<9x8x1xf32>
    %cst_221 = arith.constant 3.200000e+01 : f32
    %512 = vector.broadcast %cst_221 : f32 to vector<9x8x1xf32>
    %513 = arith.divf %511, %512 : vector<9x8x1xf32>
    %cst_222 = arith.constant 9.99999974E-6 : f32
    %514 = vector.broadcast %cst_222 : f32 to vector<9x8x1xf32>
    %515 = arith.addf %513, %514 : vector<9x8x1xf32>
    %516 = math.rsqrt %515 : vector<9x8x1xf32>
    %517 = vector.broadcast %516 : vector<9x8x1xf32> to vector<9x8x32xf32>
    %518 = arith.mulf %508, %517 : vector<9x8x32xf32>
    %519 = vector.shape_cast %501 : vector<1x32xf32> to vector<1x1x32xf32>
    %520 = vector.broadcast %519 : vector<1x1x32xf32> to vector<9x8x32xf32>
    %521 = arith.mulf %518, %520 : vector<9x8x32xf32>
    %522 = vector.shape_cast %502 : vector<1x32xf32> to vector<1x1x32xf32>
    %523 = vector.broadcast %522 : vector<1x1x32xf32> to vector<9x8x32xf32>
    %524 = arith.addf %521, %523 : vector<9x8x32xf32>
    %525 = vector.extract_strided_slice %524 {offsets = [0, 0, 0], sizes = [1, 8, 32], strides = [1, 1, 1]} : vector<9x8x32xf32> to vector<1x8x32xf32>
    %526 = vector.shape_cast %525 : vector<1x8x32xf32> to vector<8x32xf32>
    %c0_223 = arith.constant 0 : index
    %c0_224 = arith.constant 0 : index
    %527 = vector.load %arg13[%c0_223, %c0_224] : memref<1x32xf32, #tpu.memory_space<vmem>>, vector<1x32xf32>
    %528 = vector.broadcast %527 : vector<1x32xf32> to vector<8x32xf32>
    %529 = arith.mulf %526, %528 : vector<8x32xf32>
    %cst_225 = arith.constant dense<0.000000e+00> : vector<8xf32>
    %530 = vector.multi_reduction <add>, %529, %cst_225 [1] : vector<8x32xf32> to vector<8xf32>
    %531 = vector.shape_cast %530 : vector<8xf32> to vector<8x1xf32>
    %c0_226 = arith.constant 0 : index
    %c0_227 = arith.constant 0 : index
    %532 = memref.load %arg18[%c0_226, %c0_227] : memref<1x1xf32, #tpu.memory_space<smem>>
    %533 = vector.broadcast %532 : f32 to vector<8x1xf32>
    %534 = arith.addf %531, %533 : vector<8x1xf32>
    %cst_228 = arith.constant 0.000000e+00 : f32
    %535 = vector.broadcast %cst_228 : f32 to vector<8x1xf32>
    %536 = arith.subf %535, %534 : vector<8x1xf32>
    %537 = math.exp %536 : vector<8x1xf32>
    %cst_229 = arith.constant 1.000000e+00 : f32
    %538 = vector.broadcast %cst_229 : f32 to vector<8x1xf32>
    %539 = arith.addf %538, %537 : vector<8x1xf32>
    %cst_230 = arith.constant 1.000000e+00 : f32
    %540 = vector.broadcast %cst_230 : f32 to vector<8x1xf32>
    %541 = arith.divf %540, %539 : vector<8x1xf32>
    %c0_231 = arith.constant 0 : index
    %c0_232 = arith.constant 0 : index
    %542 = vector.load %arg19[%c0_231, %c0_232] : memref<8x32xf32, #tpu.memory_space<vmem>>, vector<8x32xf32>
    tpu.vector_store %arg19[%c0_231, %c0_232], %526 {strides = array<i32>} : memref<8x32xf32, #tpu.memory_space<vmem>>, vector<8x32xf32>,
    %543 = vector.shape_cast %541 : vector<8x1xf32> to vector<1x8x1xf32>
    %544 = vector.extract_strided_slice %524 {offsets = [1, 0, 0], sizes = [8, 8, 32], strides = [1, 1, 1]} : vector<9x8x32xf32> to vector<8x8x32xf32>
    %545 = vector.broadcast %543 : vector<1x8x1xf32> to vector<8x8x32xf32>
    %546 = arith.mulf %545, %544 : vector<8x8x32xf32>
    %c0_233 = arith.constant 0 : index
    %c0_234 = arith.constant 0 : index
    %c0_235 = arith.constant 0 : index
    %547 = vector.load %arg20[%c0_233, %c0_234, %c0_235] : memref<8x8x32xf32, #tpu.memory_space<vmem>>, vector<8x8x32xf32>
    tpu.vector_store %arg20[%c0_233, %c0_234, %c0_235], %546 {strides = array<i32>} : memref<8x8x32xf32, #tpu.memory_space<vmem>>, vector<8x8x32xf32>,
    return
  }
  func.func @transform_0(%arg0: i32) -> (i32, i32, i32) {
    %c0_i32 = arith.constant 0 : i32
    %c0_i32_0 = arith.constant 0 : i32
    %c0_i32_1 = arith.constant 0 : i32
    return %c0_i32, %arg0, %c0_i32_0 : i32, i32, i32
  }
  func.func @transform_1(%arg0: i32) -> (i32, i32, i32) {
    %c0_i32 = arith.constant 0 : i32
    %c0_i32_0 = arith.constant 0 : i32
    %c0_i32_1 = arith.constant 0 : i32
    return %c0_i32, %arg0, %c0_i32_0 : i32, i32, i32
  }
  func.func @transform_2(%arg0: i32) -> (i32, i32) {
    %c0_i32 = arith.constant 0 : i32
    %c0_i32_0 = arith.constant 0 : i32
    %c0_i32_1 = arith.constant 0 : i32
    return %c0_i32, %c0_i32_0 : i32, i32
  }
  func.func @transform_3(%arg0: i32) -> (i32, i32) {
    %c0_i32 = arith.constant 0 : i32
    %c0_i32_0 = arith.constant 0 : i32
    %c0_i32_1 = arith.constant 0 : i32
    return %c0_i32, %c0_i32_0 : i32, i32
  }
  func.func @transform_4(%arg0: i32) -> (i32, i32) {
    %c0_i32 = arith.constant 0 : i32
    %c0_i32_0 = arith.constant 0 : i32
    %c0_i32_1 = arith.constant 0 : i32
    return %c0_i32, %c0_i32_0 : i32, i32
  }
  func.func @transform_5(%arg0: i32) -> (i32, i32) {
    %c0_i32 = arith.constant 0 : i32
    %c0_i32_0 = arith.constant 0 : i32
    %c0_i32_1 = arith.constant 0 : i32
    return %c0_i32, %c0_i32_0 : i32, i32
  }
  func.func @transform_6(%arg0: i32) -> (i32, i32) {
    %c0_i32 = arith.constant 0 : i32
    %c0_i32_0 = arith.constant 0 : i32
    %c0_i32_1 = arith.constant 0 : i32
    return %c0_i32, %c0_i32_0 : i32, i32
  }
  func.func @transform_7(%arg0: i32) -> (i32, i32) {
    %c0_i32 = arith.constant 0 : i32
    %c0_i32_0 = arith.constant 0 : i32
    %c0_i32_1 = arith.constant 0 : i32
    return %c0_i32, %c0_i32_0 : i32, i32
  }
  func.func @transform_8(%arg0: i32) -> (i32, i32) {
    %c0_i32 = arith.constant 0 : i32
    %c0_i32_0 = arith.constant 0 : i32
    %c0_i32_1 = arith.constant 0 : i32
    return %c0_i32, %c0_i32_0 : i32, i32
  }
  func.func @transform_9(%arg0: i32) -> (i32, i32) {
    %c0_i32 = arith.constant 0 : i32
    %c0_i32_0 = arith.constant 0 : i32
    %c0_i32_1 = arith.constant 0 : i32
    return %c0_i32, %c0_i32_0 : i32, i32
  }
  func.func @transform_10(%arg0: i32) -> (i32, i32) {
    %c0_i32 = arith.constant 0 : i32
    %c0_i32_0 = arith.constant 0 : i32
    %c0_i32_1 = arith.constant 0 : i32
    return %c0_i32, %c0_i32_0 : i32, i32
  }
  func.func @transform_11(%arg0: i32) -> (i32, i32) {
    %c0_i32 = arith.constant 0 : i32
    %c0_i32_0 = arith.constant 0 : i32
    %c0_i32_1 = arith.constant 0 : i32
    return %c0_i32, %c0_i32_0 : i32, i32
  }
  func.func @transform_12(%arg0: i32) -> (i32, i32) {
    %c0_i32 = arith.constant 0 : i32
    %c0_i32_0 = arith.constant 0 : i32
    %c0_i32_1 = arith.constant 0 : i32
    return %c0_i32, %c0_i32_0 : i32, i32
  }
  func.func @transform_13(%arg0: i32) -> (i32, i32) {
    %c0_i32 = arith.constant 0 : i32
    %c0_i32_0 = arith.constant 0 : i32
    %c0_i32_1 = arith.constant 0 : i32
    return %c0_i32, %c0_i32_0 : i32, i32
  }
  func.func @transform_14(%arg0: i32) -> (i32, i32) {
    %c0_i32 = arith.constant 0 : i32
    %c0_i32_0 = arith.constant 0 : i32
    %c0_i32_1 = arith.constant 0 : i32
    return %c0_i32, %c0_i32_0 : i32, i32
  }
  func.func @transform_15(%arg0: i32) -> (i32, i32) {
    %c0_i32 = arith.constant 0 : i32
    %c0_i32_0 = arith.constant 0 : i32
    %c0_i32_1 = arith.constant 0 : i32
    return %c0_i32, %c0_i32_0 : i32, i32
  }
  func.func @transform_16(%arg0: i32) -> (i32, i32) {
    %c0_i32 = arith.constant 0 : i32
    %c0_i32_0 = arith.constant 0 : i32
    %c0_i32_1 = arith.constant 0 : i32
    return %c0_i32, %c0_i32_0 : i32, i32
  }
  func.func @transform_17(%arg0: i32) -> (i32, i32) {
    %c0_i32 = arith.constant 0 : i32
    %c0_i32_0 = arith.constant 0 : i32
    %c0_i32_1 = arith.constant 0 : i32
    return %c0_i32, %c0_i32_0 : i32, i32
  }
  func.func @transform_18(%arg0: i32) -> (i32, i32) {
    %c0_i32 = arith.constant 0 : i32
    %c0_i32_0 = arith.constant 0 : i32
    return %arg0, %c0_i32 : i32, i32
  }
  func.func @transform_19(%arg0: i32) -> (i32, i32, i32) {
    %c0_i32 = arith.constant 0 : i32
    %c0_i32_0 = arith.constant 0 : i32
    %c0_i32_1 = arith.constant 0 : i32
    return %c0_i32, %arg0, %c0_i32_0 : i32, i32, i32
  }
}

module attributes {stable_mosaic.version = 11 : i64} {
  func.func @link_model_kernel(%arg0: i32, %arg1: memref<4x8x32xf32, #tpu.memory_space<vmem>>, %arg2: memref<4x8x32xf32, #tpu.memory_space<vmem>>, %arg3: memref<1x32xf32, #tpu.memory_space<vmem>>, %arg4: memref<1x32xf32, #tpu.memory_space<vmem>>, %arg5: memref<1x64xf32, #tpu.memory_space<vmem>>, %arg6: memref<1x64xf32, #tpu.memory_space<vmem>>, %arg7: memref<1x64xf32, #tpu.memory_space<vmem>>, %arg8: memref<1x64xf32, #tpu.memory_space<vmem>>, %arg9: memref<1x64xf32, #tpu.memory_space<vmem>>, %arg10: memref<1x64xf32, #tpu.memory_space<vmem>>, %arg11: memref<64x128xf32, #tpu.memory_space<vmem>>, %arg12: memref<1x128xf32, #tpu.memory_space<vmem>>, %arg13: memref<128x64xf32, #tpu.memory_space<vmem>>, %arg14: memref<1x64xf32, #tpu.memory_space<vmem>>, %arg15: memref<8x4xf32, #tpu.memory_space<smem>>, %arg16: memref<8x1xf32, #tpu.memory_space<smem>>, %arg17: memref<4x8xf32, #tpu.memory_space<smem>>, %arg18: memref<4x1xf32, #tpu.memory_space<smem>>, %arg19: memref<4x8x32xf32, #tpu.memory_space<vmem>>) attributes {dimension_semantics = [#tpu.dimension_semantics<parallel>], iteration_bounds = array<i64: 1>, scalar_prefetch = 0 : i64, scratch_operands = 0 : i64, tpu.core_type = #tpu.core_type<tc>, window_params = [{transform_indices = @transform_0, window_bounds = array<i64: 4, 8, 32>}, {transform_indices = @transform_1, window_bounds = array<i64: 4, 8, 32>}, {pipeline_mode = #tpu.pipeline_mode<synchronous>, transform_indices = @transform_2, window_bounds = array<i64: 1, 32>}, {pipeline_mode = #tpu.pipeline_mode<synchronous>, transform_indices = @transform_3, window_bounds = array<i64: 1, 32>}, {pipeline_mode = #tpu.pipeline_mode<synchronous>, transform_indices = @transform_4, window_bounds = array<i64: 1, 64>}, {pipeline_mode = #tpu.pipeline_mode<synchronous>, transform_indices = @transform_5, window_bounds = array<i64: 1, 64>}, {pipeline_mode = #tpu.pipeline_mode<synchronous>, transform_indices = @transform_6, window_bounds = array<i64: 1, 64>}, {pipeline_mode = #tpu.pipeline_mode<synchronous>, transform_indices = @transform_7, window_bounds = array<i64: 1, 64>}, {pipeline_mode = #tpu.pipeline_mode<synchronous>, transform_indices = @transform_8, window_bounds = array<i64: 1, 64>}, {pipeline_mode = #tpu.pipeline_mode<synchronous>, transform_indices = @transform_9, window_bounds = array<i64: 1, 64>}, {pipeline_mode = #tpu.pipeline_mode<synchronous>, transform_indices = @transform_10, window_bounds = array<i64: 64, 128>}, {pipeline_mode = #tpu.pipeline_mode<synchronous>, transform_indices = @transform_11, window_bounds = array<i64: 1, 128>}, {pipeline_mode = #tpu.pipeline_mode<synchronous>, transform_indices = @transform_12, window_bounds = array<i64: 128, 64>}, {pipeline_mode = #tpu.pipeline_mode<synchronous>, transform_indices = @transform_13, window_bounds = array<i64: 1, 64>}, {transform_indices = @transform_14, window_bounds = array<i64: 8, 4>}, {transform_indices = @transform_15, window_bounds = array<i64: 8, 1>}, {transform_indices = @transform_16, window_bounds = array<i64: 4, 8>}, {transform_indices = @transform_17, window_bounds = array<i64: 4, 1>}, {transform_indices = @transform_18, window_bounds = array<i64: 4, 8, 32>}]} {
    %c0 = arith.constant 0 : index
    %c0_0 = arith.constant 0 : index
    %c0_1 = arith.constant 0 : index
    %0 = vector.load %arg1[%c0, %c0_0, %c0_1] : memref<4x8x32xf32, #tpu.memory_space<vmem>>, vector<4x8x32xf32>
    %c0_2 = arith.constant 0 : index
    %c0_3 = arith.constant 0 : index
    %c0_4 = arith.constant 0 : index
    %1 = vector.load %arg2[%c0_2, %c0_3, %c0_4] : memref<4x8x32xf32, #tpu.memory_space<vmem>>, vector<4x8x32xf32>
    %c0_5 = arith.constant 0 : index
    %c0_6 = arith.constant 0 : index
    %2 = vector.load %arg3[%c0_5, %c0_6] : memref<1x32xf32, #tpu.memory_space<vmem>>, vector<1x32xf32>
    %c0_7 = arith.constant 0 : index
    %c0_8 = arith.constant 0 : index
    %3 = vector.load %arg4[%c0_7, %c0_8] : memref<1x32xf32, #tpu.memory_space<vmem>>, vector<1x32xf32>
    %cst = arith.constant dense<0.000000e+00> : vector<4x8xf32>
    %4 = vector.multi_reduction <add>, %1, %cst [2] : vector<4x8x32xf32> to vector<4x8xf32>
    %5 = vector.shape_cast %4 : vector<4x8xf32> to vector<4x8x1xf32>
    %cst_9 = arith.constant 3.200000e+01 : f32
    %6 = vector.broadcast %cst_9 : f32 to vector<4x8x1xf32>
    %7 = arith.divf %5, %6 : vector<4x8x1xf32>
    %8 = vector.broadcast %7 : vector<4x8x1xf32> to vector<4x8x32xf32>
    %9 = arith.subf %1, %8 : vector<4x8x32xf32>
    %10 = arith.mulf %9, %9 : vector<4x8x32xf32>
    %cst_10 = arith.constant dense<0.000000e+00> : vector<4x8xf32>
    %11 = vector.multi_reduction <add>, %10, %cst_10 [2] : vector<4x8x32xf32> to vector<4x8xf32>
    %12 = vector.shape_cast %11 : vector<4x8xf32> to vector<4x8x1xf32>
    %cst_11 = arith.constant 3.200000e+01 : f32
    %13 = vector.broadcast %cst_11 : f32 to vector<4x8x1xf32>
    %14 = arith.divf %12, %13 : vector<4x8x1xf32>
    %cst_12 = arith.constant 9.99999974E-6 : f32
    %15 = vector.broadcast %cst_12 : f32 to vector<4x8x1xf32>
    %16 = arith.addf %14, %15 : vector<4x8x1xf32>
    %17 = math.rsqrt %16 : vector<4x8x1xf32>
    %18 = vector.broadcast %17 : vector<4x8x1xf32> to vector<4x8x32xf32>
    %19 = arith.mulf %9, %18 : vector<4x8x32xf32>
    %20 = vector.shape_cast %2 : vector<1x32xf32> to vector<1x1x32xf32>
    %21 = vector.broadcast %20 : vector<1x1x32xf32> to vector<4x8x32xf32>
    %22 = arith.mulf %19, %21 : vector<4x8x32xf32>
    %23 = vector.shape_cast %3 : vector<1x32xf32> to vector<1x1x32xf32>
    %24 = vector.broadcast %23 : vector<1x1x32xf32> to vector<4x8x32xf32>
    %25 = arith.addf %22, %24 : vector<4x8x32xf32>
    %26 = tpu.concatenate %0, %25 in 2 : vector<4x8x32xf32>, vector<4x8x32xf32> -> vector<4x8x64xf32>
    %c0_13 = arith.constant 0 : index
    %c0_14 = arith.constant 0 : index
    %27 = vector.load %arg5[%c0_13, %c0_14] : memref<1x64xf32, #tpu.memory_space<vmem>>, vector<1x64xf32>
    %c0_15 = arith.constant 0 : index
    %c0_16 = arith.constant 0 : index
    %28 = vector.load %arg6[%c0_15, %c0_16] : memref<1x64xf32, #tpu.memory_space<vmem>>, vector<1x64xf32>
    %cst_17 = arith.constant dense<0.000000e+00> : vector<4x8xf32>
    %29 = vector.multi_reduction <add>, %26, %cst_17 [2] : vector<4x8x64xf32> to vector<4x8xf32>
    %30 = vector.shape_cast %29 : vector<4x8xf32> to vector<4x8x1xf32>
    %cst_18 = arith.constant 6.400000e+01 : f32
    %31 = vector.broadcast %cst_18 : f32 to vector<4x8x1xf32>
    %32 = arith.divf %30, %31 : vector<4x8x1xf32>
    %33 = vector.broadcast %32 : vector<4x8x1xf32> to vector<4x8x64xf32>
    %34 = arith.subf %26, %33 : vector<4x8x64xf32>
    %35 = arith.mulf %34, %34 : vector<4x8x64xf32>
    %cst_19 = arith.constant dense<0.000000e+00> : vector<4x8xf32>
    %36 = vector.multi_reduction <add>, %35, %cst_19 [2] : vector<4x8x64xf32> to vector<4x8xf32>
    %37 = vector.shape_cast %36 : vector<4x8xf32> to vector<4x8x1xf32>
    %cst_20 = arith.constant 6.400000e+01 : f32
    %38 = vector.broadcast %cst_20 : f32 to vector<4x8x1xf32>
    %39 = arith.divf %37, %38 : vector<4x8x1xf32>
    %cst_21 = arith.constant 9.99999974E-6 : f32
    %40 = vector.broadcast %cst_21 : f32 to vector<4x8x1xf32>
    %41 = arith.addf %39, %40 : vector<4x8x1xf32>
    %42 = math.rsqrt %41 : vector<4x8x1xf32>
    %43 = vector.broadcast %42 : vector<4x8x1xf32> to vector<4x8x64xf32>
    %44 = arith.mulf %34, %43 : vector<4x8x64xf32>
    %45 = vector.shape_cast %27 : vector<1x64xf32> to vector<1x1x64xf32>
    %46 = vector.broadcast %45 : vector<1x1x64xf32> to vector<4x8x64xf32>
    %47 = arith.mulf %44, %46 : vector<4x8x64xf32>
    %48 = vector.shape_cast %28 : vector<1x64xf32> to vector<1x1x64xf32>
    %49 = vector.broadcast %48 : vector<1x1x64xf32> to vector<4x8x64xf32>
    %50 = arith.addf %47, %49 : vector<4x8x64xf32>
    %51 = vector.extract_strided_slice %50 {offsets = [0, 0, 0], sizes = [1, 8, 64], strides = [1, 1, 1]} : vector<4x8x64xf32> to vector<1x8x64xf32>
    %52 = vector.shape_cast %51 : vector<1x8x64xf32> to vector<8x64xf32>
    %53 = vector.extract_strided_slice %50 {offsets = [1, 0, 0], sizes = [1, 8, 64], strides = [1, 1, 1]} : vector<4x8x64xf32> to vector<1x8x64xf32>
    %54 = vector.shape_cast %53 : vector<1x8x64xf32> to vector<8x64xf32>
    %55 = vector.extract_strided_slice %50 {offsets = [2, 0, 0], sizes = [1, 8, 64], strides = [1, 1, 1]} : vector<4x8x64xf32> to vector<1x8x64xf32>
    %56 = vector.shape_cast %55 : vector<1x8x64xf32> to vector<8x64xf32>
    %57 = vector.extract_strided_slice %50 {offsets = [3, 0, 0], sizes = [1, 8, 64], strides = [1, 1, 1]} : vector<4x8x64xf32> to vector<1x8x64xf32>
    %58 = vector.shape_cast %57 : vector<1x8x64xf32> to vector<8x64xf32>
    %c0_22 = arith.constant 0 : index
    %c0_23 = arith.constant 0 : index
    %59 = memref.load %arg15[%c0_22, %c0_23] : memref<8x4xf32, #tpu.memory_space<smem>>
    %60 = vector.broadcast %59 : f32 to vector<8x64xf32>
    %61 = arith.mulf %60, %52 : vector<8x64xf32>
    %c0_24 = arith.constant 0 : index
    %c1 = arith.constant 1 : index
    %62 = memref.load %arg15[%c0_24, %c1] : memref<8x4xf32, #tpu.memory_space<smem>>
    %63 = vector.broadcast %62 : f32 to vector<8x64xf32>
    %64 = arith.mulf %63, %54 : vector<8x64xf32>
    %65 = arith.addf %61, %64 : vector<8x64xf32>
    %c0_25 = arith.constant 0 : index
    %c2 = arith.constant 2 : index
    %66 = memref.load %arg15[%c0_25, %c2] : memref<8x4xf32, #tpu.memory_space<smem>>
    %67 = vector.broadcast %66 : f32 to vector<8x64xf32>
    %68 = arith.mulf %67, %56 : vector<8x64xf32>
    %69 = arith.addf %65, %68 : vector<8x64xf32>
    %c0_26 = arith.constant 0 : index
    %c3 = arith.constant 3 : index
    %70 = memref.load %arg15[%c0_26, %c3] : memref<8x4xf32, #tpu.memory_space<smem>>
    %71 = vector.broadcast %70 : f32 to vector<8x64xf32>
    %72 = arith.mulf %71, %58 : vector<8x64xf32>
    %73 = arith.addf %69, %72 : vector<8x64xf32>
    %c0_27 = arith.constant 0 : index
    %c0_28 = arith.constant 0 : index
    %74 = memref.load %arg16[%c0_27, %c0_28] : memref<8x1xf32, #tpu.memory_space<smem>>
    %75 = vector.broadcast %74 : f32 to vector<8x64xf32>
    %76 = arith.addf %73, %75 : vector<8x64xf32>
    %77 = arith.mulf %76, %76 : vector<8x64xf32>
    %78 = arith.mulf %76, %77 : vector<8x64xf32>
    %cst_29 = arith.constant 4.471500e-02 : f32
    %79 = vector.broadcast %cst_29 : f32 to vector<8x64xf32>
    %80 = arith.mulf %79, %78 : vector<8x64xf32>
    %81 = arith.addf %76, %80 : vector<8x64xf32>
    %cst_30 = arith.constant 0.797884583 : f32
    %82 = vector.broadcast %cst_30 : f32 to vector<8x64xf32>
    %83 = arith.mulf %82, %81 : vector<8x64xf32>
    %84 = math.tanh %83 : vector<8x64xf32>
    %cst_31 = arith.constant 1.000000e+00 : f32
    %85 = vector.broadcast %cst_31 : f32 to vector<8x64xf32>
    %86 = arith.addf %85, %84 : vector<8x64xf32>
    %cst_32 = arith.constant 5.000000e-01 : f32
    %87 = vector.broadcast %cst_32 : f32 to vector<8x64xf32>
    %88 = arith.mulf %87, %86 : vector<8x64xf32>
    %89 = arith.mulf %76, %88 : vector<8x64xf32>
    %c1_33 = arith.constant 1 : index
    %c0_34 = arith.constant 0 : index
    %90 = memref.load %arg15[%c1_33, %c0_34] : memref<8x4xf32, #tpu.memory_space<smem>>
    %91 = vector.broadcast %90 : f32 to vector<8x64xf32>
    %92 = arith.mulf %91, %52 : vector<8x64xf32>
    %c1_35 = arith.constant 1 : index
    %c1_36 = arith.constant 1 : index
    %93 = memref.load %arg15[%c1_35, %c1_36] : memref<8x4xf32, #tpu.memory_space<smem>>
    %94 = vector.broadcast %93 : f32 to vector<8x64xf32>
    %95 = arith.mulf %94, %54 : vector<8x64xf32>
    %96 = arith.addf %92, %95 : vector<8x64xf32>
    %c1_37 = arith.constant 1 : index
    %c2_38 = arith.constant 2 : index
    %97 = memref.load %arg15[%c1_37, %c2_38] : memref<8x4xf32, #tpu.memory_space<smem>>
    %98 = vector.broadcast %97 : f32 to vector<8x64xf32>
    %99 = arith.mulf %98, %56 : vector<8x64xf32>
    %100 = arith.addf %96, %99 : vector<8x64xf32>
    %c1_39 = arith.constant 1 : index
    %c3_40 = arith.constant 3 : index
    %101 = memref.load %arg15[%c1_39, %c3_40] : memref<8x4xf32, #tpu.memory_space<smem>>
    %102 = vector.broadcast %101 : f32 to vector<8x64xf32>
    %103 = arith.mulf %102, %58 : vector<8x64xf32>
    %104 = arith.addf %100, %103 : vector<8x64xf32>
    %c1_41 = arith.constant 1 : index
    %c0_42 = arith.constant 0 : index
    %105 = memref.load %arg16[%c1_41, %c0_42] : memref<8x1xf32, #tpu.memory_space<smem>>
    %106 = vector.broadcast %105 : f32 to vector<8x64xf32>
    %107 = arith.addf %104, %106 : vector<8x64xf32>
    %108 = arith.mulf %107, %107 : vector<8x64xf32>
    %109 = arith.mulf %107, %108 : vector<8x64xf32>
    %cst_43 = arith.constant 4.471500e-02 : f32
    %110 = vector.broadcast %cst_43 : f32 to vector<8x64xf32>
    %111 = arith.mulf %110, %109 : vector<8x64xf32>
    %112 = arith.addf %107, %111 : vector<8x64xf32>
    %cst_44 = arith.constant 0.797884583 : f32
    %113 = vector.broadcast %cst_44 : f32 to vector<8x64xf32>
    %114 = arith.mulf %113, %112 : vector<8x64xf32>
    %115 = math.tanh %114 : vector<8x64xf32>
    %cst_45 = arith.constant 1.000000e+00 : f32
    %116 = vector.broadcast %cst_45 : f32 to vector<8x64xf32>
    %117 = arith.addf %116, %115 : vector<8x64xf32>
    %cst_46 = arith.constant 5.000000e-01 : f32
    %118 = vector.broadcast %cst_46 : f32 to vector<8x64xf32>
    %119 = arith.mulf %118, %117 : vector<8x64xf32>
    %120 = arith.mulf %107, %119 : vector<8x64xf32>
    %c2_47 = arith.constant 2 : index
    %c0_48 = arith.constant 0 : index
    %121 = memref.load %arg15[%c2_47, %c0_48] : memref<8x4xf32, #tpu.memory_space<smem>>
    %122 = vector.broadcast %121 : f32 to vector<8x64xf32>
    %123 = arith.mulf %122, %52 : vector<8x64xf32>
    %c2_49 = arith.constant 2 : index
    %c1_50 = arith.constant 1 : index
    %124 = memref.load %arg15[%c2_49, %c1_50] : memref<8x4xf32, #tpu.memory_space<smem>>
    %125 = vector.broadcast %124 : f32 to vector<8x64xf32>
    %126 = arith.mulf %125, %54 : vector<8x64xf32>
    %127 = arith.addf %123, %126 : vector<8x64xf32>
    %c2_51 = arith.constant 2 : index
    %c2_52 = arith.constant 2 : index
    %128 = memref.load %arg15[%c2_51, %c2_52] : memref<8x4xf32, #tpu.memory_space<smem>>
    %129 = vector.broadcast %128 : f32 to vector<8x64xf32>
    %130 = arith.mulf %129, %56 : vector<8x64xf32>
    %131 = arith.addf %127, %130 : vector<8x64xf32>
    %c2_53 = arith.constant 2 : index
    %c3_54 = arith.constant 3 : index
    %132 = memref.load %arg15[%c2_53, %c3_54] : memref<8x4xf32, #tpu.memory_space<smem>>
    %133 = vector.broadcast %132 : f32 to vector<8x64xf32>
    %134 = arith.mulf %133, %58 : vector<8x64xf32>
    %135 = arith.addf %131, %134 : vector<8x64xf32>
    %c2_55 = arith.constant 2 : index
    %c0_56 = arith.constant 0 : index
    %136 = memref.load %arg16[%c2_55, %c0_56] : memref<8x1xf32, #tpu.memory_space<smem>>
    %137 = vector.broadcast %136 : f32 to vector<8x64xf32>
    %138 = arith.addf %135, %137 : vector<8x64xf32>
    %139 = arith.mulf %138, %138 : vector<8x64xf32>
    %140 = arith.mulf %138, %139 : vector<8x64xf32>
    %cst_57 = arith.constant 4.471500e-02 : f32
    %141 = vector.broadcast %cst_57 : f32 to vector<8x64xf32>
    %142 = arith.mulf %141, %140 : vector<8x64xf32>
    %143 = arith.addf %138, %142 : vector<8x64xf32>
    %cst_58 = arith.constant 0.797884583 : f32
    %144 = vector.broadcast %cst_58 : f32 to vector<8x64xf32>
    %145 = arith.mulf %144, %143 : vector<8x64xf32>
    %146 = math.tanh %145 : vector<8x64xf32>
    %cst_59 = arith.constant 1.000000e+00 : f32
    %147 = vector.broadcast %cst_59 : f32 to vector<8x64xf32>
    %148 = arith.addf %147, %146 : vector<8x64xf32>
    %cst_60 = arith.constant 5.000000e-01 : f32
    %149 = vector.broadcast %cst_60 : f32 to vector<8x64xf32>
    %150 = arith.mulf %149, %148 : vector<8x64xf32>
    %151 = arith.mulf %138, %150 : vector<8x64xf32>
    %c3_61 = arith.constant 3 : index
    %c0_62 = arith.constant 0 : index
    %152 = memref.load %arg15[%c3_61, %c0_62] : memref<8x4xf32, #tpu.memory_space<smem>>
    %153 = vector.broadcast %152 : f32 to vector<8x64xf32>
    %154 = arith.mulf %153, %52 : vector<8x64xf32>
    %c3_63 = arith.constant 3 : index
    %c1_64 = arith.constant 1 : index
    %155 = memref.load %arg15[%c3_63, %c1_64] : memref<8x4xf32, #tpu.memory_space<smem>>
    %156 = vector.broadcast %155 : f32 to vector<8x64xf32>
    %157 = arith.mulf %156, %54 : vector<8x64xf32>
    %158 = arith.addf %154, %157 : vector<8x64xf32>
    %c3_65 = arith.constant 3 : index
    %c2_66 = arith.constant 2 : index
    %159 = memref.load %arg15[%c3_65, %c2_66] : memref<8x4xf32, #tpu.memory_space<smem>>
    %160 = vector.broadcast %159 : f32 to vector<8x64xf32>
    %161 = arith.mulf %160, %56 : vector<8x64xf32>
    %162 = arith.addf %158, %161 : vector<8x64xf32>
    %c3_67 = arith.constant 3 : index
    %c3_68 = arith.constant 3 : index
    %163 = memref.load %arg15[%c3_67, %c3_68] : memref<8x4xf32, #tpu.memory_space<smem>>
    %164 = vector.broadcast %163 : f32 to vector<8x64xf32>
    %165 = arith.mulf %164, %58 : vector<8x64xf32>
    %166 = arith.addf %162, %165 : vector<8x64xf32>
    %c3_69 = arith.constant 3 : index
    %c0_70 = arith.constant 0 : index
    %167 = memref.load %arg16[%c3_69, %c0_70] : memref<8x1xf32, #tpu.memory_space<smem>>
    %168 = vector.broadcast %167 : f32 to vector<8x64xf32>
    %169 = arith.addf %166, %168 : vector<8x64xf32>
    %170 = arith.mulf %169, %169 : vector<8x64xf32>
    %171 = arith.mulf %169, %170 : vector<8x64xf32>
    %cst_71 = arith.constant 4.471500e-02 : f32
    %172 = vector.broadcast %cst_71 : f32 to vector<8x64xf32>
    %173 = arith.mulf %172, %171 : vector<8x64xf32>
    %174 = arith.addf %169, %173 : vector<8x64xf32>
    %cst_72 = arith.constant 0.797884583 : f32
    %175 = vector.broadcast %cst_72 : f32 to vector<8x64xf32>
    %176 = arith.mulf %175, %174 : vector<8x64xf32>
    %177 = math.tanh %176 : vector<8x64xf32>
    %cst_73 = arith.constant 1.000000e+00 : f32
    %178 = vector.broadcast %cst_73 : f32 to vector<8x64xf32>
    %179 = arith.addf %178, %177 : vector<8x64xf32>
    %cst_74 = arith.constant 5.000000e-01 : f32
    %180 = vector.broadcast %cst_74 : f32 to vector<8x64xf32>
    %181 = arith.mulf %180, %179 : vector<8x64xf32>
    %182 = arith.mulf %169, %181 : vector<8x64xf32>
    %c4 = arith.constant 4 : index
    %c0_75 = arith.constant 0 : index
    %183 = memref.load %arg15[%c4, %c0_75] : memref<8x4xf32, #tpu.memory_space<smem>>
    %184 = vector.broadcast %183 : f32 to vector<8x64xf32>
    %185 = arith.mulf %184, %52 : vector<8x64xf32>
    %c4_76 = arith.constant 4 : index
    %c1_77 = arith.constant 1 : index
    %186 = memref.load %arg15[%c4_76, %c1_77] : memref<8x4xf32, #tpu.memory_space<smem>>
    %187 = vector.broadcast %186 : f32 to vector<8x64xf32>
    %188 = arith.mulf %187, %54 : vector<8x64xf32>
    %189 = arith.addf %185, %188 : vector<8x64xf32>
    %c4_78 = arith.constant 4 : index
    %c2_79 = arith.constant 2 : index
    %190 = memref.load %arg15[%c4_78, %c2_79] : memref<8x4xf32, #tpu.memory_space<smem>>
    %191 = vector.broadcast %190 : f32 to vector<8x64xf32>
    %192 = arith.mulf %191, %56 : vector<8x64xf32>
    %193 = arith.addf %189, %192 : vector<8x64xf32>
    %c4_80 = arith.constant 4 : index
    %c3_81 = arith.constant 3 : index
    %194 = memref.load %arg15[%c4_80, %c3_81] : memref<8x4xf32, #tpu.memory_space<smem>>
    %195 = vector.broadcast %194 : f32 to vector<8x64xf32>
    %196 = arith.mulf %195, %58 : vector<8x64xf32>
    %197 = arith.addf %193, %196 : vector<8x64xf32>
    %c4_82 = arith.constant 4 : index
    %c0_83 = arith.constant 0 : index
    %198 = memref.load %arg16[%c4_82, %c0_83] : memref<8x1xf32, #tpu.memory_space<smem>>
    %199 = vector.broadcast %198 : f32 to vector<8x64xf32>
    %200 = arith.addf %197, %199 : vector<8x64xf32>
    %201 = arith.mulf %200, %200 : vector<8x64xf32>
    %202 = arith.mulf %200, %201 : vector<8x64xf32>
    %cst_84 = arith.constant 4.471500e-02 : f32
    %203 = vector.broadcast %cst_84 : f32 to vector<8x64xf32>
    %204 = arith.mulf %203, %202 : vector<8x64xf32>
    %205 = arith.addf %200, %204 : vector<8x64xf32>
    %cst_85 = arith.constant 0.797884583 : f32
    %206 = vector.broadcast %cst_85 : f32 to vector<8x64xf32>
    %207 = arith.mulf %206, %205 : vector<8x64xf32>
    %208 = math.tanh %207 : vector<8x64xf32>
    %cst_86 = arith.constant 1.000000e+00 : f32
    %209 = vector.broadcast %cst_86 : f32 to vector<8x64xf32>
    %210 = arith.addf %209, %208 : vector<8x64xf32>
    %cst_87 = arith.constant 5.000000e-01 : f32
    %211 = vector.broadcast %cst_87 : f32 to vector<8x64xf32>
    %212 = arith.mulf %211, %210 : vector<8x64xf32>
    %213 = arith.mulf %200, %212 : vector<8x64xf32>
    %c5 = arith.constant 5 : index
    %c0_88 = arith.constant 0 : index
    %214 = memref.load %arg15[%c5, %c0_88] : memref<8x4xf32, #tpu.memory_space<smem>>
    %215 = vector.broadcast %214 : f32 to vector<8x64xf32>
    %216 = arith.mulf %215, %52 : vector<8x64xf32>
    %c5_89 = arith.constant 5 : index
    %c1_90 = arith.constant 1 : index
    %217 = memref.load %arg15[%c5_89, %c1_90] : memref<8x4xf32, #tpu.memory_space<smem>>
    %218 = vector.broadcast %217 : f32 to vector<8x64xf32>
    %219 = arith.mulf %218, %54 : vector<8x64xf32>
    %220 = arith.addf %216, %219 : vector<8x64xf32>
    %c5_91 = arith.constant 5 : index
    %c2_92 = arith.constant 2 : index
    %221 = memref.load %arg15[%c5_91, %c2_92] : memref<8x4xf32, #tpu.memory_space<smem>>
    %222 = vector.broadcast %221 : f32 to vector<8x64xf32>
    %223 = arith.mulf %222, %56 : vector<8x64xf32>
    %224 = arith.addf %220, %223 : vector<8x64xf32>
    %c5_93 = arith.constant 5 : index
    %c3_94 = arith.constant 3 : index
    %225 = memref.load %arg15[%c5_93, %c3_94] : memref<8x4xf32, #tpu.memory_space<smem>>
    %226 = vector.broadcast %225 : f32 to vector<8x64xf32>
    %227 = arith.mulf %226, %58 : vector<8x64xf32>
    %228 = arith.addf %224, %227 : vector<8x64xf32>
    %c5_95 = arith.constant 5 : index
    %c0_96 = arith.constant 0 : index
    %229 = memref.load %arg16[%c5_95, %c0_96] : memref<8x1xf32, #tpu.memory_space<smem>>
    %230 = vector.broadcast %229 : f32 to vector<8x64xf32>
    %231 = arith.addf %228, %230 : vector<8x64xf32>
    %232 = arith.mulf %231, %231 : vector<8x64xf32>
    %233 = arith.mulf %231, %232 : vector<8x64xf32>
    %cst_97 = arith.constant 4.471500e-02 : f32
    %234 = vector.broadcast %cst_97 : f32 to vector<8x64xf32>
    %235 = arith.mulf %234, %233 : vector<8x64xf32>
    %236 = arith.addf %231, %235 : vector<8x64xf32>
    %cst_98 = arith.constant 0.797884583 : f32
    %237 = vector.broadcast %cst_98 : f32 to vector<8x64xf32>
    %238 = arith.mulf %237, %236 : vector<8x64xf32>
    %239 = math.tanh %238 : vector<8x64xf32>
    %cst_99 = arith.constant 1.000000e+00 : f32
    %240 = vector.broadcast %cst_99 : f32 to vector<8x64xf32>
    %241 = arith.addf %240, %239 : vector<8x64xf32>
    %cst_100 = arith.constant 5.000000e-01 : f32
    %242 = vector.broadcast %cst_100 : f32 to vector<8x64xf32>
    %243 = arith.mulf %242, %241 : vector<8x64xf32>
    %244 = arith.mulf %231, %243 : vector<8x64xf32>
    %c6 = arith.constant 6 : index
    %c0_101 = arith.constant 0 : index
    %245 = memref.load %arg15[%c6, %c0_101] : memref<8x4xf32, #tpu.memory_space<smem>>
    %246 = vector.broadcast %245 : f32 to vector<8x64xf32>
    %247 = arith.mulf %246, %52 : vector<8x64xf32>
    %c6_102 = arith.constant 6 : index
    %c1_103 = arith.constant 1 : index
    %248 = memref.load %arg15[%c6_102, %c1_103] : memref<8x4xf32, #tpu.memory_space<smem>>
    %249 = vector.broadcast %248 : f32 to vector<8x64xf32>
    %250 = arith.mulf %249, %54 : vector<8x64xf32>
    %251 = arith.addf %247, %250 : vector<8x64xf32>
    %c6_104 = arith.constant 6 : index
    %c2_105 = arith.constant 2 : index
    %252 = memref.load %arg15[%c6_104, %c2_105] : memref<8x4xf32, #tpu.memory_space<smem>>
    %253 = vector.broadcast %252 : f32 to vector<8x64xf32>
    %254 = arith.mulf %253, %56 : vector<8x64xf32>
    %255 = arith.addf %251, %254 : vector<8x64xf32>
    %c6_106 = arith.constant 6 : index
    %c3_107 = arith.constant 3 : index
    %256 = memref.load %arg15[%c6_106, %c3_107] : memref<8x4xf32, #tpu.memory_space<smem>>
    %257 = vector.broadcast %256 : f32 to vector<8x64xf32>
    %258 = arith.mulf %257, %58 : vector<8x64xf32>
    %259 = arith.addf %255, %258 : vector<8x64xf32>
    %c6_108 = arith.constant 6 : index
    %c0_109 = arith.constant 0 : index
    %260 = memref.load %arg16[%c6_108, %c0_109] : memref<8x1xf32, #tpu.memory_space<smem>>
    %261 = vector.broadcast %260 : f32 to vector<8x64xf32>
    %262 = arith.addf %259, %261 : vector<8x64xf32>
    %263 = arith.mulf %262, %262 : vector<8x64xf32>
    %264 = arith.mulf %262, %263 : vector<8x64xf32>
    %cst_110 = arith.constant 4.471500e-02 : f32
    %265 = vector.broadcast %cst_110 : f32 to vector<8x64xf32>
    %266 = arith.mulf %265, %264 : vector<8x64xf32>
    %267 = arith.addf %262, %266 : vector<8x64xf32>
    %cst_111 = arith.constant 0.797884583 : f32
    %268 = vector.broadcast %cst_111 : f32 to vector<8x64xf32>
    %269 = arith.mulf %268, %267 : vector<8x64xf32>
    %270 = math.tanh %269 : vector<8x64xf32>
    %cst_112 = arith.constant 1.000000e+00 : f32
    %271 = vector.broadcast %cst_112 : f32 to vector<8x64xf32>
    %272 = arith.addf %271, %270 : vector<8x64xf32>
    %cst_113 = arith.constant 5.000000e-01 : f32
    %273 = vector.broadcast %cst_113 : f32 to vector<8x64xf32>
    %274 = arith.mulf %273, %272 : vector<8x64xf32>
    %275 = arith.mulf %262, %274 : vector<8x64xf32>
    %c7 = arith.constant 7 : index
    %c0_114 = arith.constant 0 : index
    %276 = memref.load %arg15[%c7, %c0_114] : memref<8x4xf32, #tpu.memory_space<smem>>
    %277 = vector.broadcast %276 : f32 to vector<8x64xf32>
    %278 = arith.mulf %277, %52 : vector<8x64xf32>
    %c7_115 = arith.constant 7 : index
    %c1_116 = arith.constant 1 : index
    %279 = memref.load %arg15[%c7_115, %c1_116] : memref<8x4xf32, #tpu.memory_space<smem>>
    %280 = vector.broadcast %279 : f32 to vector<8x64xf32>
    %281 = arith.mulf %280, %54 : vector<8x64xf32>
    %282 = arith.addf %278, %281 : vector<8x64xf32>
    %c7_117 = arith.constant 7 : index
    %c2_118 = arith.constant 2 : index
    %283 = memref.load %arg15[%c7_117, %c2_118] : memref<8x4xf32, #tpu.memory_space<smem>>
    %284 = vector.broadcast %283 : f32 to vector<8x64xf32>
    %285 = arith.mulf %284, %56 : vector<8x64xf32>
    %286 = arith.addf %282, %285 : vector<8x64xf32>
    %c7_119 = arith.constant 7 : index
    %c3_120 = arith.constant 3 : index
    %287 = memref.load %arg15[%c7_119, %c3_120] : memref<8x4xf32, #tpu.memory_space<smem>>
    %288 = vector.broadcast %287 : f32 to vector<8x64xf32>
    %289 = arith.mulf %288, %58 : vector<8x64xf32>
    %290 = arith.addf %286, %289 : vector<8x64xf32>
    %c7_121 = arith.constant 7 : index
    %c0_122 = arith.constant 0 : index
    %291 = memref.load %arg16[%c7_121, %c0_122] : memref<8x1xf32, #tpu.memory_space<smem>>
    %292 = vector.broadcast %291 : f32 to vector<8x64xf32>
    %293 = arith.addf %290, %292 : vector<8x64xf32>
    %294 = arith.mulf %293, %293 : vector<8x64xf32>
    %295 = arith.mulf %293, %294 : vector<8x64xf32>
    %cst_123 = arith.constant 4.471500e-02 : f32
    %296 = vector.broadcast %cst_123 : f32 to vector<8x64xf32>
    %297 = arith.mulf %296, %295 : vector<8x64xf32>
    %298 = arith.addf %293, %297 : vector<8x64xf32>
    %cst_124 = arith.constant 0.797884583 : f32
    %299 = vector.broadcast %cst_124 : f32 to vector<8x64xf32>
    %300 = arith.mulf %299, %298 : vector<8x64xf32>
    %301 = math.tanh %300 : vector<8x64xf32>
    %cst_125 = arith.constant 1.000000e+00 : f32
    %302 = vector.broadcast %cst_125 : f32 to vector<8x64xf32>
    %303 = arith.addf %302, %301 : vector<8x64xf32>
    %cst_126 = arith.constant 5.000000e-01 : f32
    %304 = vector.broadcast %cst_126 : f32 to vector<8x64xf32>
    %305 = arith.mulf %304, %303 : vector<8x64xf32>
    %306 = arith.mulf %293, %305 : vector<8x64xf32>
    %c0_127 = arith.constant 0 : index
    %c0_128 = arith.constant 0 : index
    %307 = memref.load %arg17[%c0_127, %c0_128] : memref<4x8xf32, #tpu.memory_space<smem>>
    %308 = vector.broadcast %307 : f32 to vector<8x64xf32>
    %309 = arith.mulf %308, %89 : vector<8x64xf32>
    %c0_129 = arith.constant 0 : index
    %c1_130 = arith.constant 1 : index
    %310 = memref.load %arg17[%c0_129, %c1_130] : memref<4x8xf32, #tpu.memory_space<smem>>
    %311 = vector.broadcast %310 : f32 to vector<8x64xf32>
    %312 = arith.mulf %311, %120 : vector<8x64xf32>
    %313 = arith.addf %309, %312 : vector<8x64xf32>
    %c0_131 = arith.constant 0 : index
    %c2_132 = arith.constant 2 : index
    %314 = memref.load %arg17[%c0_131, %c2_132] : memref<4x8xf32, #tpu.memory_space<smem>>
    %315 = vector.broadcast %314 : f32 to vector<8x64xf32>
    %316 = arith.mulf %315, %151 : vector<8x64xf32>
    %317 = arith.addf %313, %316 : vector<8x64xf32>
    %c0_133 = arith.constant 0 : index
    %c3_134 = arith.constant 3 : index
    %318 = memref.load %arg17[%c0_133, %c3_134] : memref<4x8xf32, #tpu.memory_space<smem>>
    %319 = vector.broadcast %318 : f32 to vector<8x64xf32>
    %320 = arith.mulf %319, %182 : vector<8x64xf32>
    %321 = arith.addf %317, %320 : vector<8x64xf32>
    %c0_135 = arith.constant 0 : index
    %c4_136 = arith.constant 4 : index
    %322 = memref.load %arg17[%c0_135, %c4_136] : memref<4x8xf32, #tpu.memory_space<smem>>
    %323 = vector.broadcast %322 : f32 to vector<8x64xf32>
    %324 = arith.mulf %323, %213 : vector<8x64xf32>
    %325 = arith.addf %321, %324 : vector<8x64xf32>
    %c0_137 = arith.constant 0 : index
    %c5_138 = arith.constant 5 : index
    %326 = memref.load %arg17[%c0_137, %c5_138] : memref<4x8xf32, #tpu.memory_space<smem>>
    %327 = vector.broadcast %326 : f32 to vector<8x64xf32>
    %328 = arith.mulf %327, %244 : vector<8x64xf32>
    %329 = arith.addf %325, %328 : vector<8x64xf32>
    %c0_139 = arith.constant 0 : index
    %c6_140 = arith.constant 6 : index
    %330 = memref.load %arg17[%c0_139, %c6_140] : memref<4x8xf32, #tpu.memory_space<smem>>
    %331 = vector.broadcast %330 : f32 to vector<8x64xf32>
    %332 = arith.mulf %331, %275 : vector<8x64xf32>
    %333 = arith.addf %329, %332 : vector<8x64xf32>
    %c0_141 = arith.constant 0 : index
    %c7_142 = arith.constant 7 : index
    %334 = memref.load %arg17[%c0_141, %c7_142] : memref<4x8xf32, #tpu.memory_space<smem>>
    %335 = vector.broadcast %334 : f32 to vector<8x64xf32>
    %336 = arith.mulf %335, %306 : vector<8x64xf32>
    %337 = arith.addf %333, %336 : vector<8x64xf32>
    %338 = vector.extract_strided_slice %26 {offsets = [0, 0, 0], sizes = [1, 8, 64], strides = [1, 1, 1]} : vector<4x8x64xf32> to vector<1x8x64xf32>
    %339 = vector.shape_cast %338 : vector<1x8x64xf32> to vector<8x64xf32>
    %340 = arith.addf %339, %337 : vector<8x64xf32>
    %c0_143 = arith.constant 0 : index
    %c0_144 = arith.constant 0 : index
    %341 = memref.load %arg18[%c0_143, %c0_144] : memref<4x1xf32, #tpu.memory_space<smem>>
    %342 = vector.broadcast %341 : f32 to vector<8x64xf32>
    %343 = arith.addf %340, %342 : vector<8x64xf32>
    %c1_145 = arith.constant 1 : index
    %c0_146 = arith.constant 0 : index
    %344 = memref.load %arg17[%c1_145, %c0_146] : memref<4x8xf32, #tpu.memory_space<smem>>
    %345 = vector.broadcast %344 : f32 to vector<8x64xf32>
    %346 = arith.mulf %345, %89 : vector<8x64xf32>
    %c1_147 = arith.constant 1 : index
    %c1_148 = arith.constant 1 : index
    %347 = memref.load %arg17[%c1_147, %c1_148] : memref<4x8xf32, #tpu.memory_space<smem>>
    %348 = vector.broadcast %347 : f32 to vector<8x64xf32>
    %349 = arith.mulf %348, %120 : vector<8x64xf32>
    %350 = arith.addf %346, %349 : vector<8x64xf32>
    %c1_149 = arith.constant 1 : index
    %c2_150 = arith.constant 2 : index
    %351 = memref.load %arg17[%c1_149, %c2_150] : memref<4x8xf32, #tpu.memory_space<smem>>
    %352 = vector.broadcast %351 : f32 to vector<8x64xf32>
    %353 = arith.mulf %352, %151 : vector<8x64xf32>
    %354 = arith.addf %350, %353 : vector<8x64xf32>
    %c1_151 = arith.constant 1 : index
    %c3_152 = arith.constant 3 : index
    %355 = memref.load %arg17[%c1_151, %c3_152] : memref<4x8xf32, #tpu.memory_space<smem>>
    %356 = vector.broadcast %355 : f32 to vector<8x64xf32>
    %357 = arith.mulf %356, %182 : vector<8x64xf32>
    %358 = arith.addf %354, %357 : vector<8x64xf32>
    %c1_153 = arith.constant 1 : index
    %c4_154 = arith.constant 4 : index
    %359 = memref.load %arg17[%c1_153, %c4_154] : memref<4x8xf32, #tpu.memory_space<smem>>
    %360 = vector.broadcast %359 : f32 to vector<8x64xf32>
    %361 = arith.mulf %360, %213 : vector<8x64xf32>
    %362 = arith.addf %358, %361 : vector<8x64xf32>
    %c1_155 = arith.constant 1 : index
    %c5_156 = arith.constant 5 : index
    %363 = memref.load %arg17[%c1_155, %c5_156] : memref<4x8xf32, #tpu.memory_space<smem>>
    %364 = vector.broadcast %363 : f32 to vector<8x64xf32>
    %365 = arith.mulf %364, %244 : vector<8x64xf32>
    %366 = arith.addf %362, %365 : vector<8x64xf32>
    %c1_157 = arith.constant 1 : index
    %c6_158 = arith.constant 6 : index
    %367 = memref.load %arg17[%c1_157, %c6_158] : memref<4x8xf32, #tpu.memory_space<smem>>
    %368 = vector.broadcast %367 : f32 to vector<8x64xf32>
    %369 = arith.mulf %368, %275 : vector<8x64xf32>
    %370 = arith.addf %366, %369 : vector<8x64xf32>
    %c1_159 = arith.constant 1 : index
    %c7_160 = arith.constant 7 : index
    %371 = memref.load %arg17[%c1_159, %c7_160] : memref<4x8xf32, #tpu.memory_space<smem>>
    %372 = vector.broadcast %371 : f32 to vector<8x64xf32>
    %373 = arith.mulf %372, %306 : vector<8x64xf32>
    %374 = arith.addf %370, %373 : vector<8x64xf32>
    %375 = vector.extract_strided_slice %26 {offsets = [1, 0, 0], sizes = [1, 8, 64], strides = [1, 1, 1]} : vector<4x8x64xf32> to vector<1x8x64xf32>
    %376 = vector.shape_cast %375 : vector<1x8x64xf32> to vector<8x64xf32>
    %377 = arith.addf %376, %374 : vector<8x64xf32>
    %c1_161 = arith.constant 1 : index
    %c0_162 = arith.constant 0 : index
    %378 = memref.load %arg18[%c1_161, %c0_162] : memref<4x1xf32, #tpu.memory_space<smem>>
    %379 = vector.broadcast %378 : f32 to vector<8x64xf32>
    %380 = arith.addf %377, %379 : vector<8x64xf32>
    %c2_163 = arith.constant 2 : index
    %c0_164 = arith.constant 0 : index
    %381 = memref.load %arg17[%c2_163, %c0_164] : memref<4x8xf32, #tpu.memory_space<smem>>
    %382 = vector.broadcast %381 : f32 to vector<8x64xf32>
    %383 = arith.mulf %382, %89 : vector<8x64xf32>
    %c2_165 = arith.constant 2 : index
    %c1_166 = arith.constant 1 : index
    %384 = memref.load %arg17[%c2_165, %c1_166] : memref<4x8xf32, #tpu.memory_space<smem>>
    %385 = vector.broadcast %384 : f32 to vector<8x64xf32>
    %386 = arith.mulf %385, %120 : vector<8x64xf32>
    %387 = arith.addf %383, %386 : vector<8x64xf32>
    %c2_167 = arith.constant 2 : index
    %c2_168 = arith.constant 2 : index
    %388 = memref.load %arg17[%c2_167, %c2_168] : memref<4x8xf32, #tpu.memory_space<smem>>
    %389 = vector.broadcast %388 : f32 to vector<8x64xf32>
    %390 = arith.mulf %389, %151 : vector<8x64xf32>
    %391 = arith.addf %387, %390 : vector<8x64xf32>
    %c2_169 = arith.constant 2 : index
    %c3_170 = arith.constant 3 : index
    %392 = memref.load %arg17[%c2_169, %c3_170] : memref<4x8xf32, #tpu.memory_space<smem>>
    %393 = vector.broadcast %392 : f32 to vector<8x64xf32>
    %394 = arith.mulf %393, %182 : vector<8x64xf32>
    %395 = arith.addf %391, %394 : vector<8x64xf32>
    %c2_171 = arith.constant 2 : index
    %c4_172 = arith.constant 4 : index
    %396 = memref.load %arg17[%c2_171, %c4_172] : memref<4x8xf32, #tpu.memory_space<smem>>
    %397 = vector.broadcast %396 : f32 to vector<8x64xf32>
    %398 = arith.mulf %397, %213 : vector<8x64xf32>
    %399 = arith.addf %395, %398 : vector<8x64xf32>
    %c2_173 = arith.constant 2 : index
    %c5_174 = arith.constant 5 : index
    %400 = memref.load %arg17[%c2_173, %c5_174] : memref<4x8xf32, #tpu.memory_space<smem>>
    %401 = vector.broadcast %400 : f32 to vector<8x64xf32>
    %402 = arith.mulf %401, %244 : vector<8x64xf32>
    %403 = arith.addf %399, %402 : vector<8x64xf32>
    %c2_175 = arith.constant 2 : index
    %c6_176 = arith.constant 6 : index
    %404 = memref.load %arg17[%c2_175, %c6_176] : memref<4x8xf32, #tpu.memory_space<smem>>
    %405 = vector.broadcast %404 : f32 to vector<8x64xf32>
    %406 = arith.mulf %405, %275 : vector<8x64xf32>
    %407 = arith.addf %403, %406 : vector<8x64xf32>
    %c2_177 = arith.constant 2 : index
    %c7_178 = arith.constant 7 : index
    %408 = memref.load %arg17[%c2_177, %c7_178] : memref<4x8xf32, #tpu.memory_space<smem>>
    %409 = vector.broadcast %408 : f32 to vector<8x64xf32>
    %410 = arith.mulf %409, %306 : vector<8x64xf32>
    %411 = arith.addf %407, %410 : vector<8x64xf32>
    %412 = vector.extract_strided_slice %26 {offsets = [2, 0, 0], sizes = [1, 8, 64], strides = [1, 1, 1]} : vector<4x8x64xf32> to vector<1x8x64xf32>
    %413 = vector.shape_cast %412 : vector<1x8x64xf32> to vector<8x64xf32>
    %414 = arith.addf %413, %411 : vector<8x64xf32>
    %c2_179 = arith.constant 2 : index
    %c0_180 = arith.constant 0 : index
    %415 = memref.load %arg18[%c2_179, %c0_180] : memref<4x1xf32, #tpu.memory_space<smem>>
    %416 = vector.broadcast %415 : f32 to vector<8x64xf32>
    %417 = arith.addf %414, %416 : vector<8x64xf32>
    %c3_181 = arith.constant 3 : index
    %c0_182 = arith.constant 0 : index
    %418 = memref.load %arg17[%c3_181, %c0_182] : memref<4x8xf32, #tpu.memory_space<smem>>
    %419 = vector.broadcast %418 : f32 to vector<8x64xf32>
    %420 = arith.mulf %419, %89 : vector<8x64xf32>
    %c3_183 = arith.constant 3 : index
    %c1_184 = arith.constant 1 : index
    %421 = memref.load %arg17[%c3_183, %c1_184] : memref<4x8xf32, #tpu.memory_space<smem>>
    %422 = vector.broadcast %421 : f32 to vector<8x64xf32>
    %423 = arith.mulf %422, %120 : vector<8x64xf32>
    %424 = arith.addf %420, %423 : vector<8x64xf32>
    %c3_185 = arith.constant 3 : index
    %c2_186 = arith.constant 2 : index
    %425 = memref.load %arg17[%c3_185, %c2_186] : memref<4x8xf32, #tpu.memory_space<smem>>
    %426 = vector.broadcast %425 : f32 to vector<8x64xf32>
    %427 = arith.mulf %426, %151 : vector<8x64xf32>
    %428 = arith.addf %424, %427 : vector<8x64xf32>
    %c3_187 = arith.constant 3 : index
    %c3_188 = arith.constant 3 : index
    %429 = memref.load %arg17[%c3_187, %c3_188] : memref<4x8xf32, #tpu.memory_space<smem>>
    %430 = vector.broadcast %429 : f32 to vector<8x64xf32>
    %431 = arith.mulf %430, %182 : vector<8x64xf32>
    %432 = arith.addf %428, %431 : vector<8x64xf32>
    %c3_189 = arith.constant 3 : index
    %c4_190 = arith.constant 4 : index
    %433 = memref.load %arg17[%c3_189, %c4_190] : memref<4x8xf32, #tpu.memory_space<smem>>
    %434 = vector.broadcast %433 : f32 to vector<8x64xf32>
    %435 = arith.mulf %434, %213 : vector<8x64xf32>
    %436 = arith.addf %432, %435 : vector<8x64xf32>
    %c3_191 = arith.constant 3 : index
    %c5_192 = arith.constant 5 : index
    %437 = memref.load %arg17[%c3_191, %c5_192] : memref<4x8xf32, #tpu.memory_space<smem>>
    %438 = vector.broadcast %437 : f32 to vector<8x64xf32>
    %439 = arith.mulf %438, %244 : vector<8x64xf32>
    %440 = arith.addf %436, %439 : vector<8x64xf32>
    %c3_193 = arith.constant 3 : index
    %c6_194 = arith.constant 6 : index
    %441 = memref.load %arg17[%c3_193, %c6_194] : memref<4x8xf32, #tpu.memory_space<smem>>
    %442 = vector.broadcast %441 : f32 to vector<8x64xf32>
    %443 = arith.mulf %442, %275 : vector<8x64xf32>
    %444 = arith.addf %440, %443 : vector<8x64xf32>
    %c3_195 = arith.constant 3 : index
    %c7_196 = arith.constant 7 : index
    %445 = memref.load %arg17[%c3_195, %c7_196] : memref<4x8xf32, #tpu.memory_space<smem>>
    %446 = vector.broadcast %445 : f32 to vector<8x64xf32>
    %447 = arith.mulf %446, %306 : vector<8x64xf32>
    %448 = arith.addf %444, %447 : vector<8x64xf32>
    %449 = vector.extract_strided_slice %26 {offsets = [3, 0, 0], sizes = [1, 8, 64], strides = [1, 1, 1]} : vector<4x8x64xf32> to vector<1x8x64xf32>
    %450 = vector.shape_cast %449 : vector<1x8x64xf32> to vector<8x64xf32>
    %451 = arith.addf %450, %448 : vector<8x64xf32>
    %c3_197 = arith.constant 3 : index
    %c0_198 = arith.constant 0 : index
    %452 = memref.load %arg18[%c3_197, %c0_198] : memref<4x1xf32, #tpu.memory_space<smem>>
    %453 = vector.broadcast %452 : f32 to vector<8x64xf32>
    %454 = arith.addf %451, %453 : vector<8x64xf32>
    %455 = vector.shape_cast %343 : vector<8x64xf32> to vector<1x8x64xf32>
    %456 = vector.shape_cast %380 : vector<8x64xf32> to vector<1x8x64xf32>
    %457 = vector.shape_cast %417 : vector<8x64xf32> to vector<1x8x64xf32>
    %458 = vector.shape_cast %454 : vector<8x64xf32> to vector<1x8x64xf32>
    %459 = tpu.concatenate %455, %456, %457, %458 in 0 : vector<1x8x64xf32>, vector<1x8x64xf32>, vector<1x8x64xf32>, vector<1x8x64xf32> -> vector<4x8x64xf32>
    %c0_199 = arith.constant 0 : index
    %c0_200 = arith.constant 0 : index
    %460 = vector.load %arg7[%c0_199, %c0_200] : memref<1x64xf32, #tpu.memory_space<vmem>>, vector<1x64xf32>
    %c0_201 = arith.constant 0 : index
    %c0_202 = arith.constant 0 : index
    %461 = vector.load %arg8[%c0_201, %c0_202] : memref<1x64xf32, #tpu.memory_space<vmem>>, vector<1x64xf32>
    %cst_203 = arith.constant dense<0.000000e+00> : vector<4x8xf32>
    %462 = vector.multi_reduction <add>, %459, %cst_203 [2] : vector<4x8x64xf32> to vector<4x8xf32>
    %463 = vector.shape_cast %462 : vector<4x8xf32> to vector<4x8x1xf32>
    %cst_204 = arith.constant 6.400000e+01 : f32
    %464 = vector.broadcast %cst_204 : f32 to vector<4x8x1xf32>
    %465 = arith.divf %463, %464 : vector<4x8x1xf32>
    %466 = vector.broadcast %465 : vector<4x8x1xf32> to vector<4x8x64xf32>
    %467 = arith.subf %459, %466 : vector<4x8x64xf32>
    %468 = arith.mulf %467, %467 : vector<4x8x64xf32>
    %cst_205 = arith.constant dense<0.000000e+00> : vector<4x8xf32>
    %469 = vector.multi_reduction <add>, %468, %cst_205 [2] : vector<4x8x64xf32> to vector<4x8xf32>
    %470 = vector.shape_cast %469 : vector<4x8xf32> to vector<4x8x1xf32>
    %cst_206 = arith.constant 6.400000e+01 : f32
    %471 = vector.broadcast %cst_206 : f32 to vector<4x8x1xf32>
    %472 = arith.divf %470, %471 : vector<4x8x1xf32>
    %cst_207 = arith.constant 9.99999974E-6 : f32
    %473 = vector.broadcast %cst_207 : f32 to vector<4x8x1xf32>
    %474 = arith.addf %472, %473 : vector<4x8x1xf32>
    %475 = math.rsqrt %474 : vector<4x8x1xf32>
    %476 = vector.broadcast %475 : vector<4x8x1xf32> to vector<4x8x64xf32>
    %477 = arith.mulf %467, %476 : vector<4x8x64xf32>
    %478 = vector.shape_cast %460 : vector<1x64xf32> to vector<1x1x64xf32>
    %479 = vector.broadcast %478 : vector<1x1x64xf32> to vector<4x8x64xf32>
    %480 = arith.mulf %477, %479 : vector<4x8x64xf32>
    %481 = vector.shape_cast %461 : vector<1x64xf32> to vector<1x1x64xf32>
    %482 = vector.broadcast %481 : vector<1x1x64xf32> to vector<4x8x64xf32>
    %483 = arith.addf %480, %482 : vector<4x8x64xf32>
    %484 = vector.shape_cast %483 : vector<4x8x64xf32> to vector<32x64xf32>
    %c0_208 = arith.constant 0 : index
    %c0_209 = arith.constant 0 : index
    %485 = vector.load %arg11[%c0_208, %c0_209] : memref<64x128xf32, #tpu.memory_space<vmem>>, vector<64x128xf32>
    %cst_210 = arith.constant dense<0.000000e+00> : vector<32x128xf32>
    %486 = tpu.matmul %484, %485, %cst_210 {dimension_numbers = #tpu.dot_dimension_numbers<[1], [0], [0], [1], [0, 0, 1, 1], [], []>} : vector<32x64xf32>, vector<64x128xf32>, vector<32x128xf32> -> vector<32x128xf32>
    %c0_211 = arith.constant 0 : index
    %c0_212 = arith.constant 0 : index
    %487 = vector.load %arg12[%c0_211, %c0_212] : memref<1x128xf32, #tpu.memory_space<vmem>>, vector<1x128xf32>
    %488 = vector.broadcast %487 : vector<1x128xf32> to vector<32x128xf32>
    %489 = arith.addf %486, %488 : vector<32x128xf32>
    %490 = arith.mulf %489, %489 : vector<32x128xf32>
    %491 = arith.mulf %489, %490 : vector<32x128xf32>
    %cst_213 = arith.constant 4.471500e-02 : f32
    %492 = vector.broadcast %cst_213 : f32 to vector<32x128xf32>
    %493 = arith.mulf %492, %491 : vector<32x128xf32>
    %494 = arith.addf %489, %493 : vector<32x128xf32>
    %cst_214 = arith.constant 0.797884583 : f32
    %495 = vector.broadcast %cst_214 : f32 to vector<32x128xf32>
    %496 = arith.mulf %495, %494 : vector<32x128xf32>
    %497 = math.tanh %496 : vector<32x128xf32>
    %cst_215 = arith.constant 1.000000e+00 : f32
    %498 = vector.broadcast %cst_215 : f32 to vector<32x128xf32>
    %499 = arith.addf %498, %497 : vector<32x128xf32>
    %cst_216 = arith.constant 5.000000e-01 : f32
    %500 = vector.broadcast %cst_216 : f32 to vector<32x128xf32>
    %501 = arith.mulf %500, %499 : vector<32x128xf32>
    %502 = arith.mulf %489, %501 : vector<32x128xf32>
    %c0_217 = arith.constant 0 : index
    %c0_218 = arith.constant 0 : index
    %503 = vector.load %arg13[%c0_217, %c0_218] : memref<128x64xf32, #tpu.memory_space<vmem>>, vector<128x64xf32>
    %cst_219 = arith.constant dense<0.000000e+00> : vector<32x64xf32>
    %504 = tpu.matmul %502, %503, %cst_219 {dimension_numbers = #tpu.dot_dimension_numbers<[1], [0], [0], [1], [0, 0, 1, 1], [], []>} : vector<32x128xf32>, vector<128x64xf32>, vector<32x64xf32> -> vector<32x64xf32>
    %c0_220 = arith.constant 0 : index
    %c0_221 = arith.constant 0 : index
    %505 = vector.load %arg14[%c0_220, %c0_221] : memref<1x64xf32, #tpu.memory_space<vmem>>, vector<1x64xf32>
    %506 = vector.broadcast %505 : vector<1x64xf32> to vector<32x64xf32>
    %507 = arith.addf %504, %506 : vector<32x64xf32>
    %508 = vector.shape_cast %507 : vector<32x64xf32> to vector<4x8x64xf32>
    %509 = arith.addf %459, %508 : vector<4x8x64xf32>
    %c0_222 = arith.constant 0 : index
    %c0_223 = arith.constant 0 : index
    %510 = vector.load %arg9[%c0_222, %c0_223] : memref<1x64xf32, #tpu.memory_space<vmem>>, vector<1x64xf32>
    %c0_224 = arith.constant 0 : index
    %c0_225 = arith.constant 0 : index
    %511 = vector.load %arg10[%c0_224, %c0_225] : memref<1x64xf32, #tpu.memory_space<vmem>>, vector<1x64xf32>
    %cst_226 = arith.constant dense<0.000000e+00> : vector<4x8xf32>
    %512 = vector.multi_reduction <add>, %509, %cst_226 [2] : vector<4x8x64xf32> to vector<4x8xf32>
    %513 = vector.shape_cast %512 : vector<4x8xf32> to vector<4x8x1xf32>
    %cst_227 = arith.constant 6.400000e+01 : f32
    %514 = vector.broadcast %cst_227 : f32 to vector<4x8x1xf32>
    %515 = arith.divf %513, %514 : vector<4x8x1xf32>
    %516 = vector.broadcast %515 : vector<4x8x1xf32> to vector<4x8x64xf32>
    %517 = arith.subf %509, %516 : vector<4x8x64xf32>
    %518 = arith.mulf %517, %517 : vector<4x8x64xf32>
    %cst_228 = arith.constant dense<0.000000e+00> : vector<4x8xf32>
    %519 = vector.multi_reduction <add>, %518, %cst_228 [2] : vector<4x8x64xf32> to vector<4x8xf32>
    %520 = vector.shape_cast %519 : vector<4x8xf32> to vector<4x8x1xf32>
    %cst_229 = arith.constant 6.400000e+01 : f32
    %521 = vector.broadcast %cst_229 : f32 to vector<4x8x1xf32>
    %522 = arith.divf %520, %521 : vector<4x8x1xf32>
    %cst_230 = arith.constant 9.99999974E-6 : f32
    %523 = vector.broadcast %cst_230 : f32 to vector<4x8x1xf32>
    %524 = arith.addf %522, %523 : vector<4x8x1xf32>
    %525 = math.rsqrt %524 : vector<4x8x1xf32>
    %526 = vector.broadcast %525 : vector<4x8x1xf32> to vector<4x8x64xf32>
    %527 = arith.mulf %517, %526 : vector<4x8x64xf32>
    %528 = vector.shape_cast %510 : vector<1x64xf32> to vector<1x1x64xf32>
    %529 = vector.broadcast %528 : vector<1x1x64xf32> to vector<4x8x64xf32>
    %530 = arith.mulf %527, %529 : vector<4x8x64xf32>
    %531 = vector.shape_cast %511 : vector<1x64xf32> to vector<1x1x64xf32>
    %532 = vector.broadcast %531 : vector<1x1x64xf32> to vector<4x8x64xf32>
    %533 = arith.addf %530, %532 : vector<4x8x64xf32>
    %534 = vector.shape_cast %533 : vector<4x8x64xf32> to vector<32x64xf32>
    %535 = tpu.iota {dimensions = array<i32: 0>} : vector<64x32xi32>
    %536 = tpu.iota {dimensions = array<i32: 1>} : vector<64x32xi32>
    %c2_i32 = arith.constant 2 : i32
    %537 = vector.broadcast %c2_i32 : i32 to vector<64x32xi32>
    %538 = arith.muli %537, %536 : vector<64x32xi32>
    %539 = arith.cmpi eq, %535, %538 : vector<64x32xi32>
    %540 = arith.extui %539 : vector<64x32xi1> to vector<64x32xi32>
    %541 = arith.sitofp %540 : vector<64x32xi32> to vector<64x32xf32>
    %c2_i32_231 = arith.constant 2 : i32
    %542 = vector.broadcast %c2_i32_231 : i32 to vector<64x32xi32>
    %543 = arith.muli %542, %536 : vector<64x32xi32>
    %c1_i32 = arith.constant 1 : i32
    %544 = vector.broadcast %c1_i32 : i32 to vector<64x32xi32>
    %545 = arith.addi %543, %544 : vector<64x32xi32>
    %546 = arith.cmpi eq, %535, %545 : vector<64x32xi32>
    %547 = arith.extui %546 : vector<64x32xi1> to vector<64x32xi32>
    %548 = arith.sitofp %547 : vector<64x32xi32> to vector<64x32xf32>
    %cst_232 = arith.constant dense<0.000000e+00> : vector<32x32xf32>
    %549 = tpu.matmul %534, %541, %cst_232 {dimension_numbers = #tpu.dot_dimension_numbers<[1], [0], [0], [1], [0, 0, 1, 1], [], []>} : vector<32x64xf32>, vector<64x32xf32>, vector<32x32xf32> -> vector<32x32xf32>
    %cst_233 = arith.constant dense<0.000000e+00> : vector<32x32xf32>
    %550 = tpu.matmul %534, %548, %cst_233 {dimension_numbers = #tpu.dot_dimension_numbers<[1], [0], [0], [1], [0, 0, 1, 1], [], []>} : vector<32x64xf32>, vector<64x32xf32>, vector<32x32xf32> -> vector<32x32xf32>
    %551 = arith.maximumf %549, %550 : vector<32x32xf32>
    %552 = vector.shape_cast %551 : vector<32x32xf32> to vector<4x8x32xf32>
    %c0_234 = arith.constant 0 : index
    %c0_235 = arith.constant 0 : index
    %c0_236 = arith.constant 0 : index
    %553 = vector.load %arg19[%c0_234, %c0_235, %c0_236] : memref<4x8x32xf32, #tpu.memory_space<vmem>>, vector<4x8x32xf32>
    tpu.vector_store %arg19[%c0_234, %c0_235, %c0_236], %552 {strides = array<i32>} : memref<4x8x32xf32, #tpu.memory_space<vmem>>, vector<4x8x32xf32>,
    return
  }
  func.func @transform_0(%arg0: i32) -> (i32, i32, i32) {
    %c0_i32 = arith.constant 0 : i32
    %c0_i32_0 = arith.constant 0 : i32
    %c0_i32_1 = arith.constant 0 : i32
    return %c0_i32, %arg0, %c0_i32_0 : i32, i32, i32
  }
  func.func @transform_1(%arg0: i32) -> (i32, i32, i32) {
    %c0_i32 = arith.constant 0 : i32
    %c0_i32_0 = arith.constant 0 : i32
    %c0_i32_1 = arith.constant 0 : i32
    return %c0_i32, %arg0, %c0_i32_0 : i32, i32, i32
  }
  func.func @transform_2(%arg0: i32) -> (i32, i32) {
    %c0_i32 = arith.constant 0 : i32
    %c0_i32_0 = arith.constant 0 : i32
    %c0_i32_1 = arith.constant 0 : i32
    return %c0_i32, %c0_i32_0 : i32, i32
  }
  func.func @transform_3(%arg0: i32) -> (i32, i32) {
    %c0_i32 = arith.constant 0 : i32
    %c0_i32_0 = arith.constant 0 : i32
    %c0_i32_1 = arith.constant 0 : i32
    return %c0_i32, %c0_i32_0 : i32, i32
  }
  func.func @transform_4(%arg0: i32) -> (i32, i32) {
    %c0_i32 = arith.constant 0 : i32
    %c0_i32_0 = arith.constant 0 : i32
    %c0_i32_1 = arith.constant 0 : i32
    return %c0_i32, %c0_i32_0 : i32, i32
  }
  func.func @transform_5(%arg0: i32) -> (i32, i32) {
    %c0_i32 = arith.constant 0 : i32
    %c0_i32_0 = arith.constant 0 : i32
    %c0_i32_1 = arith.constant 0 : i32
    return %c0_i32, %c0_i32_0 : i32, i32
  }
  func.func @transform_6(%arg0: i32) -> (i32, i32) {
    %c0_i32 = arith.constant 0 : i32
    %c0_i32_0 = arith.constant 0 : i32
    %c0_i32_1 = arith.constant 0 : i32
    return %c0_i32, %c0_i32_0 : i32, i32
  }
  func.func @transform_7(%arg0: i32) -> (i32, i32) {
    %c0_i32 = arith.constant 0 : i32
    %c0_i32_0 = arith.constant 0 : i32
    %c0_i32_1 = arith.constant 0 : i32
    return %c0_i32, %c0_i32_0 : i32, i32
  }
  func.func @transform_8(%arg0: i32) -> (i32, i32) {
    %c0_i32 = arith.constant 0 : i32
    %c0_i32_0 = arith.constant 0 : i32
    %c0_i32_1 = arith.constant 0 : i32
    return %c0_i32, %c0_i32_0 : i32, i32
  }
  func.func @transform_9(%arg0: i32) -> (i32, i32) {
    %c0_i32 = arith.constant 0 : i32
    %c0_i32_0 = arith.constant 0 : i32
    %c0_i32_1 = arith.constant 0 : i32
    return %c0_i32, %c0_i32_0 : i32, i32
  }
  func.func @transform_10(%arg0: i32) -> (i32, i32) {
    %c0_i32 = arith.constant 0 : i32
    %c0_i32_0 = arith.constant 0 : i32
    %c0_i32_1 = arith.constant 0 : i32
    return %c0_i32, %c0_i32_0 : i32, i32
  }
  func.func @transform_11(%arg0: i32) -> (i32, i32) {
    %c0_i32 = arith.constant 0 : i32
    %c0_i32_0 = arith.constant 0 : i32
    %c0_i32_1 = arith.constant 0 : i32
    return %c0_i32, %c0_i32_0 : i32, i32
  }
  func.func @transform_12(%arg0: i32) -> (i32, i32) {
    %c0_i32 = arith.constant 0 : i32
    %c0_i32_0 = arith.constant 0 : i32
    %c0_i32_1 = arith.constant 0 : i32
    return %c0_i32, %c0_i32_0 : i32, i32
  }
  func.func @transform_13(%arg0: i32) -> (i32, i32) {
    %c0_i32 = arith.constant 0 : i32
    %c0_i32_0 = arith.constant 0 : i32
    %c0_i32_1 = arith.constant 0 : i32
    return %c0_i32, %c0_i32_0 : i32, i32
  }
  func.func @transform_14(%arg0: i32) -> (i32, i32) {
    %c0_i32 = arith.constant 0 : i32
    %c0_i32_0 = arith.constant 0 : i32
    %c0_i32_1 = arith.constant 0 : i32
    return %c0_i32, %c0_i32_0 : i32, i32
  }
  func.func @transform_15(%arg0: i32) -> (i32, i32) {
    %c0_i32 = arith.constant 0 : i32
    %c0_i32_0 = arith.constant 0 : i32
    %c0_i32_1 = arith.constant 0 : i32
    return %c0_i32, %c0_i32_0 : i32, i32
  }
  func.func @transform_16(%arg0: i32) -> (i32, i32) {
    %c0_i32 = arith.constant 0 : i32
    %c0_i32_0 = arith.constant 0 : i32
    %c0_i32_1 = arith.constant 0 : i32
    return %c0_i32, %c0_i32_0 : i32, i32
  }
  func.func @transform_17(%arg0: i32) -> (i32, i32) {
    %c0_i32 = arith.constant 0 : i32
    %c0_i32_0 = arith.constant 0 : i32
    %c0_i32_1 = arith.constant 0 : i32
    return %c0_i32, %c0_i32_0 : i32, i32
  }
  func.func @transform_18(%arg0: i32) -> (i32, i32, i32) {
    %c0_i32 = arith.constant 0 : i32
    %c0_i32_0 = arith.constant 0 : i32
    %c0_i32_1 = arith.constant 0 : i32
    return %c0_i32, %arg0, %c0_i32_0 : i32, i32, i32
  }
}

module attributes {stable_mosaic.version = 11 : i64} {
  func.func @path_model_kernel(%arg0: i32, %arg1: memref<9x8x32xf32, #tpu.memory_space<vmem>>, %arg2: memref<9x8x1xf32, #tpu.memory_space<vmem>>, %arg3: memref<1x32xf32, #tpu.memory_space<vmem>>, %arg4: memref<1x32xf32, #tpu.memory_space<vmem>>, %arg5: memref<1x32xf32, #tpu.memory_space<vmem>>, %arg6: memref<1x32xf32, #tpu.memory_space<vmem>>, %arg7: memref<1x32xf32, #tpu.memory_space<vmem>>, %arg8: memref<1x32xf32, #tpu.memory_space<vmem>>, %arg9: memref<32x16xf32, #tpu.memory_space<vmem>>, %arg10: memref<1x16xf32, #tpu.memory_space<vmem>>, %arg11: memref<16x32xf32, #tpu.memory_space<vmem>>, %arg12: memref<1x32xf32, #tpu.memory_space<vmem>>, %arg13: memref<1x32xf32, #tpu.memory_space<vmem>>, %arg14: memref<4x9xf32, #tpu.memory_space<smem>>, %arg15: memref<4x1xf32, #tpu.memory_space<smem>>, %arg16: memref<9x4xf32, #tpu.memory_space<smem>>, %arg17: memref<9x1xf32, #tpu.memory_space<smem>>, %arg18: memref<1x1xf32, #tpu.memory_space<smem>>, %arg19: memref<8x32xf32, #tpu.memory_space<vmem>>, %arg20: memref<8x8x32xf32, #tpu.memory_space<vmem>>) attributes {dimension_semantics = [#tpu.dimension_semantics<parallel>], iteration_bounds = array<i64: 1>, scalar_prefetch = 0 : i64, scratch_operands = 0 : i64, tpu.core_type = #tpu.core_type<tc>, window_params = [{transform_indices = @transform_0, window_bounds = array<i64: 9, 8, 32>}, {transform_indices = @transform_1, window_bounds = array<i64: 9, 8, 1>}, {pipeline_mode = #tpu.pipeline_mode<synchronous>, transform_indices = @transform_2, window_bounds = array<i64: 1, 32>}, {pipeline_mode = #tpu.pipeline_mode<synchronous>, transform_indices = @transform_3, window_bounds = array<i64: 1, 32>}, {pipeline_mode = #tpu.pipeline_mode<synchronous>, transform_indices = @transform_4, window_bounds = array<i64: 1, 32>}, {pipeline_mode = #tpu.pipeline_mode<synchronous>, transform_indices = @transform_5, window_bounds = array<i64: 1, 32>}, {pipeline_mode = #tpu.pipeline_mode<synchronous>, transform_indices = @transform_6, window_bounds = array<i64: 1, 32>}, {pipeline_mode = #tpu.pipeline_mode<synchronous>, transform_indices = @transform_7, window_bounds = array<i64: 1, 32>}, {pipeline_mode = #tpu.pipeline_mode<synchronous>, transform_indices = @transform_8, window_bounds = array<i64: 32, 16>}, {pipeline_mode = #tpu.pipeline_mode<synchronous>, transform_indices = @transform_9, window_bounds = array<i64: 1, 16>}, {pipeline_mode = #tpu.pipeline_mode<synchronous>, transform_indices = @transform_10, window_bounds = array<i64: 16, 32>}, {pipeline_mode = #tpu.pipeline_mode<synchronous>, transform_indices = @transform_11, window_bounds = array<i64: 1, 32>}, {pipeline_mode = #tpu.pipeline_mode<synchronous>, transform_indices = @transform_12, window_bounds = array<i64: 1, 32>}, {transform_indices = @transform_13, window_bounds = array<i64: 4, 9>}, {transform_indices = @transform_14, window_bounds = array<i64: 4, 1>}, {transform_indices = @transform_15, window_bounds = array<i64: 9, 4>}, {transform_indices = @transform_16, window_bounds = array<i64: 9, 1>}, {transform_indices = @transform_17, window_bounds = array<i64: 1, 1>}, {transform_indices = @transform_18, window_bounds = array<i64: 8, 32>}, {transform_indices = @transform_19, window_bounds = array<i64: 8, 8, 32>}]} {
    %c0 = arith.constant 0 : index
    %c0_0 = arith.constant 0 : index
    %c0_1 = arith.constant 0 : index
    %0 = vector.load %arg1[%c0, %c0_0, %c0_1] : memref<9x8x32xf32, #tpu.memory_space<vmem>>, vector<9x8x32xf32>
    %c0_2 = arith.constant 0 : index
    %c0_3 = arith.constant 0 : index
    %c0_4 = arith.constant 0 : index
    %1 = vector.load %arg2[%c0_2, %c0_3, %c0_4] : memref<9x8x1xf32, #tpu.memory_space<vmem>>, vector<9x8x1xf32>
    %2 = vector.broadcast %1 : vector<9x8x1xf32> to vector<9x8x32xf32>
    %3 = arith.mulf %0, %2 : vector<9x8x32xf32>
    %c0_5 = arith.constant 0 : index
    %c0_6 = arith.constant 0 : index
    %4 = vector.load %arg3[%c0_5, %c0_6] : memref<1x32xf32, #tpu.memory_space<vmem>>, vector<1x32xf32>
    %c0_7 = arith.constant 0 : index
    %c0_8 = arith.constant 0 : index
    %5 = vector.load %arg4[%c0_7, %c0_8] : memref<1x32xf32, #tpu.memory_space<vmem>>, vector<1x32xf32>
    %cst = arith.constant dense<0.000000e+00> : vector<9x8xf32>
    %6 = vector.multi_reduction <add>, %3, %cst [2] : vector<9x8x32xf32> to vector<9x8xf32>
    %7 = vector.shape_cast %6 : vector<9x8xf32> to vector<9x8x1xf32>
    %cst_9 = arith.constant 3.200000e+01 : f32
    %8 = vector.broadcast %cst_9 : f32 to vector<9x8x1xf32>
    %9 = arith.divf %7, %8 : vector<9x8x1xf32>
    %10 = vector.broadcast %9 : vector<9x8x1xf32> to vector<9x8x32xf32>
    %11 = arith.subf %3, %10 : vector<9x8x32xf32>
    %12 = arith.mulf %11, %11 : vector<9x8x32xf32>
    %cst_10 = arith.constant dense<0.000000e+00> : vector<9x8xf32>
    %13 = vector.multi_reduction <add>, %12, %cst_10 [2] : vector<9x8x32xf32> to vector<9x8xf32>
    %14 = vector.shape_cast %13 : vector<9x8xf32> to vector<9x8x1xf32>
    %cst_11 = arith.constant 3.200000e+01 : f32
    %15 = vector.broadcast %cst_11 : f32 to vector<9x8x1xf32>
    %16 = arith.divf %14, %15 : vector<9x8x1xf32>
    %cst_12 = arith.constant 9.99999974E-6 : f32
    %17 = vector.broadcast %cst_12 : f32 to vector<9x8x1xf32>
    %18 = arith.addf %16, %17 : vector<9x8x1xf32>
    %19 = math.rsqrt %18 : vector<9x8x1xf32>
    %20 = vector.broadcast %19 : vector<9x8x1xf32> to vector<9x8x32xf32>
    %21 = arith.mulf %11, %20 : vector<9x8x32xf32>
    %22 = vector.shape_cast %4 : vector<1x32xf32> to vector<1x1x32xf32>
    %23 = vector.broadcast %22 : vector<1x1x32xf32> to vector<9x8x32xf32>
    %24 = arith.mulf %21, %23 : vector<9x8x32xf32>
    %25 = vector.shape_cast %5 : vector<1x32xf32> to vector<1x1x32xf32>
    %26 = vector.broadcast %25 : vector<1x1x32xf32> to vector<9x8x32xf32>
    %27 = arith.addf %24, %26 : vector<9x8x32xf32>
    %28 = vector.extract_strided_slice %27 {offsets = [0, 0, 0], sizes = [1, 8, 32], strides = [1, 1, 1]} : vector<9x8x32xf32> to vector<1x8x32xf32>
    %29 = vector.shape_cast %28 : vector<1x8x32xf32> to vector<8x32xf32>
    %30 = vector.extract_strided_slice %27 {offsets = [1, 0, 0], sizes = [1, 8, 32], strides = [1, 1, 1]} : vector<9x8x32xf32> to vector<1x8x32xf32>
    %31 = vector.shape_cast %30 : vector<1x8x32xf32> to vector<8x32xf32>
    %32 = vector.extract_strided_slice %27 {offsets = [2, 0, 0], sizes = [1, 8, 32], strides = [1, 1, 1]} : vector<9x8x32xf32> to vector<1x8x32xf32>
    %33 = vector.shape_cast %32 : vector<1x8x32xf32> to vector<8x32xf32>
    %34 = vector.extract_strided_slice %27 {offsets = [3, 0, 0], sizes = [1, 8, 32], strides = [1, 1, 1]} : vector<9x8x32xf32> to vector<1x8x32xf32>
    %35 = vector.shape_cast %34 : vector<1x8x32xf32> to vector<8x32xf32>
    %36 = vector.extract_strided_slice %27 {offsets = [4, 0, 0], sizes = [1, 8, 32], strides = [1, 1, 1]} : vector<9x8x32xf32> to vector<1x8x32xf32>
    %37 = vector.shape_cast %36 : vector<1x8x32xf32> to vector<8x32xf32>
    %38 = vector.extract_strided_slice %27 {offsets = [5, 0, 0], sizes = [1, 8, 32], strides = [1, 1, 1]} : vector<9x8x32xf32> to vector<1x8x32xf32>
    %39 = vector.shape_cast %38 : vector<1x8x32xf32> to vector<8x32xf32>
    %40 = vector.extract_strided_slice %27 {offsets = [6, 0, 0], sizes = [1, 8, 32], strides = [1, 1, 1]} : vector<9x8x32xf32> to vector<1x8x32xf32>
    %41 = vector.shape_cast %40 : vector<1x8x32xf32> to vector<8x32xf32>
    %42 = vector.extract_strided_slice %27 {offsets = [7, 0, 0], sizes = [1, 8, 32], strides = [1, 1, 1]} : vector<9x8x32xf32> to vector<1x8x32xf32>
    %43 = vector.shape_cast %42 : vector<1x8x32xf32> to vector<8x32xf32>
    %44 = vector.extract_strided_slice %27 {offsets = [8, 0, 0], sizes = [1, 8, 32], strides = [1, 1, 1]} : vector<9x8x32xf32> to vector<1x8x32xf32>
    %45 = vector.shape_cast %44 : vector<1x8x32xf32> to vector<8x32xf32>
    %c0_13 = arith.constant 0 : index
    %c0_14 = arith.constant 0 : index
    %46 = memref.load %arg14[%c0_13, %c0_14] : memref<4x9xf32, #tpu.memory_space<smem>>
    %47 = vector.broadcast %46 : f32 to vector<8x32xf32>
    %48 = arith.mulf %47, %29 : vector<8x32xf32>
    %c0_15 = arith.constant 0 : index
    %c1 = arith.constant 1 : index
    %49 = memref.load %arg14[%c0_15, %c1] : memref<4x9xf32, #tpu.memory_space<smem>>
    %50 = vector.broadcast %49 : f32 to vector<8x32xf32>
    %51 = arith.mulf %50, %31 : vector<8x32xf32>
    %52 = arith.addf %48, %51 : vector<8x32xf32>
    %c0_16 = arith.constant 0 : index
    %c2 = arith.constant 2 : index
    %53 = memref.load %arg14[%c0_16, %c2] : memref<4x9xf32, #tpu.memory_space<smem>>
    %54 = vector.broadcast %53 : f32 to vector<8x32xf32>
    %55 = arith.mulf %54, %33 : vector<8x32xf32>
    %56 = arith.addf %52, %55 : vector<8x32xf32>
    %c0_17 = arith.constant 0 : index
    %c3 = arith.constant 3 : index
    %57 = memref.load %arg14[%c0_17, %c3] : memref<4x9xf32, #tpu.memory_space<smem>>
    %58 = vector.broadcast %57 : f32 to vector<8x32xf32>
    %59 = arith.mulf %58, %35 : vector<8x32xf32>
    %60 = arith.addf %56, %59 : vector<8x32xf32>
    %c0_18 = arith.constant 0 : index
    %c4 = arith.constant 4 : index
    %61 = memref.load %arg14[%c0_18, %c4] : memref<4x9xf32, #tpu.memory_space<smem>>
    %62 = vector.broadcast %61 : f32 to vector<8x32xf32>
    %63 = arith.mulf %62, %37 : vector<8x32xf32>
    %64 = arith.addf %60, %63 : vector<8x32xf32>
    %c0_19 = arith.constant 0 : index
    %c5 = arith.constant 5 : index
    %65 = memref.load %arg14[%c0_19, %c5] : memref<4x9xf32, #tpu.memory_space<smem>>
    %66 = vector.broadcast %65 : f32 to vector<8x32xf32>
    %67 = arith.mulf %66, %39 : vector<8x32xf32>
    %68 = arith.addf %64, %67 : vector<8x32xf32>
    %c0_20 = arith.constant 0 : index
    %c6 = arith.constant 6 : index
    %69 = memref.load %arg14[%c0_20, %c6] : memref<4x9xf32, #tpu.memory_space<smem>>
    %70 = vector.broadcast %69 : f32 to vector<8x32xf32>
    %71 = arith.mulf %70, %41 : vector<8x32xf32>
    %72 = arith.addf %68, %71 : vector<8x32xf32>
    %c0_21 = arith.constant 0 : index
    %c7 = arith.constant 7 : index
    %73 = memref.load %arg14[%c0_21, %c7] : memref<4x9xf32, #tpu.memory_space<smem>>
    %74 = vector.broadcast %73 : f32 to vector<8x32xf32>
    %75 = arith.mulf %74, %43 : vector<8x32xf32>
    %76 = arith.addf %72, %75 : vector<8x32xf32>
    %c0_22 = arith.constant 0 : index
    %c8 = arith.constant 8 : index
    %77 = memref.load %arg14[%c0_22, %c8] : memref<4x9xf32, #tpu.memory_space<smem>>
    %78 = vector.broadcast %77 : f32 to vector<8x32xf32>
    %79 = arith.mulf %78, %45 : vector<8x32xf32>
    %80 = arith.addf %76, %79 : vector<8x32xf32>
    %c0_23 = arith.constant 0 : index
    %c0_24 = arith.constant 0 : index
    %81 = memref.load %arg15[%c0_23, %c0_24] : memref<4x1xf32, #tpu.memory_space<smem>>
    %82 = vector.broadcast %81 : f32 to vector<8x32xf32>
    %83 = arith.addf %80, %82 : vector<8x32xf32>
    %84 = arith.mulf %83, %83 : vector<8x32xf32>
    %85 = arith.mulf %83, %84 : vector<8x32xf32>
    %cst_25 = arith.constant 4.471500e-02 : f32
    %86 = vector.broadcast %cst_25 : f32 to vector<8x32xf32>
    %87 = arith.mulf %86, %85 : vector<8x32xf32>
    %88 = arith.addf %83, %87 : vector<8x32xf32>
    %cst_26 = arith.constant 0.797884583 : f32
    %89 = vector.broadcast %cst_26 : f32 to vector<8x32xf32>
    %90 = arith.mulf %89, %88 : vector<8x32xf32>
    %91 = math.tanh %90 : vector<8x32xf32>
    %cst_27 = arith.constant 1.000000e+00 : f32
    %92 = vector.broadcast %cst_27 : f32 to vector<8x32xf32>
    %93 = arith.addf %92, %91 : vector<8x32xf32>
    %cst_28 = arith.constant 5.000000e-01 : f32
    %94 = vector.broadcast %cst_28 : f32 to vector<8x32xf32>
    %95 = arith.mulf %94, %93 : vector<8x32xf32>
    %96 = arith.mulf %83, %95 : vector<8x32xf32>
    %c1_29 = arith.constant 1 : index
    %c0_30 = arith.constant 0 : index
    %97 = memref.load %arg14[%c1_29, %c0_30] : memref<4x9xf32, #tpu.memory_space<smem>>
    %98 = vector.broadcast %97 : f32 to vector<8x32xf32>
    %99 = arith.mulf %98, %29 : vector<8x32xf32>
    %c1_31 = arith.constant 1 : index
    %c1_32 = arith.constant 1 : index
    %100 = memref.load %arg14[%c1_31, %c1_32] : memref<4x9xf32, #tpu.memory_space<smem>>
    %101 = vector.broadcast %100 : f32 to vector<8x32xf32>
    %102 = arith.mulf %101, %31 : vector<8x32xf32>
    %103 = arith.addf %99, %102 : vector<8x32xf32>
    %c1_33 = arith.constant 1 : index
    %c2_34 = arith.constant 2 : index
    %104 = memref.load %arg14[%c1_33, %c2_34] : memref<4x9xf32, #tpu.memory_space<smem>>
    %105 = vector.broadcast %104 : f32 to vector<8x32xf32>
    %106 = arith.mulf %105, %33 : vector<8x32xf32>
    %107 = arith.addf %103, %106 : vector<8x32xf32>
    %c1_35 = arith.constant 1 : index
    %c3_36 = arith.constant 3 : index
    %108 = memref.load %arg14[%c1_35, %c3_36] : memref<4x9xf32, #tpu.memory_space<smem>>
    %109 = vector.broadcast %108 : f32 to vector<8x32xf32>
    %110 = arith.mulf %109, %35 : vector<8x32xf32>
    %111 = arith.addf %107, %110 : vector<8x32xf32>
    %c1_37 = arith.constant 1 : index
    %c4_38 = arith.constant 4 : index
    %112 = memref.load %arg14[%c1_37, %c4_38] : memref<4x9xf32, #tpu.memory_space<smem>>
    %113 = vector.broadcast %112 : f32 to vector<8x32xf32>
    %114 = arith.mulf %113, %37 : vector<8x32xf32>
    %115 = arith.addf %111, %114 : vector<8x32xf32>
    %c1_39 = arith.constant 1 : index
    %c5_40 = arith.constant 5 : index
    %116 = memref.load %arg14[%c1_39, %c5_40] : memref<4x9xf32, #tpu.memory_space<smem>>
    %117 = vector.broadcast %116 : f32 to vector<8x32xf32>
    %118 = arith.mulf %117, %39 : vector<8x32xf32>
    %119 = arith.addf %115, %118 : vector<8x32xf32>
    %c1_41 = arith.constant 1 : index
    %c6_42 = arith.constant 6 : index
    %120 = memref.load %arg14[%c1_41, %c6_42] : memref<4x9xf32, #tpu.memory_space<smem>>
    %121 = vector.broadcast %120 : f32 to vector<8x32xf32>
    %122 = arith.mulf %121, %41 : vector<8x32xf32>
    %123 = arith.addf %119, %122 : vector<8x32xf32>
    %c1_43 = arith.constant 1 : index
    %c7_44 = arith.constant 7 : index
    %124 = memref.load %arg14[%c1_43, %c7_44] : memref<4x9xf32, #tpu.memory_space<smem>>
    %125 = vector.broadcast %124 : f32 to vector<8x32xf32>
    %126 = arith.mulf %125, %43 : vector<8x32xf32>
    %127 = arith.addf %123, %126 : vector<8x32xf32>
    %c1_45 = arith.constant 1 : index
    %c8_46 = arith.constant 8 : index
    %128 = memref.load %arg14[%c1_45, %c8_46] : memref<4x9xf32, #tpu.memory_space<smem>>
    %129 = vector.broadcast %128 : f32 to vector<8x32xf32>
    %130 = arith.mulf %129, %45 : vector<8x32xf32>
    %131 = arith.addf %127, %130 : vector<8x32xf32>
    %c1_47 = arith.constant 1 : index
    %c0_48 = arith.constant 0 : index
    %132 = memref.load %arg15[%c1_47, %c0_48] : memref<4x1xf32, #tpu.memory_space<smem>>
    %133 = vector.broadcast %132 : f32 to vector<8x32xf32>
    %134 = arith.addf %131, %133 : vector<8x32xf32>
    %135 = arith.mulf %134, %134 : vector<8x32xf32>
    %136 = arith.mulf %134, %135 : vector<8x32xf32>
    %cst_49 = arith.constant 4.471500e-02 : f32
    %137 = vector.broadcast %cst_49 : f32 to vector<8x32xf32>
    %138 = arith.mulf %137, %136 : vector<8x32xf32>
    %139 = arith.addf %134, %138 : vector<8x32xf32>
    %cst_50 = arith.constant 0.797884583 : f32
    %140 = vector.broadcast %cst_50 : f32 to vector<8x32xf32>
    %141 = arith.mulf %140, %139 : vector<8x32xf32>
    %142 = math.tanh %141 : vector<8x32xf32>
    %cst_51 = arith.constant 1.000000e+00 : f32
    %143 = vector.broadcast %cst_51 : f32 to vector<8x32xf32>
    %144 = arith.addf %143, %142 : vector<8x32xf32>
    %cst_52 = arith.constant 5.000000e-01 : f32
    %145 = vector.broadcast %cst_52 : f32 to vector<8x32xf32>
    %146 = arith.mulf %145, %144 : vector<8x32xf32>
    %147 = arith.mulf %134, %146 : vector<8x32xf32>
    %c2_53 = arith.constant 2 : index
    %c0_54 = arith.constant 0 : index
    %148 = memref.load %arg14[%c2_53, %c0_54] : memref<4x9xf32, #tpu.memory_space<smem>>
    %149 = vector.broadcast %148 : f32 to vector<8x32xf32>
    %150 = arith.mulf %149, %29 : vector<8x32xf32>
    %c2_55 = arith.constant 2 : index
    %c1_56 = arith.constant 1 : index
    %151 = memref.load %arg14[%c2_55, %c1_56] : memref<4x9xf32, #tpu.memory_space<smem>>
    %152 = vector.broadcast %151 : f32 to vector<8x32xf32>
    %153 = arith.mulf %152, %31 : vector<8x32xf32>
    %154 = arith.addf %150, %153 : vector<8x32xf32>
    %c2_57 = arith.constant 2 : index
    %c2_58 = arith.constant 2 : index
    %155 = memref.load %arg14[%c2_57, %c2_58] : memref<4x9xf32, #tpu.memory_space<smem>>
    %156 = vector.broadcast %155 : f32 to vector<8x32xf32>
    %157 = arith.mulf %156, %33 : vector<8x32xf32>
    %158 = arith.addf %154, %157 : vector<8x32xf32>
    %c2_59 = arith.constant 2 : index
    %c3_60 = arith.constant 3 : index
    %159 = memref.load %arg14[%c2_59, %c3_60] : memref<4x9xf32, #tpu.memory_space<smem>>
    %160 = vector.broadcast %159 : f32 to vector<8x32xf32>
    %161 = arith.mulf %160, %35 : vector<8x32xf32>
    %162 = arith.addf %158, %161 : vector<8x32xf32>
    %c2_61 = arith.constant 2 : index
    %c4_62 = arith.constant 4 : index
    %163 = memref.load %arg14[%c2_61, %c4_62] : memref<4x9xf32, #tpu.memory_space<smem>>
    %164 = vector.broadcast %163 : f32 to vector<8x32xf32>
    %165 = arith.mulf %164, %37 : vector<8x32xf32>
    %166 = arith.addf %162, %165 : vector<8x32xf32>
    %c2_63 = arith.constant 2 : index
    %c5_64 = arith.constant 5 : index
    %167 = memref.load %arg14[%c2_63, %c5_64] : memref<4x9xf32, #tpu.memory_space<smem>>
    %168 = vector.broadcast %167 : f32 to vector<8x32xf32>
    %169 = arith.mulf %168, %39 : vector<8x32xf32>
    %170 = arith.addf %166, %169 : vector<8x32xf32>
    %c2_65 = arith.constant 2 : index
    %c6_66 = arith.constant 6 : index
    %171 = memref.load %arg14[%c2_65, %c6_66] : memref<4x9xf32, #tpu.memory_space<smem>>
    %172 = vector.broadcast %171 : f32 to vector<8x32xf32>
    %173 = arith.mulf %172, %41 : vector<8x32xf32>
    %174 = arith.addf %170, %173 : vector<8x32xf32>
    %c2_67 = arith.constant 2 : index
    %c7_68 = arith.constant 7 : index
    %175 = memref.load %arg14[%c2_67, %c7_68] : memref<4x9xf32, #tpu.memory_space<smem>>
    %176 = vector.broadcast %175 : f32 to vector<8x32xf32>
    %177 = arith.mulf %176, %43 : vector<8x32xf32>
    %178 = arith.addf %174, %177 : vector<8x32xf32>
    %c2_69 = arith.constant 2 : index
    %c8_70 = arith.constant 8 : index
    %179 = memref.load %arg14[%c2_69, %c8_70] : memref<4x9xf32, #tpu.memory_space<smem>>
    %180 = vector.broadcast %179 : f32 to vector<8x32xf32>
    %181 = arith.mulf %180, %45 : vector<8x32xf32>
    %182 = arith.addf %178, %181 : vector<8x32xf32>
    %c2_71 = arith.constant 2 : index
    %c0_72 = arith.constant 0 : index
    %183 = memref.load %arg15[%c2_71, %c0_72] : memref<4x1xf32, #tpu.memory_space<smem>>
    %184 = vector.broadcast %183 : f32 to vector<8x32xf32>
    %185 = arith.addf %182, %184 : vector<8x32xf32>
    %186 = arith.mulf %185, %185 : vector<8x32xf32>
    %187 = arith.mulf %185, %186 : vector<8x32xf32>
    %cst_73 = arith.constant 4.471500e-02 : f32
    %188 = vector.broadcast %cst_73 : f32 to vector<8x32xf32>
    %189 = arith.mulf %188, %187 : vector<8x32xf32>
    %190 = arith.addf %185, %189 : vector<8x32xf32>
    %cst_74 = arith.constant 0.797884583 : f32
    %191 = vector.broadcast %cst_74 : f32 to vector<8x32xf32>
    %192 = arith.mulf %191, %190 : vector<8x32xf32>
    %193 = math.tanh %192 : vector<8x32xf32>
    %cst_75 = arith.constant 1.000000e+00 : f32
    %194 = vector.broadcast %cst_75 : f32 to vector<8x32xf32>
    %195 = arith.addf %194, %193 : vector<8x32xf32>
    %cst_76 = arith.constant 5.000000e-01 : f32
    %196 = vector.broadcast %cst_76 : f32 to vector<8x32xf32>
    %197 = arith.mulf %196, %195 : vector<8x32xf32>
    %198 = arith.mulf %185, %197 : vector<8x32xf32>
    %c3_77 = arith.constant 3 : index
    %c0_78 = arith.constant 0 : index
    %199 = memref.load %arg14[%c3_77, %c0_78] : memref<4x9xf32, #tpu.memory_space<smem>>
    %200 = vector.broadcast %199 : f32 to vector<8x32xf32>
    %201 = arith.mulf %200, %29 : vector<8x32xf32>
    %c3_79 = arith.constant 3 : index
    %c1_80 = arith.constant 1 : index
    %202 = memref.load %arg14[%c3_79, %c1_80] : memref<4x9xf32, #tpu.memory_space<smem>>
    %203 = vector.broadcast %202 : f32 to vector<8x32xf32>
    %204 = arith.mulf %203, %31 : vector<8x32xf32>
    %205 = arith.addf %201, %204 : vector<8x32xf32>
    %c3_81 = arith.constant 3 : index
    %c2_82 = arith.constant 2 : index
    %206 = memref.load %arg14[%c3_81, %c2_82] : memref<4x9xf32, #tpu.memory_space<smem>>
    %207 = vector.broadcast %206 : f32 to vector<8x32xf32>
    %208 = arith.mulf %207, %33 : vector<8x32xf32>
    %209 = arith.addf %205, %208 : vector<8x32xf32>
    %c3_83 = arith.constant 3 : index
    %c3_84 = arith.constant 3 : index
    %210 = memref.load %arg14[%c3_83, %c3_84] : memref<4x9xf32, #tpu.memory_space<smem>>
    %211 = vector.broadcast %210 : f32 to vector<8x32xf32>
    %212 = arith.mulf %211, %35 : vector<8x32xf32>
    %213 = arith.addf %209, %212 : vector<8x32xf32>
    %c3_85 = arith.constant 3 : index
    %c4_86 = arith.constant 4 : index
    %214 = memref.load %arg14[%c3_85, %c4_86] : memref<4x9xf32, #tpu.memory_space<smem>>
    %215 = vector.broadcast %214 : f32 to vector<8x32xf32>
    %216 = arith.mulf %215, %37 : vector<8x32xf32>
    %217 = arith.addf %213, %216 : vector<8x32xf32>
    %c3_87 = arith.constant 3 : index
    %c5_88 = arith.constant 5 : index
    %218 = memref.load %arg14[%c3_87, %c5_88] : memref<4x9xf32, #tpu.memory_space<smem>>
    %219 = vector.broadcast %218 : f32 to vector<8x32xf32>
    %220 = arith.mulf %219, %39 : vector<8x32xf32>
    %221 = arith.addf %217, %220 : vector<8x32xf32>
    %c3_89 = arith.constant 3 : index
    %c6_90 = arith.constant 6 : index
    %222 = memref.load %arg14[%c3_89, %c6_90] : memref<4x9xf32, #tpu.memory_space<smem>>
    %223 = vector.broadcast %222 : f32 to vector<8x32xf32>
    %224 = arith.mulf %223, %41 : vector<8x32xf32>
    %225 = arith.addf %221, %224 : vector<8x32xf32>
    %c3_91 = arith.constant 3 : index
    %c7_92 = arith.constant 7 : index
    %226 = memref.load %arg14[%c3_91, %c7_92] : memref<4x9xf32, #tpu.memory_space<smem>>
    %227 = vector.broadcast %226 : f32 to vector<8x32xf32>
    %228 = arith.mulf %227, %43 : vector<8x32xf32>
    %229 = arith.addf %225, %228 : vector<8x32xf32>
    %c3_93 = arith.constant 3 : index
    %c8_94 = arith.constant 8 : index
    %230 = memref.load %arg14[%c3_93, %c8_94] : memref<4x9xf32, #tpu.memory_space<smem>>
    %231 = vector.broadcast %230 : f32 to vector<8x32xf32>
    %232 = arith.mulf %231, %45 : vector<8x32xf32>
    %233 = arith.addf %229, %232 : vector<8x32xf32>
    %c3_95 = arith.constant 3 : index
    %c0_96 = arith.constant 0 : index
    %234 = memref.load %arg15[%c3_95, %c0_96] : memref<4x1xf32, #tpu.memory_space<smem>>
    %235 = vector.broadcast %234 : f32 to vector<8x32xf32>
    %236 = arith.addf %233, %235 : vector<8x32xf32>
    %237 = arith.mulf %236, %236 : vector<8x32xf32>
    %238 = arith.mulf %236, %237 : vector<8x32xf32>
    %cst_97 = arith.constant 4.471500e-02 : f32
    %239 = vector.broadcast %cst_97 : f32 to vector<8x32xf32>
    %240 = arith.mulf %239, %238 : vector<8x32xf32>
    %241 = arith.addf %236, %240 : vector<8x32xf32>
    %cst_98 = arith.constant 0.797884583 : f32
    %242 = vector.broadcast %cst_98 : f32 to vector<8x32xf32>
    %243 = arith.mulf %242, %241 : vector<8x32xf32>
    %244 = math.tanh %243 : vector<8x32xf32>
    %cst_99 = arith.constant 1.000000e+00 : f32
    %245 = vector.broadcast %cst_99 : f32 to vector<8x32xf32>
    %246 = arith.addf %245, %244 : vector<8x32xf32>
    %cst_100 = arith.constant 5.000000e-01 : f32
    %247 = vector.broadcast %cst_100 : f32 to vector<8x32xf32>
    %248 = arith.mulf %247, %246 : vector<8x32xf32>
    %249 = arith.mulf %236, %248 : vector<8x32xf32>
    %c0_101 = arith.constant 0 : index
    %c0_102 = arith.constant 0 : index
    %250 = memref.load %arg16[%c0_101, %c0_102] : memref<9x4xf32, #tpu.memory_space<smem>>
    %251 = vector.broadcast %250 : f32 to vector<8x32xf32>
    %252 = arith.mulf %251, %96 : vector<8x32xf32>
    %c0_103 = arith.constant 0 : index
    %c1_104 = arith.constant 1 : index
    %253 = memref.load %arg16[%c0_103, %c1_104] : memref<9x4xf32, #tpu.memory_space<smem>>
    %254 = vector.broadcast %253 : f32 to vector<8x32xf32>
    %255 = arith.mulf %254, %147 : vector<8x32xf32>
    %256 = arith.addf %252, %255 : vector<8x32xf32>
    %c0_105 = arith.constant 0 : index
    %c2_106 = arith.constant 2 : index
    %257 = memref.load %arg16[%c0_105, %c2_106] : memref<9x4xf32, #tpu.memory_space<smem>>
    %258 = vector.broadcast %257 : f32 to vector<8x32xf32>
    %259 = arith.mulf %258, %198 : vector<8x32xf32>
    %260 = arith.addf %256, %259 : vector<8x32xf32>
    %c0_107 = arith.constant 0 : index
    %c3_108 = arith.constant 3 : index
    %261 = memref.load %arg16[%c0_107, %c3_108] : memref<9x4xf32, #tpu.memory_space<smem>>
    %262 = vector.broadcast %261 : f32 to vector<8x32xf32>
    %263 = arith.mulf %262, %249 : vector<8x32xf32>
    %264 = arith.addf %260, %263 : vector<8x32xf32>
    %265 = vector.extract_strided_slice %0 {offsets = [0, 0, 0], sizes = [1, 8, 32], strides = [1, 1, 1]} : vector<9x8x32xf32> to vector<1x8x32xf32>
    %266 = vector.shape_cast %265 : vector<1x8x32xf32> to vector<8x32xf32>
    %267 = arith.addf %266, %264 : vector<8x32xf32>
    %c0_109 = arith.constant 0 : index
    %c0_110 = arith.constant 0 : index
    %268 = memref.load %arg17[%c0_109, %c0_110] : memref<9x1xf32, #tpu.memory_space<smem>>
    %269 = vector.broadcast %268 : f32 to vector<8x32xf32>
    %270 = arith.addf %267, %269 : vector<8x32xf32>
    %c1_111 = arith.constant 1 : index
    %c0_112 = arith.constant 0 : index
    %271 = memref.load %arg16[%c1_111, %c0_112] : memref<9x4xf32, #tpu.memory_space<smem>>
    %272 = vector.broadcast %271 : f32 to vector<8x32xf32>
    %273 = arith.mulf %272, %96 : vector<8x32xf32>
    %c1_113 = arith.constant 1 : index
    %c1_114 = arith.constant 1 : index
    %274 = memref.load %arg16[%c1_113, %c1_114] : memref<9x4xf32, #tpu.memory_space<smem>>
    %275 = vector.broadcast %274 : f32 to vector<8x32xf32>
    %276 = arith.mulf %275, %147 : vector<8x32xf32>
    %277 = arith.addf %273, %276 : vector<8x32xf32>
    %c1_115 = arith.constant 1 : index
    %c2_116 = arith.constant 2 : index
    %278 = memref.load %arg16[%c1_115, %c2_116] : memref<9x4xf32, #tpu.memory_space<smem>>
    %279 = vector.broadcast %278 : f32 to vector<8x32xf32>
    %280 = arith.mulf %279, %198 : vector<8x32xf32>
    %281 = arith.addf %277, %280 : vector<8x32xf32>
    %c1_117 = arith.constant 1 : index
    %c3_118 = arith.constant 3 : index
    %282 = memref.load %arg16[%c1_117, %c3_118] : memref<9x4xf32, #tpu.memory_space<smem>>
    %283 = vector.broadcast %282 : f32 to vector<8x32xf32>
    %284 = arith.mulf %283, %249 : vector<8x32xf32>
    %285 = arith.addf %281, %284 : vector<8x32xf32>
    %286 = vector.extract_strided_slice %0 {offsets = [1, 0, 0], sizes = [1, 8, 32], strides = [1, 1, 1]} : vector<9x8x32xf32> to vector<1x8x32xf32>
    %287 = vector.shape_cast %286 : vector<1x8x32xf32> to vector<8x32xf32>
    %288 = arith.addf %287, %285 : vector<8x32xf32>
    %c1_119 = arith.constant 1 : index
    %c0_120 = arith.constant 0 : index
    %289 = memref.load %arg17[%c1_119, %c0_120] : memref<9x1xf32, #tpu.memory_space<smem>>
    %290 = vector.broadcast %289 : f32 to vector<8x32xf32>
    %291 = arith.addf %288, %290 : vector<8x32xf32>
    %c2_121 = arith.constant 2 : index
    %c0_122 = arith.constant 0 : index
    %292 = memref.load %arg16[%c2_121, %c0_122] : memref<9x4xf32, #tpu.memory_space<smem>>
    %293 = vector.broadcast %292 : f32 to vector<8x32xf32>
    %294 = arith.mulf %293, %96 : vector<8x32xf32>
    %c2_123 = arith.constant 2 : index
    %c1_124 = arith.constant 1 : index
    %295 = memref.load %arg16[%c2_123, %c1_124] : memref<9x4xf32, #tpu.memory_space<smem>>
    %296 = vector.broadcast %295 : f32 to vector<8x32xf32>
    %297 = arith.mulf %296, %147 : vector<8x32xf32>
    %298 = arith.addf %294, %297 : vector<8x32xf32>
    %c2_125 = arith.constant 2 : index
    %c2_126 = arith.constant 2 : index
    %299 = memref.load %arg16[%c2_125, %c2_126] : memref<9x4xf32, #tpu.memory_space<smem>>
    %300 = vector.broadcast %299 : f32 to vector<8x32xf32>
    %301 = arith.mulf %300, %198 : vector<8x32xf32>
    %302 = arith.addf %298, %301 : vector<8x32xf32>
    %c2_127 = arith.constant 2 : index
    %c3_128 = arith.constant 3 : index
    %303 = memref.load %arg16[%c2_127, %c3_128] : memref<9x4xf32, #tpu.memory_space<smem>>
    %304 = vector.broadcast %303 : f32 to vector<8x32xf32>
    %305 = arith.mulf %304, %249 : vector<8x32xf32>
    %306 = arith.addf %302, %305 : vector<8x32xf32>
    %307 = vector.extract_strided_slice %0 {offsets = [2, 0, 0], sizes = [1, 8, 32], strides = [1, 1, 1]} : vector<9x8x32xf32> to vector<1x8x32xf32>
    %308 = vector.shape_cast %307 : vector<1x8x32xf32> to vector<8x32xf32>
    %309 = arith.addf %308, %306 : vector<8x32xf32>
    %c2_129 = arith.constant 2 : index
    %c0_130 = arith.constant 0 : index
    %310 = memref.load %arg17[%c2_129, %c0_130] : memref<9x1xf32, #tpu.memory_space<smem>>
    %311 = vector.broadcast %310 : f32 to vector<8x32xf32>
    %312 = arith.addf %309, %311 : vector<8x32xf32>
    %c3_131 = arith.constant 3 : index
    %c0_132 = arith.constant 0 : index
    %313 = memref.load %arg16[%c3_131, %c0_132] : memref<9x4xf32, #tpu.memory_space<smem>>
    %314 = vector.broadcast %313 : f32 to vector<8x32xf32>
    %315 = arith.mulf %314, %96 : vector<8x32xf32>
    %c3_133 = arith.constant 3 : index
    %c1_134 = arith.constant 1 : index
    %316 = memref.load %arg16[%c3_133, %c1_134] : memref<9x4xf32, #tpu.memory_space<smem>>
    %317 = vector.broadcast %316 : f32 to vector<8x32xf32>
    %318 = arith.mulf %317, %147 : vector<8x32xf32>
    %319 = arith.addf %315, %318 : vector<8x32xf32>
    %c3_135 = arith.constant 3 : index
    %c2_136 = arith.constant 2 : index
    %320 = memref.load %arg16[%c3_135, %c2_136] : memref<9x4xf32, #tpu.memory_space<smem>>
    %321 = vector.broadcast %320 : f32 to vector<8x32xf32>
    %322 = arith.mulf %321, %198 : vector<8x32xf32>
    %323 = arith.addf %319, %322 : vector<8x32xf32>
    %c3_137 = arith.constant 3 : index
    %c3_138 = arith.constant 3 : index
    %324 = memref.load %arg16[%c3_137, %c3_138] : memref<9x4xf32, #tpu.memory_space<smem>>
    %325 = vector.broadcast %324 : f32 to vector<8x32xf32>
    %326 = arith.mulf %325, %249 : vector<8x32xf32>
    %327 = arith.addf %323, %326 : vector<8x32xf32>
    %328 = vector.extract_strided_slice %0 {offsets = [3, 0, 0], sizes = [1, 8, 32], strides = [1, 1, 1]} : vector<9x8x32xf32> to vector<1x8x32xf32>
    %329 = vector.shape_cast %328 : vector<1x8x32xf32> to vector<8x32xf32>
    %330 = arith.addf %329, %327 : vector<8x32xf32>
    %c3_139 = arith.constant 3 : index
    %c0_140 = arith.constant 0 : index
    %331 = memref.load %arg17[%c3_139, %c0_140] : memref<9x1xf32, #tpu.memory_space<smem>>
    %332 = vector.broadcast %331 : f32 to vector<8x32xf32>
    %333 = arith.addf %330, %332 : vector<8x32xf32>
    %c4_141 = arith.constant 4 : index
    %c0_142 = arith.constant 0 : index
    %334 = memref.load %arg16[%c4_141, %c0_142] : memref<9x4xf32, #tpu.memory_space<smem>>
    %335 = vector.broadcast %334 : f32 to vector<8x32xf32>
    %336 = arith.mulf %335, %96 : vector<8x32xf32>
    %c4_143 = arith.constant 4 : index
    %c1_144 = arith.constant 1 : index
    %337 = memref.load %arg16[%c4_143, %c1_144] : memref<9x4xf32, #tpu.memory_space<smem>>
    %338 = vector.broadcast %337 : f32 to vector<8x32xf32>
    %339 = arith.mulf %338, %147 : vector<8x32xf32>
    %340 = arith.addf %336, %339 : vector<8x32xf32>
    %c4_145 = arith.constant 4 : index
    %c2_146 = arith.constant 2 : index
    %341 = memref.load %arg16[%c4_145, %c2_146] : memref<9x4xf32, #tpu.memory_space<smem>>
    %342 = vector.broadcast %341 : f32 to vector<8x32xf32>
    %343 = arith.mulf %342, %198 : vector<8x32xf32>
    %344 = arith.addf %340, %343 : vector<8x32xf32>
    %c4_147 = arith.constant 4 : index
    %c3_148 = arith.constant 3 : index
    %345 = memref.load %arg16[%c4_147, %c3_148] : memref<9x4xf32, #tpu.memory_space<smem>>
    %346 = vector.broadcast %345 : f32 to vector<8x32xf32>
    %347 = arith.mulf %346, %249 : vector<8x32xf32>
    %348 = arith.addf %344, %347 : vector<8x32xf32>
    %349 = vector.extract_strided_slice %0 {offsets = [4, 0, 0], sizes = [1, 8, 32], strides = [1, 1, 1]} : vector<9x8x32xf32> to vector<1x8x32xf32>
    %350 = vector.shape_cast %349 : vector<1x8x32xf32> to vector<8x32xf32>
    %351 = arith.addf %350, %348 : vector<8x32xf32>
    %c4_149 = arith.constant 4 : index
    %c0_150 = arith.constant 0 : index
    %352 = memref.load %arg17[%c4_149, %c0_150] : memref<9x1xf32, #tpu.memory_space<smem>>
    %353 = vector.broadcast %352 : f32 to vector<8x32xf32>
    %354 = arith.addf %351, %353 : vector<8x32xf32>
    %c5_151 = arith.constant 5 : index
    %c0_152 = arith.constant 0 : index
    %355 = memref.load %arg16[%c5_151, %c0_152] : memref<9x4xf32, #tpu.memory_space<smem>>
    %356 = vector.broadcast %355 : f32 to vector<8x32xf32>
    %357 = arith.mulf %356, %96 : vector<8x32xf32>
    %c5_153 = arith.constant 5 : index
    %c1_154 = arith.constant 1 : index
    %358 = memref.load %arg16[%c5_153, %c1_154] : memref<9x4xf32, #tpu.memory_space<smem>>
    %359 = vector.broadcast %358 : f32 to vector<8x32xf32>
    %360 = arith.mulf %359, %147 : vector<8x32xf32>
    %361 = arith.addf %357, %360 : vector<8x32xf32>
    %c5_155 = arith.constant 5 : index
    %c2_156 = arith.constant 2 : index
    %362 = memref.load %arg16[%c5_155, %c2_156] : memref<9x4xf32, #tpu.memory_space<smem>>
    %363 = vector.broadcast %362 : f32 to vector<8x32xf32>
    %364 = arith.mulf %363, %198 : vector<8x32xf32>
    %365 = arith.addf %361, %364 : vector<8x32xf32>
    %c5_157 = arith.constant 5 : index
    %c3_158 = arith.constant 3 : index
    %366 = memref.load %arg16[%c5_157, %c3_158] : memref<9x4xf32, #tpu.memory_space<smem>>
    %367 = vector.broadcast %366 : f32 to vector<8x32xf32>
    %368 = arith.mulf %367, %249 : vector<8x32xf32>
    %369 = arith.addf %365, %368 : vector<8x32xf32>
    %370 = vector.extract_strided_slice %0 {offsets = [5, 0, 0], sizes = [1, 8, 32], strides = [1, 1, 1]} : vector<9x8x32xf32> to vector<1x8x32xf32>
    %371 = vector.shape_cast %370 : vector<1x8x32xf32> to vector<8x32xf32>
    %372 = arith.addf %371, %369 : vector<8x32xf32>
    %c5_159 = arith.constant 5 : index
    %c0_160 = arith.constant 0 : index
    %373 = memref.load %arg17[%c5_159, %c0_160] : memref<9x1xf32, #tpu.memory_space<smem>>
    %374 = vector.broadcast %373 : f32 to vector<8x32xf32>
    %375 = arith.addf %372, %374 : vector<8x32xf32>
    %c6_161 = arith.constant 6 : index
    %c0_162 = arith.constant 0 : index
    %376 = memref.load %arg16[%c6_161, %c0_162] : memref<9x4xf32, #tpu.memory_space<smem>>
    %377 = vector.broadcast %376 : f32 to vector<8x32xf32>
    %378 = arith.mulf %377, %96 : vector<8x32xf32>
    %c6_163 = arith.constant 6 : index
    %c1_164 = arith.constant 1 : index
    %379 = memref.load %arg16[%c6_163, %c1_164] : memref<9x4xf32, #tpu.memory_space<smem>>
    %380 = vector.broadcast %379 : f32 to vector<8x32xf32>
    %381 = arith.mulf %380, %147 : vector<8x32xf32>
    %382 = arith.addf %378, %381 : vector<8x32xf32>
    %c6_165 = arith.constant 6 : index
    %c2_166 = arith.constant 2 : index
    %383 = memref.load %arg16[%c6_165, %c2_166] : memref<9x4xf32, #tpu.memory_space<smem>>
    %384 = vector.broadcast %383 : f32 to vector<8x32xf32>
    %385 = arith.mulf %384, %198 : vector<8x32xf32>
    %386 = arith.addf %382, %385 : vector<8x32xf32>
    %c6_167 = arith.constant 6 : index
    %c3_168 = arith.constant 3 : index
    %387 = memref.load %arg16[%c6_167, %c3_168] : memref<9x4xf32, #tpu.memory_space<smem>>
    %388 = vector.broadcast %387 : f32 to vector<8x32xf32>
    %389 = arith.mulf %388, %249 : vector<8x32xf32>
    %390 = arith.addf %386, %389 : vector<8x32xf32>
    %391 = vector.extract_strided_slice %0 {offsets = [6, 0, 0], sizes = [1, 8, 32], strides = [1, 1, 1]} : vector<9x8x32xf32> to vector<1x8x32xf32>
    %392 = vector.shape_cast %391 : vector<1x8x32xf32> to vector<8x32xf32>
    %393 = arith.addf %392, %390 : vector<8x32xf32>
    %c6_169 = arith.constant 6 : index
    %c0_170 = arith.constant 0 : index
    %394 = memref.load %arg17[%c6_169, %c0_170] : memref<9x1xf32, #tpu.memory_space<smem>>
    %395 = vector.broadcast %394 : f32 to vector<8x32xf32>
    %396 = arith.addf %393, %395 : vector<8x32xf32>
    %c7_171 = arith.constant 7 : index
    %c0_172 = arith.constant 0 : index
    %397 = memref.load %arg16[%c7_171, %c0_172] : memref<9x4xf32, #tpu.memory_space<smem>>
    %398 = vector.broadcast %397 : f32 to vector<8x32xf32>
    %399 = arith.mulf %398, %96 : vector<8x32xf32>
    %c7_173 = arith.constant 7 : index
    %c1_174 = arith.constant 1 : index
    %400 = memref.load %arg16[%c7_173, %c1_174] : memref<9x4xf32, #tpu.memory_space<smem>>
    %401 = vector.broadcast %400 : f32 to vector<8x32xf32>
    %402 = arith.mulf %401, %147 : vector<8x32xf32>
    %403 = arith.addf %399, %402 : vector<8x32xf32>
    %c7_175 = arith.constant 7 : index
    %c2_176 = arith.constant 2 : index
    %404 = memref.load %arg16[%c7_175, %c2_176] : memref<9x4xf32, #tpu.memory_space<smem>>
    %405 = vector.broadcast %404 : f32 to vector<8x32xf32>
    %406 = arith.mulf %405, %198 : vector<8x32xf32>
    %407 = arith.addf %403, %406 : vector<8x32xf32>
    %c7_177 = arith.constant 7 : index
    %c3_178 = arith.constant 3 : index
    %408 = memref.load %arg16[%c7_177, %c3_178] : memref<9x4xf32, #tpu.memory_space<smem>>
    %409 = vector.broadcast %408 : f32 to vector<8x32xf32>
    %410 = arith.mulf %409, %249 : vector<8x32xf32>
    %411 = arith.addf %407, %410 : vector<8x32xf32>
    %412 = vector.extract_strided_slice %0 {offsets = [7, 0, 0], sizes = [1, 8, 32], strides = [1, 1, 1]} : vector<9x8x32xf32> to vector<1x8x32xf32>
    %413 = vector.shape_cast %412 : vector<1x8x32xf32> to vector<8x32xf32>
    %414 = arith.addf %413, %411 : vector<8x32xf32>
    %c7_179 = arith.constant 7 : index
    %c0_180 = arith.constant 0 : index
    %415 = memref.load %arg17[%c7_179, %c0_180] : memref<9x1xf32, #tpu.memory_space<smem>>
    %416 = vector.broadcast %415 : f32 to vector<8x32xf32>
    %417 = arith.addf %414, %416 : vector<8x32xf32>
    %c8_181 = arith.constant 8 : index
    %c0_182 = arith.constant 0 : index
    %418 = memref.load %arg16[%c8_181, %c0_182] : memref<9x4xf32, #tpu.memory_space<smem>>
    %419 = vector.broadcast %418 : f32 to vector<8x32xf32>
    %420 = arith.mulf %419, %96 : vector<8x32xf32>
    %c8_183 = arith.constant 8 : index
    %c1_184 = arith.constant 1 : index
    %421 = memref.load %arg16[%c8_183, %c1_184] : memref<9x4xf32, #tpu.memory_space<smem>>
    %422 = vector.broadcast %421 : f32 to vector<8x32xf32>
    %423 = arith.mulf %422, %147 : vector<8x32xf32>
    %424 = arith.addf %420, %423 : vector<8x32xf32>
    %c8_185 = arith.constant 8 : index
    %c2_186 = arith.constant 2 : index
    %425 = memref.load %arg16[%c8_185, %c2_186] : memref<9x4xf32, #tpu.memory_space<smem>>
    %426 = vector.broadcast %425 : f32 to vector<8x32xf32>
    %427 = arith.mulf %426, %198 : vector<8x32xf32>
    %428 = arith.addf %424, %427 : vector<8x32xf32>
    %c8_187 = arith.constant 8 : index
    %c3_188 = arith.constant 3 : index
    %429 = memref.load %arg16[%c8_187, %c3_188] : memref<9x4xf32, #tpu.memory_space<smem>>
    %430 = vector.broadcast %429 : f32 to vector<8x32xf32>
    %431 = arith.mulf %430, %249 : vector<8x32xf32>
    %432 = arith.addf %428, %431 : vector<8x32xf32>
    %433 = vector.extract_strided_slice %0 {offsets = [8, 0, 0], sizes = [1, 8, 32], strides = [1, 1, 1]} : vector<9x8x32xf32> to vector<1x8x32xf32>
    %434 = vector.shape_cast %433 : vector<1x8x32xf32> to vector<8x32xf32>
    %435 = arith.addf %434, %432 : vector<8x32xf32>
    %c8_189 = arith.constant 8 : index
    %c0_190 = arith.constant 0 : index
    %436 = memref.load %arg17[%c8_189, %c0_190] : memref<9x1xf32, #tpu.memory_space<smem>>
    %437 = vector.broadcast %436 : f32 to vector<8x32xf32>
    %438 = arith.addf %435, %437 : vector<8x32xf32>
    %439 = vector.shape_cast %270 : vector<8x32xf32> to vector<1x8x32xf32>
    %440 = vector.shape_cast %291 : vector<8x32xf32> to vector<1x8x32xf32>
    %441 = vector.shape_cast %312 : vector<8x32xf32> to vector<1x8x32xf32>
    %442 = vector.shape_cast %333 : vector<8x32xf32> to vector<1x8x32xf32>
    %443 = vector.shape_cast %354 : vector<8x32xf32> to vector<1x8x32xf32>
    %444 = vector.shape_cast %375 : vector<8x32xf32> to vector<1x8x32xf32>
    %445 = vector.shape_cast %396 : vector<8x32xf32> to vector<1x8x32xf32>
    %446 = vector.shape_cast %417 : vector<8x32xf32> to vector<1x8x32xf32>
    %447 = vector.shape_cast %438 : vector<8x32xf32> to vector<1x8x32xf32>
    %448 = tpu.concatenate %439, %440, %441, %442, %443, %444, %445, %446, %447 in 0 : vector<1x8x32xf32>, vector<1x8x32xf32>, vector<1x8x32xf32>, vector<1x8x32xf32>, vector<1x8x32xf32>, vector<1x8x32xf32>, vector<1x8x32xf32>, vector<1x8x32xf32>, vector<1x8x32xf32> -> vector<9x8x32xf32>
    %449 = vector.broadcast %1 : vector<9x8x1xf32> to vector<9x8x32xf32>
    %450 = arith.mulf %448, %449 : vector<9x8x32xf32>
    %c0_191 = arith.constant 0 : index
    %c0_192 = arith.constant 0 : index
    %451 = vector.load %arg5[%c0_191, %c0_192] : memref<1x32xf32, #tpu.memory_space<vmem>>, vector<1x32xf32>
    %c0_193 = arith.constant 0 : index
    %c0_194 = arith.constant 0 : index
    %452 = vector.load %arg6[%c0_193, %c0_194] : memref<1x32xf32, #tpu.memory_space<vmem>>, vector<1x32xf32>
    %cst_195 = arith.constant dense<0.000000e+00> : vector<9x8xf32>
    %453 = vector.multi_reduction <add>, %450, %cst_195 [2] : vector<9x8x32xf32> to vector<9x8xf32>
    %454 = vector.shape_cast %453 : vector<9x8xf32> to vector<9x8x1xf32>
    %cst_196 = arith.constant 3.200000e+01 : f32
    %455 = vector.broadcast %cst_196 : f32 to vector<9x8x1xf32>
    %456 = arith.divf %454, %455 : vector<9x8x1xf32>
    %457 = vector.broadcast %456 : vector<9x8x1xf32> to vector<9x8x32xf32>
    %458 = arith.subf %450, %457 : vector<9x8x32xf32>
    %459 = arith.mulf %458, %458 : vector<9x8x32xf32>
    %cst_197 = arith.constant dense<0.000000e+00> : vector<9x8xf32>
    %460 = vector.multi_reduction <add>, %459, %cst_197 [2] : vector<9x8x32xf32> to vector<9x8xf32>
    %461 = vector.shape_cast %460 : vector<9x8xf32> to vector<9x8x1xf32>
    %cst_198 = arith.constant 3.200000e+01 : f32
    %462 = vector.broadcast %cst_198 : f32 to vector<9x8x1xf32>
    %463 = arith.divf %461, %462 : vector<9x8x1xf32>
    %cst_199 = arith.constant 9.99999974E-6 : f32
    %464 = vector.broadcast %cst_199 : f32 to vector<9x8x1xf32>
    %465 = arith.addf %463, %464 : vector<9x8x1xf32>
    %466 = math.rsqrt %465 : vector<9x8x1xf32>
    %467 = vector.broadcast %466 : vector<9x8x1xf32> to vector<9x8x32xf32>
    %468 = arith.mulf %458, %467 : vector<9x8x32xf32>
    %469 = vector.shape_cast %451 : vector<1x32xf32> to vector<1x1x32xf32>
    %470 = vector.broadcast %469 : vector<1x1x32xf32> to vector<9x8x32xf32>
    %471 = arith.mulf %468, %470 : vector<9x8x32xf32>
    %472 = vector.shape_cast %452 : vector<1x32xf32> to vector<1x1x32xf32>
    %473 = vector.broadcast %472 : vector<1x1x32xf32> to vector<9x8x32xf32>
    %474 = arith.addf %471, %473 : vector<9x8x32xf32>
    %475 = vector.shape_cast %474 : vector<9x8x32xf32> to vector<72x32xf32>
    %c0_200 = arith.constant 0 : index
    %c0_201 = arith.constant 0 : index
    %476 = vector.load %arg9[%c0_200, %c0_201] : memref<32x16xf32, #tpu.memory_space<vmem>>, vector<32x16xf32>
    %cst_202 = arith.constant dense<0.000000e+00> : vector<72x16xf32>
    %477 = tpu.matmul %475, %476, %cst_202 {dimension_numbers = #tpu.dot_dimension_numbers<[1], [0], [0], [1], [0, 0, 1, 1], [], []>} : vector<72x32xf32>, vector<32x16xf32>, vector<72x16xf32> -> vector<72x16xf32>
    %c0_203 = arith.constant 0 : index
    %c0_204 = arith.constant 0 : index
    %478 = vector.load %arg10[%c0_203, %c0_204] : memref<1x16xf32, #tpu.memory_space<vmem>>, vector<1x16xf32>
    %479 = vector.broadcast %478 : vector<1x16xf32> to vector<72x16xf32>
    %480 = arith.addf %477, %479 : vector<72x16xf32>
    %481 = arith.mulf %480, %480 : vector<72x16xf32>
    %482 = arith.mulf %480, %481 : vector<72x16xf32>
    %cst_205 = arith.constant 4.471500e-02 : f32
    %483 = vector.broadcast %cst_205 : f32 to vector<72x16xf32>
    %484 = arith.mulf %483, %482 : vector<72x16xf32>
    %485 = arith.addf %480, %484 : vector<72x16xf32>
    %cst_206 = arith.constant 0.797884583 : f32
    %486 = vector.broadcast %cst_206 : f32 to vector<72x16xf32>
    %487 = arith.mulf %486, %485 : vector<72x16xf32>
    %488 = math.tanh %487 : vector<72x16xf32>
    %cst_207 = arith.constant 1.000000e+00 : f32
    %489 = vector.broadcast %cst_207 : f32 to vector<72x16xf32>
    %490 = arith.addf %489, %488 : vector<72x16xf32>
    %cst_208 = arith.constant 5.000000e-01 : f32
    %491 = vector.broadcast %cst_208 : f32 to vector<72x16xf32>
    %492 = arith.mulf %491, %490 : vector<72x16xf32>
    %493 = arith.mulf %480, %492 : vector<72x16xf32>
    %c0_209 = arith.constant 0 : index
    %c0_210 = arith.constant 0 : index
    %494 = vector.load %arg11[%c0_209, %c0_210] : memref<16x32xf32, #tpu.memory_space<vmem>>, vector<16x32xf32>
    %cst_211 = arith.constant dense<0.000000e+00> : vector<72x32xf32>
    %495 = tpu.matmul %493, %494, %cst_211 {dimension_numbers = #tpu.dot_dimension_numbers<[1], [0], [0], [1], [0, 0, 1, 1], [], []>} : vector<72x16xf32>, vector<16x32xf32>, vector<72x32xf32> -> vector<72x32xf32>
    %c0_212 = arith.constant 0 : index
    %c0_213 = arith.constant 0 : index
    %496 = vector.load %arg12[%c0_212, %c0_213] : memref<1x32xf32, #tpu.memory_space<vmem>>, vector<1x32xf32>
    %497 = vector.broadcast %496 : vector<1x32xf32> to vector<72x32xf32>
    %498 = arith.addf %495, %497 : vector<72x32xf32>
    %499 = vector.shape_cast %498 : vector<72x32xf32> to vector<9x8x32xf32>
    %500 = arith.addf %448, %499 : vector<9x8x32xf32>
    %c0_214 = arith.constant 0 : index
    %c0_215 = arith.constant 0 : index
    %501 = vector.load %arg7[%c0_214, %c0_215] : memref<1x32xf32, #tpu.memory_space<vmem>>, vector<1x32xf32>
    %c0_216 = arith.constant 0 : index
    %c0_217 = arith.constant 0 : index
    %502 = vector.load %arg8[%c0_216, %c0_217] : memref<1x32xf32, #tpu.memory_space<vmem>>, vector<1x32xf32>
    %cst_218 = arith.constant dense<0.000000e+00> : vector<9x8xf32>
    %503 = vector.multi_reduction <add>, %500, %cst_218 [2] : vector<9x8x32xf32> to vector<9x8xf32>
    %504 = vector.shape_cast %503 : vector<9x8xf32> to vector<9x8x1xf32>
    %cst_219 = arith.constant 3.200000e+01 : f32
    %505 = vector.broadcast %cst_219 : f32 to vector<9x8x1xf32>
    %506 = arith.divf %504, %505 : vector<9x8x1xf32>
    %507 = vector.broadcast %506 : vector<9x8x1xf32> to vector<9x8x32xf32>
    %508 = arith.subf %500, %507 : vector<9x8x32xf32>
    %509 = arith.mulf %508, %508 : vector<9x8x32xf32>
    %cst_220 = arith.constant dense<0.000000e+00> : vector<9x8xf32>
    %510 = vector.multi_reduction <add>, %509, %cst_220 [2] : vector<9x8x32xf32> to vector<9x8xf32>
    %511 = vector.shape_cast %510 : vector<9x8xf32> to vector<9x8x1xf32>
    %cst_221 = arith.constant 3.200000e+01 : f32
    %512 = vector.broadcast %cst_221 : f32 to vector<9x8x1xf32>
    %513 = arith.divf %511, %512 : vector<9x8x1xf32>
    %cst_222 = arith.constant 9.99999974E-6 : f32
    %514 = vector.broadcast %cst_222 : f32 to vector<9x8x1xf32>
    %515 = arith.addf %513, %514 : vector<9x8x1xf32>
    %516 = math.rsqrt %515 : vector<9x8x1xf32>
    %517 = vector.broadcast %516 : vector<9x8x1xf32> to vector<9x8x32xf32>
    %518 = arith.mulf %508, %517 : vector<9x8x32xf32>
    %519 = vector.shape_cast %501 : vector<1x32xf32> to vector<1x1x32xf32>
    %520 = vector.broadcast %519 : vector<1x1x32xf32> to vector<9x8x32xf32>
    %521 = arith.mulf %518, %520 : vector<9x8x32xf32>
    %522 = vector.shape_cast %502 : vector<1x32xf32> to vector<1x1x32xf32>
    %523 = vector.broadcast %522 : vector<1x1x32xf32> to vector<9x8x32xf32>
    %524 = arith.addf %521, %523 : vector<9x8x32xf32>
    %525 = vector.extract_strided_slice %524 {offsets = [0, 0, 0], sizes = [1, 8, 32], strides = [1, 1, 1]} : vector<9x8x32xf32> to vector<1x8x32xf32>
    %526 = vector.shape_cast %525 : vector<1x8x32xf32> to vector<8x32xf32>
    %c0_223 = arith.constant 0 : index
    %c0_224 = arith.constant 0 : index
    %527 = vector.load %arg13[%c0_223, %c0_224] : memref<1x32xf32, #tpu.memory_space<vmem>>, vector<1x32xf32>
    %528 = vector.broadcast %527 : vector<1x32xf32> to vector<8x32xf32>
    %529 = arith.mulf %526, %528 : vector<8x32xf32>
    %cst_225 = arith.constant dense<0.000000e+00> : vector<8xf32>
    %530 = vector.multi_reduction <add>, %529, %cst_225 [1] : vector<8x32xf32> to vector<8xf32>
    %531 = vector.shape_cast %530 : vector<8xf32> to vector<8x1xf32>
    %c0_226 = arith.constant 0 : index
    %c0_227 = arith.constant 0 : index
    %532 = memref.load %arg18[%c0_226, %c0_227] : memref<1x1xf32, #tpu.memory_space<smem>>
    %533 = vector.broadcast %532 : f32 to vector<8x1xf32>
    %534 = arith.addf %531, %533 : vector<8x1xf32>
    %cst_228 = arith.constant 0.000000e+00 : f32
    %535 = vector.broadcast %cst_228 : f32 to vector<8x1xf32>
    %536 = arith.subf %535, %534 : vector<8x1xf32>
    %537 = math.exp %536 : vector<8x1xf32>
    %cst_229 = arith.constant 1.000000e+00 : f32
    %538 = vector.broadcast %cst_229 : f32 to vector<8x1xf32>
    %539 = arith.addf %538, %537 : vector<8x1xf32>
    %cst_230 = arith.constant 1.000000e+00 : f32
    %540 = vector.broadcast %cst_230 : f32 to vector<8x1xf32>
    %541 = arith.divf %540, %539 : vector<8x1xf32>
    %c0_231 = arith.constant 0 : index
    %c0_232 = arith.constant 0 : index
    %542 = vector.load %arg19[%c0_231, %c0_232] : memref<8x32xf32, #tpu.memory_space<vmem>>, vector<8x32xf32>
    tpu.vector_store %arg19[%c0_231, %c0_232], %526 {strides = array<i32>} : memref<8x32xf32, #tpu.memory_space<vmem>>, vector<8x32xf32>,
    %543 = vector.shape_cast %541 : vector<8x1xf32> to vector<1x8x1xf32>
    %544 = vector.extract_strided_slice %524 {offsets = [1, 0, 0], sizes = [8, 8, 32], strides = [1, 1, 1]} : vector<9x8x32xf32> to vector<8x8x32xf32>
    %545 = vector.broadcast %543 : vector<1x8x1xf32> to vector<8x8x32xf32>
    %546 = arith.mulf %545, %544 : vector<8x8x32xf32>
    %c0_233 = arith.constant 0 : index
    %c0_234 = arith.constant 0 : index
    %c0_235 = arith.constant 0 : index
    %547 = vector.load %arg20[%c0_233, %c0_234, %c0_235] : memref<8x8x32xf32, #tpu.memory_space<vmem>>, vector<8x8x32xf32>
    tpu.vector_store %arg20[%c0_233, %c0_234, %c0_235], %546 {strides = array<i32>} : memref<8x8x32xf32, #tpu.memory_space<vmem>>, vector<8x8x32xf32>,
    return
  }
  func.func @transform_0(%arg0: i32) -> (i32, i32, i32) {
    %c0_i32 = arith.constant 0 : i32
    %c0_i32_0 = arith.constant 0 : i32
    %c0_i32_1 = arith.constant 0 : i32
    return %c0_i32, %arg0, %c0_i32_0 : i32, i32, i32
  }
  func.func @transform_1(%arg0: i32) -> (i32, i32, i32) {
    %c0_i32 = arith.constant 0 : i32
    %c0_i32_0 = arith.constant 0 : i32
    %c0_i32_1 = arith.constant 0 : i32
    return %c0_i32, %arg0, %c0_i32_0 : i32, i32, i32
  }
  func.func @transform_2(%arg0: i32) -> (i32, i32) {
    %c0_i32 = arith.constant 0 : i32
    %c0_i32_0 = arith.constant 0 : i32
    %c0_i32_1 = arith.constant 0 : i32
    return %c0_i32, %c0_i32_0 : i32, i32
  }
  func.func @transform_3(%arg0: i32) -> (i32, i32) {
    %c0_i32 = arith.constant 0 : i32
    %c0_i32_0 = arith.constant 0 : i32
    %c0_i32_1 = arith.constant 0 : i32
    return %c0_i32, %c0_i32_0 : i32, i32
  }
  func.func @transform_4(%arg0: i32) -> (i32, i32) {
    %c0_i32 = arith.constant 0 : i32
    %c0_i32_0 = arith.constant 0 : i32
    %c0_i32_1 = arith.constant 0 : i32
    return %c0_i32, %c0_i32_0 : i32, i32
  }
  func.func @transform_5(%arg0: i32) -> (i32, i32) {
    %c0_i32 = arith.constant 0 : i32
    %c0_i32_0 = arith.constant 0 : i32
    %c0_i32_1 = arith.constant 0 : i32
    return %c0_i32, %c0_i32_0 : i32, i32
  }
  func.func @transform_6(%arg0: i32) -> (i32, i32) {
    %c0_i32 = arith.constant 0 : i32
    %c0_i32_0 = arith.constant 0 : i32
    %c0_i32_1 = arith.constant 0 : i32
    return %c0_i32, %c0_i32_0 : i32, i32
  }
  func.func @transform_7(%arg0: i32) -> (i32, i32) {
    %c0_i32 = arith.constant 0 : i32
    %c0_i32_0 = arith.constant 0 : i32
    %c0_i32_1 = arith.constant 0 : i32
    return %c0_i32, %c0_i32_0 : i32, i32
  }
  func.func @transform_8(%arg0: i32) -> (i32, i32) {
    %c0_i32 = arith.constant 0 : i32
    %c0_i32_0 = arith.constant 0 : i32
    %c0_i32_1 = arith.constant 0 : i32
    return %c0_i32, %c0_i32_0 : i32, i32
  }
  func.func @transform_9(%arg0: i32) -> (i32, i32) {
    %c0_i32 = arith.constant 0 : i32
    %c0_i32_0 = arith.constant 0 : i32
    %c0_i32_1 = arith.constant 0 : i32
    return %c0_i32, %c0_i32_0 : i32, i32
  }
  func.func @transform_10(%arg0: i32) -> (i32, i32) {
    %c0_i32 = arith.constant 0 : i32
    %c0_i32_0 = arith.constant 0 : i32
    %c0_i32_1 = arith.constant 0 : i32
    return %c0_i32, %c0_i32_0 : i32, i32
  }
  func.func @transform_11(%arg0: i32) -> (i32, i32) {
    %c0_i32 = arith.constant 0 : i32
    %c0_i32_0 = arith.constant 0 : i32
    %c0_i32_1 = arith.constant 0 : i32
    return %c0_i32, %c0_i32_0 : i32, i32
  }
  func.func @transform_12(%arg0: i32) -> (i32, i32) {
    %c0_i32 = arith.constant 0 : i32
    %c0_i32_0 = arith.constant 0 : i32
    %c0_i32_1 = arith.constant 0 : i32
    return %c0_i32, %c0_i32_0 : i32, i32
  }
  func.func @transform_13(%arg0: i32) -> (i32, i32) {
    %c0_i32 = arith.constant 0 : i32
    %c0_i32_0 = arith.constant 0 : i32
    %c0_i32_1 = arith.constant 0 : i32
    return %c0_i32, %c0_i32_0 : i32, i32
  }
  func.func @transform_14(%arg0: i32) -> (i32, i32) {
    %c0_i32 = arith.constant 0 : i32
    %c0_i32_0 = arith.constant 0 : i32
    %c0_i32_1 = arith.constant 0 : i32
    return %c0_i32, %c0_i32_0 : i32, i32
  }
  func.func @transform_15(%arg0: i32) -> (i32, i32) {
    %c0_i32 = arith.constant 0 : i32
    %c0_i32_0 = arith.constant 0 : i32
    %c0_i32_1 = arith.constant 0 : i32
    return %c0_i32, %c0_i32_0 : i32, i32
  }
  func.func @transform_16(%arg0: i32) -> (i32, i32) {
    %c0_i32 = arith.constant 0 : i32
    %c0_i32_0 = arith.constant 0 : i32
    %c0_i32_1 = arith.constant 0 : i32
    return %c0_i32, %c0_i32_0 : i32, i32
  }
  func.func @transform_17(%arg0: i32) -> (i32, i32) {
    %c0_i32 = arith.constant 0 : i32
    %c0_i32_0 = arith.constant 0 : i32
    %c0_i32_1 = arith.constant 0 : i32
    return %c0_i32, %c0_i32_0 : i32, i32
  }
  func.func @transform_18(%arg0: i32) -> (i32, i32) {
    %c0_i32 = arith.constant 0 : i32
    %c0_i32_0 = arith.constant 0 : i32
    return %arg0, %c0_i32 : i32, i32
  }
  func.func @transform_19(%arg0: i32) -> (i32, i32, i32) {
    %c0_i32 = arith.constant 0 : i32
    %c0_i32_0 = arith.constant 0 : i32
    %c0_i32_1 = arith.constant 0 : i32
    return %c0_i32, %arg0, %c0_i32_0 : i32, i32, i32
  }
}

module attributes {stable_mosaic.version = 11 : i64} {
  func.func @mlp_head_kernel(%arg0: i32, %arg1: memref<8x32xf32, #tpu.memory_space<vmem>>, %arg2: memref<1x32xf32, #tpu.memory_space<vmem>>, %arg3: memref<1x32xf32, #tpu.memory_space<vmem>>, %arg4: memref<32x32xf32, #tpu.memory_space<vmem>>, %arg5: memref<1x32xf32, #tpu.memory_space<vmem>>, %arg6: memref<32x32xf32, #tpu.memory_space<vmem>>, %arg7: memref<1x32xf32, #tpu.memory_space<vmem>>, %arg8: memref<32x1xf32, #tpu.memory_space<vmem>>, %arg9: memref<1x1xf32, #tpu.memory_space<vmem>>, %arg10: memref<8x1xf32, #tpu.memory_space<vmem>>) attributes {dimension_semantics = [#tpu.dimension_semantics<parallel>], iteration_bounds = array<i64: 1>, scalar_prefetch = 0 : i64, scratch_operands = 0 : i64, tpu.core_type = #tpu.core_type<tc>, window_params = [{transform_indices = @transform_0, window_bounds = array<i64: 8, 32>}, {pipeline_mode = #tpu.pipeline_mode<synchronous>, transform_indices = @transform_1, window_bounds = array<i64: 1, 32>}, {pipeline_mode = #tpu.pipeline_mode<synchronous>, transform_indices = @transform_2, window_bounds = array<i64: 1, 32>}, {pipeline_mode = #tpu.pipeline_mode<synchronous>, transform_indices = @transform_3, window_bounds = array<i64: 32, 32>}, {pipeline_mode = #tpu.pipeline_mode<synchronous>, transform_indices = @transform_4, window_bounds = array<i64: 1, 32>}, {pipeline_mode = #tpu.pipeline_mode<synchronous>, transform_indices = @transform_5, window_bounds = array<i64: 32, 32>}, {pipeline_mode = #tpu.pipeline_mode<synchronous>, transform_indices = @transform_6, window_bounds = array<i64: 1, 32>}, {pipeline_mode = #tpu.pipeline_mode<synchronous>, transform_indices = @transform_7, window_bounds = array<i64: 32, 1>}, {pipeline_mode = #tpu.pipeline_mode<synchronous>, transform_indices = @transform_8, window_bounds = array<i64: 1, 1>}, {transform_indices = @transform_9, window_bounds = array<i64: 8, 1>}]} {
    %c0 = arith.constant 0 : index
    %c0_0 = arith.constant 0 : index
    %0 = vector.load %arg1[%c0, %c0_0] : memref<8x32xf32, #tpu.memory_space<vmem>>, vector<8x32xf32>
    %c0_1 = arith.constant 0 : index
    %c0_2 = arith.constant 0 : index
    %1 = vector.load %arg2[%c0_1, %c0_2] : memref<1x32xf32, #tpu.memory_space<vmem>>, vector<1x32xf32>
    %c0_3 = arith.constant 0 : index
    %c0_4 = arith.constant 0 : index
    %2 = vector.load %arg3[%c0_3, %c0_4] : memref<1x32xf32, #tpu.memory_space<vmem>>, vector<1x32xf32>
    %cst = arith.constant dense<0.000000e+00> : vector<8xf32>
    %3 = vector.multi_reduction <add>, %0, %cst [1] : vector<8x32xf32> to vector<8xf32>
    %4 = vector.shape_cast %3 : vector<8xf32> to vector<8x1xf32>
    %cst_5 = arith.constant 3.200000e+01 : f32
    %5 = vector.broadcast %cst_5 : f32 to vector<8x1xf32>
    %6 = arith.divf %4, %5 : vector<8x1xf32>
    %7 = vector.broadcast %6 : vector<8x1xf32> to vector<8x32xf32>
    %8 = arith.subf %0, %7 : vector<8x32xf32>
    %9 = arith.mulf %8, %8 : vector<8x32xf32>
    %cst_6 = arith.constant dense<0.000000e+00> : vector<8xf32>
    %10 = vector.multi_reduction <add>, %9, %cst_6 [1] : vector<8x32xf32> to vector<8xf32>
    %11 = vector.shape_cast %10 : vector<8xf32> to vector<8x1xf32>
    %cst_7 = arith.constant 3.200000e+01 : f32
    %12 = vector.broadcast %cst_7 : f32 to vector<8x1xf32>
    %13 = arith.divf %11, %12 : vector<8x1xf32>
    %cst_8 = arith.constant 9.99999974E-6 : f32
    %14 = vector.broadcast %cst_8 : f32 to vector<8x1xf32>
    %15 = arith.addf %13, %14 : vector<8x1xf32>
    %16 = math.rsqrt %15 : vector<8x1xf32>
    %17 = vector.broadcast %16 : vector<8x1xf32> to vector<8x32xf32>
    %18 = arith.mulf %8, %17 : vector<8x32xf32>
    %19 = vector.broadcast %1 : vector<1x32xf32> to vector<8x32xf32>
    %20 = arith.mulf %18, %19 : vector<8x32xf32>
    %21 = vector.broadcast %2 : vector<1x32xf32> to vector<8x32xf32>
    %22 = arith.addf %20, %21 : vector<8x32xf32>
    %c0_9 = arith.constant 0 : index
    %c0_10 = arith.constant 0 : index
    %23 = vector.load %arg4[%c0_9, %c0_10] : memref<32x32xf32, #tpu.memory_space<vmem>>, vector<32x32xf32>
    %cst_11 = arith.constant dense<0.000000e+00> : vector<8x32xf32>
    %24 = tpu.matmul %22, %23, %cst_11 {dimension_numbers = #tpu.dot_dimension_numbers<[1], [0], [0], [1], [0, 0, 1, 1], [], []>} : vector<8x32xf32>, vector<32x32xf32>, vector<8x32xf32> -> vector<8x32xf32>
    %c0_12 = arith.constant 0 : index
    %c0_13 = arith.constant 0 : index
    %25 = vector.load %arg5[%c0_12, %c0_13] : memref<1x32xf32, #tpu.memory_space<vmem>>, vector<1x32xf32>
    %26 = vector.broadcast %25 : vector<1x32xf32> to vector<8x32xf32>
    %27 = arith.addf %24, %26 : vector<8x32xf32>
    %28 = arith.mulf %27, %27 : vector<8x32xf32>
    %29 = arith.mulf %27, %28 : vector<8x32xf32>
    %cst_14 = arith.constant 4.471500e-02 : f32
    %30 = vector.broadcast %cst_14 : f32 to vector<8x32xf32>
    %31 = arith.mulf %30, %29 : vector<8x32xf32>
    %32 = arith.addf %27, %31 : vector<8x32xf32>
    %cst_15 = arith.constant 0.797884583 : f32
    %33 = vector.broadcast %cst_15 : f32 to vector<8x32xf32>
    %34 = arith.mulf %33, %32 : vector<8x32xf32>
    %35 = math.tanh %34 : vector<8x32xf32>
    %cst_16 = arith.constant 1.000000e+00 : f32
    %36 = vector.broadcast %cst_16 : f32 to vector<8x32xf32>
    %37 = arith.addf %36, %35 : vector<8x32xf32>
    %cst_17 = arith.constant 5.000000e-01 : f32
    %38 = vector.broadcast %cst_17 : f32 to vector<8x32xf32>
    %39 = arith.mulf %38, %37 : vector<8x32xf32>
    %40 = arith.mulf %27, %39 : vector<8x32xf32>
    %c0_18 = arith.constant 0 : index
    %c0_19 = arith.constant 0 : index
    %41 = vector.load %arg6[%c0_18, %c0_19] : memref<32x32xf32, #tpu.memory_space<vmem>>, vector<32x32xf32>
    %cst_20 = arith.constant dense<0.000000e+00> : vector<8x32xf32>
    %42 = tpu.matmul %40, %41, %cst_20 {dimension_numbers = #tpu.dot_dimension_numbers<[1], [0], [0], [1], [0, 0, 1, 1], [], []>} : vector<8x32xf32>, vector<32x32xf32>, vector<8x32xf32> -> vector<8x32xf32>
    %c0_21 = arith.constant 0 : index
    %c0_22 = arith.constant 0 : index
    %43 = vector.load %arg7[%c0_21, %c0_22] : memref<1x32xf32, #tpu.memory_space<vmem>>, vector<1x32xf32>
    %44 = vector.broadcast %43 : vector<1x32xf32> to vector<8x32xf32>
    %45 = arith.addf %42, %44 : vector<8x32xf32>
    %46 = arith.mulf %45, %45 : vector<8x32xf32>
    %47 = arith.mulf %45, %46 : vector<8x32xf32>
    %cst_23 = arith.constant 4.471500e-02 : f32
    %48 = vector.broadcast %cst_23 : f32 to vector<8x32xf32>
    %49 = arith.mulf %48, %47 : vector<8x32xf32>
    %50 = arith.addf %45, %49 : vector<8x32xf32>
    %cst_24 = arith.constant 0.797884583 : f32
    %51 = vector.broadcast %cst_24 : f32 to vector<8x32xf32>
    %52 = arith.mulf %51, %50 : vector<8x32xf32>
    %53 = math.tanh %52 : vector<8x32xf32>
    %cst_25 = arith.constant 1.000000e+00 : f32
    %54 = vector.broadcast %cst_25 : f32 to vector<8x32xf32>
    %55 = arith.addf %54, %53 : vector<8x32xf32>
    %cst_26 = arith.constant 5.000000e-01 : f32
    %56 = vector.broadcast %cst_26 : f32 to vector<8x32xf32>
    %57 = arith.mulf %56, %55 : vector<8x32xf32>
    %58 = arith.mulf %45, %57 : vector<8x32xf32>
    %c0_27 = arith.constant 0 : index
    %c0_28 = arith.constant 0 : index
    %59 = vector.load %arg8[%c0_27, %c0_28] : memref<32x1xf32, #tpu.memory_space<vmem>>, vector<32x1xf32>
    %cst_29 = arith.constant dense<0.000000e+00> : vector<8x1xf32>
    %60 = tpu.matmul %58, %59, %cst_29 {dimension_numbers = #tpu.dot_dimension_numbers<[1], [0], [0], [1], [0, 0, 1, 1], [], []>} : vector<8x32xf32>, vector<32x1xf32>, vector<8x1xf32> -> vector<8x1xf32>
    %c0_30 = arith.constant 0 : index
    %c0_31 = arith.constant 0 : index
    %61 = vector.load %arg9[%c0_30, %c0_31] : memref<1x1xf32, #tpu.memory_space<vmem>>, vector<1x1xf32>
    %62 = vector.broadcast %61 : vector<1x1xf32> to vector<8x1xf32>
    %63 = arith.addf %60, %62 : vector<8x1xf32>
    %c0_32 = arith.constant 0 : index
    %c0_33 = arith.constant 0 : index
    %64 = vector.load %arg10[%c0_32, %c0_33] : memref<8x1xf32, #tpu.memory_space<vmem>>, vector<8x1xf32>
    tpu.vector_store %arg10[%c0_32, %c0_33], %63 {strides = array<i32>} : memref<8x1xf32, #tpu.memory_space<vmem>>, vector<8x1xf32>,
    return
  }
  func.func @transform_0(%arg0: i32) -> (i32, i32) {
    %c0_i32 = arith.constant 0 : i32
    %c0_i32_0 = arith.constant 0 : i32
    return %arg0, %c0_i32 : i32, i32
  }
  func.func @transform_1(%arg0: i32) -> (i32, i32) {
    %c0_i32 = arith.constant 0 : i32
    %c0_i32_0 = arith.constant 0 : i32
    %c0_i32_1 = arith.constant 0 : i32
    return %c0_i32, %c0_i32_0 : i32, i32
  }
  func.func @transform_2(%arg0: i32) -> (i32, i32) {
    %c0_i32 = arith.constant 0 : i32
    %c0_i32_0 = arith.constant 0 : i32
    %c0_i32_1 = arith.constant 0 : i32
    return %c0_i32, %c0_i32_0 : i32, i32
  }
  func.func @transform_3(%arg0: i32) -> (i32, i32) {
    %c0_i32 = arith.constant 0 : i32
    %c0_i32_0 = arith.constant 0 : i32
    %c0_i32_1 = arith.constant 0 : i32
    return %c0_i32, %c0_i32_0 : i32, i32
  }
  func.func @transform_4(%arg0: i32) -> (i32, i32) {
    %c0_i32 = arith.constant 0 : i32
    %c0_i32_0 = arith.constant 0 : i32
    %c0_i32_1 = arith.constant 0 : i32
    return %c0_i32, %c0_i32_0 : i32, i32
  }
  func.func @transform_5(%arg0: i32) -> (i32, i32) {
    %c0_i32 = arith.constant 0 : i32
    %c0_i32_0 = arith.constant 0 : i32
    %c0_i32_1 = arith.constant 0 : i32
    return %c0_i32, %c0_i32_0 : i32, i32
  }
  func.func @transform_6(%arg0: i32) -> (i32, i32) {
    %c0_i32 = arith.constant 0 : i32
    %c0_i32_0 = arith.constant 0 : i32
    %c0_i32_1 = arith.constant 0 : i32
    return %c0_i32, %c0_i32_0 : i32, i32
  }
  func.func @transform_7(%arg0: i32) -> (i32, i32) {
    %c0_i32 = arith.constant 0 : i32
    %c0_i32_0 = arith.constant 0 : i32
    %c0_i32_1 = arith.constant 0 : i32
    return %c0_i32, %c0_i32_0 : i32, i32
  }
  func.func @transform_8(%arg0: i32) -> (i32, i32) {
    %c0_i32 = arith.constant 0 : i32
    %c0_i32_0 = arith.constant 0 : i32
    %c0_i32_1 = arith.constant 0 : i32
    return %c0_i32, %c0_i32_0 : i32, i32
  }
  func.func @transform_9(%arg0: i32) -> (i32, i32) {
    %c0_i32 = arith.constant 0 : i32
    %c0_i32_0 = arith.constant 0 : i32
    return %arg0, %c0_i32 : i32, i32
  }
}

</mosaic_0001>

<llo_original>
// kernel: tpu_custom_call.1
$region0: #{tpu_custom_call.1}
  #allocation0 [shape = 'u32[]', space=smem, size = 0x4, offset = 0x4, fixed_abs, tag = 'smem constant byte address 0x4 - core index']
  #allocation1 [shape = 'u32[144,128]{1,0:T(1,128)}', space=vmem, size = 0x12000, scoped, tag = 'internal scratch']
  %s0 = inlined_call_operand.hbm [shape: f32[8,128], index: 0, kind: input, shape index: {}]
  %s1 = inlined_call_operand.hbm [shape: f32[8,128], index: 1, kind: output, shape index: {}]
  %s2 = sld [smem:[#allocation0]]
  $region18: #{tpu_custom_call.1} parent=0
    _
  %s4 = ssub.s32 1, %s2
  %s5 = scalar_select 0, %s4, %s2
  $region1: #{tpu_custom_call.1} parent=0
    #allocation2 [shape = 'u8[4096]{0}', space=vmem, size = 0x1000, scoped, tag = 'input window, operand 0, single buffered']
    #allocation3 [shape = 's32[1]{0}', space=sflag, size = 0x4, scoped, tag = 'scoped memory for tpu_custom_call.1']
    #allocation4 [shape = 's32[1]{0}', space=sflag, size = 0x4, scoped, tag = 'scoped memory for tpu_custom_call.1']
    #allocation5 [shape = 'u8[4096]{0}', space=vmem, size = 0x1000, scoped, tag = 'output window, operand 0, single buffered']
    %6 = vsyncpa [#allocation3], 0
    %7 = vsyncpa [#allocation4], 0
    // Predicated region
    $region2: #{tpu_custom_call.1} parent=1 // pred_check
      _
    $region3: #{tpu_custom_call.1} parent=1 // pred_check_branch
      %9 = sbr.rel (0) target = $region5
    $region4: #{tpu_custom_call.1} parent=1 // pred_region
      %s11 = ssub.s32 128, 128
      %12 = vsyncadd [#allocation3], %s11
      %s14 = sshll.u32 [#allocation2], 4
      %s15 = int_to_ptr.vmem [resolvable:$true] %s14
      %17 = dma.hbm_to_vmem [thread:$0]  %s0, 128, %s15, [#allocation3]
    $region5: #{tpu_custom_call.1} parent=1 // pred_fallthru
      _
    // Predicated region
    $region6: #{tpu_custom_call.1} parent=1 // pred_check
      _
    $region7: #{tpu_custom_call.1} parent=1 // pred_check_branch
      %19 = sbr.rel (0) target = $region9
    $region8: #{tpu_custom_call.1} parent=1 // pred_region
      %20 = dma.done [#allocation3], 128
    $region9: #{tpu_custom_call.1} parent=1 // pred_fallthru
      _
    %v21 = vld [vmem:[#allocation2] sm:$0xff]
    %v22 = verf.f32.pop %v21
    %23 = vst [vmem:[#allocation5] sm:$0xff] %v22
    // Predicated region
    $region10: #{tpu_custom_call.1} parent=1 // pred_check
      _
    $region11: #{tpu_custom_call.1} parent=1 // pred_check_branch
      %25 = sbr.rel (0) target = $region13
    $region12: #{tpu_custom_call.1} parent=1 // pred_region
      %s27 = ssub.s32 128, 128
      %28 = vsyncadd [#allocation4], %s27
      %s30 = sshll.u32 [#allocation5], 4
      %s31 = int_to_ptr.vmem [resolvable:$true] %s30
      %33 = dma.vmem_to_hbm [thread:$0]  %s31, 128, %s1, [#allocation4]
    $region13: #{tpu_custom_call.1} parent=1 // pred_fallthru
      _
    // Predicated region
    $region14: #{tpu_custom_call.1} parent=1 // pred_check
      _
    $region15: #{tpu_custom_call.1} parent=1 // pred_check_branch
      %35 = sbr.rel (0) target = $region17
    $region16: #{tpu_custom_call.1} parent=1 // pred_region
      %36 = dma.done [#allocation4], 128
    $region17: #{tpu_custom_call.1} parent=1 // pred_fallthru
      _
    %37 = vsyncpa [#allocation3], 1
    %38 = vsyncpa [#allocation4], 1

// kernel: new_model_forward.4
$region0: #{new_model_forward.4}
  #allocation0 [shape = 'u32[]', space=smem, size = 0x4, offset = 0x4, fixed_abs, tag = 'smem constant byte address 0x4 - core index']
  #allocation1 [shape = 'u32[144,128]{1,0:T(1,128)}', space=vmem, size = 0x12000, scoped, tag = 'internal scratch']
  #allocation2 [shape = 'f32[1,1]{1,0:T(1,128)S(6)}', space=smem, size = 0x200, scoped, tag = 'scoped memory for new_model_forward.4']
  %s0 = inlined_call_operand.vmem [shape: f32[9,8,32], index: 0, kind: input, shape index: {}]
  %s1 = inlined_call_operand.vmem [shape: f32[9,8,1], index: 1, kind: input, shape index: {}]
  %s2 = inlined_call_operand.vmem [shape: f32[1,32], index: 2, kind: input, shape index: {}]
  %s3 = inlined_call_operand.vmem [shape: f32[1,32], index: 3, kind: input, shape index: {}]
  %s4 = inlined_call_operand.vmem [shape: f32[1,32], index: 4, kind: input, shape index: {}]
  %s5 = inlined_call_operand.vmem [shape: f32[1,32], index: 5, kind: input, shape index: {}]
  %s6 = inlined_call_operand.vmem [shape: f32[1,32], index: 6, kind: input, shape index: {}]
  %s7 = inlined_call_operand.vmem [shape: f32[1,32], index: 7, kind: input, shape index: {}]
  %s8 = inlined_call_operand.vmem [shape: f32[32,16], index: 8, kind: input, shape index: {}]
  %s9 = inlined_call_operand.vmem [shape: f32[1,16], index: 9, kind: input, shape index: {}]
  %s10 = inlined_call_operand.vmem [shape: f32[16,32], index: 10, kind: input, shape index: {}]
  %s11 = inlined_call_operand.vmem [shape: f32[1,32], index: 11, kind: input, shape index: {}]
  %s12 = inlined_call_operand.vmem [shape: f32[1,32], index: 12, kind: input, shape index: {}]
  %s13 = inlined_call_operand.vmem [shape: f32[4,9], index: 13, kind: input, shape index: {}]
  %s14 = inlined_call_operand.vmem [shape: f32[4,1], index: 14, kind: input, shape index: {}]
  %s15 = inlined_call_operand.vmem [shape: f32[9,4], index: 15, kind: input, shape index: {}]
  %s16 = inlined_call_operand.vmem [shape: f32[9,1], index: 16, kind: input, shape index: {}]
  %s17 = inlined_call_operand.<no memory space> [shape: f32[1,1], index: 17, kind: input, shape index: {}]
  %s18 = inlined_call_operand.vmem [shape: f32[8,32], index: 18, kind: output, shape index: {0}]
  %s19 = inlined_call_operand.vmem [shape: f32[8,8,32], index: 19, kind: output, shape index: {1}]
  %20 = xla_tuple %s18, %s19
  %s21 = sld [smem:[#allocation0]]
  $region106: #{new_model_forward.4} parent=0
    _
  %s23 = ssub.s32 1, %s21
  %s24 = scalar_select 0, %s23, %s21
  %25 = sst [smem:[#allocation2]] %s17
  $region1: #{new_model_forward.4} parent=0
    #allocation3 [shape = 'u8[2048]{0}', space=smem, size = 0x800, scoped, tag = 'input window, operand 13, single buffered']
    #allocation4 [shape = 's32[1]{0}', space=sflag, size = 0x4, scoped, tag = 'scoped memory for new_model_forward.4']
    #allocation5 [shape = 'u8[2048]{0}', space=smem, size = 0x800, scoped, tag = 'input window, operand 14, single buffered']
    #allocation6 [shape = 's32[1]{0}', space=sflag, size = 0x4, scoped, tag = 'scoped memory for new_model_forward.4']
    #allocation7 [shape = 'u8[8192]{0}', space=smem, size = 0x2000, scoped, tag = 'input window, operand 15, single buffered']
    #allocation8 [shape = 'u8[8192]{0}', space=smem, size = 0x2000, scoped, tag = 'input window, operand 16, single buffered']
    #allocation9 [shape = 's32[1]{0}', space=sflag, size = 0x4, scoped, tag = 'scoped memory for new_model_forward.4']
    %26 = vsyncpa [#allocation4], 0
    %27 = vsyncpa [#allocation6], 0
    %28 = vsyncpa [#allocation9], 0
    // Predicated region
    $region2: #{new_model_forward.4} parent=1 // pred_check
      _
    $region3: #{new_model_forward.4} parent=1 // pred_check_branch
      %30 = sbr.rel (0) target = $region5
    $region4: #{new_model_forward.4} parent=1 // pred_region
      _
    $region5: #{new_model_forward.4} parent=1 // pred_fallthru
      _
    // Predicated region
    $region6: #{new_model_forward.4} parent=1 // pred_check
      _
    $region7: #{new_model_forward.4} parent=1 // pred_check_branch
      %32 = sbr.rel (0) target = $region9
    $region8: #{new_model_forward.4} parent=1 // pred_region
      _
    $region9: #{new_model_forward.4} parent=1 // pred_fallthru
      _
    // Predicated region
    $region10: #{new_model_forward.4} parent=1 // pred_check
      _
    $region11: #{new_model_forward.4} parent=1 // pred_check_branch
      %34 = sbr.rel (0) target = $region13
    $region12: #{new_model_forward.4} parent=1 // pred_region
      _
    $region13: #{new_model_forward.4} parent=1 // pred_fallthru
      _
    // Predicated region
    $region14: #{new_model_forward.4} parent=1 // pred_check
      _
    $region15: #{new_model_forward.4} parent=1 // pred_check_branch
      %36 = sbr.rel (0) target = $region17
    $region16: #{new_model_forward.4} parent=1 // pred_region
      _
    $region17: #{new_model_forward.4} parent=1 // pred_fallthru
      _
    // Predicated region
    $region18: #{new_model_forward.4} parent=1 // pred_check
      _
    $region19: #{new_model_forward.4} parent=1 // pred_check_branch
      %38 = sbr.rel (0) target = $region21
    $region20: #{new_model_forward.4} parent=1 // pred_region
      _
    $region21: #{new_model_forward.4} parent=1 // pred_fallthru
      _
    // Predicated region
    $region22: #{new_model_forward.4} parent=1 // pred_check
      _
    $region23: #{new_model_forward.4} parent=1 // pred_check_branch
      %40 = sbr.rel (0) target = $region25
    $region24: #{new_model_forward.4} parent=1 // pred_region
      _
    $region25: #{new_model_forward.4} parent=1 // pred_fallthru
      _
    // Predicated region
    $region26: #{new_model_forward.4} parent=1 // pred_check
      _
    $region27: #{new_model_forward.4} parent=1 // pred_check_branch
      %42 = sbr.rel (0) target = $region29
    $region28: #{new_model_forward.4} parent=1 // pred_region
      _
    $region29: #{new_model_forward.4} parent=1 // pred_fallthru
      _
    // Predicated region
    $region30: #{new_model_forward.4} parent=1 // pred_check
      _
    $region31: #{new_model_forward.4} parent=1 // pred_check_branch
      %44 = sbr.rel (0) target = $region33
    $region32: #{new_model_forward.4} parent=1 // pred_region
      _
    $region33: #{new_model_forward.4} parent=1 // pred_fallthru
      _
    // Predicated region
    $region34: #{new_model_forward.4} parent=1 // pred_check
      _
    $region35: #{new_model_forward.4} parent=1 // pred_check_branch
      %46 = sbr.rel (0) target = $region37
    $region36: #{new_model_forward.4} parent=1 // pred_region
      _
    $region37: #{new_model_forward.4} parent=1 // pred_fallthru
      _
    // Predicated region
    $region38: #{new_model_forward.4} parent=1 // pred_check
      _
    $region39: #{new_model_forward.4} parent=1 // pred_check_branch
      %48 = sbr.rel (0) target = $region41
    $region40: #{new_model_forward.4} parent=1 // pred_region
      _
    $region41: #{new_model_forward.4} parent=1 // pred_fallthru
      _
    // Predicated region
    $region42: #{new_model_forward.4} parent=1 // pred_check
      _
    $region43: #{new_model_forward.4} parent=1 // pred_check_branch
      %50 = sbr.rel (0) target = $region45
    $region44: #{new_model_forward.4} parent=1 // pred_region
      _
    $region45: #{new_model_forward.4} parent=1 // pred_fallthru
      _
    // Predicated region
    $region46: #{new_model_forward.4} parent=1 // pred_check
      _
    $region47: #{new_model_forward.4} parent=1 // pred_check_branch
      %52 = sbr.rel (0) target = $region49
    $region48: #{new_model_forward.4} parent=1 // pred_region
      _
    $region49: #{new_model_forward.4} parent=1 // pred_fallthru
      _
    // Predicated region
    $region50: #{new_model_forward.4} parent=1 // pred_check
      _
    $region51: #{new_model_forward.4} parent=1 // pred_check_branch
      %54 = sbr.rel (0) target = $region53
    $region52: #{new_model_forward.4} parent=1 // pred_region
      _
    $region53: #{new_model_forward.4} parent=1 // pred_fallthru
      _
    // Predicated region
    $region54: #{new_model_forward.4} parent=1 // pred_check
      _
    $region55: #{new_model_forward.4} parent=1 // pred_check_branch
      %56 = sbr.rel (0) target = $region57
    $region56: #{new_model_forward.4} parent=1 // pred_region
      %s58 = ssub.s32 64, 64
      %59 = vsyncadd [#allocation4], %s58
      %s61 = sshll.u32 %s13, 4
      %s62 = int_to_ptr.vmem [resolvable:$true] %s61
      %64 = dma.vmem_to_smem %s62, 64, [#allocation3], [#allocation4]
    $region57: #{new_model_forward.4} parent=1 // pred_fallthru
      _
    // Predicated region
    $region58: #{new_model_forward.4} parent=1 // pred_check
      _
    $region59: #{new_model_forward.4} parent=1 // pred_check_branch
      %66 = sbr.rel (0) target = $region61
    $region60: #{new_model_forward.4} parent=1 // pred_region
      %s68 = ssub.s32 64, 64
      %69 = vsyncadd [#allocation6], %s68
      %s71 = sshll.u32 %s14, 4
      %s72 = int_to_ptr.vmem [resolvable:$true] %s71
      %74 = dma.vmem_to_smem %s72, 64, [#allocation5], [#allocation6]
    $region61: #{new_model_forward.4} parent=1 // pred_fallthru
      _
    // Predicated region
    $region62: #{new_model_forward.4} parent=1 // pred_check
      _
    $region63: #{new_model_forward.4} parent=1 // pred_check_branch
      %76 = sbr.rel (0) target = $region65
    $region64: #{new_model_forward.4} parent=1 // pred_region
      %s78 = ssub.s32 256, 256
      %79 = vsyncadd [#allocation6], %s78
      %s80 = sshll.u32 %s15, 4
      %s81 = int_to_ptr.vmem [resolvable:$true] %s80
      %86 = dma.vmem_to_smem %s81, 256, [#allocation7], [#allocation6], 128, 128, 8
    $region65: #{new_model_forward.4} parent=1 // pred_fallthru
      _
    // Predicated region
    $region66: #{new_model_forward.4} parent=1 // pred_check
      _
    $region67: #{new_model_forward.4} parent=1 // pred_check_branch
      %88 = sbr.rel (0) target = $region69
    $region68: #{new_model_forward.4} parent=1 // pred_region
      %s90 = ssub.s32 256, 256
      %91 = vsyncadd [#allocation9], %s90
      %s92 = sshll.u32 %s16, 4
      %s93 = int_to_ptr.vmem [resolvable:$true] %s92
      %98 = dma.vmem_to_smem %s93, 256, [#allocation8], [#allocation9], 128, 128, 8
    $region69: #{new_model_forward.4} parent=1 // pred_fallthru
      _
    // Predicated region
    $region70: #{new_model_forward.4} parent=1 // pred_check
      _
    $region71: #{new_model_forward.4} parent=1 // pred_check_branch
      %100 = sbr.rel (0) target = $region73
    $region72: #{new_model_forward.4} parent=1 // pred_region
      _
    $region73: #{new_model_forward.4} parent=1 // pred_fallthru
      _
    // Predicated region
    $region74: #{new_model_forward.4} parent=1 // pred_check
      _
    $region75: #{new_model_forward.4} parent=1 // pred_check_branch
      %102 = sbr.rel (0) target = $region77
    $region76: #{new_model_forward.4} parent=1 // pred_region
      %103 = dma.done [#allocation4], 64
    $region77: #{new_model_forward.4} parent=1 // pred_fallthru
      _
    // Predicated region
    $region78: #{new_model_forward.4} parent=1 // pred_check
      _
    $region79: #{new_model_forward.4} parent=1 // pred_check_branch
      %105 = sbr.rel (0) target = $region81
    $region80: #{new_model_forward.4} parent=1 // pred_region
      %106 = dma.done [#allocation6], 64
    $region81: #{new_model_forward.4} parent=1 // pred_fallthru
      _
    // Predicated region
    $region82: #{new_model_forward.4} parent=1 // pred_check
      _
    $region83: #{new_model_forward.4} parent=1 // pred_check_branch
      %108 = sbr.rel (0) target = $region85
    $region84: #{new_model_forward.4} parent=1 // pred_region
      %109 = dma.done [#allocation6], 256
    $region85: #{new_model_forward.4} parent=1 // pred_fallthru
      _
    // Predicated region
    $region86: #{new_model_forward.4} parent=1 // pred_check
      _
    $region87: #{new_model_forward.4} parent=1 // pred_check_branch
      %111 = sbr.rel (0) target = $region89
    $region88: #{new_model_forward.4} parent=1 // pred_region
      %112 = dma.done [#allocation9], 256
    $region89: #{new_model_forward.4} parent=1 // pred_fallthru
      _
    %113 = sfence
    %v114 = vld [vmem:[%s0] sm:$0xff]
    %v115 = vld [vmem:[%s0 + $0x8] sm:$0xff]
    %v116 = vld [vmem:[%s0 + $0x10] sm:$0xff]
    %v117 = vld [vmem:[%s0 + $0x18] sm:$0xff]
    %v118 = vld [vmem:[%s0 + $0x20] sm:$0xff]
    %v119 = vld [vmem:[%s0 + $0x28] sm:$0xff]
    %v120 = vld [vmem:[%s0 + $0x30] sm:$0xff]
    %v121 = vld [vmem:[%s0 + $0x38] sm:$0xff]
    %v122 = vld [vmem:[%s0 + $0x40] sm:$0xff]
    %v123 = vld [vmem:[%s1] sm:$0xff]
    %v124 = vld [vmem:[%s1 + $0x8] sm:$0xff]
    %v125 = vld [vmem:[%s1 + $0x10] sm:$0xff]
    %v126 = vld [vmem:[%s1 + $0x18] sm:$0xff]
    %v127 = vld [vmem:[%s1 + $0x20] sm:$0xff]
    %v128 = vld [vmem:[%s1 + $0x28] sm:$0xff]
    %v129 = vld [vmem:[%s1 + $0x30] sm:$0xff]
    %v130 = vld [vmem:[%s1 + $0x38] sm:$0xff]
    %v131 = vld [vmem:[%s1 + $0x40] sm:$0xff]
    %133 = vset.pattern.permute.xlu0 0
    %134 = vperm.xlu0 %133, %v123
    %v135 = vpop.permute.xlu0 %134
    %138 = vset.pattern.permute.xlu0 0
    %139 = vperm.xlu0 %138, %v124
    %v140 = vpop.permute.xlu0 %139
    %143 = vset.pattern.permute.xlu0 0
    %144 = vperm.xlu0 %143, %v125
    %v145 = vpop.permute.xlu0 %144
    %148 = vset.pattern.permute.xlu0 0
    %149 = vperm.xlu0 %148, %v126
    %v150 = vpop.permute.xlu0 %149
    %153 = vset.pattern.permute.xlu0 0
    %154 = vperm.xlu0 %153, %v127
    %v155 = vpop.permute.xlu0 %154
    %158 = vset.pattern.permute.xlu0 0
    %159 = vperm.xlu0 %158, %v128
    %v160 = vpop.permute.xlu0 %159
    %163 = vset.pattern.permute.xlu0 0
    %164 = vperm.xlu0 %163, %v129
    %v165 = vpop.permute.xlu0 %164
    %168 = vset.pattern.permute.xlu0 0
    %169 = vperm.xlu0 %168, %v130
    %v170 = vpop.permute.xlu0 %169
    %173 = vset.pattern.permute.xlu0 0
    %174 = vperm.xlu0 %173, %v131
    %v175 = vpop.permute.xlu0 %174
    %v177 = vmul.f32 %v114, %v135
    %v178 = vmul.f32 %v115, %v140
    %v179 = vmul.f32 %v116, %v145
    %v180 = vmul.f32 %v117, %v150
    %v181 = vmul.f32 %v118, %v155
    %v182 = vmul.f32 %v119, %v160
    %v183 = vmul.f32 %v120, %v165
    %v184 = vmul.f32 %v121, %v170
    %v185 = vmul.f32 %v122, %v175
    %v186 = vld [vmem:[%s2] sm:$0x1]
    %v187 = vld [vmem:[%s3] sm:$0x1]
    %vm188 = vcmask 261120
    %v189 = vsel %vm188, %v177, 0.0
    %190 = vadd.xlane.f32.xlu0 %v189
    %v191 = vpop.xlane.xlu0 %190
    %v192 = vsel %vm188, %v178, 0.0
    %193 = vadd.xlane.f32.xlu0 %v192
    %v194 = vpop.xlane.xlu0 %193
    %v195 = vsel %vm188, %v179, 0.0
    %196 = vadd.xlane.f32.xlu0 %v195
    %v197 = vpop.xlane.xlu0 %196
    %v198 = vsel %vm188, %v180, 0.0
    %199 = vadd.xlane.f32.xlu0 %v198
    %v200 = vpop.xlane.xlu0 %199
    %v201 = vsel %vm188, %v181, 0.0
    %202 = vadd.xlane.f32.xlu0 %v201
    %v203 = vpop.xlane.xlu0 %202
    %v204 = vsel %vm188, %v182, 0.0
    %205 = vadd.xlane.f32.xlu0 %v204
    %v206 = vpop.xlane.xlu0 %205
    %v207 = vsel %vm188, %v183, 0.0
    %208 = vadd.xlane.f32.xlu0 %v207
    %v209 = vpop.xlane.xlu0 %208
    %v210 = vsel %vm188, %v184, 0.0
    %211 = vadd.xlane.f32.xlu0 %v210
    %v212 = vpop.xlane.xlu0 %211
    %v213 = vsel %vm188, %v185, 0.0
    %214 = vadd.xlane.f32.xlu0 %v213
    %v215 = vpop.xlane.xlu0 %214
    %v216 = vrcp.pop 32.0
    %v217 = vmul.f32 %v191, %v216
    %v218 = vmul.f32 %v194, %v216
    %v219 = vmul.f32 %v197, %v216
    %v220 = vmul.f32 %v200, %v216
    %v221 = vmul.f32 %v203, %v216
    %v222 = vmul.f32 %v206, %v216
    %v223 = vmul.f32 %v209, %v216
    %v224 = vmul.f32 %v212, %v216
    %v225 = vmul.f32 %v215, %v216
    %v226 = vsub.f32 %v177, %v217
    %v227 = vsub.f32 %v178, %v218
    %v228 = vsub.f32 %v179, %v219
    %v229 = vsub.f32 %v180, %v220
    %v230 = vsub.f32 %v181, %v221
    %v231 = vsub.f32 %v182, %v222
    %v232 = vsub.f32 %v183, %v223
    %v233 = vsub.f32 %v184, %v224
    %v234 = vsub.f32 %v185, %v225
    %v235 = vmul.f32 %v226, %v226
    %v236 = vmul.f32 %v227, %v227
    %v237 = vmul.f32 %v228, %v228
    %v238 = vmul.f32 %v229, %v229
    %v239 = vmul.f32 %v230, %v230
    %v240 = vmul.f32 %v231, %v231
    %v241 = vmul.f32 %v232, %v232
    %v242 = vmul.f32 %v233, %v233
    %v243 = vmul.f32 %v234, %v234
    %v244 = vsel %vm188, %v235, 0.0
    %245 = vadd.xlane.f32.xlu0 %v244
    %v246 = vpop.xlane.xlu0 %245
    %v247 = vsel %vm188, %v236, 0.0
    %248 = vadd.xlane.f32.xlu0 %v247
    %v249 = vpop.xlane.xlu0 %248
    %v250 = vsel %vm188, %v237, 0.0
    %251 = vadd.xlane.f32.xlu0 %v250
    %v252 = vpop.xlane.xlu0 %251
    %v253 = vsel %vm188, %v238, 0.0
    %254 = vadd.xlane.f32.xlu0 %v253
    %v255 = vpop.xlane.xlu0 %254
    %v256 = vsel %vm188, %v239, 0.0
    %257 = vadd.xlane.f32.xlu0 %v256
    %v258 = vpop.xlane.xlu0 %257
    %v259 = vsel %vm188, %v240, 0.0
    %260 = vadd.xlane.f32.xlu0 %v259
    %v261 = vpop.xlane.xlu0 %260
    %v262 = vsel %vm188, %v241, 0.0
    %263 = vadd.xlane.f32.xlu0 %v262
    %v264 = vpop.xlane.xlu0 %263
    %v265 = vsel %vm188, %v242, 0.0
    %266 = vadd.xlane.f32.xlu0 %v265
    %v267 = vpop.xlane.xlu0 %266
    %v268 = vsel %vm188, %v243, 0.0
    %269 = vadd.xlane.f32.xlu0 %v268
    %v270 = vpop.xlane.xlu0 %269
    %v271 = vmul.f32 %v246, %v216
    %v272 = vmul.f32 %v249, %v216
    %v273 = vmul.f32 %v252, %v216
    %v274 = vmul.f32 %v255, %v216
    %v275 = vmul.f32 %v258, %v216
    %v276 = vmul.f32 %v261, %v216
    %v277 = vmul.f32 %v264, %v216
    %v278 = vmul.f32 %v267, %v216
    %v279 = vmul.f32 %v270, %v216
    %v280 = vadd.f32 %v271, 1e-05
    %v281 = vadd.f32 %v272, 1e-05
    %v282 = vadd.f32 %v273, 1e-05
    %v283 = vadd.f32 %v274, 1e-05
    %v284 = vadd.f32 %v275, 1e-05
    %v285 = vadd.f32 %v276, 1e-05
    %v286 = vadd.f32 %v277, 1e-05
    %v287 = vadd.f32 %v278, 1e-05
    %v288 = vadd.f32 %v279, 1e-05
    %v289 = vrsqrt.pop %v280
    %v290 = vrsqrt.pop %v281
    %v291 = vrsqrt.pop %v282
    %v292 = vrsqrt.pop %v283
    %v293 = vrsqrt.pop %v284
    %v294 = vrsqrt.pop %v285
    %v295 = vrsqrt.pop %v286
    %v296 = vrsqrt.pop %v287
    %v297 = vrsqrt.pop %v288
    %v298 = vmul.f32 %v226, %v289
    %v299 = vmul.f32 %v227, %v290
    %v300 = vmul.f32 %v228, %v291
    %v301 = vmul.f32 %v229, %v292
    %v302 = vmul.f32 %v230, %v293
    %v303 = vmul.f32 %v231, %v294
    %v304 = vmul.f32 %v232, %v295
    %v305 = vmul.f32 %v233, %v296
    %v306 = vmul.f32 %v234, %v297
    %v308 = vlaneseq
    %v309 = vshrl.u32 %v308, 7
    %v310 = vsub.s32 0, %v309
    %v311 = vrot.slane %v186, %v310
    %v313 = vmul.f32 %v298, %v311
    %v314 = vmul.f32 %v299, %v311
    %v315 = vmul.f32 %v300, %v311
    %v316 = vmul.f32 %v301, %v311
    %v317 = vmul.f32 %v302, %v311
    %v318 = vmul.f32 %v303, %v311
    %v319 = vmul.f32 %v304, %v311
    %v320 = vmul.f32 %v305, %v311
    %v321 = vmul.f32 %v306, %v311
    %v323 = vlaneseq
    %v324 = vshrl.u32 %v323, 7
    %v325 = vsub.s32 0, %v324
    %v326 = vrot.slane %v187, %v325
    %v328 = vadd.f32 %v313, %v326
    %v329 = vadd.f32 %v314, %v326
    %v330 = vadd.f32 %v315, %v326
    %v331 = vadd.f32 %v316, %v326
    %v332 = vadd.f32 %v317, %v326
    %v333 = vadd.f32 %v318, %v326
    %v334 = vadd.f32 %v319, %v326
    %v335 = vadd.f32 %v320, %v326
    %v336 = vadd.f32 %v321, %v326
    %s337 = sld [smem:[#allocation3]]
    %v338 = vstv %s337
    %v339 = vmul.f32 %v338, %v328
    %s340 = sld [smem:[#allocation3 + $0x1]]
    %v341 = vstv %s340
    %v342 = vmul.f32 %v341, %v329
    %v343 = vadd.f32 %v339, %v342
    %s344 = sld [smem:[#allocation3 + $0x2]]
    %v345 = vstv %s344
    %v346 = vmul.f32 %v345, %v330
    %v347 = vadd.f32 %v343, %v346
    %s348 = sld [smem:[#allocation3 + $0x3]]
    %v349 = vstv %s348
    %v350 = vmul.f32 %v349, %v331
    %v351 = vadd.f32 %v347, %v350
    %s352 = sld [smem:[#allocation3 + $0x4]]
    %v353 = vstv %s352
    %v354 = vmul.f32 %v353, %v332
    %v355 = vadd.f32 %v351, %v354
    %s356 = sld [smem:[#allocation3 + $0x5]]
    %v357 = vstv %s356
    %v358 = vmul.f32 %v357, %v333
    %v359 = vadd.f32 %v355, %v358
    %s360 = sld [smem:[#allocation3 + $0x6]]
    %v361 = vstv %s360
    %v362 = vmul.f32 %v361, %v334
    %v363 = vadd.f32 %v359, %v362
    %s364 = sld [smem:[#allocation3 + $0x7]]
    %v365 = vstv %s364
    %v366 = vmul.f32 %v365, %v335
    %v367 = vadd.f32 %v363, %v366
    %s368 = sld [smem:[#allocation3 + $0x8]]
    %v369 = vstv %s368
    %v370 = vmul.f32 %v369, %v336
    %v371 = vadd.f32 %v367, %v370
    %s372 = sld [smem:[#allocation5]]
    %v373 = vstv %s372
    %v374 = vadd.f32 %v371, %v373
    %v375 = vmul.f32 %v374, %v374
    %v376 = vmul.f32 %v374, %v375
    %v377 = vmul.f32 %v376, 0.044715
    %v378 = vadd.f32 %v374, %v377
    %v379 = vmul.f32 %v378, 0.7978846
    %v380 = vtanh.pop %v379
    %v381 = vadd.f32 %v380, 1.0
    %v382 = vmul.f32 %v381, 0.5
    %v383 = vmul.f32 %v374, %v382
    %s384 = sld [smem:[#allocation3 + $0x80]]
    %v385 = vstv %s384
    %v386 = vmul.f32 %v385, %v328
    %s387 = sld [smem:[#allocation3 + $0x81]]
    %v388 = vstv %s387
    %v389 = vmul.f32 %v388, %v329
    %v390 = vadd.f32 %v386, %v389
    %s391 = sld [smem:[#allocation3 + $0x82]]
    %v392 = vstv %s391
    %v393 = vmul.f32 %v392, %v330
    %v394 = vadd.f32 %v390, %v393
    %s395 = sld [smem:[#allocation3 + $0x83]]
    %v396 = vstv %s395
    %v397 = vmul.f32 %v396, %v331
    %v398 = vadd.f32 %v394, %v397
    %s399 = sld [smem:[#allocation3 + $0x84]]
    %v400 = vstv %s399
    %v401 = vmul.f32 %v400, %v332
    %v402 = vadd.f32 %v398, %v401
    %s403 = sld [smem:[#allocation3 + $0x85]]
    %v404 = vstv %s403
    %v405 = vmul.f32 %v404, %v333
    %v406 = vadd.f32 %v402, %v405
    %s407 = sld [smem:[#allocation3 + $0x86]]
    %v408 = vstv %s407
    %v409 = vmul.f32 %v408, %v334
    %v410 = vadd.f32 %v406, %v409
    %s411 = sld [smem:[#allocation3 + $0x87]]
    %v412 = vstv %s411
    %v413 = vmul.f32 %v412, %v335
    %v414 = vadd.f32 %v410, %v413
    %s415 = sld [smem:[#allocation3 + $0x88]]
    %v416 = vstv %s415
    %v417 = vmul.f32 %v416, %v336
    %v418 = vadd.f32 %v414, %v417
    %s419 = sld [smem:[#allocation5 + $0x80]]
    %v420 = vstv %s419
    %v421 = vadd.f32 %v418, %v420
    %v422 = vmul.f32 %v421, %v421
    %v423 = vmul.f32 %v421, %v422
    %v424 = vmul.f32 %v423, 0.044715
    %v425 = vadd.f32 %v421, %v424
    %v426 = vmul.f32 %v425, 0.7978846
    %v427 = vtanh.pop %v426
    %v428 = vadd.f32 %v427, 1.0
    %v429 = vmul.f32 %v428, 0.5
    %v430 = vmul.f32 %v421, %v429
    %s431 = sld [smem:[#allocation3 + $0x100]]
    %v432 = vstv %s431
    %v433 = vmul.f32 %v432, %v328
    %s434 = sld [smem:[#allocation3 + $0x101]]
    %v435 = vstv %s434
    %v436 = vmul.f32 %v435, %v329
    %v437 = vadd.f32 %v433, %v436
    %s438 = sld [smem:[#allocation3 + $0x102]]
    %v439 = vstv %s438
    %v440 = vmul.f32 %v439, %v330
    %v441 = vadd.f32 %v437, %v440
    %s442 = sld [smem:[#allocation3 + $0x103]]
    %v443 = vstv %s442
    %v444 = vmul.f32 %v443, %v331
    %v445 = vadd.f32 %v441, %v444
    %s446 = sld [smem:[#allocation3 + $0x104]]
    %v447 = vstv %s446
    %v448 = vmul.f32 %v447, %v332
    %v449 = vadd.f32 %v445, %v448
    %s450 = sld [smem:[#allocation3 + $0x105]]
    %v451 = vstv %s450
    %v452 = vmul.f32 %v451, %v333
    %v453 = vadd.f32 %v449, %v452
    %s454 = sld [smem:[#allocation3 + $0x106]]
    %v455 = vstv %s454
    %v456 = vmul.f32 %v455, %v334
    %v457 = vadd.f32 %v453, %v456
    %s458 = sld [smem:[#allocation3 + $0x107]]
    %v459 = vstv %s458
    %v460 = vmul.f32 %v459, %v335
    %v461 = vadd.f32 %v457, %v460
    %s462 = sld [smem:[#allocation3 + $0x108]]
    %v463 = vstv %s462
    %v464 = vmul.f32 %v463, %v336
    %v465 = vadd.f32 %v461, %v464
    %s466 = sld [smem:[#allocation5 + $0x100]]
    %v467 = vstv %s466
    %v468 = vadd.f32 %v465, %v467
    %v469 = vmul.f32 %v468, %v468
    %v470 = vmul.f32 %v468, %v469
    %v471 = vmul.f32 %v470, 0.044715
    %v472 = vadd.f32 %v468, %v471
    %v473 = vmul.f32 %v472, 0.7978846
    %v474 = vtanh.pop %v473
    %v475 = vadd.f32 %v474, 1.0
    %v476 = vmul.f32 %v475, 0.5
    %v477 = vmul.f32 %v468, %v476
    %s478 = sld [smem:[#allocation3 + $0x180]]
    %v479 = vstv %s478
    %v480 = vmul.f32 %v479, %v328
    %s481 = sld [smem:[#allocation3 + $0x181]]
    %v482 = vstv %s481
    %v483 = vmul.f32 %v482, %v329
    %v484 = vadd.f32 %v480, %v483
    %s485 = sld [smem:[#allocation3 + $0x182]]
    %v486 = vstv %s485
    %v487 = vmul.f32 %v486, %v330
    %v488 = vadd.f32 %v484, %v487
    %s489 = sld [smem:[#allocation3 + $0x183]]
    %v490 = vstv %s489
    %v491 = vmul.f32 %v490, %v331
    %v492 = vadd.f32 %v488, %v491
    %s493 = sld [smem:[#allocation3 + $0x184]]
    %v494 = vstv %s493
    %v495 = vmul.f32 %v494, %v332
    %v496 = vadd.f32 %v492, %v495
    %s497 = sld [smem:[#allocation3 + $0x185]]
    %v498 = vstv %s497
    %v499 = vmul.f32 %v498, %v333
    %v500 = vadd.f32 %v496, %v499
    %s501 = sld [smem:[#allocation3 + $0x186]]
    %v502 = vstv %s501
    %v503 = vmul.f32 %v502, %v334
    %v504 = vadd.f32 %v500, %v503
    %s505 = sld [smem:[#allocation3 + $0x187]]
    %v506 = vstv %s505
    %v507 = vmul.f32 %v506, %v335
    %v508 = vadd.f32 %v504, %v507
    %s509 = sld [smem:[#allocation3 + $0x188]]
    %v510 = vstv %s509
    %v511 = vmul.f32 %v510, %v336
    %v512 = vadd.f32 %v508, %v511
    %s513 = sld [smem:[#allocation5 + $0x180]]
    %v514 = vstv %s513
    %v515 = vadd.f32 %v512, %v514
    %v516 = vmul.f32 %v515, %v515
    %v517 = vmul.f32 %v515, %v516
    %v518 = vmul.f32 %v517, 0.044715
    %v519 = vadd.f32 %v515, %v518
    %v520 = vmul.f32 %v519, 0.7978846
    %v521 = vtanh.pop %v520
    %v522 = vadd.f32 %v521, 1.0
    %v523 = vmul.f32 %v522, 0.5
    %v524 = vmul.f32 %v515, %v523
    %s525 = sld [smem:[#allocation7]]
    %v526 = vstv %s525
    %v527 = vmul.f32 %v526, %v383
    %s528 = sld [smem:[#allocation7 + $0x1]]
    %v529 = vstv %s528
    %v530 = vmul.f32 %v529, %v430
    %v531 = vadd.f32 %v527, %v530
    %s532 = sld [smem:[#allocation7 + $0x2]]
    %v533 = vstv %s532
    %v534 = vmul.f32 %v533, %v477
    %v535 = vadd.f32 %v531, %v534
    %s536 = sld [smem:[#allocation7 + $0x3]]
    %v537 = vstv %s536
    %v538 = vmul.f32 %v537, %v524
    %v539 = vadd.f32 %v535, %v538
    %v540 = vadd.f32 %v114, %v539
    %s541 = sld [smem:[#allocation8]]
    %v542 = vstv %s541
    %v543 = vadd.f32 %v540, %v542
    %s544 = sld [smem:[#allocation7 + $0x80]]
    %v545 = vstv %s544
    %v546 = vmul.f32 %v545, %v383
    %s547 = sld [smem:[#allocation7 + $0x81]]
    %v548 = vstv %s547
    %v549 = vmul.f32 %v548, %v430
    %v550 = vadd.f32 %v546, %v549
    %s551 = sld [smem:[#allocation7 + $0x82]]
    %v552 = vstv %s551
    %v553 = vmul.f32 %v552, %v477
    %v554 = vadd.f32 %v550, %v553
    %s555 = sld [smem:[#allocation7 + $0x83]]
    %v556 = vstv %s555
    %v557 = vmul.f32 %v556, %v524
    %v558 = vadd.f32 %v554, %v557
    %v559 = vadd.f32 %v115, %v558
    %s560 = sld [smem:[#allocation8 + $0x80]]
    %v561 = vstv %s560
    %v562 = vadd.f32 %v559, %v561
    %s563 = sld [smem:[#allocation7 + $0x100]]
    %v564 = vstv %s563
    %v565 = vmul.f32 %v564, %v383
    %s566 = sld [smem:[#allocation7 + $0x101]]
    %v567 = vstv %s566
    %v568 = vmul.f32 %v567, %v430
    %v569 = vadd.f32 %v565, %v568
    %s570 = sld [smem:[#allocation7 + $0x102]]
    %v571 = vstv %s570
    %v572 = vmul.f32 %v571, %v477
    %v573 = vadd.f32 %v569, %v572
    %s574 = sld [smem:[#allocation7 + $0x103]]
    %v575 = vstv %s574
    %v576 = vmul.f32 %v575, %v524
    %v577 = vadd.f32 %v573, %v576
    %v578 = vadd.f32 %v116, %v577
    %s579 = sld [smem:[#allocation8 + $0x100]]
    %v580 = vstv %s579
    %v581 = vadd.f32 %v578, %v580
    %s582 = sld [smem:[#allocation7 + $0x180]]
    %v583 = vstv %s582
    %v584 = vmul.f32 %v583, %v383
    %s585 = sld [smem:[#allocation7 + $0x181]]
    %v586 = vstv %s585
    %v587 = vmul.f32 %v586, %v430
    %v588 = vadd.f32 %v584, %v587
    %s589 = sld [smem:[#allocation7 + $0x182]]
    %v590 = vstv %s589
    %v591 = vmul.f32 %v590, %v477
    %v592 = vadd.f32 %v588, %v591
    %s593 = sld [smem:[#allocation7 + $0x183]]
    %v594 = vstv %s593
    %v595 = vmul.f32 %v594, %v524
    %v596 = vadd.f32 %v592, %v595
    %v597 = vadd.f32 %v117, %v596
    %s598 = sld [smem:[#allocation8 + $0x180]]
    %v599 = vstv %s598
    %v600 = vadd.f32 %v597, %v599
    %s601 = sld [smem:[#allocation7 + $0x200]]
    %v602 = vstv %s601
    %v603 = vmul.f32 %v602, %v383
    %s604 = sld [smem:[#allocation7 + $0x201]]
    %v605 = vstv %s604
    %v606 = vmul.f32 %v605, %v430
    %v607 = vadd.f32 %v603, %v606
    %s608 = sld [smem:[#allocation7 + $0x202]]
    %v609 = vstv %s608
    %v610 = vmul.f32 %v609, %v477
    %v611 = vadd.f32 %v607, %v610
    %s612 = sld [smem:[#allocation7 + $0x203]]
    %v613 = vstv %s612
    %v614 = vmul.f32 %v613, %v524
    %v615 = vadd.f32 %v611, %v614
    %v616 = vadd.f32 %v118, %v615
    %s617 = sld [smem:[#allocation8 + $0x200]]
    %v618 = vstv %s617
    %v619 = vadd.f32 %v616, %v618
    %s620 = sld [smem:[#allocation7 + $0x280]]
    %v621 = vstv %s620
    %v622 = vmul.f32 %v621, %v383
    %s623 = sld [smem:[#allocation7 + $0x281]]
    %v624 = vstv %s623
    %v625 = vmul.f32 %v624, %v430
    %v626 = vadd.f32 %v622, %v625
    %s627 = sld [smem:[#allocation7 + $0x282]]
    %v628 = vstv %s627
    %v629 = vmul.f32 %v628, %v477
    %v630 = vadd.f32 %v626, %v629
    %s631 = sld [smem:[#allocation7 + $0x283]]
    %v632 = vstv %s631
    %v633 = vmul.f32 %v632, %v524
    %v634 = vadd.f32 %v630, %v633
    %v635 = vadd.f32 %v119, %v634
    %s636 = sld [smem:[#allocation8 + $0x280]]
    %v637 = vstv %s636
    %v638 = vadd.f32 %v635, %v637
    %s639 = sld [smem:[#allocation7 + $0x300]]
    %v640 = vstv %s639
    %v641 = vmul.f32 %v640, %v383
    %s642 = sld [smem:[#allocation7 + $0x301]]
    %v643 = vstv %s642
    %v644 = vmul.f32 %v643, %v430
    %v645 = vadd.f32 %v641, %v644
    %s646 = sld [smem:[#allocation7 + $0x302]]
    %v647 = vstv %s646
    %v648 = vmul.f32 %v647, %v477
    %v649 = vadd.f32 %v645, %v648
    %s650 = sld [smem:[#allocation7 + $0x303]]
    %v651 = vstv %s650
    %v652 = vmul.f32 %v651, %v524
    %v653 = vadd.f32 %v649, %v652
    %v654 = vadd.f32 %v120, %v653
    %s655 = sld [smem:[#allocation8 + $0x300]]
    %v656 = vstv %s655
    %v657 = vadd.f32 %v654, %v656
    %s658 = sld [smem:[#allocation7 + $0x380]]
    %v659 = vstv %s658
    %v660 = vmul.f32 %v659, %v383
    %s661 = sld [smem:[#allocation7 + $0x381]]
    %v662 = vstv %s661
    %v663 = vmul.f32 %v662, %v430
    %v664 = vadd.f32 %v660, %v663
    %s665 = sld [smem:[#allocation7 + $0x382]]
    %v666 = vstv %s665
    %v667 = vmul.f32 %v666, %v477
    %v668 = vadd.f32 %v664, %v667
    %s669 = sld [smem:[#allocation7 + $0x383]]
    %v670 = vstv %s669
    %v671 = vmul.f32 %v670, %v524
    %v672 = vadd.f32 %v668, %v671
    %v673 = vadd.f32 %v121, %v672
    %s674 = sld [smem:[#allocation8 + $0x380]]
    %v675 = vstv %s674
    %v676 = vadd.f32 %v673, %v675
    %s677 = sld [smem:[#allocation7 + $0x400]]
    %v678 = vstv %s677
    %v679 = vmul.f32 %v678, %v383
    %s680 = sld [smem:[#allocation7 + $0x401]]
    %v681 = vstv %s680
    %v682 = vmul.f32 %v681, %v430
    %v683 = vadd.f32 %v679, %v682
    %s684 = sld [smem:[#allocation7 + $0x402]]
    %v685 = vstv %s684
    %v686 = vmul.f32 %v685, %v477
    %v687 = vadd.f32 %v683, %v686
    %s688 = sld [smem:[#allocation7 + $0x403]]
    %v689 = vstv %s688
    %v690 = vmul.f32 %v689, %v524
    %v691 = vadd.f32 %v687, %v690
    %v692 = vadd.f32 %v122, %v691
    %s693 = sld [smem:[#allocation8 + $0x400]]
    %v694 = vstv %s693
    %v695 = vadd.f32 %v692, %v694
    %v696 = vmul.f32 %v543, %v135
    %v697 = vmul.f32 %v562, %v140
    %v698 = vmul.f32 %v581, %v145
    %v699 = vmul.f32 %v600, %v150
    %v700 = vmul.f32 %v619, %v155
    %v701 = vmul.f32 %v638, %v160
    %v702 = vmul.f32 %v657, %v165
    %v703 = vmul.f32 %v676, %v170
    %v704 = vmul.f32 %v695, %v175
    %v705 = vld [vmem:[%s4] sm:$0x1]
    %v706 = vld [vmem:[%s5] sm:$0x1]
    %v707 = vsel %vm188, %v696, 0.0
    %708 = vadd.xlane.f32.xlu0 %v707
    %v709 = vpop.xlane.xlu0 %708
    %v710 = vsel %vm188, %v697, 0.0
    %711 = vadd.xlane.f32.xlu0 %v710
    %v712 = vpop.xlane.xlu0 %711
    %v713 = vsel %vm188, %v698, 0.0
    %714 = vadd.xlane.f32.xlu0 %v713
    %v715 = vpop.xlane.xlu0 %714
    %v716 = vsel %vm188, %v699, 0.0
    %717 = vadd.xlane.f32.xlu0 %v716
    %v718 = vpop.xlane.xlu0 %717
    %v719 = vsel %vm188, %v700, 0.0
    %720 = vadd.xlane.f32.xlu0 %v719
    %v721 = vpop.xlane.xlu0 %720
    %v722 = vsel %vm188, %v701, 0.0
    %723 = vadd.xlane.f32.xlu0 %v722
    %v724 = vpop.xlane.xlu0 %723
    %v725 = vsel %vm188, %v702, 0.0
    %726 = vadd.xlane.f32.xlu0 %v725
    %v727 = vpop.xlane.xlu0 %726
    %v728 = vsel %vm188, %v703, 0.0
    %729 = vadd.xlane.f32.xlu0 %v728
    %v730 = vpop.xlane.xlu0 %729
    %v731 = vsel %vm188, %v704, 0.0
    %732 = vadd.xlane.f32.xlu0 %v731
    %v733 = vpop.xlane.xlu0 %732
    %v734 = vmul.f32 %v709, %v216
    %v735 = vmul.f32 %v712, %v216
    %v736 = vmul.f32 %v715, %v216
    %v737 = vmul.f32 %v718, %v216
    %v738 = vmul.f32 %v721, %v216
    %v739 = vmul.f32 %v724, %v216
    %v740 = vmul.f32 %v727, %v216
    %v741 = vmul.f32 %v730, %v216
    %v742 = vmul.f32 %v733, %v216
    %v743 = vsub.f32 %v696, %v734
    %v744 = vsub.f32 %v697, %v735
    %v745 = vsub.f32 %v698, %v736
    %v746 = vsub.f32 %v699, %v737
    %v747 = vsub.f32 %v700, %v738
    %v748 = vsub.f32 %v701, %v739
    %v749 = vsub.f32 %v702, %v740
    %v750 = vsub.f32 %v703, %v741
    %v751 = vsub.f32 %v704, %v742
    %v752 = vmul.f32 %v743, %v743
    %v753 = vmul.f32 %v744, %v744
    %v754 = vmul.f32 %v745, %v745
    %v755 = vmul.f32 %v746, %v746
    %v756 = vmul.f32 %v747, %v747
    %v757 = vmul.f32 %v748, %v748
    %v758 = vmul.f32 %v749, %v749
    %v759 = vmul.f32 %v750, %v750
    %v760 = vmul.f32 %v751, %v751
    %v761 = vsel %vm188, %v752, 0.0
    %762 = vadd.xlane.f32.xlu0 %v761
    %v763 = vpop.xlane.xlu0 %762
    %v764 = vsel %vm188, %v753, 0.0
    %765 = vadd.xlane.f32.xlu0 %v764
    %v766 = vpop.xlane.xlu0 %765
    %v767 = vsel %vm188, %v754, 0.0
    %768 = vadd.xlane.f32.xlu0 %v767
    %v769 = vpop.xlane.xlu0 %768
    %v770 = vsel %vm188, %v755, 0.0
    %771 = vadd.xlane.f32.xlu0 %v770
    %v772 = vpop.xlane.xlu0 %771
    %v773 = vsel %vm188, %v756, 0.0
    %774 = vadd.xlane.f32.xlu0 %v773
    %v775 = vpop.xlane.xlu0 %774
    %v776 = vsel %vm188, %v757, 0.0
    %777 = vadd.xlane.f32.xlu0 %v776
    %v778 = vpop.xlane.xlu0 %777
    %v779 = vsel %vm188, %v758, 0.0
    %780 = vadd.xlane.f32.xlu0 %v779
    %v781 = vpop.xlane.xlu0 %780
    %v782 = vsel %vm188, %v759, 0.0
    %783 = vadd.xlane.f32.xlu0 %v782
    %v784 = vpop.xlane.xlu0 %783
    %v785 = vsel %vm188, %v760, 0.0
    %786 = vadd.xlane.f32.xlu0 %v785
    %v787 = vpop.xlane.xlu0 %786
    %v788 = vmul.f32 %v763, %v216
    %v789 = vmul.f32 %v766, %v216
    %v790 = vmul.f32 %v769, %v216
    %v791 = vmul.f32 %v772, %v216
    %v792 = vmul.f32 %v775, %v216
    %v793 = vmul.f32 %v778, %v216
    %v794 = vmul.f32 %v781, %v216
    %v795 = vmul.f32 %v784, %v216
    %v796 = vmul.f32 %v787, %v216
    %v797 = vadd.f32 %v788, 1e-05
    %v798 = vadd.f32 %v789, 1e-05
    %v799 = vadd.f32 %v790, 1e-05
    %v800 = vadd.f32 %v791, 1e-05
    %v801 = vadd.f32 %v792, 1e-05
    %v802 = vadd.f32 %v793, 1e-05
    %v803 = vadd.f32 %v794, 1e-05
    %v804 = vadd.f32 %v795, 1e-05
    %v805 = vadd.f32 %v796, 1e-05
    %v806 = vrsqrt.pop %v797
    %v807 = vrsqrt.pop %v798
    %v808 = vrsqrt.pop %v799
    %v809 = vrsqrt.pop %v800
    %v810 = vrsqrt.pop %v801
    %v811 = vrsqrt.pop %v802
    %v812 = vrsqrt.pop %v803
    %v813 = vrsqrt.pop %v804
    %v814 = vrsqrt.pop %v805
    %v815 = vmul.f32 %v743, %v806
    %v816 = vmul.f32 %v744, %v807
    %v817 = vmul.f32 %v745, %v808
    %v818 = vmul.f32 %v746, %v809
    %v819 = vmul.f32 %v747, %v810
    %v820 = vmul.f32 %v748, %v811
    %v821 = vmul.f32 %v749, %v812
    %v822 = vmul.f32 %v750, %v813
    %v823 = vmul.f32 %v751, %v814
    %v825 = vlaneseq
    %v826 = vshrl.u32 %v825, 7
    %v827 = vsub.s32 0, %v826
    %v828 = vrot.slane %v705, %v827
    %v830 = vmul.f32 %v815, %v828
    %v831 = vmul.f32 %v816, %v828
    %v832 = vmul.f32 %v817, %v828
    %v833 = vmul.f32 %v818, %v828
    %v834 = vmul.f32 %v819, %v828
    %v835 = vmul.f32 %v820, %v828
    %v836 = vmul.f32 %v821, %v828
    %v837 = vmul.f32 %v822, %v828
    %v838 = vmul.f32 %v823, %v828
    %v840 = vlaneseq
    %v841 = vshrl.u32 %v840, 7
    %v842 = vsub.s32 0, %v841
    %v843 = vrot.slane %v706, %v842
    %v845 = vadd.f32 %v830, %v843
    %v846 = vadd.f32 %v831, %v843
    %v847 = vadd.f32 %v832, %v843
    %v848 = vadd.f32 %v833, %v843
    %v849 = vadd.f32 %v834, %v843
    %v850 = vadd.f32 %v835, %v843
    %v851 = vadd.f32 %v836, %v843
    %v852 = vadd.f32 %v837, %v843
    %v853 = vadd.f32 %v838, %v843
    %v854 = vld [vmem:[%s8] sm:$0xff]
    %v855 = vld [vmem:[%s8 + $0x8] sm:$0xff]
    %v856 = vld [vmem:[%s8 + $0x10] sm:$0xff]
    %v857 = vld [vmem:[%s8 + $0x18] sm:$0xff]
    %v858 = vld [vmem:[%s9] sm:$0x1]
    %v860 = vlaneseq
    %v861 = vshrl.u32 %v860, 7
    %v862 = vsub.s32 0, %v861
    %v863 = vrot.slane %v858, %v862
    %v866 = vsel %vm188, %v845, 0
    %v869 = vsel %vm188, %v846, 0
    %v872 = vsel %vm188, %v847, 0
    %v875 = vsel %vm188, %v848, 0
    %v878 = vsel %vm188, %v849, 0
    %v881 = vsel %vm188, %v850, 0
    %v884 = vsel %vm188, %v851, 0
    %v887 = vsel %vm188, %v852, 0
    %v890 = vsel %vm188, %v853, 0
    %892 = vmatprep.subr.mxu0 0.0
    %893 = vmatpush1.msra.mxu0 %v854
    %894 = vmatprep.subr.mxu0 0.0
    %895 = vmatpush1.msra.mxu0 %v855
    %896 = vmatprep.subr.mxu0 0.0
    %897 = vmatpush1.msra.mxu0 %v856
    %898 = vmatprep.subr.mxu0 0.0
    %899 = vmatpush1.msra.mxu0 %v857
    %900 = vmatprep.subr.mxu0 0.0
    %901 = vmatpush1.msra.mxu0 0.0
    %902 = vmatprep.subr.mxu0 0.0
    %903 = vmatpush1.msra.mxu0 0.0
    %904 = vmatprep.subr.mxu0 0.0
    %905 = vmatpush1.msra.mxu0 0.0
    %906 = vmatprep.subr.mxu0 0.0
    %907 = vmatpush1.msra.mxu0 0.0
    %908 = vmatprep.subr.mxu0 0.0
    %909 = vmatpush1.msra.mxu0 0.0
    %910 = vmatprep.subr.mxu0 0.0
    %911 = vmatpush1.msra.mxu0 0.0
    %912 = vmatprep.subr.mxu0 0.0
    %913 = vmatpush1.msra.mxu0 0.0
    %914 = vmatprep.subr.mxu0 0.0
    %915 = vmatpush1.msra.mxu0 0.0
    %916 = vmatprep.subr.mxu0 0.0
    %917 = vmatpush1.msra.mxu0 0.0
    %918 = vmatprep.subr.mxu0 0.0
    %919 = vmatpush1.msra.mxu0 0.0
    %920 = vmatprep.subr.mxu0 0.0
    %921 = vmatpush1.msra.mxu0 0.0
    %922 = vmatprep.subr.mxu0 0.0
    %923 = vmatpush1.msra.mxu0 0.0
    %924 = vmatprep.subr.mxu0 0.0
    %925 = vmatpush1.msra.mxu0 0.0
    %926 = vmatprep.subr.mxu0 0.0
    %927 = vmatpush1.msra.mxu0 0.0
    %928 = vmatprep.subr.mxu0 0.0
    %929 = vmatpush1.msra.mxu0 0.0
    %930 = vmatprep.subr.mxu0 0.0
    %931 = vmatpush1.msra.mxu0 0.0
    %932 = vmatprep.subr.mxu0 0.0
    %933 = vmatpush1.msra.mxu0 0.0
    %934 = vmatprep.subr.mxu0 0.0
    %935 = vmatpush1.msra.mxu0 0.0
    %936 = vmatprep.subr.mxu0 0.0
    %937 = vmatpush1.msra.mxu0 0.0
    %938 = vmatprep.subr.mxu0 0.0
    %939 = vmatpush1.msra.mxu0 0.0
    %940 = vmatprep.subr.mxu0 0.0
    %941 = vmatpush1.msra.mxu0 0.0
    %942 = vmatprep.subr.mxu0 0.0
    %943 = vmatpush1.msra.mxu0 0.0
    %944 = vmatprep.subr.mxu0 0.0
    %945 = vmatpush1.msra.mxu0 0.0
    %946 = vmatprep.subr.mxu0 0.0
    %947 = vmatpush1.msra.mxu0 0.0
    %948 = vmatprep.subr.mxu0 0.0
    %949 = vmatpush1.msra.mxu0 0.0
    %950 = vmatprep.subr.mxu0 0.0
    %951 = vmatpush1.msra.mxu0 0.0
    %952 = vmatprep.subr.mxu0 0.0
    %953 = vmatpush1.msra.mxu0 0.0
    %954 = vmatprep.subr.mxu0 0.0
    %955 = vmatpush1.msra.mxu0 0.0
    %956 = vmatprep.mubr.f32.mxu0 0.0
    %957 = vmatmul.mubr.f32.gmra.mrb[0].mxu0 %v866
    %v958 = vpop.f32.mrb[0].mxu0
    %v959 = vadd.f32 %v863, %v958
    %v960 = vpop.f32.mrb[0].mxu0
    %961 = vmatprep.mubr.f32.mxu0 0.0
    %962 = vmatmul.mubr.f32.gmra.mrb[0].mxu0 %v869
    %v963 = vpop.f32.mrb[0].mxu0
    %v964 = vadd.f32 %v863, %v963
    %v965 = vpop.f32.mrb[0].mxu0
    %966 = vmatprep.mubr.f32.mxu0 0.0
    %967 = vmatmul.mubr.f32.gmra.mrb[0].mxu0 %v872
    %v968 = vpop.f32.mrb[0].mxu0
    %v969 = vadd.f32 %v863, %v968
    %v970 = vpop.f32.mrb[0].mxu0
    %971 = vmatprep.mubr.f32.mxu0 0.0
    %972 = vmatmul.mubr.f32.gmra.mrb[0].mxu0 %v875
    %v973 = vpop.f32.mrb[0].mxu0
    %v974 = vadd.f32 %v863, %v973
    %v975 = vpop.f32.mrb[0].mxu0
    %976 = vmatprep.mubr.f32.mxu0 0.0
    %977 = vmatmul.mubr.f32.gmra.mrb[0].mxu0 %v878
    %v978 = vpop.f32.mrb[0].mxu0
    %v979 = vadd.f32 %v863, %v978
    %v980 = vpop.f32.mrb[0].mxu0
    %981 = vmatprep.mubr.f32.mxu0 0.0
    %982 = vmatmul.mubr.f32.gmra.mrb[0].mxu0 %v881
    %v983 = vpop.f32.mrb[0].mxu0
    %v984 = vadd.f32 %v863, %v983
    %v985 = vpop.f32.mrb[0].mxu0
    %986 = vmatprep.mubr.f32.mxu0 0.0
    %987 = vmatmul.mubr.f32.gmra.mrb[0].mxu0 %v884
    %v988 = vpop.f32.mrb[0].mxu0
    %v989 = vadd.f32 %v863, %v988
    %v990 = vpop.f32.mrb[0].mxu0
    %991 = vmatprep.mubr.f32.mxu0 0.0
    %992 = vmatmul.mubr.f32.gmra.mrb[0].mxu0 %v887
    %v993 = vpop.f32.mrb[0].mxu0
    %v994 = vadd.f32 %v863, %v993
    %v995 = vpop.f32.mrb[0].mxu0
    %996 = vmatprep.mubr.f32.mxu0 0.0
    %997 = vmatmul.mubr.f32.gmra.mrb[0].mxu0 %v890
    %v998 = vpop.f32.mrb[0].mxu0
    %v999 = vadd.f32 %v863, %v998
    %v1000 = vpop.f32.mrb[0].mxu0
    %1001 = vdwg.mxu0
    %v1002 = vmul.f32 %v959, %v959
    %v1003 = vmul.f32 %v964, %v964
    %v1004 = vmul.f32 %v969, %v969
    %v1005 = vmul.f32 %v974, %v974
    %v1006 = vmul.f32 %v979, %v979
    %v1007 = vmul.f32 %v984, %v984
    %v1008 = vmul.f32 %v989, %v989
    %v1009 = vmul.f32 %v994, %v994
    %v1010 = vmul.f32 %v999, %v999
    %v1011 = vmul.f32 %v959, %v1002
    %v1012 = vmul.f32 %v964, %v1003
    %v1013 = vmul.f32 %v969, %v1004
    %v1014 = vmul.f32 %v974, %v1005
    %v1015 = vmul.f32 %v979, %v1006
    %v1016 = vmul.f32 %v984, %v1007
    %v1017 = vmul.f32 %v989, %v1008
    %v1018 = vmul.f32 %v994, %v1009
    %v1019 = vmul.f32 %v999, %v1010
    %v1020 = vmul.f32 %v1011, 0.044715
    %v1021 = vmul.f32 %v1012, 0.044715
    %v1022 = vmul.f32 %v1013, 0.044715
    %v1023 = vmul.f32 %v1014, 0.044715
    %v1024 = vmul.f32 %v1015, 0.044715
    %v1025 = vmul.f32 %v1016, 0.044715
    %v1026 = vmul.f32 %v1017, 0.044715
    %v1027 = vmul.f32 %v1018, 0.044715
    %v1028 = vmul.f32 %v1019, 0.044715
    %v1029 = vadd.f32 %v959, %v1020
    %v1030 = vadd.f32 %v964, %v1021
    %v1031 = vadd.f32 %v969, %v1022
    %v1032 = vadd.f32 %v974, %v1023
    %v1033 = vadd.f32 %v979, %v1024
    %v1034 = vadd.f32 %v984, %v1025
    %v1035 = vadd.f32 %v989, %v1026
    %v1036 = vadd.f32 %v994, %v1027
    %v1037 = vadd.f32 %v999, %v1028
    %v1038 = vmul.f32 %v1029, 0.7978846
    %v1039 = vmul.f32 %v1030, 0.7978846
    %v1040 = vmul.f32 %v1031, 0.7978846
    %v1041 = vmul.f32 %v1032, 0.7978846
    %v1042 = vmul.f32 %v1033, 0.7978846
    %v1043 = vmul.f32 %v1034, 0.7978846
    %v1044 = vmul.f32 %v1035, 0.7978846
    %v1045 = vmul.f32 %v1036, 0.7978846
    %v1046 = vmul.f32 %v1037, 0.7978846
    %v1047 = vtanh.pop %v1038
    %v1048 = vtanh.pop %v1039
    %v1049 = vtanh.pop %v1040
    %v1050 = vtanh.pop %v1041
    %v1051 = vtanh.pop %v1042
    %v1052 = vtanh.pop %v1043
    %v1053 = vtanh.pop %v1044
    %v1054 = vtanh.pop %v1045
    %v1055 = vtanh.pop %v1046
    %v1056 = vadd.f32 %v1047, 1.0
    %v1057 = vadd.f32 %v1048, 1.0
    %v1058 = vadd.f32 %v1049, 1.0
    %v1059 = vadd.f32 %v1050, 1.0
    %v1060 = vadd.f32 %v1051, 1.0
    %v1061 = vadd.f32 %v1052, 1.0
    %v1062 = vadd.f32 %v1053, 1.0
    %v1063 = vadd.f32 %v1054, 1.0
    %v1064 = vadd.f32 %v1055, 1.0
    %v1065 = vmul.f32 %v1056, 0.5
    %v1066 = vmul.f32 %v1057, 0.5
    %v1067 = vmul.f32 %v1058, 0.5
    %v1068 = vmul.f32 %v1059, 0.5
    %v1069 = vmul.f32 %v1060, 0.5
    %v1070 = vmul.f32 %v1061, 0.5
    %v1071 = vmul.f32 %v1062, 0.5
    %v1072 = vmul.f32 %v1063, 0.5
    %v1073 = vmul.f32 %v1064, 0.5
    %v1074 = vmul.f32 %v959, %v1065
    %v1075 = vmul.f32 %v964, %v1066
    %v1076 = vmul.f32 %v969, %v1067
    %v1077 = vmul.f32 %v974, %v1068
    %v1078 = vmul.f32 %v979, %v1069
    %v1079 = vmul.f32 %v984, %v1070
    %v1080 = vmul.f32 %v989, %v1071
    %v1081 = vmul.f32 %v994, %v1072
    %v1082 = vmul.f32 %v999, %v1073
    %v1083 = vld [vmem:[%s10] sm:$0xff]
    %v1084 = vld [vmem:[%s10 + $0x8] sm:$0xff]
    %v1085 = vld [vmem:[%s11] sm:$0x1]
    %v1087 = vlaneseq
    %v1088 = vshrl.u32 %v1087, 7
    %v1089 = vsub.s32 0, %v1088
    %v1090 = vrot.slane %v1085, %v1089
    %vm1092 = vcmask 130048
    %v1094 = vsel %vm1092, %v1074, 0
    %v1097 = vsel %vm1092, %v1075, 0
    %v1100 = vsel %vm1092, %v1076, 0
    %v1103 = vsel %vm1092, %v1077, 0
    %v1106 = vsel %vm1092, %v1078, 0
    %v1109 = vsel %vm1092, %v1079, 0
    %v1112 = vsel %vm1092, %v1080, 0
    %v1115 = vsel %vm1092, %v1081, 0
    %v1118 = vsel %vm1092, %v1082, 0
    %1120 = vmatprep.subr.mxu0 0.0
    %1121 = vmatpush1.msra.mxu0 %v1083
    %1122 = vmatprep.subr.mxu0 0.0
    %1123 = vmatpush1.msra.mxu0 %v1084
    %1124 = vmatprep.subr.mxu0 0.0
    %1125 = vmatpush1.msra.mxu0 0.0
    %1126 = vmatprep.subr.mxu0 0.0
    %1127 = vmatpush1.msra.mxu0 0.0
    %1128 = vmatprep.subr.mxu0 0.0
    %1129 = vmatpush1.msra.mxu0 0.0
    %1130 = vmatprep.subr.mxu0 0.0
    %1131 = vmatpush1.msra.mxu0 0.0
    %1132 = vmatprep.subr.mxu0 0.0
    %1133 = vmatpush1.msra.mxu0 0.0
    %1134 = vmatprep.subr.mxu0 0.0
    %1135 = vmatpush1.msra.mxu0 0.0
    %1136 = vmatprep.subr.mxu0 0.0
    %1137 = vmatpush1.msra.mxu0 0.0
    %1138 = vmatprep.subr.mxu0 0.0
    %1139 = vmatpush1.msra.mxu0 0.0
    %1140 = vmatprep.subr.mxu0 0.0
    %1141 = vmatpush1.msra.mxu0 0.0
    %1142 = vmatprep.subr.mxu0 0.0
    %1143 = vmatpush1.msra.mxu0 0.0
    %1144 = vmatprep.subr.mxu0 0.0
    %1145 = vmatpush1.msra.mxu0 0.0
    %1146 = vmatprep.subr.mxu0 0.0
    %1147 = vmatpush1.msra.mxu0 0.0
    %1148 = vmatprep.subr.mxu0 0.0
    %1149 = vmatpush1.msra.mxu0 0.0
    %1150 = vmatprep.subr.mxu0 0.0
    %1151 = vmatpush1.msra.mxu0 0.0
    %1152 = vmatprep.subr.mxu0 0.0
    %1153 = vmatpush1.msra.mxu0 0.0
    %1154 = vmatprep.subr.mxu0 0.0
    %1155 = vmatpush1.msra.mxu0 0.0
    %1156 = vmatprep.subr.mxu0 0.0
    %1157 = vmatpush1.msra.mxu0 0.0
    %1158 = vmatprep.subr.mxu0 0.0
    %1159 = vmatpush1.msra.mxu0 0.0
    %1160 = vmatprep.subr.mxu0 0.0
    %1161 = vmatpush1.msra.mxu0 0.0
    %1162 = vmatprep.subr.mxu0 0.0
    %1163 = vmatpush1.msra.mxu0 0.0
    %1164 = vmatprep.subr.mxu0 0.0
    %1165 = vmatpush1.msra.mxu0 0.0
    %1166 = vmatprep.subr.mxu0 0.0
    %1167 = vmatpush1.msra.mxu0 0.0
    %1168 = vmatprep.subr.mxu0 0.0
    %1169 = vmatpush1.msra.mxu0 0.0
    %1170 = vmatprep.subr.mxu0 0.0
    %1171 = vmatpush1.msra.mxu0 0.0
    %1172 = vmatprep.subr.mxu0 0.0
    %1173 = vmatpush1.msra.mxu0 0.0
    %1174 = vmatprep.subr.mxu0 0.0
    %1175 = vmatpush1.msra.mxu0 0.0
    %1176 = vmatprep.subr.mxu0 0.0
    %1177 = vmatpush1.msra.mxu0 0.0
    %1178 = vmatprep.subr.mxu0 0.0
    %1179 = vmatpush1.msra.mxu0 0.0
    %1180 = vmatprep.subr.mxu0 0.0
    %1181 = vmatpush1.msra.mxu0 0.0
    %1182 = vmatprep.subr.mxu0 0.0
    %1183 = vmatpush1.msra.mxu0 0.0
    %1184 = vmatprep.mubr.f32.mxu0 0.0
    %1185 = vmatmul.mubr.f32.gmra.mrb[0].mxu0 %v1094
    %v1186 = vpop.f32.mrb[0].mxu0
    %v1187 = vadd.f32 %v1090, %v1186
    %v1188 = vpop.f32.mrb[0].mxu0
    %1189 = vmatprep.mubr.f32.mxu0 0.0
    %1190 = vmatmul.mubr.f32.gmra.mrb[0].mxu0 %v1097
    %v1191 = vpop.f32.mrb[0].mxu0
    %v1192 = vadd.f32 %v1090, %v1191
    %v1193 = vpop.f32.mrb[0].mxu0
    %1194 = vmatprep.mubr.f32.mxu0 0.0
    %1195 = vmatmul.mubr.f32.gmra.mrb[0].mxu0 %v1100
    %v1196 = vpop.f32.mrb[0].mxu0
    %v1197 = vadd.f32 %v1090, %v1196
    %v1198 = vpop.f32.mrb[0].mxu0
    %1199 = vmatprep.mubr.f32.mxu0 0.0
    %1200 = vmatmul.mubr.f32.gmra.mrb[0].mxu0 %v1103
    %v1201 = vpop.f32.mrb[0].mxu0
    %v1202 = vadd.f32 %v1090, %v1201
    %v1203 = vpop.f32.mrb[0].mxu0
    %1204 = vmatprep.mubr.f32.mxu0 0.0
    %1205 = vmatmul.mubr.f32.gmra.mrb[0].mxu0 %v1106
    %v1206 = vpop.f32.mrb[0].mxu0
    %v1207 = vadd.f32 %v1090, %v1206
    %v1208 = vpop.f32.mrb[0].mxu0
    %1209 = vmatprep.mubr.f32.mxu0 0.0
    %1210 = vmatmul.mubr.f32.gmra.mrb[0].mxu0 %v1109
    %v1211 = vpop.f32.mrb[0].mxu0
    %v1212 = vadd.f32 %v1090, %v1211
    %v1213 = vpop.f32.mrb[0].mxu0
    %1214 = vmatprep.mubr.f32.mxu0 0.0
    %1215 = vmatmul.mubr.f32.gmra.mrb[0].mxu0 %v1112
    %v1216 = vpop.f32.mrb[0].mxu0
    %v1217 = vadd.f32 %v1090, %v1216
    %v1218 = vpop.f32.mrb[0].mxu0
    %1219 = vmatprep.mubr.f32.mxu0 0.0
    %1220 = vmatmul.mubr.f32.gmra.mrb[0].mxu0 %v1115
    %v1221 = vpop.f32.mrb[0].mxu0
    %v1222 = vadd.f32 %v1090, %v1221
    %v1223 = vpop.f32.mrb[0].mxu0
    %1224 = vmatprep.mubr.f32.mxu0 0.0
    %1225 = vmatmul.mubr.f32.gmra.mrb[0].mxu0 %v1118
    %v1226 = vpop.f32.mrb[0].mxu0
    %v1227 = vadd.f32 %v1090, %v1226
    %v1228 = vpop.f32.mrb[0].mxu0
    %1229 = vdwg.mxu0
    %v1230 = vadd.f32 %v543, %v1187
    %v1231 = vadd.f32 %v562, %v1192
    %v1232 = vadd.f32 %v581, %v1197
    %v1233 = vadd.f32 %v600, %v1202
    %v1234 = vadd.f32 %v619, %v1207
    %v1235 = vadd.f32 %v638, %v1212
    %v1236 = vadd.f32 %v657, %v1217
    %v1237 = vadd.f32 %v676, %v1222
    %v1238 = vadd.f32 %v695, %v1227
    %v1239 = vld [vmem:[%s6] sm:$0x1]
    %v1240 = vld [vmem:[%s7] sm:$0x1]
    %v1241 = vsel %vm188, %v1230, 0.0
    %1242 = vadd.xlane.f32.xlu0 %v1241
    %v1243 = vpop.xlane.xlu0 %1242
    %v1244 = vsel %vm188, %v1231, 0.0
    %1245 = vadd.xlane.f32.xlu0 %v1244
    %v1246 = vpop.xlane.xlu0 %1245
    %v1247 = vsel %vm188, %v1232, 0.0
    %1248 = vadd.xlane.f32.xlu0 %v1247
    %v1249 = vpop.xlane.xlu0 %1248
    %v1250 = vsel %vm188, %v1233, 0.0
    %1251 = vadd.xlane.f32.xlu0 %v1250
    %v1252 = vpop.xlane.xlu0 %1251
    %v1253 = vsel %vm188, %v1234, 0.0
    %1254 = vadd.xlane.f32.xlu0 %v1253
    %v1255 = vpop.xlane.xlu0 %1254
    %v1256 = vsel %vm188, %v1235, 0.0
    %1257 = vadd.xlane.f32.xlu0 %v1256
    %v1258 = vpop.xlane.xlu0 %1257
    %v1259 = vsel %vm188, %v1236, 0.0
    %1260 = vadd.xlane.f32.xlu0 %v1259
    %v1261 = vpop.xlane.xlu0 %1260
    %v1262 = vsel %vm188, %v1237, 0.0
    %1263 = vadd.xlane.f32.xlu0 %v1262
    %v1264 = vpop.xlane.xlu0 %1263
    %v1265 = vsel %vm188, %v1238, 0.0
    %1266 = vadd.xlane.f32.xlu0 %v1265
    %v1267 = vpop.xlane.xlu0 %1266
    %v1268 = vmul.f32 %v1243, %v216
    %v1269 = vmul.f32 %v1246, %v216
    %v1270 = vmul.f32 %v1249, %v216
    %v1271 = vmul.f32 %v1252, %v216
    %v1272 = vmul.f32 %v1255, %v216
    %v1273 = vmul.f32 %v1258, %v216
    %v1274 = vmul.f32 %v1261, %v216
    %v1275 = vmul.f32 %v1264, %v216
    %v1276 = vmul.f32 %v1267, %v216
    %v1277 = vsub.f32 %v1230, %v1268
    %v1278 = vsub.f32 %v1231, %v1269
    %v1279 = vsub.f32 %v1232, %v1270
    %v1280 = vsub.f32 %v1233, %v1271
    %v1281 = vsub.f32 %v1234, %v1272
    %v1282 = vsub.f32 %v1235, %v1273
    %v1283 = vsub.f32 %v1236, %v1274
    %v1284 = vsub.f32 %v1237, %v1275
    %v1285 = vsub.f32 %v1238, %v1276
    %v1286 = vmul.f32 %v1277, %v1277
    %v1287 = vmul.f32 %v1278, %v1278
    %v1288 = vmul.f32 %v1279, %v1279
    %v1289 = vmul.f32 %v1280, %v1280
    %v1290 = vmul.f32 %v1281, %v1281
    %v1291 = vmul.f32 %v1282, %v1282
    %v1292 = vmul.f32 %v1283, %v1283
    %v1293 = vmul.f32 %v1284, %v1284
    %v1294 = vmul.f32 %v1285, %v1285
    %v1295 = vsel %vm188, %v1286, 0.0
    %1296 = vadd.xlane.f32.xlu0 %v1295
    %v1297 = vpop.xlane.xlu0 %1296
    %v1298 = vsel %vm188, %v1287, 0.0
    %1299 = vadd.xlane.f32.xlu0 %v1298
    %v1300 = vpop.xlane.xlu0 %1299
    %v1301 = vsel %vm188, %v1288, 0.0
    %1302 = vadd.xlane.f32.xlu0 %v1301
    %v1303 = vpop.xlane.xlu0 %1302
    %v1304 = vsel %vm188, %v1289, 0.0
    %1305 = vadd.xlane.f32.xlu0 %v1304
    %v1306 = vpop.xlane.xlu0 %1305
    %v1307 = vsel %vm188, %v1290, 0.0
    %1308 = vadd.xlane.f32.xlu0 %v1307
    %v1309 = vpop.xlane.xlu0 %1308
    %v1310 = vsel %vm188, %v1291, 0.0
    %1311 = vadd.xlane.f32.xlu0 %v1310
    %v1312 = vpop.xlane.xlu0 %1311
    %v1313 = vsel %vm188, %v1292, 0.0
    %1314 = vadd.xlane.f32.xlu0 %v1313
    %v1315 = vpop.xlane.xlu0 %1314
    %v1316 = vsel %vm188, %v1293, 0.0
    %1317 = vadd.xlane.f32.xlu0 %v1316
    %v1318 = vpop.xlane.xlu0 %1317
    %v1319 = vsel %vm188, %v1294, 0.0
    %1320 = vadd.xlane.f32.xlu0 %v1319
    %v1321 = vpop.xlane.xlu0 %1320
    %v1322 = vmul.f32 %v1297, %v216
    %v1323 = vmul.f32 %v1300, %v216
    %v1324 = vmul.f32 %v1303, %v216
    %v1325 = vmul.f32 %v1306, %v216
    %v1326 = vmul.f32 %v1309, %v216
    %v1327 = vmul.f32 %v1312, %v216
    %v1328 = vmul.f32 %v1315, %v216
    %v1329 = vmul.f32 %v1318, %v216
    %v1330 = vmul.f32 %v1321, %v216
    %v1331 = vadd.f32 %v1322, 1e-05
    %v1332 = vadd.f32 %v1323, 1e-05
    %v1333 = vadd.f32 %v1324, 1e-05
    %v1334 = vadd.f32 %v1325, 1e-05
    %v1335 = vadd.f32 %v1326, 1e-05
    %v1336 = vadd.f32 %v1327, 1e-05
    %v1337 = vadd.f32 %v1328, 1e-05
    %v1338 = vadd.f32 %v1329, 1e-05
    %v1339 = vadd.f32 %v1330, 1e-05
    %v1340 = vrsqrt.pop %v1331
    %v1341 = vrsqrt.pop %v1332
    %v1342 = vrsqrt.pop %v1333
    %v1343 = vrsqrt.pop %v1334
    %v1344 = vrsqrt.pop %v1335
    %v1345 = vrsqrt.pop %v1336
    %v1346 = vrsqrt.pop %v1337
    %v1347 = vrsqrt.pop %v1338
    %v1348 = vrsqrt.pop %v1339
    %v1349 = vmul.f32 %v1277, %v1340
    %v1350 = vmul.f32 %v1278, %v1341
    %v1351 = vmul.f32 %v1279, %v1342
    %v1352 = vmul.f32 %v1280, %v1343
    %v1353 = vmul.f32 %v1281, %v1344
    %v1354 = vmul.f32 %v1282, %v1345
    %v1355 = vmul.f32 %v1283, %v1346
    %v1356 = vmul.f32 %v1284, %v1347
    %v1357 = vmul.f32 %v1285, %v1348
    %v1359 = vlaneseq
    %v1360 = vshrl.u32 %v1359, 7
    %v1361 = vsub.s32 0, %v1360
    %v1362 = vrot.slane %v1239, %v1361
    %v1364 = vmul.f32 %v1349, %v1362
    %v1365 = vmul.f32 %v1350, %v1362
    %v1366 = vmul.f32 %v1351, %v1362
    %v1367 = vmul.f32 %v1352, %v1362
    %v1368 = vmul.f32 %v1353, %v1362
    %v1369 = vmul.f32 %v1354, %v1362
    %v1370 = vmul.f32 %v1355, %v1362
    %v1371 = vmul.f32 %v1356, %v1362
    %v1372 = vmul.f32 %v1357, %v1362
    %v1374 = vlaneseq
    %v1375 = vshrl.u32 %v1374, 7
    %v1376 = vsub.s32 0, %v1375
    %v1377 = vrot.slane %v1240, %v1376
    %v1379 = vadd.f32 %v1364, %v1377
    %v1380 = vadd.f32 %v1365, %v1377
    %v1381 = vadd.f32 %v1366, %v1377
    %v1382 = vadd.f32 %v1367, %v1377
    %v1383 = vadd.f32 %v1368, %v1377
    %v1384 = vadd.f32 %v1369, %v1377
    %v1385 = vadd.f32 %v1370, %v1377
    %v1386 = vadd.f32 %v1371, %v1377
    %v1387 = vadd.f32 %v1372, %v1377
    %v1388 = vld [vmem:[%s12] sm:$0x1]
    %v1390 = vlaneseq
    %v1391 = vshrl.u32 %v1390, 7
    %v1392 = vsub.s32 0, %v1391
    %v1393 = vrot.slane %v1388, %v1392
    %v1395 = vmul.f32 %v1379, %v1393
    %v1396 = vsel %vm188, %v1395, 0.0
    %1397 = vadd.xlane.f32.xlu0 %v1396
    %v1398 = vpop.xlane.xlu0 %1397
    %s1399 = sld [smem:[#allocation2]]
    %v1400 = vstv %s1399
    %v1401 = vadd.f32 %v1398, %v1400
    %v1402 = vsub.f32 0.0, %v1401
    %v1403 = vmul.f32 %v1402, 1.442695
    %v1404 = vpow.pop %v1403
    %v1405 = vadd.f32 %v1404, 1.0
    %v1406 = vrcp.pop %v1405
    %v1407 = vmul.f32 1.0, %v1406
    %1408 = vst.msk [vmem:[%s18] sm:$0xff] %vm188, %v1379
    %v1409 = vmul.f32 %v1407, %v1380
    %v1410 = vmul.f32 %v1407, %v1381
    %v1411 = vmul.f32 %v1407, %v1382
    %v1412 = vmul.f32 %v1407, %v1383
    %v1413 = vmul.f32 %v1407, %v1384
    %v1414 = vmul.f32 %v1407, %v1385
    %v1415 = vmul.f32 %v1407, %v1386
    %v1416 = vmul.f32 %v1407, %v1387
    %1417 = vst.msk [vmem:[%s19] sm:$0xff] %vm188, %v1409
    %1418 = vst.msk [vmem:[%s19 + $0x8] sm:$0xff] %vm188, %v1410
    %1419 = vst.msk [vmem:[%s19 + $0x10] sm:$0xff] %vm188, %v1411
    %1420 = vst.msk [vmem:[%s19 + $0x18] sm:$0xff] %vm188, %v1412
    %1421 = vst.msk [vmem:[%s19 + $0x20] sm:$0xff] %vm188, %v1413
    %1422 = vst.msk [vmem:[%s19 + $0x28] sm:$0xff] %vm188, %v1414
    %1423 = vst.msk [vmem:[%s19 + $0x30] sm:$0xff] %vm188, %v1415
    %1424 = vst.msk [vmem:[%s19 + $0x38] sm:$0xff] %vm188, %v1416
    // Predicated region
    $region90: #{new_model_forward.4} parent=1 // pred_check
      _
    $region91: #{new_model_forward.4} parent=1 // pred_check_branch
      %1426 = sbr.rel (0) target = $region93
    $region92: #{new_model_forward.4} parent=1 // pred_region
      _
    $region93: #{new_model_forward.4} parent=1 // pred_fallthru
      _
    // Predicated region
    $region94: #{new_model_forward.4} parent=1 // pred_check
      _
    $region95: #{new_model_forward.4} parent=1 // pred_check_branch
      %1428 = sbr.rel (0) target = $region97
    $region96: #{new_model_forward.4} parent=1 // pred_region
      _
    $region97: #{new_model_forward.4} parent=1 // pred_fallthru
      _
    // Predicated region
    $region98: #{new_model_forward.4} parent=1 // pred_check
      _
    $region99: #{new_model_forward.4} parent=1 // pred_check_branch
      %1430 = sbr.rel (0) target = $region101
    $region100: #{new_model_forward.4} parent=1 // pred_region
      _
    $region101: #{new_model_forward.4} parent=1 // pred_fallthru
      _
    // Predicated region
    $region102: #{new_model_forward.4} parent=1 // pred_check
      _
    $region103: #{new_model_forward.4} parent=1 // pred_check_branch
      %1432 = sbr.rel (0) target = $region105
    $region104: #{new_model_forward.4} parent=1 // pred_region
      _
    $region105: #{new_model_forward.4} parent=1 // pred_fallthru
      _
    %1433 = vsyncpa [#allocation4], 1
    %1434 = vsyncpa [#allocation6], 1
    %1435 = vsyncpa [#allocation9], 1

// kernel: new_model_forward.5
$region0: #{new_model_forward.5}
  #allocation0 [shape = 'u32[]', space=smem, size = 0x4, offset = 0x4, fixed_abs, tag = 'smem constant byte address 0x4 - core index']
  #allocation1 [shape = 'u32[144,128]{1,0:T(1,128)}', space=vmem, size = 0x12000, scoped, tag = 'internal scratch']
  %s0 = inlined_call_operand.vmem [shape: f32[4,8,32], index: 0, kind: input, shape index: {}]
  %s1 = inlined_call_operand.vmem [shape: f32[4,8,32], index: 1, kind: input, shape index: {}]
  %s2 = inlined_call_operand.vmem [shape: f32[1,32], index: 2, kind: input, shape index: {}]
  %s3 = inlined_call_operand.vmem [shape: f32[1,32], index: 3, kind: input, shape index: {}]
  %s4 = inlined_call_operand.vmem [shape: f32[1,64], index: 4, kind: input, shape index: {}]
  %s5 = inlined_call_operand.vmem [shape: f32[1,64], index: 5, kind: input, shape index: {}]
  %s6 = inlined_call_operand.vmem [shape: f32[1,64], index: 6, kind: input, shape index: {}]
  %s7 = inlined_call_operand.vmem [shape: f32[1,64], index: 7, kind: input, shape index: {}]
  %s8 = inlined_call_operand.vmem [shape: f32[1,64], index: 8, kind: input, shape index: {}]
  %s9 = inlined_call_operand.vmem [shape: f32[1,64], index: 9, kind: input, shape index: {}]
  %s10 = inlined_call_operand.vmem [shape: f32[64,128], index: 10, kind: input, shape index: {}]
  %s11 = inlined_call_operand.vmem [shape: f32[1,128], index: 11, kind: input, shape index: {}]
  %s12 = inlined_call_operand.vmem [shape: f32[128,64], index: 12, kind: input, shape index: {}]
  %s13 = inlined_call_operand.vmem [shape: f32[1,64], index: 13, kind: input, shape index: {}]
  %s14 = inlined_call_operand.vmem [shape: f32[8,4], index: 14, kind: input, shape index: {}]
  %s15 = inlined_call_operand.vmem [shape: f32[8,1], index: 15, kind: input, shape index: {}]
  %s16 = inlined_call_operand.vmem [shape: f32[4,8], index: 16, kind: input, shape index: {}]
  %s17 = inlined_call_operand.vmem [shape: f32[4,1], index: 17, kind: input, shape index: {}]
  %s18 = inlined_call_operand.vmem [shape: f32[4,8,32], index: 18, kind: output, shape index: {}]
  %s19 = sld [smem:[#allocation0]]
  $region98: #{new_model_forward.5} parent=0
    _
  %s21 = ssub.s32 1, %s19
  %s22 = scalar_select 0, %s21, %s19
  $region1: #{new_model_forward.5} parent=0
    #allocation2 [shape = 'u8[4096]{0}', space=smem, size = 0x1000, scoped, tag = 'input window, operand 14, single buffered']
    #allocation3 [shape = 's32[1]{0}', space=sflag, size = 0x4, scoped, tag = 'scoped memory for new_model_forward.5']
    #allocation4 [shape = 'u8[4096]{0}', space=smem, size = 0x1000, scoped, tag = 'input window, operand 15, single buffered']
    #allocation5 [shape = 's32[1]{0}', space=sflag, size = 0x4, scoped, tag = 'scoped memory for new_model_forward.5']
    #allocation6 [shape = 'u8[2048]{0}', space=smem, size = 0x800, scoped, tag = 'input window, operand 16, single buffered']
    #allocation7 [shape = 'u8[2048]{0}', space=smem, size = 0x800, scoped, tag = 'input window, operand 17, single buffered']
    #allocation8 [shape = 's32[1]{0}', space=sflag, size = 0x4, scoped, tag = 'scoped memory for new_model_forward.5']
    %23 = vsyncpa [#allocation3], 0
    %24 = vsyncpa [#allocation5], 0
    %25 = vsyncpa [#allocation8], 0
    // Predicated region
    $region2: #{new_model_forward.5} parent=1 // pred_check
      _
    $region3: #{new_model_forward.5} parent=1 // pred_check_branch
      %27 = sbr.rel (0) target = $region5
    $region4: #{new_model_forward.5} parent=1 // pred_region
      _
    $region5: #{new_model_forward.5} parent=1 // pred_fallthru
      _
    // Predicated region
    $region6: #{new_model_forward.5} parent=1 // pred_check
      _
    $region7: #{new_model_forward.5} parent=1 // pred_check_branch
      %29 = sbr.rel (0) target = $region9
    $region8: #{new_model_forward.5} parent=1 // pred_region
      _
    $region9: #{new_model_forward.5} parent=1 // pred_fallthru
      _
    // Predicated region
    $region10: #{new_model_forward.5} parent=1 // pred_check
      _
    $region11: #{new_model_forward.5} parent=1 // pred_check_branch
      %31 = sbr.rel (0) target = $region13
    $region12: #{new_model_forward.5} parent=1 // pred_region
      _
    $region13: #{new_model_forward.5} parent=1 // pred_fallthru
      _
    // Predicated region
    $region14: #{new_model_forward.5} parent=1 // pred_check
      _
    $region15: #{new_model_forward.5} parent=1 // pred_check_branch
      %33 = sbr.rel (0) target = $region17
    $region16: #{new_model_forward.5} parent=1 // pred_region
      _
    $region17: #{new_model_forward.5} parent=1 // pred_fallthru
      _
    // Predicated region
    $region18: #{new_model_forward.5} parent=1 // pred_check
      _
    $region19: #{new_model_forward.5} parent=1 // pred_check_branch
      %35 = sbr.rel (0) target = $region21
    $region20: #{new_model_forward.5} parent=1 // pred_region
      _
    $region21: #{new_model_forward.5} parent=1 // pred_fallthru
      _
    // Predicated region
    $region22: #{new_model_forward.5} parent=1 // pred_check
      _
    $region23: #{new_model_forward.5} parent=1 // pred_check_branch
      %37 = sbr.rel (0) target = $region25
    $region24: #{new_model_forward.5} parent=1 // pred_region
      _
    $region25: #{new_model_forward.5} parent=1 // pred_fallthru
      _
    // Predicated region
    $region26: #{new_model_forward.5} parent=1 // pred_check
      _
    $region27: #{new_model_forward.5} parent=1 // pred_check_branch
      %39 = sbr.rel (0) target = $region29
    $region28: #{new_model_forward.5} parent=1 // pred_region
      _
    $region29: #{new_model_forward.5} parent=1 // pred_fallthru
      _
    // Predicated region
    $region30: #{new_model_forward.5} parent=1 // pred_check
      _
    $region31: #{new_model_forward.5} parent=1 // pred_check_branch
      %41 = sbr.rel (0) target = $region33
    $region32: #{new_model_forward.5} parent=1 // pred_region
      _
    $region33: #{new_model_forward.5} parent=1 // pred_fallthru
      _
    // Predicated region
    $region34: #{new_model_forward.5} parent=1 // pred_check
      _
    $region35: #{new_model_forward.5} parent=1 // pred_check_branch
      %43 = sbr.rel (0) target = $region37
    $region36: #{new_model_forward.5} parent=1 // pred_region
      _
    $region37: #{new_model_forward.5} parent=1 // pred_fallthru
      _
    // Predicated region
    $region38: #{new_model_forward.5} parent=1 // pred_check
      _
    $region39: #{new_model_forward.5} parent=1 // pred_check_branch
      %45 = sbr.rel (0) target = $region41
    $region40: #{new_model_forward.5} parent=1 // pred_region
      _
    $region41: #{new_model_forward.5} parent=1 // pred_fallthru
      _
    // Predicated region
    $region42: #{new_model_forward.5} parent=1 // pred_check
      _
    $region43: #{new_model_forward.5} parent=1 // pred_check_branch
      %47 = sbr.rel (0) target = $region45
    $region44: #{new_model_forward.5} parent=1 // pred_region
      _
    $region45: #{new_model_forward.5} parent=1 // pred_fallthru
      _
    // Predicated region
    $region46: #{new_model_forward.5} parent=1 // pred_check
      _
    $region47: #{new_model_forward.5} parent=1 // pred_check_branch
      %49 = sbr.rel (0) target = $region49
    $region48: #{new_model_forward.5} parent=1 // pred_region
      _
    $region49: #{new_model_forward.5} parent=1 // pred_fallthru
      _
    // Predicated region
    $region50: #{new_model_forward.5} parent=1 // pred_check
      _
    $region51: #{new_model_forward.5} parent=1 // pred_check_branch
      %51 = sbr.rel (0) target = $region53
    $region52: #{new_model_forward.5} parent=1 // pred_region
      _
    $region53: #{new_model_forward.5} parent=1 // pred_fallthru
      _
    // Predicated region
    $region54: #{new_model_forward.5} parent=1 // pred_check
      _
    $region55: #{new_model_forward.5} parent=1 // pred_check_branch
      %53 = sbr.rel (0) target = $region57
    $region56: #{new_model_forward.5} parent=1 // pred_region
      _
    $region57: #{new_model_forward.5} parent=1 // pred_fallthru
      _
    // Predicated region
    $region58: #{new_model_forward.5} parent=1 // pred_check
      _
    $region59: #{new_model_forward.5} parent=1 // pred_check_branch
      %55 = sbr.rel (0) target = $region61
    $region60: #{new_model_forward.5} parent=1 // pred_region
      %s57 = ssub.s32 128, 128
      %58 = vsyncadd [#allocation3], %s57
      %s60 = sshll.u32 %s14, 4
      %s61 = int_to_ptr.vmem [resolvable:$true] %s60
      %63 = dma.vmem_to_smem %s61, 128, [#allocation2], [#allocation3]
    $region61: #{new_model_forward.5} parent=1 // pred_fallthru
      _
    // Predicated region
    $region62: #{new_model_forward.5} parent=1 // pred_check
      _
    $region63: #{new_model_forward.5} parent=1 // pred_check_branch
      %65 = sbr.rel (0) target = $region65
    $region64: #{new_model_forward.5} parent=1 // pred_region
      %s67 = ssub.s32 128, 128
      %68 = vsyncadd [#allocation5], %s67
      %s70 = sshll.u32 %s15, 4
      %s71 = int_to_ptr.vmem [resolvable:$true] %s70
      %73 = dma.vmem_to_smem %s71, 128, [#allocation4], [#allocation5]
    $region65: #{new_model_forward.5} parent=1 // pred_fallthru
      _
    // Predicated region
    $region66: #{new_model_forward.5} parent=1 // pred_check
      _
    $region67: #{new_model_forward.5} parent=1 // pred_check_branch
      %75 = sbr.rel (0) target = $region69
    $region68: #{new_model_forward.5} parent=1 // pred_region
      %s77 = ssub.s32 64, 64
      %78 = vsyncadd [#allocation5], %s77
      %s80 = sshll.u32 %s16, 4
      %s81 = int_to_ptr.vmem [resolvable:$true] %s80
      %83 = dma.vmem_to_smem %s81, 64, [#allocation6], [#allocation5]
    $region69: #{new_model_forward.5} parent=1 // pred_fallthru
      _
    // Predicated region
    $region70: #{new_model_forward.5} parent=1 // pred_check
      _
    $region71: #{new_model_forward.5} parent=1 // pred_check_branch
      %85 = sbr.rel (0) target = $region73
    $region72: #{new_model_forward.5} parent=1 // pred_region
      %s87 = ssub.s32 64, 64
      %88 = vsyncadd [#allocation8], %s87
      %s90 = sshll.u32 %s17, 4
      %s91 = int_to_ptr.vmem [resolvable:$true] %s90
      %93 = dma.vmem_to_smem %s91, 64, [#allocation7], [#allocation8]
    $region73: #{new_model_forward.5} parent=1 // pred_fallthru
      _
    // Predicated region
    $region74: #{new_model_forward.5} parent=1 // pred_check
      _
    $region75: #{new_model_forward.5} parent=1 // pred_check_branch
      %95 = sbr.rel (0) target = $region77
    $region76: #{new_model_forward.5} parent=1 // pred_region
      %96 = dma.done [#allocation3], 128
    $region77: #{new_model_forward.5} parent=1 // pred_fallthru
      _
    // Predicated region
    $region78: #{new_model_forward.5} parent=1 // pred_check
      _
    $region79: #{new_model_forward.5} parent=1 // pred_check_branch
      %98 = sbr.rel (0) target = $region81
    $region80: #{new_model_forward.5} parent=1 // pred_region
      %99 = dma.done [#allocation5], 128
    $region81: #{new_model_forward.5} parent=1 // pred_fallthru
      _
    // Predicated region
    $region82: #{new_model_forward.5} parent=1 // pred_check
      _
    $region83: #{new_model_forward.5} parent=1 // pred_check_branch
      %101 = sbr.rel (0) target = $region85
    $region84: #{new_model_forward.5} parent=1 // pred_region
      %102 = dma.done [#allocation5], 64
    $region85: #{new_model_forward.5} parent=1 // pred_fallthru
      _
    // Predicated region
    $region86: #{new_model_forward.5} parent=1 // pred_check
      _
    $region87: #{new_model_forward.5} parent=1 // pred_check_branch
      %104 = sbr.rel (0) target = $region89
    $region88: #{new_model_forward.5} parent=1 // pred_region
      %105 = dma.done [#allocation8], 64
    $region89: #{new_model_forward.5} parent=1 // pred_fallthru
      _
    %106 = sfence
    %v107 = vld [vmem:[%s0] sm:$0xff]
    %v108 = vld [vmem:[%s0 + $0x8] sm:$0xff]
    %v109 = vld [vmem:[%s0 + $0x10] sm:$0xff]
    %v110 = vld [vmem:[%s0 + $0x18] sm:$0xff]
    %v111 = vld [vmem:[%s1] sm:$0xff]
    %v112 = vld [vmem:[%s1 + $0x8] sm:$0xff]
    %v113 = vld [vmem:[%s1 + $0x10] sm:$0xff]
    %v114 = vld [vmem:[%s1 + $0x18] sm:$0xff]
    %v115 = vld [vmem:[%s2] sm:$0x1]
    %v116 = vld [vmem:[%s3] sm:$0x1]
    %vm117 = vcmask 261120
    %v118 = vsel %vm117, %v111, 0.0
    %119 = vadd.xlane.f32.xlu0 %v118
    %v120 = vpop.xlane.xlu0 %119
    %v121 = vsel %vm117, %v112, 0.0
    %122 = vadd.xlane.f32.xlu0 %v121
    %v123 = vpop.xlane.xlu0 %122
    %v124 = vsel %vm117, %v113, 0.0
    %125 = vadd.xlane.f32.xlu0 %v124
    %v126 = vpop.xlane.xlu0 %125
    %v127 = vsel %vm117, %v114, 0.0
    %128 = vadd.xlane.f32.xlu0 %v127
    %v129 = vpop.xlane.xlu0 %128
    %v130 = vrcp.pop 32.0
    %v131 = vmul.f32 %v120, %v130
    %v132 = vmul.f32 %v123, %v130
    %v133 = vmul.f32 %v126, %v130
    %v134 = vmul.f32 %v129, %v130
    %v135 = vsub.f32 %v111, %v131
    %v136 = vsub.f32 %v112, %v132
    %v137 = vsub.f32 %v113, %v133
    %v138 = vsub.f32 %v114, %v134
    %v139 = vmul.f32 %v135, %v135
    %v140 = vmul.f32 %v136, %v136
    %v141 = vmul.f32 %v137, %v137
    %v142 = vmul.f32 %v138, %v138
    %v143 = vsel %vm117, %v139, 0.0
    %144 = vadd.xlane.f32.xlu0 %v143
    %v145 = vpop.xlane.xlu0 %144
    %v146 = vsel %vm117, %v140, 0.0
    %147 = vadd.xlane.f32.xlu0 %v146
    %v148 = vpop.xlane.xlu0 %147
    %v149 = vsel %vm117, %v141, 0.0
    %150 = vadd.xlane.f32.xlu0 %v149
    %v151 = vpop.xlane.xlu0 %150
    %v152 = vsel %vm117, %v142, 0.0
    %153 = vadd.xlane.f32.xlu0 %v152
    %v154 = vpop.xlane.xlu0 %153
    %v155 = vmul.f32 %v145, %v130
    %v156 = vmul.f32 %v148, %v130
    %v157 = vmul.f32 %v151, %v130
    %v158 = vmul.f32 %v154, %v130
    %v159 = vadd.f32 %v155, 1e-05
    %v160 = vadd.f32 %v156, 1e-05
    %v161 = vadd.f32 %v157, 1e-05
    %v162 = vadd.f32 %v158, 1e-05
    %v163 = vrsqrt.pop %v159
    %v164 = vrsqrt.pop %v160
    %v165 = vrsqrt.pop %v161
    %v166 = vrsqrt.pop %v162
    %v167 = vmul.f32 %v135, %v163
    %v168 = vmul.f32 %v136, %v164
    %v169 = vmul.f32 %v137, %v165
    %v170 = vmul.f32 %v138, %v166
    %v172 = vlaneseq
    %v173 = vshrl.u32 %v172, 7
    %v174 = vsub.s32 0, %v173
    %v175 = vrot.slane %v115, %v174
    %v177 = vmul.f32 %v167, %v175
    %v178 = vmul.f32 %v168, %v175
    %v179 = vmul.f32 %v169, %v175
    %v180 = vmul.f32 %v170, %v175
    %v182 = vlaneseq
    %v183 = vshrl.u32 %v182, 7
    %v184 = vsub.s32 0, %v183
    %v185 = vrot.slane %v116, %v184
    %v187 = vadd.f32 %v177, %v185
    %v188 = vadd.f32 %v178, %v185
    %v189 = vadd.f32 %v179, %v185
    %v190 = vadd.f32 %v180, %v185
    %195 = vrot.lane.b32.xlu0 %v187, 32
    %v196 = vpop.permute.xlu0 %195
    %197 = vrot.lane.b32.xlu0 %v188, 32
    %v198 = vpop.permute.xlu0 %197
    %199 = vrot.lane.b32.xlu0 %v189, 32
    %v200 = vpop.permute.xlu0 %199
    %201 = vrot.lane.b32.xlu0 %v190, 32
    %v202 = vpop.permute.xlu0 %201
    %v207 = vsel %vm117, %v107, %v196
    %v208 = vsel %vm117, %v108, %v198
    %v209 = vsel %vm117, %v109, %v200
    %v210 = vsel %vm117, %v110, %v202
    %v211 = vld [vmem:[%s4] sm:$0x1]
    %v212 = vld [vmem:[%s5] sm:$0x1]
    %vm213 = vcmask 523264
    %v214 = vsel %vm213, %v207, 0.0
    %215 = vadd.xlane.f32.xlu0 %v214
    %v216 = vpop.xlane.xlu0 %215
    %v217 = vsel %vm213, %v208, 0.0
    %218 = vadd.xlane.f32.xlu0 %v217
    %v219 = vpop.xlane.xlu0 %218
    %v220 = vsel %vm213, %v209, 0.0
    %221 = vadd.xlane.f32.xlu0 %v220
    %v222 = vpop.xlane.xlu0 %221
    %v223 = vsel %vm213, %v210, 0.0
    %224 = vadd.xlane.f32.xlu0 %v223
    %v225 = vpop.xlane.xlu0 %224
    %v226 = vrcp.pop 64.0
    %v227 = vmul.f32 %v216, %v226
    %v228 = vmul.f32 %v219, %v226
    %v229 = vmul.f32 %v222, %v226
    %v230 = vmul.f32 %v225, %v226
    %v231 = vsub.f32 %v207, %v227
    %v232 = vsub.f32 %v208, %v228
    %v233 = vsub.f32 %v209, %v229
    %v234 = vsub.f32 %v210, %v230
    %v235 = vmul.f32 %v231, %v231
    %v236 = vmul.f32 %v232, %v232
    %v237 = vmul.f32 %v233, %v233
    %v238 = vmul.f32 %v234, %v234
    %v239 = vsel %vm213, %v235, 0.0
    %240 = vadd.xlane.f32.xlu0 %v239
    %v241 = vpop.xlane.xlu0 %240
    %v242 = vsel %vm213, %v236, 0.0
    %243 = vadd.xlane.f32.xlu0 %v242
    %v244 = vpop.xlane.xlu0 %243
    %v245 = vsel %vm213, %v237, 0.0
    %246 = vadd.xlane.f32.xlu0 %v245
    %v247 = vpop.xlane.xlu0 %246
    %v248 = vsel %vm213, %v238, 0.0
    %249 = vadd.xlane.f32.xlu0 %v248
    %v250 = vpop.xlane.xlu0 %249
    %v251 = vmul.f32 %v241, %v226
    %v252 = vmul.f32 %v244, %v226
    %v253 = vmul.f32 %v247, %v226
    %v254 = vmul.f32 %v250, %v226
    %v255 = vadd.f32 %v251, 1e-05
    %v256 = vadd.f32 %v252, 1e-05
    %v257 = vadd.f32 %v253, 1e-05
    %v258 = vadd.f32 %v254, 1e-05
    %v259 = vrsqrt.pop %v255
    %v260 = vrsqrt.pop %v256
    %v261 = vrsqrt.pop %v257
    %v262 = vrsqrt.pop %v258
    %v263 = vmul.f32 %v231, %v259
    %v264 = vmul.f32 %v232, %v260
    %v265 = vmul.f32 %v233, %v261
    %v266 = vmul.f32 %v234, %v262
    %v268 = vlaneseq
    %v269 = vshrl.u32 %v268, 7
    %v270 = vsub.s32 0, %v269
    %v271 = vrot.slane %v211, %v270
    %v273 = vmul.f32 %v263, %v271
    %v274 = vmul.f32 %v264, %v271
    %v275 = vmul.f32 %v265, %v271
    %v276 = vmul.f32 %v266, %v271
    %v278 = vlaneseq
    %v279 = vshrl.u32 %v278, 7
    %v280 = vsub.s32 0, %v279
    %v281 = vrot.slane %v212, %v280
    %v283 = vadd.f32 %v273, %v281
    %v284 = vadd.f32 %v274, %v281
    %v285 = vadd.f32 %v275, %v281
    %v286 = vadd.f32 %v276, %v281
    %s287 = sld [smem:[#allocation2]]
    %v288 = vstv %s287
    %v289 = vmul.f32 %v288, %v283
    %s290 = sld [smem:[#allocation2 + $0x1]]
    %v291 = vstv %s290
    %v292 = vmul.f32 %v291, %v284
    %v293 = vadd.f32 %v289, %v292
    %s294 = sld [smem:[#allocation2 + $0x2]]
    %v295 = vstv %s294
    %v296 = vmul.f32 %v295, %v285
    %v297 = vadd.f32 %v293, %v296
    %s298 = sld [smem:[#allocation2 + $0x3]]
    %v299 = vstv %s298
    %v300 = vmul.f32 %v299, %v286
    %v301 = vadd.f32 %v297, %v300
    %s302 = sld [smem:[#allocation4]]
    %v303 = vstv %s302
    %v304 = vadd.f32 %v301, %v303
    %v305 = vmul.f32 %v304, %v304
    %v306 = vmul.f32 %v304, %v305
    %v307 = vmul.f32 %v306, 0.044715
    %v308 = vadd.f32 %v304, %v307
    %v309 = vmul.f32 %v308, 0.7978846
    %v310 = vtanh.pop %v309
    %v311 = vadd.f32 %v310, 1.0
    %v312 = vmul.f32 %v311, 0.5
    %v313 = vmul.f32 %v304, %v312
    %s314 = sld [smem:[#allocation2 + $0x80]]
    %v315 = vstv %s314
    %v316 = vmul.f32 %v315, %v283
    %s317 = sld [smem:[#allocation2 + $0x81]]
    %v318 = vstv %s317
    %v319 = vmul.f32 %v318, %v284
    %v320 = vadd.f32 %v316, %v319
    %s321 = sld [smem:[#allocation2 + $0x82]]
    %v322 = vstv %s321
    %v323 = vmul.f32 %v322, %v285
    %v324 = vadd.f32 %v320, %v323
    %s325 = sld [smem:[#allocation2 + $0x83]]
    %v326 = vstv %s325
    %v327 = vmul.f32 %v326, %v286
    %v328 = vadd.f32 %v324, %v327
    %s329 = sld [smem:[#allocation4 + $0x80]]
    %v330 = vstv %s329
    %v331 = vadd.f32 %v328, %v330
    %v332 = vmul.f32 %v331, %v331
    %v333 = vmul.f32 %v331, %v332
    %v334 = vmul.f32 %v333, 0.044715
    %v335 = vadd.f32 %v331, %v334
    %v336 = vmul.f32 %v335, 0.7978846
    %v337 = vtanh.pop %v336
    %v338 = vadd.f32 %v337, 1.0
    %v339 = vmul.f32 %v338, 0.5
    %v340 = vmul.f32 %v331, %v339
    %s341 = sld [smem:[#allocation2 + $0x100]]
    %v342 = vstv %s341
    %v343 = vmul.f32 %v342, %v283
    %s344 = sld [smem:[#allocation2 + $0x101]]
    %v345 = vstv %s344
    %v346 = vmul.f32 %v345, %v284
    %v347 = vadd.f32 %v343, %v346
    %s348 = sld [smem:[#allocation2 + $0x102]]
    %v349 = vstv %s348
    %v350 = vmul.f32 %v349, %v285
    %v351 = vadd.f32 %v347, %v350
    %s352 = sld [smem:[#allocation2 + $0x103]]
    %v353 = vstv %s352
    %v354 = vmul.f32 %v353, %v286
    %v355 = vadd.f32 %v351, %v354
    %s356 = sld [smem:[#allocation4 + $0x100]]
    %v357 = vstv %s356
    %v358 = vadd.f32 %v355, %v357
    %v359 = vmul.f32 %v358, %v358
    %v360 = vmul.f32 %v358, %v359
    %v361 = vmul.f32 %v360, 0.044715
    %v362 = vadd.f32 %v358, %v361
    %v363 = vmul.f32 %v362, 0.7978846
    %v364 = vtanh.pop %v363
    %v365 = vadd.f32 %v364, 1.0
    %v366 = vmul.f32 %v365, 0.5
    %v367 = vmul.f32 %v358, %v366
    %s368 = sld [smem:[#allocation2 + $0x180]]
    %v369 = vstv %s368
    %v370 = vmul.f32 %v369, %v283
    %s371 = sld [smem:[#allocation2 + $0x181]]
    %v372 = vstv %s371
    %v373 = vmul.f32 %v372, %v284
    %v374 = vadd.f32 %v370, %v373
    %s375 = sld [smem:[#allocation2 + $0x182]]
    %v376 = vstv %s375
    %v377 = vmul.f32 %v376, %v285
    %v378 = vadd.f32 %v374, %v377
    %s379 = sld [smem:[#allocation2 + $0x183]]
    %v380 = vstv %s379
    %v381 = vmul.f32 %v380, %v286
    %v382 = vadd.f32 %v378, %v381
    %s383 = sld [smem:[#allocation4 + $0x180]]
    %v384 = vstv %s383
    %v385 = vadd.f32 %v382, %v384
    %v386 = vmul.f32 %v385, %v385
    %v387 = vmul.f32 %v385, %v386
    %v388 = vmul.f32 %v387, 0.044715
    %v389 = vadd.f32 %v385, %v388
    %v390 = vmul.f32 %v389, 0.7978846
    %v391 = vtanh.pop %v390
    %v392 = vadd.f32 %v391, 1.0
    %v393 = vmul.f32 %v392, 0.5
    %v394 = vmul.f32 %v385, %v393
    %s395 = sld [smem:[#allocation2 + $0x200]]
    %v396 = vstv %s395
    %v397 = vmul.f32 %v396, %v283
    %s398 = sld [smem:[#allocation2 + $0x201]]
    %v399 = vstv %s398
    %v400 = vmul.f32 %v399, %v284
    %v401 = vadd.f32 %v397, %v400
    %s402 = sld [smem:[#allocation2 + $0x202]]
    %v403 = vstv %s402
    %v404 = vmul.f32 %v403, %v285
    %v405 = vadd.f32 %v401, %v404
    %s406 = sld [smem:[#allocation2 + $0x203]]
    %v407 = vstv %s406
    %v408 = vmul.f32 %v407, %v286
    %v409 = vadd.f32 %v405, %v408
    %s410 = sld [smem:[#allocation4 + $0x200]]
    %v411 = vstv %s410
    %v412 = vadd.f32 %v409, %v411
    %v413 = vmul.f32 %v412, %v412
    %v414 = vmul.f32 %v412, %v413
    %v415 = vmul.f32 %v414, 0.044715
    %v416 = vadd.f32 %v412, %v415
    %v417 = vmul.f32 %v416, 0.7978846
    %v418 = vtanh.pop %v417
    %v419 = vadd.f32 %v418, 1.0
    %v420 = vmul.f32 %v419, 0.5
    %v421 = vmul.f32 %v412, %v420
    %s422 = sld [smem:[#allocation2 + $0x280]]
    %v423 = vstv %s422
    %v424 = vmul.f32 %v423, %v283
    %s425 = sld [smem:[#allocation2 + $0x281]]
    %v426 = vstv %s425
    %v427 = vmul.f32 %v426, %v284
    %v428 = vadd.f32 %v424, %v427
    %s429 = sld [smem:[#allocation2 + $0x282]]
    %v430 = vstv %s429
    %v431 = vmul.f32 %v430, %v285
    %v432 = vadd.f32 %v428, %v431
    %s433 = sld [smem:[#allocation2 + $0x283]]
    %v434 = vstv %s433
    %v435 = vmul.f32 %v434, %v286
    %v436 = vadd.f32 %v432, %v435
    %s437 = sld [smem:[#allocation4 + $0x280]]
    %v438 = vstv %s437
    %v439 = vadd.f32 %v436, %v438
    %v440 = vmul.f32 %v439, %v439
    %v441 = vmul.f32 %v439, %v440
    %v442 = vmul.f32 %v441, 0.044715
    %v443 = vadd.f32 %v439, %v442
    %v444 = vmul.f32 %v443, 0.7978846
    %v445 = vtanh.pop %v444
    %v446 = vadd.f32 %v445, 1.0
    %v447 = vmul.f32 %v446, 0.5
    %v448 = vmul.f32 %v439, %v447
    %s449 = sld [smem:[#allocation2 + $0x300]]
    %v450 = vstv %s449
    %v451 = vmul.f32 %v450, %v283
    %s452 = sld [smem:[#allocation2 + $0x301]]
    %v453 = vstv %s452
    %v454 = vmul.f32 %v453, %v284
    %v455 = vadd.f32 %v451, %v454
    %s456 = sld [smem:[#allocation2 + $0x302]]
    %v457 = vstv %s456
    %v458 = vmul.f32 %v457, %v285
    %v459 = vadd.f32 %v455, %v458
    %s460 = sld [smem:[#allocation2 + $0x303]]
    %v461 = vstv %s460
    %v462 = vmul.f32 %v461, %v286
    %v463 = vadd.f32 %v459, %v462
    %s464 = sld [smem:[#allocation4 + $0x300]]
    %v465 = vstv %s464
    %v466 = vadd.f32 %v463, %v465
    %v467 = vmul.f32 %v466, %v466
    %v468 = vmul.f32 %v466, %v467
    %v469 = vmul.f32 %v468, 0.044715
    %v470 = vadd.f32 %v466, %v469
    %v471 = vmul.f32 %v470, 0.7978846
    %v472 = vtanh.pop %v471
    %v473 = vadd.f32 %v472, 1.0
    %v474 = vmul.f32 %v473, 0.5
    %v475 = vmul.f32 %v466, %v474
    %s476 = sld [smem:[#allocation2 + $0x380]]
    %v477 = vstv %s476
    %v478 = vmul.f32 %v477, %v283
    %s479 = sld [smem:[#allocation2 + $0x381]]
    %v480 = vstv %s479
    %v481 = vmul.f32 %v480, %v284
    %v482 = vadd.f32 %v478, %v481
    %s483 = sld [smem:[#allocation2 + $0x382]]
    %v484 = vstv %s483
    %v485 = vmul.f32 %v484, %v285
    %v486 = vadd.f32 %v482, %v485
    %s487 = sld [smem:[#allocation2 + $0x383]]
    %v488 = vstv %s487
    %v489 = vmul.f32 %v488, %v286
    %v490 = vadd.f32 %v486, %v489
    %s491 = sld [smem:[#allocation4 + $0x380]]
    %v492 = vstv %s491
    %v493 = vadd.f32 %v490, %v492
    %v494 = vmul.f32 %v493, %v493
    %v495 = vmul.f32 %v493, %v494
    %v496 = vmul.f32 %v495, 0.044715
    %v497 = vadd.f32 %v493, %v496
    %v498 = vmul.f32 %v497, 0.7978846
    %v499 = vtanh.pop %v498
    %v500 = vadd.f32 %v499, 1.0
    %v501 = vmul.f32 %v500, 0.5
    %v502 = vmul.f32 %v493, %v501
    %s503 = sld [smem:[#allocation6]]
    %v504 = vstv %s503
    %v505 = vmul.f32 %v504, %v313
    %s506 = sld [smem:[#allocation6 + $0x1]]
    %v507 = vstv %s506
    %v508 = vmul.f32 %v507, %v340
    %v509 = vadd.f32 %v505, %v508
    %s510 = sld [smem:[#allocation6 + $0x2]]
    %v511 = vstv %s510
    %v512 = vmul.f32 %v511, %v367
    %v513 = vadd.f32 %v509, %v512
    %s514 = sld [smem:[#allocation6 + $0x3]]
    %v515 = vstv %s514
    %v516 = vmul.f32 %v515, %v394
    %v517 = vadd.f32 %v513, %v516
    %s518 = sld [smem:[#allocation6 + $0x4]]
    %v519 = vstv %s518
    %v520 = vmul.f32 %v519, %v421
    %v521 = vadd.f32 %v517, %v520
    %s522 = sld [smem:[#allocation6 + $0x5]]
    %v523 = vstv %s522
    %v524 = vmul.f32 %v523, %v448
    %v525 = vadd.f32 %v521, %v524
    %s526 = sld [smem:[#allocation6 + $0x6]]
    %v527 = vstv %s526
    %v528 = vmul.f32 %v527, %v475
    %v529 = vadd.f32 %v525, %v528
    %s530 = sld [smem:[#allocation6 + $0x7]]
    %v531 = vstv %s530
    %v532 = vmul.f32 %v531, %v502
    %v533 = vadd.f32 %v529, %v532
    %v534 = vadd.f32 %v207, %v533
    %s535 = sld [smem:[#allocation7]]
    %v536 = vstv %s535
    %v537 = vadd.f32 %v534, %v536
    %s538 = sld [smem:[#allocation6 + $0x80]]
    %v539 = vstv %s538
    %v540 = vmul.f32 %v539, %v313
    %s541 = sld [smem:[#allocation6 + $0x81]]
    %v542 = vstv %s541
    %v543 = vmul.f32 %v542, %v340
    %v544 = vadd.f32 %v540, %v543
    %s545 = sld [smem:[#allocation6 + $0x82]]
    %v546 = vstv %s545
    %v547 = vmul.f32 %v546, %v367
    %v548 = vadd.f32 %v544, %v547
    %s549 = sld [smem:[#allocation6 + $0x83]]
    %v550 = vstv %s549
    %v551 = vmul.f32 %v550, %v394
    %v552 = vadd.f32 %v548, %v551
    %s553 = sld [smem:[#allocation6 + $0x84]]
    %v554 = vstv %s553
    %v555 = vmul.f32 %v554, %v421
    %v556 = vadd.f32 %v552, %v555
    %s557 = sld [smem:[#allocation6 + $0x85]]
    %v558 = vstv %s557
    %v559 = vmul.f32 %v558, %v448
    %v560 = vadd.f32 %v556, %v559
    %s561 = sld [smem:[#allocation6 + $0x86]]
    %v562 = vstv %s561
    %v563 = vmul.f32 %v562, %v475
    %v564 = vadd.f32 %v560, %v563
    %s565 = sld [smem:[#allocation6 + $0x87]]
    %v566 = vstv %s565
    %v567 = vmul.f32 %v566, %v502
    %v568 = vadd.f32 %v564, %v567
    %v569 = vadd.f32 %v208, %v568
    %s570 = sld [smem:[#allocation7 + $0x80]]
    %v571 = vstv %s570
    %v572 = vadd.f32 %v569, %v571
    %s573 = sld [smem:[#allocation6 + $0x100]]
    %v574 = vstv %s573
    %v575 = vmul.f32 %v574, %v313
    %s576 = sld [smem:[#allocation6 + $0x101]]
    %v577 = vstv %s576
    %v578 = vmul.f32 %v577, %v340
    %v579 = vadd.f32 %v575, %v578
    %s580 = sld [smem:[#allocation6 + $0x102]]
    %v581 = vstv %s580
    %v582 = vmul.f32 %v581, %v367
    %v583 = vadd.f32 %v579, %v582
    %s584 = sld [smem:[#allocation6 + $0x103]]
    %v585 = vstv %s584
    %v586 = vmul.f32 %v585, %v394
    %v587 = vadd.f32 %v583, %v586
    %s588 = sld [smem:[#allocation6 + $0x104]]
    %v589 = vstv %s588
    %v590 = vmul.f32 %v589, %v421
    %v591 = vadd.f32 %v587, %v590
    %s592 = sld [smem:[#allocation6 + $0x105]]
    %v593 = vstv %s592
    %v594 = vmul.f32 %v593, %v448
    %v595 = vadd.f32 %v591, %v594
    %s596 = sld [smem:[#allocation6 + $0x106]]
    %v597 = vstv %s596
    %v598 = vmul.f32 %v597, %v475
    %v599 = vadd.f32 %v595, %v598
    %s600 = sld [smem:[#allocation6 + $0x107]]
    %v601 = vstv %s600
    %v602 = vmul.f32 %v601, %v502
    %v603 = vadd.f32 %v599, %v602
    %v604 = vadd.f32 %v209, %v603
    %s605 = sld [smem:[#allocation7 + $0x100]]
    %v606 = vstv %s605
    %v607 = vadd.f32 %v604, %v606
    %s608 = sld [smem:[#allocation6 + $0x180]]
    %v609 = vstv %s608
    %v610 = vmul.f32 %v609, %v313
    %s611 = sld [smem:[#allocation6 + $0x181]]
    %v612 = vstv %s611
    %v613 = vmul.f32 %v612, %v340
    %v614 = vadd.f32 %v610, %v613
    %s615 = sld [smem:[#allocation6 + $0x182]]
    %v616 = vstv %s615
    %v617 = vmul.f32 %v616, %v367
    %v618 = vadd.f32 %v614, %v617
    %s619 = sld [smem:[#allocation6 + $0x183]]
    %v620 = vstv %s619
    %v621 = vmul.f32 %v620, %v394
    %v622 = vadd.f32 %v618, %v621
    %s623 = sld [smem:[#allocation6 + $0x184]]
    %v624 = vstv %s623
    %v625 = vmul.f32 %v624, %v421
    %v626 = vadd.f32 %v622, %v625
    %s627 = sld [smem:[#allocation6 + $0x185]]
    %v628 = vstv %s627
    %v629 = vmul.f32 %v628, %v448
    %v630 = vadd.f32 %v626, %v629
    %s631 = sld [smem:[#allocation6 + $0x186]]
    %v632 = vstv %s631
    %v633 = vmul.f32 %v632, %v475
    %v634 = vadd.f32 %v630, %v633
    %s635 = sld [smem:[#allocation6 + $0x187]]
    %v636 = vstv %s635
    %v637 = vmul.f32 %v636, %v502
    %v638 = vadd.f32 %v634, %v637
    %v639 = vadd.f32 %v210, %v638
    %s640 = sld [smem:[#allocation7 + $0x180]]
    %v641 = vstv %s640
    %v642 = vadd.f32 %v639, %v641
    %v643 = vld [vmem:[%s6] sm:$0x1]
    %v644 = vld [vmem:[%s7] sm:$0x1]
    %v645 = vsel %vm213, %v537, 0.0
    %646 = vadd.xlane.f32.xlu0 %v645
    %v647 = vpop.xlane.xlu0 %646
    %v648 = vsel %vm213, %v572, 0.0
    %649 = vadd.xlane.f32.xlu0 %v648
    %v650 = vpop.xlane.xlu0 %649
    %v651 = vsel %vm213, %v607, 0.0
    %652 = vadd.xlane.f32.xlu0 %v651
    %v653 = vpop.xlane.xlu0 %652
    %v654 = vsel %vm213, %v642, 0.0
    %655 = vadd.xlane.f32.xlu0 %v654
    %v656 = vpop.xlane.xlu0 %655
    %v657 = vmul.f32 %v647, %v226
    %v658 = vmul.f32 %v650, %v226
    %v659 = vmul.f32 %v653, %v226
    %v660 = vmul.f32 %v656, %v226
    %v661 = vsub.f32 %v537, %v657
    %v662 = vsub.f32 %v572, %v658
    %v663 = vsub.f32 %v607, %v659
    %v664 = vsub.f32 %v642, %v660
    %v665 = vmul.f32 %v661, %v661
    %v666 = vmul.f32 %v662, %v662
    %v667 = vmul.f32 %v663, %v663
    %v668 = vmul.f32 %v664, %v664
    %v669 = vsel %vm213, %v665, 0.0
    %670 = vadd.xlane.f32.xlu0 %v669
    %v671 = vpop.xlane.xlu0 %670
    %v672 = vsel %vm213, %v666, 0.0
    %673 = vadd.xlane.f32.xlu0 %v672
    %v674 = vpop.xlane.xlu0 %673
    %v675 = vsel %vm213, %v667, 0.0
    %676 = vadd.xlane.f32.xlu0 %v675
    %v677 = vpop.xlane.xlu0 %676
    %v678 = vsel %vm213, %v668, 0.0
    %679 = vadd.xlane.f32.xlu0 %v678
    %v680 = vpop.xlane.xlu0 %679
    %v681 = vmul.f32 %v671, %v226
    %v682 = vmul.f32 %v674, %v226
    %v683 = vmul.f32 %v677, %v226
    %v684 = vmul.f32 %v680, %v226
    %v685 = vadd.f32 %v681, 1e-05
    %v686 = vadd.f32 %v682, 1e-05
    %v687 = vadd.f32 %v683, 1e-05
    %v688 = vadd.f32 %v684, 1e-05
    %v689 = vrsqrt.pop %v685
    %v690 = vrsqrt.pop %v686
    %v691 = vrsqrt.pop %v687
    %v692 = vrsqrt.pop %v688
    %v693 = vmul.f32 %v661, %v689
    %v694 = vmul.f32 %v662, %v690
    %v695 = vmul.f32 %v663, %v691
    %v696 = vmul.f32 %v664, %v692
    %v698 = vlaneseq
    %v699 = vshrl.u32 %v698, 7
    %v700 = vsub.s32 0, %v699
    %v701 = vrot.slane %v643, %v700
    %v703 = vmul.f32 %v693, %v701
    %v704 = vmul.f32 %v694, %v701
    %v705 = vmul.f32 %v695, %v701
    %v706 = vmul.f32 %v696, %v701
    %v708 = vlaneseq
    %v709 = vshrl.u32 %v708, 7
    %v710 = vsub.s32 0, %v709
    %v711 = vrot.slane %v644, %v710
    %v713 = vadd.f32 %v703, %v711
    %v714 = vadd.f32 %v704, %v711
    %v715 = vadd.f32 %v705, %v711
    %v716 = vadd.f32 %v706, %v711
    %v717 = vld [vmem:[%s10] sm:$0xff]
    %v718 = vld [vmem:[%s10 + $0x8] sm:$0xff]
    %v719 = vld [vmem:[%s10 + $0x10] sm:$0xff]
    %v720 = vld [vmem:[%s10 + $0x18] sm:$0xff]
    %v721 = vld [vmem:[%s10 + $0x20] sm:$0xff]
    %v722 = vld [vmem:[%s10 + $0x28] sm:$0xff]
    %v723 = vld [vmem:[%s10 + $0x30] sm:$0xff]
    %v724 = vld [vmem:[%s10 + $0x38] sm:$0xff]
    %v725 = vld [vmem:[%s11] sm:$0x1]
    %v727 = vlaneseq
    %v728 = vshrl.u32 %v727, 7
    %v729 = vsub.s32 0, %v728
    %v730 = vrot.slane %v725, %v729
    %v733 = vsel %vm213, %v713, 0
    %v736 = vsel %vm213, %v714, 0
    %v739 = vsel %vm213, %v715, 0
    %v742 = vsel %vm213, %v716, 0
    %744 = vmatprep.subr.mxu0 0.0
    %745 = vmatpush1.msra.mxu0 %v717
    %746 = vmatprep.subr.mxu0 0.0
    %747 = vmatpush1.msra.mxu0 %v718
    %748 = vmatprep.subr.mxu0 0.0
    %749 = vmatpush1.msra.mxu0 %v719
    %750 = vmatprep.subr.mxu0 0.0
    %751 = vmatpush1.msra.mxu0 %v720
    %752 = vmatprep.subr.mxu0 0.0
    %753 = vmatpush1.msra.mxu0 %v721
    %754 = vmatprep.subr.mxu0 0.0
    %755 = vmatpush1.msra.mxu0 %v722
    %756 = vmatprep.subr.mxu0 0.0
    %757 = vmatpush1.msra.mxu0 %v723
    %758 = vmatprep.subr.mxu0 0.0
    %759 = vmatpush1.msra.mxu0 %v724
    %760 = vmatprep.subr.mxu0 0.0
    %761 = vmatpush1.msra.mxu0 0.0
    %762 = vmatprep.subr.mxu0 0.0
    %763 = vmatpush1.msra.mxu0 0.0
    %764 = vmatprep.subr.mxu0 0.0
    %765 = vmatpush1.msra.mxu0 0.0
    %766 = vmatprep.subr.mxu0 0.0
    %767 = vmatpush1.msra.mxu0 0.0
    %768 = vmatprep.subr.mxu0 0.0
    %769 = vmatpush1.msra.mxu0 0.0
    %770 = vmatprep.subr.mxu0 0.0
    %771 = vmatpush1.msra.mxu0 0.0
    %772 = vmatprep.subr.mxu0 0.0
    %773 = vmatpush1.msra.mxu0 0.0
    %774 = vmatprep.subr.mxu0 0.0
    %775 = vmatpush1.msra.mxu0 0.0
    %776 = vmatprep.subr.mxu0 0.0
    %777 = vmatpush1.msra.mxu0 0.0
    %778 = vmatprep.subr.mxu0 0.0
    %779 = vmatpush1.msra.mxu0 0.0
    %780 = vmatprep.subr.mxu0 0.0
    %781 = vmatpush1.msra.mxu0 0.0
    %782 = vmatprep.subr.mxu0 0.0
    %783 = vmatpush1.msra.mxu0 0.0
    %784 = vmatprep.subr.mxu0 0.0
    %785 = vmatpush1.msra.mxu0 0.0
    %786 = vmatprep.subr.mxu0 0.0
    %787 = vmatpush1.msra.mxu0 0.0
    %788 = vmatprep.subr.mxu0 0.0
    %789 = vmatpush1.msra.mxu0 0.0
    %790 = vmatprep.subr.mxu0 0.0
    %791 = vmatpush1.msra.mxu0 0.0
    %792 = vmatprep.subr.mxu0 0.0
    %793 = vmatpush1.msra.mxu0 0.0
    %794 = vmatprep.subr.mxu0 0.0
    %795 = vmatpush1.msra.mxu0 0.0
    %796 = vmatprep.subr.mxu0 0.0
    %797 = vmatpush1.msra.mxu0 0.0
    %798 = vmatprep.subr.mxu0 0.0
    %799 = vmatpush1.msra.mxu0 0.0
    %800 = vmatprep.subr.mxu0 0.0
    %801 = vmatpush1.msra.mxu0 0.0
    %802 = vmatprep.subr.mxu0 0.0
    %803 = vmatpush1.msra.mxu0 0.0
    %804 = vmatprep.subr.mxu0 0.0
    %805 = vmatpush1.msra.mxu0 0.0
    %806 = vmatprep.subr.mxu0 0.0
    %807 = vmatpush1.msra.mxu0 0.0
    %808 = vmatprep.mubr.f32.mxu0 0.0
    %809 = vmatmul.mubr.f32.gmra.mrb[0].mxu0 %v733
    %v810 = vpop.f32.mrb[0].mxu0
    %v811 = vadd.f32 %v730, %v810
    %v812 = vpop.f32.mrb[0].mxu0
    %813 = vmatprep.mubr.f32.mxu0 0.0
    %814 = vmatmul.mubr.f32.gmra.mrb[0].mxu0 %v736
    %v815 = vpop.f32.mrb[0].mxu0
    %v816 = vadd.f32 %v730, %v815
    %v817 = vpop.f32.mrb[0].mxu0
    %818 = vmatprep.mubr.f32.mxu0 0.0
    %819 = vmatmul.mubr.f32.gmra.mrb[0].mxu0 %v739
    %v820 = vpop.f32.mrb[0].mxu0
    %v821 = vadd.f32 %v730, %v820
    %v822 = vpop.f32.mrb[0].mxu0
    %823 = vmatprep.mubr.f32.mxu0 0.0
    %824 = vmatmul.mubr.f32.gmra.mrb[0].mxu0 %v742
    %v825 = vpop.f32.mrb[0].mxu0
    %v826 = vadd.f32 %v730, %v825
    %v827 = vpop.f32.mrb[0].mxu0
    %828 = vdwg.mxu0
    %v829 = vmul.f32 %v811, %v811
    %v830 = vmul.f32 %v816, %v816
    %v831 = vmul.f32 %v821, %v821
    %v832 = vmul.f32 %v826, %v826
    %v833 = vmul.f32 %v811, %v829
    %v834 = vmul.f32 %v816, %v830
    %v835 = vmul.f32 %v821, %v831
    %v836 = vmul.f32 %v826, %v832
    %v837 = vmul.f32 %v833, 0.044715
    %v838 = vmul.f32 %v834, 0.044715
    %v839 = vmul.f32 %v835, 0.044715
    %v840 = vmul.f32 %v836, 0.044715
    %v841 = vadd.f32 %v811, %v837
    %v842 = vadd.f32 %v816, %v838
    %v843 = vadd.f32 %v821, %v839
    %v844 = vadd.f32 %v826, %v840
    %v845 = vmul.f32 %v841, 0.7978846
    %v846 = vmul.f32 %v842, 0.7978846
    %v847 = vmul.f32 %v843, 0.7978846
    %v848 = vmul.f32 %v844, 0.7978846
    %v849 = vtanh.pop %v845
    %v850 = vtanh.pop %v846
    %v851 = vtanh.pop %v847
    %v852 = vtanh.pop %v848
    %v853 = vadd.f32 %v849, 1.0
    %v854 = vadd.f32 %v850, 1.0
    %v855 = vadd.f32 %v851, 1.0
    %v856 = vadd.f32 %v852, 1.0
    %v857 = vmul.f32 %v853, 0.5
    %v858 = vmul.f32 %v854, 0.5
    %v859 = vmul.f32 %v855, 0.5
    %v860 = vmul.f32 %v856, 0.5
    %v861 = vmul.f32 %v811, %v857
    %v862 = vmul.f32 %v816, %v858
    %v863 = vmul.f32 %v821, %v859
    %v864 = vmul.f32 %v826, %v860
    %v865 = vld [vmem:[%s12] sm:$0xff]
    %v866 = vld [vmem:[%s12 + $0x8] sm:$0xff]
    %v867 = vld [vmem:[%s12 + $0x10] sm:$0xff]
    %v868 = vld [vmem:[%s12 + $0x18] sm:$0xff]
    %v869 = vld [vmem:[%s12 + $0x20] sm:$0xff]
    %v870 = vld [vmem:[%s12 + $0x28] sm:$0xff]
    %v871 = vld [vmem:[%s12 + $0x30] sm:$0xff]
    %v872 = vld [vmem:[%s12 + $0x38] sm:$0xff]
    %v873 = vld [vmem:[%s12 + $0x40] sm:$0xff]
    %v874 = vld [vmem:[%s12 + $0x48] sm:$0xff]
    %v875 = vld [vmem:[%s12 + $0x50] sm:$0xff]
    %v876 = vld [vmem:[%s12 + $0x58] sm:$0xff]
    %v877 = vld [vmem:[%s12 + $0x60] sm:$0xff]
    %v878 = vld [vmem:[%s12 + $0x68] sm:$0xff]
    %v879 = vld [vmem:[%s12 + $0x70] sm:$0xff]
    %v880 = vld [vmem:[%s12 + $0x78] sm:$0xff]
    %v881 = vld [vmem:[%s13] sm:$0x1]
    %v883 = vlaneseq
    %v884 = vshrl.u32 %v883, 7
    %v885 = vsub.s32 0, %v884
    %v886 = vrot.slane %v881, %v885
    %888 = vmatprep.subr.mxu0 0.0
    %889 = vmatpush1.msra.mxu0 %v865
    %890 = vmatprep.subr.mxu0 0.0
    %891 = vmatpush1.msra.mxu0 %v866
    %892 = vmatprep.subr.mxu0 0.0
    %893 = vmatpush1.msra.mxu0 %v867
    %894 = vmatprep.subr.mxu0 0.0
    %895 = vmatpush1.msra.mxu0 %v868
    %896 = vmatprep.subr.mxu0 0.0
    %897 = vmatpush1.msra.mxu0 %v869
    %898 = vmatprep.subr.mxu0 0.0
    %899 = vmatpush1.msra.mxu0 %v870
    %900 = vmatprep.subr.mxu0 0.0
    %901 = vmatpush1.msra.mxu0 %v871
    %902 = vmatprep.subr.mxu0 0.0
    %903 = vmatpush1.msra.mxu0 %v872
    %904 = vmatprep.subr.mxu0 0.0
    %905 = vmatpush1.msra.mxu0 %v873
    %906 = vmatprep.subr.mxu0 0.0
    %907 = vmatpush1.msra.mxu0 %v874
    %908 = vmatprep.subr.mxu0 0.0
    %909 = vmatpush1.msra.mxu0 %v875
    %910 = vmatprep.subr.mxu0 0.0
    %911 = vmatpush1.msra.mxu0 %v876
    %912 = vmatprep.subr.mxu0 0.0
    %913 = vmatpush1.msra.mxu0 %v877
    %914 = vmatprep.subr.mxu0 0.0
    %915 = vmatpush1.msra.mxu0 %v878
    %916 = vmatprep.subr.mxu0 0.0
    %917 = vmatpush1.msra.mxu0 %v879
    %918 = vmatprep.subr.mxu0 0.0
    %919 = vmatpush1.msra.mxu0 %v880
    %920 = vmatprep.subr.mxu0 0.0
    %921 = vmatpush1.msra.mxu0 0.0
    %922 = vmatprep.subr.mxu0 0.0
    %923 = vmatpush1.msra.mxu0 0.0
    %924 = vmatprep.subr.mxu0 0.0
    %925 = vmatpush1.msra.mxu0 0.0
    %926 = vmatprep.subr.mxu0 0.0
    %927 = vmatpush1.msra.mxu0 0.0
    %928 = vmatprep.subr.mxu0 0.0
    %929 = vmatpush1.msra.mxu0 0.0
    %930 = vmatprep.subr.mxu0 0.0
    %931 = vmatpush1.msra.mxu0 0.0
    %932 = vmatprep.subr.mxu0 0.0
    %933 = vmatpush1.msra.mxu0 0.0
    %934 = vmatprep.subr.mxu0 0.0
    %935 = vmatpush1.msra.mxu0 0.0
    %936 = vmatprep.subr.mxu0 0.0
    %937 = vmatpush1.msra.mxu0 0.0
    %938 = vmatprep.subr.mxu0 0.0
    %939 = vmatpush1.msra.mxu0 0.0
    %940 = vmatprep.subr.mxu0 0.0
    %941 = vmatpush1.msra.mxu0 0.0
    %942 = vmatprep.subr.mxu0 0.0
    %943 = vmatpush1.msra.mxu0 0.0
    %944 = vmatprep.subr.mxu0 0.0
    %945 = vmatpush1.msra.mxu0 0.0
    %946 = vmatprep.subr.mxu0 0.0
    %947 = vmatpush1.msra.mxu0 0.0
    %948 = vmatprep.subr.mxu0 0.0
    %949 = vmatpush1.msra.mxu0 0.0
    %950 = vmatprep.subr.mxu0 0.0
    %951 = vmatpush1.msra.mxu0 0.0
    %952 = vmatprep.mubr.f32.mxu0 0.0
    %953 = vmatmul.mubr.f32.gmra.mrb[0].mxu0 %v861
    %v954 = vpop.f32.mrb[0].mxu0
    %v955 = vadd.f32 %v886, %v954
    %v956 = vpop.f32.mrb[0].mxu0
    %957 = vmatprep.mubr.f32.mxu0 0.0
    %958 = vmatmul.mubr.f32.gmra.mrb[0].mxu0 %v862
    %v959 = vpop.f32.mrb[0].mxu0
    %v960 = vadd.f32 %v886, %v959
    %v961 = vpop.f32.mrb[0].mxu0
    %962 = vmatprep.mubr.f32.mxu0 0.0
    %963 = vmatmul.mubr.f32.gmra.mrb[0].mxu0 %v863
    %v964 = vpop.f32.mrb[0].mxu0
    %v965 = vadd.f32 %v886, %v964
    %v966 = vpop.f32.mrb[0].mxu0
    %967 = vmatprep.mubr.f32.mxu0 0.0
    %968 = vmatmul.mubr.f32.gmra.mrb[0].mxu0 %v864
    %v969 = vpop.f32.mrb[0].mxu0
    %v970 = vadd.f32 %v886, %v969
    %v971 = vpop.f32.mrb[0].mxu0
    %972 = vdwg.mxu0
    %v973 = vadd.f32 %v537, %v955
    %v974 = vadd.f32 %v572, %v960
    %v975 = vadd.f32 %v607, %v965
    %v976 = vadd.f32 %v642, %v970
    %v977 = vld [vmem:[%s8] sm:$0x1]
    %v978 = vld [vmem:[%s9] sm:$0x1]
    %v979 = vsel %vm213, %v973, 0.0
    %980 = vadd.xlane.f32.xlu0 %v979
    %v981 = vpop.xlane.xlu0 %980
    %v982 = vsel %vm213, %v974, 0.0
    %983 = vadd.xlane.f32.xlu0 %v982
    %v984 = vpop.xlane.xlu0 %983
    %v985 = vsel %vm213, %v975, 0.0
    %986 = vadd.xlane.f32.xlu0 %v985
    %v987 = vpop.xlane.xlu0 %986
    %v988 = vsel %vm213, %v976, 0.0
    %989 = vadd.xlane.f32.xlu0 %v988
    %v990 = vpop.xlane.xlu0 %989
    %v991 = vmul.f32 %v981, %v226
    %v992 = vmul.f32 %v984, %v226
    %v993 = vmul.f32 %v987, %v226
    %v994 = vmul.f32 %v990, %v226
    %v995 = vsub.f32 %v973, %v991
    %v996 = vsub.f32 %v974, %v992
    %v997 = vsub.f32 %v975, %v993
    %v998 = vsub.f32 %v976, %v994
    %v999 = vmul.f32 %v995, %v995
    %v1000 = vmul.f32 %v996, %v996
    %v1001 = vmul.f32 %v997, %v997
    %v1002 = vmul.f32 %v998, %v998
    %v1003 = vsel %vm213, %v999, 0.0
    %1004 = vadd.xlane.f32.xlu0 %v1003
    %v1005 = vpop.xlane.xlu0 %1004
    %v1006 = vsel %vm213, %v1000, 0.0
    %1007 = vadd.xlane.f32.xlu0 %v1006
    %v1008 = vpop.xlane.xlu0 %1007
    %v1009 = vsel %vm213, %v1001, 0.0
    %1010 = vadd.xlane.f32.xlu0 %v1009
    %v1011 = vpop.xlane.xlu0 %1010
    %v1012 = vsel %vm213, %v1002, 0.0
    %1013 = vadd.xlane.f32.xlu0 %v1012
    %v1014 = vpop.xlane.xlu0 %1013
    %v1015 = vmul.f32 %v1005, %v226
    %v1016 = vmul.f32 %v1008, %v226
    %v1017 = vmul.f32 %v1011, %v226
    %v1018 = vmul.f32 %v1014, %v226
    %v1019 = vadd.f32 %v1015, 1e-05
    %v1020 = vadd.f32 %v1016, 1e-05
    %v1021 = vadd.f32 %v1017, 1e-05
    %v1022 = vadd.f32 %v1018, 1e-05
    %v1023 = vrsqrt.pop %v1019
    %v1024 = vrsqrt.pop %v1020
    %v1025 = vrsqrt.pop %v1021
    %v1026 = vrsqrt.pop %v1022
    %v1027 = vmul.f32 %v995, %v1023
    %v1028 = vmul.f32 %v996, %v1024
    %v1029 = vmul.f32 %v997, %v1025
    %v1030 = vmul.f32 %v998, %v1026
    %v1032 = vlaneseq
    %v1033 = vshrl.u32 %v1032, 7
    %v1034 = vsub.s32 0, %v1033
    %v1035 = vrot.slane %v977, %v1034
    %v1037 = vmul.f32 %v1027, %v1035
    %v1038 = vmul.f32 %v1028, %v1035
    %v1039 = vmul.f32 %v1029, %v1035
    %v1040 = vmul.f32 %v1030, %v1035
    %v1042 = vlaneseq
    %v1043 = vshrl.u32 %v1042, 7
    %v1044 = vsub.s32 0, %v1043
    %v1045 = vrot.slane %v978, %v1044
    %v1047 = vadd.f32 %v1037, %v1045
    %v1048 = vadd.f32 %v1038, %v1045
    %v1049 = vadd.f32 %v1039, %v1045
    %v1050 = vadd.f32 %v1040, %v1045
    %v1051 = vlaneseq
    %v1052 = vshrl.u32 %v1051, 7
    %v1053 = vadd.s32 %v1052, 8
    %v1054 = vadd.s32 %v1052, 16
    %v1055 = vadd.s32 %v1052, 24
    %v1056 = vadd.s32 %v1052, 32
    %v1057 = vadd.s32 %v1052, 40
    %v1058 = vadd.s32 %v1052, 48
    %v1059 = vadd.s32 %v1052, 56
    %v1060 = vlaneseq
    %v1061 = vand.u32 %v1060, 127
    %v1062 = vmul.u32 %v1061, 2
    %vm1063 = vcmp.eq.s32.totalorder %v1052, %v1062
    %vm1064 = vcmp.eq.s32.totalorder %v1053, %v1062
    %vm1065 = vcmp.eq.s32.totalorder %v1054, %v1062
    %vm1066 = vcmp.eq.s32.totalorder %v1055, %v1062
    %vm1067 = vcmp.eq.s32.totalorder %v1056, %v1062
    %vm1068 = vcmp.eq.s32.totalorder %v1057, %v1062
    %vm1069 = vcmp.eq.s32.totalorder %v1058, %v1062
    %vm1070 = vcmp.eq.s32.totalorder %v1059, %v1062
    %v1071 = vsel %vm1063, 1, 0
    %v1072 = vsel %vm1064, 1, 0
    %v1073 = vsel %vm1065, 1, 0
    %v1074 = vsel %vm1066, 1, 0
    %v1075 = vsel %vm1067, 1, 0
    %v1076 = vsel %vm1068, 1, 0
    %v1077 = vsel %vm1069, 1, 0
    %v1078 = vsel %vm1070, 1, 0
    %v1079 = vcvt.s32.f32 %v1071
    %v1080 = vcvt.s32.f32 %v1072
    %v1081 = vcvt.s32.f32 %v1073
    %v1082 = vcvt.s32.f32 %v1074
    %v1083 = vcvt.s32.f32 %v1075
    %v1084 = vcvt.s32.f32 %v1076
    %v1085 = vcvt.s32.f32 %v1077
    %v1086 = vcvt.s32.f32 %v1078
    %v1087 = vadd.s32 %v1062, 1
    %vm1088 = vcmp.eq.s32.totalorder %v1052, %v1087
    %vm1089 = vcmp.eq.s32.totalorder %v1053, %v1087
    %vm1090 = vcmp.eq.s32.totalorder %v1054, %v1087
    %vm1091 = vcmp.eq.s32.totalorder %v1055, %v1087
    %vm1092 = vcmp.eq.s32.totalorder %v1056, %v1087
    %vm1093 = vcmp.eq.s32.totalorder %v1057, %v1087
    %vm1094 = vcmp.eq.s32.totalorder %v1058, %v1087
    %vm1095 = vcmp.eq.s32.totalorder %v1059, %v1087
    %v1096 = vsel %vm1088, 1, 0
    %v1097 = vsel %vm1089, 1, 0
    %v1098 = vsel %vm1090, 1, 0
    %v1099 = vsel %vm1091, 1, 0
    %v1100 = vsel %vm1092, 1, 0
    %v1101 = vsel %vm1093, 1, 0
    %v1102 = vsel %vm1094, 1, 0
    %v1103 = vsel %vm1095, 1, 0
    %v1104 = vcvt.s32.f32 %v1096
    %v1105 = vcvt.s32.f32 %v1097
    %v1106 = vcvt.s32.f32 %v1098
    %v1107 = vcvt.s32.f32 %v1099
    %v1108 = vcvt.s32.f32 %v1100
    %v1109 = vcvt.s32.f32 %v1101
    %v1110 = vcvt.s32.f32 %v1102
    %v1111 = vcvt.s32.f32 %v1103
    %v1113 = vsel %vm213, %v1047, 0
    %v1116 = vsel %vm213, %v1048, 0
    %v1119 = vsel %vm213, %v1049, 0
    %v1122 = vsel %vm213, %v1050, 0
    %1124 = vmatprep.subr.mxu0 0.0
    %1125 = vmatpush1.msra.mxu0 %v1079
    %1126 = vmatprep.subr.mxu0 0.0
    %1127 = vmatpush1.msra.mxu0 %v1080
    %1128 = vmatprep.subr.mxu0 0.0
    %1129 = vmatpush1.msra.mxu0 %v1081
    %1130 = vmatprep.subr.mxu0 0.0
    %1131 = vmatpush1.msra.mxu0 %v1082
    %1132 = vmatprep.subr.mxu0 0.0
    %1133 = vmatpush1.msra.mxu0 %v1083
    %1134 = vmatprep.subr.mxu0 0.0
    %1135 = vmatpush1.msra.mxu0 %v1084
    %1136 = vmatprep.subr.mxu0 0.0
    %1137 = vmatpush1.msra.mxu0 %v1085
    %1138 = vmatprep.subr.mxu0 0.0
    %1139 = vmatpush1.msra.mxu0 %v1086
    %1140 = vmatprep.subr.mxu0 0.0
    %1141 = vmatpush1.msra.mxu0 0.0
    %1142 = vmatprep.subr.mxu0 0.0
    %1143 = vmatpush1.msra.mxu0 0.0
    %1144 = vmatprep.subr.mxu0 0.0
    %1145 = vmatpush1.msra.mxu0 0.0
    %1146 = vmatprep.subr.mxu0 0.0
    %1147 = vmatpush1.msra.mxu0 0.0
    %1148 = vmatprep.subr.mxu0 0.0
    %1149 = vmatpush1.msra.mxu0 0.0
    %1150 = vmatprep.subr.mxu0 0.0
    %1151 = vmatpush1.msra.mxu0 0.0
    %1152 = vmatprep.subr.mxu0 0.0
    %1153 = vmatpush1.msra.mxu0 0.0
    %1154 = vmatprep.subr.mxu0 0.0
    %1155 = vmatpush1.msra.mxu0 0.0
    %1156 = vmatprep.subr.mxu0 0.0
    %1157 = vmatpush1.msra.mxu0 0.0
    %1158 = vmatprep.subr.mxu0 0.0
    %1159 = vmatpush1.msra.mxu0 0.0
    %1160 = vmatprep.subr.mxu0 0.0
    %1161 = vmatpush1.msra.mxu0 0.0
    %1162 = vmatprep.subr.mxu0 0.0
    %1163 = vmatpush1.msra.mxu0 0.0
    %1164 = vmatprep.subr.mxu0 0.0
    %1165 = vmatpush1.msra.mxu0 0.0
    %1166 = vmatprep.subr.mxu0 0.0
    %1167 = vmatpush1.msra.mxu0 0.0
    %1168 = vmatprep.subr.mxu0 0.0
    %1169 = vmatpush1.msra.mxu0 0.0
    %1170 = vmatprep.subr.mxu0 0.0
    %1171 = vmatpush1.msra.mxu0 0.0
    %1172 = vmatprep.subr.mxu0 0.0
    %1173 = vmatpush1.msra.mxu0 0.0
    %1174 = vmatprep.subr.mxu0 0.0
    %1175 = vmatpush1.msra.mxu0 0.0
    %1176 = vmatprep.subr.mxu0 0.0
    %1177 = vmatpush1.msra.mxu0 0.0
    %1178 = vmatprep.subr.mxu0 0.0
    %1179 = vmatpush1.msra.mxu0 0.0
    %1180 = vmatprep.subr.mxu0 0.0
    %1181 = vmatpush1.msra.mxu0 0.0
    %1182 = vmatprep.subr.mxu0 0.0
    %1183 = vmatpush1.msra.mxu0 0.0
    %1184 = vmatprep.subr.mxu0 0.0
    %1185 = vmatpush1.msra.mxu0 0.0
    %1186 = vmatprep.subr.mxu0 0.0
    %1187 = vmatpush1.msra.mxu0 0.0
    %1188 = vmatprep.mubr.f32.mxu0 0.0
    %1189 = vmatmul.mubr.f32.gmra.mrb[0].mxu0 %v1113
    %v1190 = vpop.f32.mrb[0].mxu0
    %v1191 = vadd.f32 0.0, %v1190
    %v1192 = vpop.f32.mrb[0].mxu0
    %1193 = vmatprep.mubr.f32.mxu0 0.0
    %1194 = vmatmul.mubr.f32.gmra.mrb[0].mxu0 %v1116
    %v1195 = vpop.f32.mrb[0].mxu0
    %v1196 = vadd.f32 0.0, %v1195
    %v1197 = vpop.f32.mrb[0].mxu0
    %1198 = vmatprep.mubr.f32.mxu0 0.0
    %1199 = vmatmul.mubr.f32.gmra.mrb[0].mxu0 %v1119
    %v1200 = vpop.f32.mrb[0].mxu0
    %v1201 = vadd.f32 0.0, %v1200
    %v1202 = vpop.f32.mrb[0].mxu0
    %1203 = vmatprep.mubr.f32.mxu0 0.0
    %1204 = vmatmul.mubr.f32.gmra.mrb[0].mxu0 %v1122
    %v1205 = vpop.f32.mrb[0].mxu0
    %v1206 = vadd.f32 0.0, %v1205
    %v1207 = vpop.f32.mrb[0].mxu0
    %1208 = vdwg.mxu0
    %1209 = vmatprep.subr.mxu0 0.0
    %1210 = vmatpush1.msra.mxu0 %v1104
    %1211 = vmatprep.subr.mxu0 0.0
    %1212 = vmatpush1.msra.mxu0 %v1105
    %1213 = vmatprep.subr.mxu0 0.0
    %1214 = vmatpush1.msra.mxu0 %v1106
    %1215 = vmatprep.subr.mxu0 0.0
    %1216 = vmatpush1.msra.mxu0 %v1107
    %1217 = vmatprep.subr.mxu0 0.0
    %1218 = vmatpush1.msra.mxu0 %v1108
    %1219 = vmatprep.subr.mxu0 0.0
    %1220 = vmatpush1.msra.mxu0 %v1109
    %1221 = vmatprep.subr.mxu0 0.0
    %1222 = vmatpush1.msra.mxu0 %v1110
    %1223 = vmatprep.subr.mxu0 0.0
    %1224 = vmatpush1.msra.mxu0 %v1111
    %1225 = vmatprep.subr.mxu0 0.0
    %1226 = vmatpush1.msra.mxu0 0.0
    %1227 = vmatprep.subr.mxu0 0.0
    %1228 = vmatpush1.msra.mxu0 0.0
    %1229 = vmatprep.subr.mxu0 0.0
    %1230 = vmatpush1.msra.mxu0 0.0
    %1231 = vmatprep.subr.mxu0 0.0
    %1232 = vmatpush1.msra.mxu0 0.0
    %1233 = vmatprep.subr.mxu0 0.0
    %1234 = vmatpush1.msra.mxu0 0.0
    %1235 = vmatprep.subr.mxu0 0.0
    %1236 = vmatpush1.msra.mxu0 0.0
    %1237 = vmatprep.subr.mxu0 0.0
    %1238 = vmatpush1.msra.mxu0 0.0
    %1239 = vmatprep.subr.mxu0 0.0
    %1240 = vmatpush1.msra.mxu0 0.0
    %1241 = vmatprep.subr.mxu0 0.0
    %1242 = vmatpush1.msra.mxu0 0.0
    %1243 = vmatprep.subr.mxu0 0.0
    %1244 = vmatpush1.msra.mxu0 0.0
    %1245 = vmatprep.subr.mxu0 0.0
    %1246 = vmatpush1.msra.mxu0 0.0
    %1247 = vmatprep.subr.mxu0 0.0
    %1248 = vmatpush1.msra.mxu0 0.0
    %1249 = vmatprep.subr.mxu0 0.0
    %1250 = vmatpush1.msra.mxu0 0.0
    %1251 = vmatprep.subr.mxu0 0.0
    %1252 = vmatpush1.msra.mxu0 0.0
    %1253 = vmatprep.subr.mxu0 0.0
    %1254 = vmatpush1.msra.mxu0 0.0
    %1255 = vmatprep.subr.mxu0 0.0
    %1256 = vmatpush1.msra.mxu0 0.0
    %1257 = vmatprep.subr.mxu0 0.0
    %1258 = vmatpush1.msra.mxu0 0.0
    %1259 = vmatprep.subr.mxu0 0.0
    %1260 = vmatpush1.msra.mxu0 0.0
    %1261 = vmatprep.subr.mxu0 0.0
    %1262 = vmatpush1.msra.mxu0 0.0
    %1263 = vmatprep.subr.mxu0 0.0
    %1264 = vmatpush1.msra.mxu0 0.0
    %1265 = vmatprep.subr.mxu0 0.0
    %1266 = vmatpush1.msra.mxu0 0.0
    %1267 = vmatprep.subr.mxu0 0.0
    %1268 = vmatpush1.msra.mxu0 0.0
    %1269 = vmatprep.subr.mxu0 0.0
    %1270 = vmatpush1.msra.mxu0 0.0
    %1271 = vmatprep.subr.mxu0 0.0
    %1272 = vmatpush1.msra.mxu0 0.0
    %1273 = vmatprep.mubr.f32.mxu0 0.0
    %1274 = vmatmul.mubr.f32.gmra.mrb[0].mxu0 %v1113
    %v1275 = vpop.f32.mrb[0].mxu0
    %v1276 = vadd.f32 0.0, %v1275
    %v1277 = vpop.f32.mrb[0].mxu0
    %1278 = vmatprep.mubr.f32.mxu0 0.0
    %1279 = vmatmul.mubr.f32.gmra.mrb[0].mxu0 %v1116
    %v1280 = vpop.f32.mrb[0].mxu0
    %v1281 = vadd.f32 0.0, %v1280
    %v1282 = vpop.f32.mrb[0].mxu0
    %1283 = vmatprep.mubr.f32.mxu0 0.0
    %1284 = vmatmul.mubr.f32.gmra.mrb[0].mxu0 %v1119
    %v1285 = vpop.f32.mrb[0].mxu0
    %v1286 = vadd.f32 0.0, %v1285
    %v1287 = vpop.f32.mrb[0].mxu0
    %1288 = vmatprep.mubr.f32.mxu0 0.0
    %1289 = vmatmul.mubr.f32.gmra.mrb[0].mxu0 %v1122
    %v1290 = vpop.f32.mrb[0].mxu0
    %v1291 = vadd.f32 0.0, %v1290
    %v1292 = vpop.f32.mrb[0].mxu0
    %1293 = vdwg.mxu0
    %v1294 = vmax.f32 %v1191, %v1276
    %v1295 = vmax.f32 %v1196, %v1281
    %v1296 = vmax.f32 %v1201, %v1286
    %v1297 = vmax.f32 %v1206, %v1291
    %1298 = vst.msk [vmem:[%s18] sm:$0xff] %vm117, %v1294
    %1299 = vst.msk [vmem:[%s18 + $0x8] sm:$0xff] %vm117, %v1295
    %1300 = vst.msk [vmem:[%s18 + $0x10] sm:$0xff] %vm117, %v1296
    %1301 = vst.msk [vmem:[%s18 + $0x18] sm:$0xff] %vm117, %v1297
    // Predicated region
    $region90: #{new_model_forward.5} parent=1 // pred_check
      _
    $region91: #{new_model_forward.5} parent=1 // pred_check_branch
      %1303 = sbr.rel (0) target = $region93
    $region92: #{new_model_forward.5} parent=1 // pred_region
      _
    $region93: #{new_model_forward.5} parent=1 // pred_fallthru
      _
    // Predicated region
    $region94: #{new_model_forward.5} parent=1 // pred_check
      _
    $region95: #{new_model_forward.5} parent=1 // pred_check_branch
      %1305 = sbr.rel (0) target = $region97
    $region96: #{new_model_forward.5} parent=1 // pred_region
      _
    $region97: #{new_model_forward.5} parent=1 // pred_fallthru
      _
    %1306 = vsyncpa [#allocation3], 1
    %1307 = vsyncpa [#allocation5], 1
    %1308 = vsyncpa [#allocation8], 1

// kernel: new_model_forward.7
$region0: #{new_model_forward.7}
  #allocation0 [shape = 'u32[]', space=smem, size = 0x4, offset = 0x4, fixed_abs, tag = 'smem constant byte address 0x4 - core index']
  #allocation1 [shape = 'u32[144,128]{1,0:T(1,128)}', space=vmem, size = 0x12000, scoped, tag = 'internal scratch']
  #allocation2 [shape = 'f32[1,1]{1,0:T(1,128)S(1)}', space=vmem, size = 0x200, scoped, tag = 'scoped memory for new_model_forward.7']
  %s0 = inlined_call_operand.vmem [shape: f32[8,32], index: 0, kind: input, shape index: {}]
  %s1 = inlined_call_operand.vmem [shape: f32[1,32], index: 1, kind: input, shape index: {}]
  %s2 = inlined_call_operand.vmem [shape: f32[1,32], index: 2, kind: input, shape index: {}]
  %s3 = inlined_call_operand.vmem [shape: f32[32,32], index: 3, kind: input, shape index: {}]
  %s4 = inlined_call_operand.vmem [shape: f32[1,32], index: 4, kind: input, shape index: {}]
  %s5 = inlined_call_operand.vmem [shape: f32[32,32], index: 5, kind: input, shape index: {}]
  %s6 = inlined_call_operand.vmem [shape: f32[1,32], index: 6, kind: input, shape index: {}]
  %s7 = inlined_call_operand.vmem [shape: f32[32,1], index: 7, kind: input, shape index: {}]
  %s8 = inlined_call_operand.<no memory space> [shape: f32[1,1], index: 8, kind: input, shape index: {}]
  %s9 = inlined_call_operand.vmem [shape: f32[8,1], index: 9, kind: output, shape index: {}]
  %s10 = sld [smem:[#allocation0]]
  $region46: #{new_model_forward.7} parent=0
    _
  %s12 = ssub.s32 1, %s10
  %s13 = scalar_select 0, %s12, %s10
  %v14 = vstv %s8
  %15 = vst [vmem:[#allocation2] sm:$0x1] %v14
  // Predicated region
  $region2: #{new_model_forward.7} parent=0 // pred_check
    _
  $region3: #{new_model_forward.7} parent=0 // pred_check_branch
    %17 = sbr.rel (0) target = $region5
  $region4: #{new_model_forward.7} parent=0 // pred_region
    _
  $region5: #{new_model_forward.7} parent=0 // pred_fallthru
    _
  // Predicated region
  $region6: #{new_model_forward.7} parent=0 // pred_check
    _
  $region7: #{new_model_forward.7} parent=0 // pred_check_branch
    %19 = sbr.rel (0) target = $region9
  $region8: #{new_model_forward.7} parent=0 // pred_region
    _
  $region9: #{new_model_forward.7} parent=0 // pred_fallthru
    _
  // Predicated region
  $region10: #{new_model_forward.7} parent=0 // pred_check
    _
  $region11: #{new_model_forward.7} parent=0 // pred_check_branch
    %21 = sbr.rel (0) target = $region13
  $region12: #{new_model_forward.7} parent=0 // pred_region
    _
  $region13: #{new_model_forward.7} parent=0 // pred_fallthru
    _
  // Predicated region
  $region14: #{new_model_forward.7} parent=0 // pred_check
    _
  $region15: #{new_model_forward.7} parent=0 // pred_check_branch
    %23 = sbr.rel (0) target = $region17
  $region16: #{new_model_forward.7} parent=0 // pred_region
    _
  $region17: #{new_model_forward.7} parent=0 // pred_fallthru
    _
  // Predicated region
  $region18: #{new_model_forward.7} parent=0 // pred_check
    _
  $region19: #{new_model_forward.7} parent=0 // pred_check_branch
    %25 = sbr.rel (0) target = $region21
  $region20: #{new_model_forward.7} parent=0 // pred_region
    _
  $region21: #{new_model_forward.7} parent=0 // pred_fallthru
    _
  // Predicated region
  $region22: #{new_model_forward.7} parent=0 // pred_check
    _
  $region23: #{new_model_forward.7} parent=0 // pred_check_branch
    %27 = sbr.rel (0) target = $region25
  $region24: #{new_model_forward.7} parent=0 // pred_region
    _
  $region25: #{new_model_forward.7} parent=0 // pred_fallthru
    _
  // Predicated region
  $region26: #{new_model_forward.7} parent=0 // pred_check
    _
  $region27: #{new_model_forward.7} parent=0 // pred_check_branch
    %29 = sbr.rel (0) target = $region29
  $region28: #{new_model_forward.7} parent=0 // pred_region
    _
  $region29: #{new_model_forward.7} parent=0 // pred_fallthru
    _
  // Predicated region
  $region30: #{new_model_forward.7} parent=0 // pred_check
    _
  $region31: #{new_model_forward.7} parent=0 // pred_check_branch
    %31 = sbr.rel (0) target = $region33
  $region32: #{new_model_forward.7} parent=0 // pred_region
    _
  $region33: #{new_model_forward.7} parent=0 // pred_fallthru
    _
  // Predicated region
  $region34: #{new_model_forward.7} parent=0 // pred_check
    _
  $region35: #{new_model_forward.7} parent=0 // pred_check_branch
    %33 = sbr.rel (0) target = $region37
  $region36: #{new_model_forward.7} parent=0 // pred_region
    _
  $region37: #{new_model_forward.7} parent=0 // pred_fallthru
    _
  %v34 = vld [vmem:[%s0] sm:$0xff]
  %v35 = vld [vmem:[%s1] sm:$0x1]
  %v36 = vld [vmem:[%s2] sm:$0x1]
  %vm37 = vcmask 261120
  %v38 = vsel %vm37, %v34, 0.0
  %39 = vadd.xlane.f32.xlu0 %v38
  %v40 = vpop.xlane.xlu0 %39
  %v41 = vrcp.pop 32.0
  %v42 = vmul.f32 %v40, %v41
  %v43 = vsub.f32 %v34, %v42
  %v44 = vmul.f32 %v43, %v43
  %v45 = vsel %vm37, %v44, 0.0
  %46 = vadd.xlane.f32.xlu0 %v45
  %v47 = vpop.xlane.xlu0 %46
  %v48 = vmul.f32 %v47, %v41
  %v49 = vadd.f32 %v48, 1e-05
  %v50 = vrsqrt.pop %v49
  %v51 = vmul.f32 %v43, %v50
  %v53 = vlaneseq
  %v54 = vshrl.u32 %v53, 7
  %v55 = vsub.s32 0, %v54
  %v56 = vrot.slane %v35, %v55
  %v58 = vmul.f32 %v51, %v56
  %v60 = vlaneseq
  %v61 = vshrl.u32 %v60, 7
  %v62 = vsub.s32 0, %v61
  %v63 = vrot.slane %v36, %v62
  %v65 = vadd.f32 %v58, %v63
  %v66 = vld [vmem:[%s3] sm:$0xff]
  %v67 = vld [vmem:[%s3 + $0x8] sm:$0xff]
  %v68 = vld [vmem:[%s3 + $0x10] sm:$0xff]
  %v69 = vld [vmem:[%s3 + $0x18] sm:$0xff]
  %v70 = vld [vmem:[%s4] sm:$0x1]
  %v72 = vlaneseq
  %v73 = vshrl.u32 %v72, 7
  %v74 = vsub.s32 0, %v73
  %v75 = vrot.slane %v70, %v74
  %v78 = vsel %vm37, %v65, 0
  %80 = vmatprep.subr.mxu0 0.0
  %81 = vmatpush1.msra.mxu0 %v66
  %82 = vmatprep.subr.mxu0 0.0
  %83 = vmatpush1.msra.mxu0 %v67
  %84 = vmatprep.subr.mxu0 0.0
  %85 = vmatpush1.msra.mxu0 %v68
  %86 = vmatprep.subr.mxu0 0.0
  %87 = vmatpush1.msra.mxu0 %v69
  %88 = vmatprep.subr.mxu0 0.0
  %89 = vmatpush1.msra.mxu0 0.0
  %90 = vmatprep.subr.mxu0 0.0
  %91 = vmatpush1.msra.mxu0 0.0
  %92 = vmatprep.subr.mxu0 0.0
  %93 = vmatpush1.msra.mxu0 0.0
  %94 = vmatprep.subr.mxu0 0.0
  %95 = vmatpush1.msra.mxu0 0.0
  %96 = vmatprep.subr.mxu0 0.0
  %97 = vmatpush1.msra.mxu0 0.0
  %98 = vmatprep.subr.mxu0 0.0
  %99 = vmatpush1.msra.mxu0 0.0
  %100 = vmatprep.subr.mxu0 0.0
  %101 = vmatpush1.msra.mxu0 0.0
  %102 = vmatprep.subr.mxu0 0.0
  %103 = vmatpush1.msra.mxu0 0.0
  %104 = vmatprep.subr.mxu0 0.0
  %105 = vmatpush1.msra.mxu0 0.0
  %106 = vmatprep.subr.mxu0 0.0
  %107 = vmatpush1.msra.mxu0 0.0
  %108 = vmatprep.subr.mxu0 0.0
  %109 = vmatpush1.msra.mxu0 0.0
  %110 = vmatprep.subr.mxu0 0.0
  %111 = vmatpush1.msra.mxu0 0.0
  %112 = vmatprep.subr.mxu0 0.0
  %113 = vmatpush1.msra.mxu0 0.0
  %114 = vmatprep.subr.mxu0 0.0
  %115 = vmatpush1.msra.mxu0 0.0
  %116 = vmatprep.subr.mxu0 0.0
  %117 = vmatpush1.msra.mxu0 0.0
  %118 = vmatprep.subr.mxu0 0.0
  %119 = vmatpush1.msra.mxu0 0.0
  %120 = vmatprep.subr.mxu0 0.0
  %121 = vmatpush1.msra.mxu0 0.0
  %122 = vmatprep.subr.mxu0 0.0
  %123 = vmatpush1.msra.mxu0 0.0
  %124 = vmatprep.subr.mxu0 0.0
  %125 = vmatpush1.msra.mxu0 0.0
  %126 = vmatprep.subr.mxu0 0.0
  %127 = vmatpush1.msra.mxu0 0.0
  %128 = vmatprep.subr.mxu0 0.0
  %129 = vmatpush1.msra.mxu0 0.0
  %130 = vmatprep.subr.mxu0 0.0
  %131 = vmatpush1.msra.mxu0 0.0
  %132 = vmatprep.subr.mxu0 0.0
  %133 = vmatpush1.msra.mxu0 0.0
  %134 = vmatprep.subr.mxu0 0.0
  %135 = vmatpush1.msra.mxu0 0.0
  %136 = vmatprep.subr.mxu0 0.0
  %137 = vmatpush1.msra.mxu0 0.0
  %138 = vmatprep.subr.mxu0 0.0
  %139 = vmatpush1.msra.mxu0 0.0
  %140 = vmatprep.subr.mxu0 0.0
  %141 = vmatpush1.msra.mxu0 0.0
  %142 = vmatprep.subr.mxu0 0.0
  %143 = vmatpush1.msra.mxu0 0.0
  %144 = vmatprep.mubr.f32.mxu0 0.0
  %145 = vmatmul.mubr.f32.gmra.mrb[0].mxu0 %v78
  %v146 = vpop.f32.mrb[0].mxu0
  %v147 = vadd.f32 %v75, %v146
  %v148 = vpop.f32.mrb[0].mxu0
  %149 = vdwg.mxu0
  %v150 = vmul.f32 %v147, %v147
  %v151 = vmul.f32 %v147, %v150
  %v152 = vmul.f32 %v151, 0.044715
  %v153 = vadd.f32 %v147, %v152
  %v154 = vmul.f32 %v153, 0.7978846
  %v155 = vtanh.pop %v154
  %v156 = vadd.f32 %v155, 1.0
  %v157 = vmul.f32 %v156, 0.5
  %v158 = vmul.f32 %v147, %v157
  %v159 = vld [vmem:[%s5] sm:$0xff]
  %v160 = vld [vmem:[%s5 + $0x8] sm:$0xff]
  %v161 = vld [vmem:[%s5 + $0x10] sm:$0xff]
  %v162 = vld [vmem:[%s5 + $0x18] sm:$0xff]
  %v163 = vld [vmem:[%s6] sm:$0x1]
  %v165 = vlaneseq
  %v166 = vshrl.u32 %v165, 7
  %v167 = vsub.s32 0, %v166
  %v168 = vrot.slane %v163, %v167
  %v171 = vsel %vm37, %v158, 0
  %173 = vmatprep.subr.mxu0 0.0
  %174 = vmatpush1.msra.mxu0 %v159
  %175 = vmatprep.subr.mxu0 0.0
  %176 = vmatpush1.msra.mxu0 %v160
  %177 = vmatprep.subr.mxu0 0.0
  %178 = vmatpush1.msra.mxu0 %v161
  %179 = vmatprep.subr.mxu0 0.0
  %180 = vmatpush1.msra.mxu0 %v162
  %181 = vmatprep.subr.mxu0 0.0
  %182 = vmatpush1.msra.mxu0 0.0
  %183 = vmatprep.subr.mxu0 0.0
  %184 = vmatpush1.msra.mxu0 0.0
  %185 = vmatprep.subr.mxu0 0.0
  %186 = vmatpush1.msra.mxu0 0.0
  %187 = vmatprep.subr.mxu0 0.0
  %188 = vmatpush1.msra.mxu0 0.0
  %189 = vmatprep.subr.mxu0 0.0
  %190 = vmatpush1.msra.mxu0 0.0
  %191 = vmatprep.subr.mxu0 0.0
  %192 = vmatpush1.msra.mxu0 0.0
  %193 = vmatprep.subr.mxu0 0.0
  %194 = vmatpush1.msra.mxu0 0.0
  %195 = vmatprep.subr.mxu0 0.0
  %196 = vmatpush1.msra.mxu0 0.0
  %197 = vmatprep.subr.mxu0 0.0
  %198 = vmatpush1.msra.mxu0 0.0
  %199 = vmatprep.subr.mxu0 0.0
  %200 = vmatpush1.msra.mxu0 0.0
  %201 = vmatprep.subr.mxu0 0.0
  %202 = vmatpush1.msra.mxu0 0.0
  %203 = vmatprep.subr.mxu0 0.0
  %204 = vmatpush1.msra.mxu0 0.0
  %205 = vmatprep.subr.mxu0 0.0
  %206 = vmatpush1.msra.mxu0 0.0
  %207 = vmatprep.subr.mxu0 0.0
  %208 = vmatpush1.msra.mxu0 0.0
  %209 = vmatprep.subr.mxu0 0.0
  %210 = vmatpush1.msra.mxu0 0.0
  %211 = vmatprep.subr.mxu0 0.0
  %212 = vmatpush1.msra.mxu0 0.0
  %213 = vmatprep.subr.mxu0 0.0
  %214 = vmatpush1.msra.mxu0 0.0
  %215 = vmatprep.subr.mxu0 0.0
  %216 = vmatpush1.msra.mxu0 0.0
  %217 = vmatprep.subr.mxu0 0.0
  %218 = vmatpush1.msra.mxu0 0.0
  %219 = vmatprep.subr.mxu0 0.0
  %220 = vmatpush1.msra.mxu0 0.0
  %221 = vmatprep.subr.mxu0 0.0
  %222 = vmatpush1.msra.mxu0 0.0
  %223 = vmatprep.subr.mxu0 0.0
  %224 = vmatpush1.msra.mxu0 0.0
  %225 = vmatprep.subr.mxu0 0.0
  %226 = vmatpush1.msra.mxu0 0.0
  %227 = vmatprep.subr.mxu0 0.0
  %228 = vmatpush1.msra.mxu0 0.0
  %229 = vmatprep.subr.mxu0 0.0
  %230 = vmatpush1.msra.mxu0 0.0
  %231 = vmatprep.subr.mxu0 0.0
  %232 = vmatpush1.msra.mxu0 0.0
  %233 = vmatprep.subr.mxu0 0.0
  %234 = vmatpush1.msra.mxu0 0.0
  %235 = vmatprep.subr.mxu0 0.0
  %236 = vmatpush1.msra.mxu0 0.0
  %237 = vmatprep.mubr.f32.mxu0 0.0
  %238 = vmatmul.mubr.f32.gmra.mrb[0].mxu0 %v171
  %v239 = vpop.f32.mrb[0].mxu0
  %v240 = vadd.f32 %v168, %v239
  %v241 = vpop.f32.mrb[0].mxu0
  %242 = vdwg.mxu0
  %v243 = vmul.f32 %v240, %v240
  %v244 = vmul.f32 %v240, %v243
  %v245 = vmul.f32 %v244, 0.044715
  %v246 = vadd.f32 %v240, %v245
  %v247 = vmul.f32 %v246, 0.7978846
  %v248 = vtanh.pop %v247
  %v249 = vadd.f32 %v248, 1.0
  %v250 = vmul.f32 %v249, 0.5
  %v251 = vmul.f32 %v240, %v250
  %v252 = vld [vmem:[%s7] sm:$0xff]
  %v253 = vld [vmem:[%s7 + $0x8] sm:$0xff]
  %v254 = vld [vmem:[%s7 + $0x10] sm:$0xff]
  %v255 = vld [vmem:[%s7 + $0x18] sm:$0xff]
  %v256 = vld [vmem:[#allocation2] sm:$0x1]
  %v258 = vlaneseq
  %v259 = vshrl.u32 %v258, 7
  %v260 = vsub.s32 0, %v259
  %v261 = vrot.slane %v256, %v260
  %v264 = vsel %vm37, %v251, 0
  %266 = vmatprep.subr.mxu0 0.0
  %267 = vmatpush1.msra.mxu0 %v252
  %268 = vmatprep.subr.mxu0 0.0
  %269 = vmatpush1.msra.mxu0 %v253
  %270 = vmatprep.subr.mxu0 0.0
  %271 = vmatpush1.msra.mxu0 %v254
  %272 = vmatprep.subr.mxu0 0.0
  %273 = vmatpush1.msra.mxu0 %v255
  %274 = vmatprep.subr.mxu0 0.0
  %275 = vmatpush1.msra.mxu0 0.0
  %276 = vmatprep.subr.mxu0 0.0
  %277 = vmatpush1.msra.mxu0 0.0
  %278 = vmatprep.subr.mxu0 0.0
  %279 = vmatpush1.msra.mxu0 0.0
  %280 = vmatprep.subr.mxu0 0.0
  %281 = vmatpush1.msra.mxu0 0.0
  %282 = vmatprep.subr.mxu0 0.0
  %283 = vmatpush1.msra.mxu0 0.0
  %284 = vmatprep.subr.mxu0 0.0
  %285 = vmatpush1.msra.mxu0 0.0
  %286 = vmatprep.subr.mxu0 0.0
  %287 = vmatpush1.msra.mxu0 0.0
  %288 = vmatprep.subr.mxu0 0.0
  %289 = vmatpush1.msra.mxu0 0.0
  %290 = vmatprep.subr.mxu0 0.0
  %291 = vmatpush1.msra.mxu0 0.0
  %292 = vmatprep.subr.mxu0 0.0
  %293 = vmatpush1.msra.mxu0 0.0
  %294 = vmatprep.subr.mxu0 0.0
  %295 = vmatpush1.msra.mxu0 0.0
  %296 = vmatprep.subr.mxu0 0.0
  %297 = vmatpush1.msra.mxu0 0.0
  %298 = vmatprep.subr.mxu0 0.0
  %299 = vmatpush1.msra.mxu0 0.0
  %300 = vmatprep.subr.mxu0 0.0
  %301 = vmatpush1.msra.mxu0 0.0
  %302 = vmatprep.subr.mxu0 0.0
  %303 = vmatpush1.msra.mxu0 0.0
  %304 = vmatprep.subr.mxu0 0.0
  %305 = vmatpush1.msra.mxu0 0.0
  %306 = vmatprep.subr.mxu0 0.0
  %307 = vmatpush1.msra.mxu0 0.0
  %308 = vmatprep.subr.mxu0 0.0
  %309 = vmatpush1.msra.mxu0 0.0
  %310 = vmatprep.subr.mxu0 0.0
  %311 = vmatpush1.msra.mxu0 0.0
  %312 = vmatprep.subr.mxu0 0.0
  %313 = vmatpush1.msra.mxu0 0.0
  %314 = vmatprep.subr.mxu0 0.0
  %315 = vmatpush1.msra.mxu0 0.0
  %316 = vmatprep.subr.mxu0 0.0
  %317 = vmatpush1.msra.mxu0 0.0
  %318 = vmatprep.subr.mxu0 0.0
  %319 = vmatpush1.msra.mxu0 0.0
  %320 = vmatprep.subr.mxu0 0.0
  %321 = vmatpush1.msra.mxu0 0.0
  %322 = vmatprep.subr.mxu0 0.0
  %323 = vmatpush1.msra.mxu0 0.0
  %324 = vmatprep.subr.mxu0 0.0
  %325 = vmatpush1.msra.mxu0 0.0
  %326 = vmatprep.subr.mxu0 0.0
  %327 = vmatpush1.msra.mxu0 0.0
  %328 = vmatprep.subr.mxu0 0.0
  %329 = vmatpush1.msra.mxu0 0.0
  %330 = vmatprep.mubr.f32.mxu0 0.0
  %331 = vmatmul.mubr.f32.gmra.mrb[0].mxu0 %v264
  %v332 = vpop.f32.mrb[0].mxu0
  %v333 = vadd.f32 %v261, %v332
  %v334 = vpop.f32.mrb[0].mxu0
  %335 = vdwg.mxu0
  %vm336 = vcmask 7168
  %337 = vst.msk [vmem:[%s9] sm:$0xff] %vm336, %v333
  // Predicated region
  $region38: #{new_model_forward.7} parent=0 // pred_check
    _
  $region39: #{new_model_forward.7} parent=0 // pred_check_branch
    %339 = sbr.rel (0) target = $region41
  $region40: #{new_model_forward.7} parent=0 // pred_region
    _
  $region41: #{new_model_forward.7} parent=0 // pred_fallthru
    _
  // Predicated region
  $region42: #{new_model_forward.7} parent=0 // pred_check
    _
  $region43: #{new_model_forward.7} parent=0 // pred_check_branch
    %341 = sbr.rel (0) target = $region45
  $region44: #{new_model_forward.7} parent=0 // pred_region
    _
  $region45: #{new_model_forward.7} parent=0 // pred_fallthru
    _

// kernel: new_model_forward.6
$region0: #{new_model_forward.6}
  #allocation0 [shape = 'u32[]', space=smem, size = 0x4, offset = 0x4, fixed_abs, tag = 'smem constant byte address 0x4 - core index']
  #allocation1 [shape = 'u32[144,128]{1,0:T(1,128)}', space=vmem, size = 0x12000, scoped, tag = 'internal scratch']
  #allocation2 [shape = 'f32[1,1]{1,0:T(1,128)S(6)}', space=smem, size = 0x200, scoped, tag = 'scoped memory for new_model_forward.6']
  %s0 = inlined_call_operand.vmem [shape: f32[9,8,32], index: 0, kind: input, shape index: {}]
  %s1 = inlined_call_operand.vmem [shape: f32[9,8,1], index: 1, kind: input, shape index: {}]
  %s2 = inlined_call_operand.vmem [shape: f32[1,32], index: 2, kind: input, shape index: {}]
  %s3 = inlined_call_operand.vmem [shape: f32[1,32], index: 3, kind: input, shape index: {}]
  %s4 = inlined_call_operand.vmem [shape: f32[1,32], index: 4, kind: input, shape index: {}]
  %s5 = inlined_call_operand.vmem [shape: f32[1,32], index: 5, kind: input, shape index: {}]
  %s6 = inlined_call_operand.vmem [shape: f32[1,32], index: 6, kind: input, shape index: {}]
  %s7 = inlined_call_operand.vmem [shape: f32[1,32], index: 7, kind: input, shape index: {}]
  %s8 = inlined_call_operand.vmem [shape: f32[32,16], index: 8, kind: input, shape index: {}]
  %s9 = inlined_call_operand.vmem [shape: f32[1,16], index: 9, kind: input, shape index: {}]
  %s10 = inlined_call_operand.vmem [shape: f32[16,32], index: 10, kind: input, shape index: {}]
  %s11 = inlined_call_operand.vmem [shape: f32[1,32], index: 11, kind: input, shape index: {}]
  %s12 = inlined_call_operand.vmem [shape: f32[1,32], index: 12, kind: input, shape index: {}]
  %s13 = inlined_call_operand.vmem [shape: f32[4,9], index: 13, kind: input, shape index: {}]
  %s14 = inlined_call_operand.vmem [shape: f32[4,1], index: 14, kind: input, shape index: {}]
  %s15 = inlined_call_operand.vmem [shape: f32[9,4], index: 15, kind: input, shape index: {}]
  %s16 = inlined_call_operand.vmem [shape: f32[9,1], index: 16, kind: input, shape index: {}]
  %s17 = inlined_call_operand.<no memory space> [shape: f32[1,1], index: 17, kind: input, shape index: {}]
  %s18 = inlined_call_operand.vmem [shape: f32[8,32], index: 18, kind: output, shape index: {0}]
  %s19 = inlined_call_operand.hbm [shape: f32[8,8,32], index: 19, kind: output, shape index: {1}]
  %20 = xla_tuple %s18, %s19
  %s21 = sld [smem:[#allocation0]]
  $region106: #{new_model_forward.6} parent=0
    _
  %s23 = ssub.s32 1, %s21
  %s24 = scalar_select 0, %s23, %s21
  %25 = sst [smem:[#allocation2]] %s17
  $region1: #{new_model_forward.6} parent=0
    #allocation3 [shape = 'u8[2048]{0}', space=smem, size = 0x800, scoped, tag = 'input window, operand 13, single buffered']
    #allocation4 [shape = 's32[1]{0}', space=sflag, size = 0x4, scoped, tag = 'scoped memory for new_model_forward.6']
    #allocation5 [shape = 's32[1]{0}', space=sflag, size = 0x4, scoped, tag = 'scoped memory for new_model_forward.6']
    #allocation6 [shape = 'u8[2048]{0}', space=smem, size = 0x800, scoped, tag = 'input window, operand 14, single buffered']
    #allocation7 [shape = 's32[1]{0}', space=sflag, size = 0x4, scoped, tag = 'scoped memory for new_model_forward.6']
    #allocation8 [shape = 'u8[8192]{0}', space=smem, size = 0x2000, scoped, tag = 'input window, operand 15, single buffered']
    #allocation9 [shape = 'u8[8192]{0}', space=smem, size = 0x2000, scoped, tag = 'input window, operand 16, single buffered']
    #allocation10 [shape = 's32[1]{0}', space=sflag, size = 0x4, scoped, tag = 'scoped memory for new_model_forward.6']
    #allocation11 [shape = 'u8[32768]{0}', space=vmem, size = 0x8000, scoped, tag = 'output window, operand 1, single buffered']
    %26 = vsyncpa [#allocation5], 0
    %27 = vsyncpa [#allocation7], 0
    %28 = vsyncpa [#allocation10], 0
    %29 = vsyncpa [#allocation4], 0
    // Predicated region
    $region2: #{new_model_forward.6} parent=1 // pred_check
      _
    $region3: #{new_model_forward.6} parent=1 // pred_check_branch
      %31 = sbr.rel (0) target = $region5
    $region4: #{new_model_forward.6} parent=1 // pred_region
      _
    $region5: #{new_model_forward.6} parent=1 // pred_fallthru
      _
    // Predicated region
    $region6: #{new_model_forward.6} parent=1 // pred_check
      _
    $region7: #{new_model_forward.6} parent=1 // pred_check_branch
      %33 = sbr.rel (0) target = $region9
    $region8: #{new_model_forward.6} parent=1 // pred_region
      _
    $region9: #{new_model_forward.6} parent=1 // pred_fallthru
      _
    // Predicated region
    $region10: #{new_model_forward.6} parent=1 // pred_check
      _
    $region11: #{new_model_forward.6} parent=1 // pred_check_branch
      %35 = sbr.rel (0) target = $region13
    $region12: #{new_model_forward.6} parent=1 // pred_region
      _
    $region13: #{new_model_forward.6} parent=1 // pred_fallthru
      _
    // Predicated region
    $region14: #{new_model_forward.6} parent=1 // pred_check
      _
    $region15: #{new_model_forward.6} parent=1 // pred_check_branch
      %37 = sbr.rel (0) target = $region17
    $region16: #{new_model_forward.6} parent=1 // pred_region
      _
    $region17: #{new_model_forward.6} parent=1 // pred_fallthru
      _
    // Predicated region
    $region18: #{new_model_forward.6} parent=1 // pred_check
      _
    $region19: #{new_model_forward.6} parent=1 // pred_check_branch
      %39 = sbr.rel (0) target = $region21
    $region20: #{new_model_forward.6} parent=1 // pred_region
      _
    $region21: #{new_model_forward.6} parent=1 // pred_fallthru
      _
    // Predicated region
    $region22: #{new_model_forward.6} parent=1 // pred_check
      _
    $region23: #{new_model_forward.6} parent=1 // pred_check_branch
      %41 = sbr.rel (0) target = $region25
    $region24: #{new_model_forward.6} parent=1 // pred_region
      _
    $region25: #{new_model_forward.6} parent=1 // pred_fallthru
      _
    // Predicated region
    $region26: #{new_model_forward.6} parent=1 // pred_check
      _
    $region27: #{new_model_forward.6} parent=1 // pred_check_branch
      %43 = sbr.rel (0) target = $region29
    $region28: #{new_model_forward.6} parent=1 // pred_region
      _
    $region29: #{new_model_forward.6} parent=1 // pred_fallthru
      _
    // Predicated region
    $region30: #{new_model_forward.6} parent=1 // pred_check
      _
    $region31: #{new_model_forward.6} parent=1 // pred_check_branch
      %45 = sbr.rel (0) target = $region33
    $region32: #{new_model_forward.6} parent=1 // pred_region
      _
    $region33: #{new_model_forward.6} parent=1 // pred_fallthru
      _
    // Predicated region
    $region34: #{new_model_forward.6} parent=1 // pred_check
      _
    $region35: #{new_model_forward.6} parent=1 // pred_check_branch
      %47 = sbr.rel (0) target = $region37
    $region36: #{new_model_forward.6} parent=1 // pred_region
      _
    $region37: #{new_model_forward.6} parent=1 // pred_fallthru
      _
    // Predicated region
    $region38: #{new_model_forward.6} parent=1 // pred_check
      _
    $region39: #{new_model_forward.6} parent=1 // pred_check_branch
      %49 = sbr.rel (0) target = $region41
    $region40: #{new_model_forward.6} parent=1 // pred_region
      _
    $region41: #{new_model_forward.6} parent=1 // pred_fallthru
      _
    // Predicated region
    $region42: #{new_model_forward.6} parent=1 // pred_check
      _
    $region43: #{new_model_forward.6} parent=1 // pred_check_branch
      %51 = sbr.rel (0) target = $region45
    $region44: #{new_model_forward.6} parent=1 // pred_region
      _
    $region45: #{new_model_forward.6} parent=1 // pred_fallthru
      _
    // Predicated region
    $region46: #{new_model_forward.6} parent=1 // pred_check
      _
    $region47: #{new_model_forward.6} parent=1 // pred_check_branch
      %53 = sbr.rel (0) target = $region49
    $region48: #{new_model_forward.6} parent=1 // pred_region
      _
    $region49: #{new_model_forward.6} parent=1 // pred_fallthru
      _
    // Predicated region
    $region50: #{new_model_forward.6} parent=1 // pred_check
      _
    $region51: #{new_model_forward.6} parent=1 // pred_check_branch
      %55 = sbr.rel (0) target = $region53
    $region52: #{new_model_forward.6} parent=1 // pred_region
      _
    $region53: #{new_model_forward.6} parent=1 // pred_fallthru
      _
    // Predicated region
    $region54: #{new_model_forward.6} parent=1 // pred_check
      _
    $region55: #{new_model_forward.6} parent=1 // pred_check_branch
      %57 = sbr.rel (0) target = $region57
    $region56: #{new_model_forward.6} parent=1 // pred_region
      %s59 = ssub.s32 64, 64
      %60 = vsyncadd [#allocation5], %s59
      %s62 = sshll.u32 %s13, 4
      %s63 = int_to_ptr.vmem [resolvable:$true] %s62
      %65 = dma.vmem_to_smem %s63, 64, [#allocation3], [#allocation5]
    $region57: #{new_model_forward.6} parent=1 // pred_fallthru
      _
    // Predicated region
    $region58: #{new_model_forward.6} parent=1 // pred_check
      _
    $region59: #{new_model_forward.6} parent=1 // pred_check_branch
      %67 = sbr.rel (0) target = $region61
    $region60: #{new_model_forward.6} parent=1 // pred_region
      %s69 = ssub.s32 64, 64
      %70 = vsyncadd [#allocation7], %s69
      %s72 = sshll.u32 %s14, 4
      %s73 = int_to_ptr.vmem [resolvable:$true] %s72
      %75 = dma.vmem_to_smem %s73, 64, [#allocation6], [#allocation7]
    $region61: #{new_model_forward.6} parent=1 // pred_fallthru
      _
    // Predicated region
    $region62: #{new_model_forward.6} parent=1 // pred_check
      _
    $region63: #{new_model_forward.6} parent=1 // pred_check_branch
      %77 = sbr.rel (0) target = $region65
    $region64: #{new_model_forward.6} parent=1 // pred_region
      %s79 = ssub.s32 256, 256
      %80 = vsyncadd [#allocation7], %s79
      %s81 = sshll.u32 %s15, 4
      %s82 = int_to_ptr.vmem [resolvable:$true] %s81
      %87 = dma.vmem_to_smem %s82, 256, [#allocation8], [#allocation7], 128, 128, 8
    $region65: #{new_model_forward.6} parent=1 // pred_fallthru
      _
    // Predicated region
    $region66: #{new_model_forward.6} parent=1 // pred_check
      _
    $region67: #{new_model_forward.6} parent=1 // pred_check_branch
      %89 = sbr.rel (0) target = $region69
    $region68: #{new_model_forward.6} parent=1 // pred_region
      %s91 = ssub.s32 256, 256
      %92 = vsyncadd [#allocation10], %s91
      %s93 = sshll.u32 %s16, 4
      %s94 = int_to_ptr.vmem [resolvable:$true] %s93
      %99 = dma.vmem_to_smem %s94, 256, [#allocation9], [#allocation10], 128, 128, 8
    $region69: #{new_model_forward.6} parent=1 // pred_fallthru
      _
    // Predicated region
    $region70: #{new_model_forward.6} parent=1 // pred_check
      _
    $region71: #{new_model_forward.6} parent=1 // pred_check_branch
      %101 = sbr.rel (0) target = $region73
    $region72: #{new_model_forward.6} parent=1 // pred_region
      _
    $region73: #{new_model_forward.6} parent=1 // pred_fallthru
      _
    // Predicated region
    $region74: #{new_model_forward.6} parent=1 // pred_check
      _
    $region75: #{new_model_forward.6} parent=1 // pred_check_branch
      %103 = sbr.rel (0) target = $region77
    $region76: #{new_model_forward.6} parent=1 // pred_region
      %104 = dma.done [#allocation5], 64
    $region77: #{new_model_forward.6} parent=1 // pred_fallthru
      _
    // Predicated region
    $region78: #{new_model_forward.6} parent=1 // pred_check
      _
    $region79: #{new_model_forward.6} parent=1 // pred_check_branch
      %106 = sbr.rel (0) target = $region81
    $region80: #{new_model_forward.6} parent=1 // pred_region
      %107 = dma.done [#allocation7], 64
    $region81: #{new_model_forward.6} parent=1 // pred_fallthru
      _
    // Predicated region
    $region82: #{new_model_forward.6} parent=1 // pred_check
      _
    $region83: #{new_model_forward.6} parent=1 // pred_check_branch
      %109 = sbr.rel (0) target = $region85
    $region84: #{new_model_forward.6} parent=1 // pred_region
      %110 = dma.done [#allocation7], 256
    $region85: #{new_model_forward.6} parent=1 // pred_fallthru
      _
    // Predicated region
    $region86: #{new_model_forward.6} parent=1 // pred_check
      _
    $region87: #{new_model_forward.6} parent=1 // pred_check_branch
      %112 = sbr.rel (0) target = $region89
    $region88: #{new_model_forward.6} parent=1 // pred_region
      %113 = dma.done [#allocation10], 256
    $region89: #{new_model_forward.6} parent=1 // pred_fallthru
      _
    %114 = sfence
    %v115 = vld [vmem:[%s0] sm:$0xff]
    %v116 = vld [vmem:[%s0 + $0x8] sm:$0xff]
    %v117 = vld [vmem:[%s0 + $0x10] sm:$0xff]
    %v118 = vld [vmem:[%s0 + $0x18] sm:$0xff]
    %v119 = vld [vmem:[%s0 + $0x20] sm:$0xff]
    %v120 = vld [vmem:[%s0 + $0x28] sm:$0xff]
    %v121 = vld [vmem:[%s0 + $0x30] sm:$0xff]
    %v122 = vld [vmem:[%s0 + $0x38] sm:$0xff]
    %v123 = vld [vmem:[%s0 + $0x40] sm:$0xff]
    %v124 = vld [vmem:[%s1] sm:$0xff]
    %v125 = vld [vmem:[%s1 + $0x8] sm:$0xff]
    %v126 = vld [vmem:[%s1 + $0x10] sm:$0xff]
    %v127 = vld [vmem:[%s1 + $0x18] sm:$0xff]
    %v128 = vld [vmem:[%s1 + $0x20] sm:$0xff]
    %v129 = vld [vmem:[%s1 + $0x28] sm:$0xff]
    %v130 = vld [vmem:[%s1 + $0x30] sm:$0xff]
    %v131 = vld [vmem:[%s1 + $0x38] sm:$0xff]
    %v132 = vld [vmem:[%s1 + $0x40] sm:$0xff]
    %134 = vset.pattern.permute.xlu0 0
    %135 = vperm.xlu0 %134, %v124
    %v136 = vpop.permute.xlu0 %135
    %139 = vset.pattern.permute.xlu0 0
    %140 = vperm.xlu0 %139, %v125
    %v141 = vpop.permute.xlu0 %140
    %144 = vset.pattern.permute.xlu0 0
    %145 = vperm.xlu0 %144, %v126
    %v146 = vpop.permute.xlu0 %145
    %149 = vset.pattern.permute.xlu0 0
    %150 = vperm.xlu0 %149, %v127
    %v151 = vpop.permute.xlu0 %150
    %154 = vset.pattern.permute.xlu0 0
    %155 = vperm.xlu0 %154, %v128
    %v156 = vpop.permute.xlu0 %155
    %159 = vset.pattern.permute.xlu0 0
    %160 = vperm.xlu0 %159, %v129
    %v161 = vpop.permute.xlu0 %160
    %164 = vset.pattern.permute.xlu0 0
    %165 = vperm.xlu0 %164, %v130
    %v166 = vpop.permute.xlu0 %165
    %169 = vset.pattern.permute.xlu0 0
    %170 = vperm.xlu0 %169, %v131
    %v171 = vpop.permute.xlu0 %170
    %174 = vset.pattern.permute.xlu0 0
    %175 = vperm.xlu0 %174, %v132
    %v176 = vpop.permute.xlu0 %175
    %v178 = vmul.f32 %v115, %v136
    %v179 = vmul.f32 %v116, %v141
    %v180 = vmul.f32 %v117, %v146
    %v181 = vmul.f32 %v118, %v151
    %v182 = vmul.f32 %v119, %v156
    %v183 = vmul.f32 %v120, %v161
    %v184 = vmul.f32 %v121, %v166
    %v185 = vmul.f32 %v122, %v171
    %v186 = vmul.f32 %v123, %v176
    %v187 = vld [vmem:[%s2] sm:$0x1]
    %v188 = vld [vmem:[%s3] sm:$0x1]
    %vm189 = vcmask 261120
    %v190 = vsel %vm189, %v178, 0.0
    %191 = vadd.xlane.f32.xlu0 %v190
    %v192 = vpop.xlane.xlu0 %191
    %v193 = vsel %vm189, %v179, 0.0
    %194 = vadd.xlane.f32.xlu0 %v193
    %v195 = vpop.xlane.xlu0 %194
    %v196 = vsel %vm189, %v180, 0.0
    %197 = vadd.xlane.f32.xlu0 %v196
    %v198 = vpop.xlane.xlu0 %197
    %v199 = vsel %vm189, %v181, 0.0
    %200 = vadd.xlane.f32.xlu0 %v199
    %v201 = vpop.xlane.xlu0 %200
    %v202 = vsel %vm189, %v182, 0.0
    %203 = vadd.xlane.f32.xlu0 %v202
    %v204 = vpop.xlane.xlu0 %203
    %v205 = vsel %vm189, %v183, 0.0
    %206 = vadd.xlane.f32.xlu0 %v205
    %v207 = vpop.xlane.xlu0 %206
    %v208 = vsel %vm189, %v184, 0.0
    %209 = vadd.xlane.f32.xlu0 %v208
    %v210 = vpop.xlane.xlu0 %209
    %v211 = vsel %vm189, %v185, 0.0
    %212 = vadd.xlane.f32.xlu0 %v211
    %v213 = vpop.xlane.xlu0 %212
    %v214 = vsel %vm189, %v186, 0.0
    %215 = vadd.xlane.f32.xlu0 %v214
    %v216 = vpop.xlane.xlu0 %215
    %v217 = vrcp.pop 32.0
    %v218 = vmul.f32 %v192, %v217
    %v219 = vmul.f32 %v195, %v217
    %v220 = vmul.f32 %v198, %v217
    %v221 = vmul.f32 %v201, %v217
    %v222 = vmul.f32 %v204, %v217
    %v223 = vmul.f32 %v207, %v217
    %v224 = vmul.f32 %v210, %v217
    %v225 = vmul.f32 %v213, %v217
    %v226 = vmul.f32 %v216, %v217
    %v227 = vsub.f32 %v178, %v218
    %v228 = vsub.f32 %v179, %v219
    %v229 = vsub.f32 %v180, %v220
    %v230 = vsub.f32 %v181, %v221
    %v231 = vsub.f32 %v182, %v222
    %v232 = vsub.f32 %v183, %v223
    %v233 = vsub.f32 %v184, %v224
    %v234 = vsub.f32 %v185, %v225
    %v235 = vsub.f32 %v186, %v226
    %v236 = vmul.f32 %v227, %v227
    %v237 = vmul.f32 %v228, %v228
    %v238 = vmul.f32 %v229, %v229
    %v239 = vmul.f32 %v230, %v230
    %v240 = vmul.f32 %v231, %v231
    %v241 = vmul.f32 %v232, %v232
    %v242 = vmul.f32 %v233, %v233
    %v243 = vmul.f32 %v234, %v234
    %v244 = vmul.f32 %v235, %v235
    %v245 = vsel %vm189, %v236, 0.0
    %246 = vadd.xlane.f32.xlu0 %v245
    %v247 = vpop.xlane.xlu0 %246
    %v248 = vsel %vm189, %v237, 0.0
    %249 = vadd.xlane.f32.xlu0 %v248
    %v250 = vpop.xlane.xlu0 %249
    %v251 = vsel %vm189, %v238, 0.0
    %252 = vadd.xlane.f32.xlu0 %v251
    %v253 = vpop.xlane.xlu0 %252
    %v254 = vsel %vm189, %v239, 0.0
    %255 = vadd.xlane.f32.xlu0 %v254
    %v256 = vpop.xlane.xlu0 %255
    %v257 = vsel %vm189, %v240, 0.0
    %258 = vadd.xlane.f32.xlu0 %v257
    %v259 = vpop.xlane.xlu0 %258
    %v260 = vsel %vm189, %v241, 0.0
    %261 = vadd.xlane.f32.xlu0 %v260
    %v262 = vpop.xlane.xlu0 %261
    %v263 = vsel %vm189, %v242, 0.0
    %264 = vadd.xlane.f32.xlu0 %v263
    %v265 = vpop.xlane.xlu0 %264
    %v266 = vsel %vm189, %v243, 0.0
    %267 = vadd.xlane.f32.xlu0 %v266
    %v268 = vpop.xlane.xlu0 %267
    %v269 = vsel %vm189, %v244, 0.0
    %270 = vadd.xlane.f32.xlu0 %v269
    %v271 = vpop.xlane.xlu0 %270
    %v272 = vmul.f32 %v247, %v217
    %v273 = vmul.f32 %v250, %v217
    %v274 = vmul.f32 %v253, %v217
    %v275 = vmul.f32 %v256, %v217
    %v276 = vmul.f32 %v259, %v217
    %v277 = vmul.f32 %v262, %v217
    %v278 = vmul.f32 %v265, %v217
    %v279 = vmul.f32 %v268, %v217
    %v280 = vmul.f32 %v271, %v217
    %v281 = vadd.f32 %v272, 1e-05
    %v282 = vadd.f32 %v273, 1e-05
    %v283 = vadd.f32 %v274, 1e-05
    %v284 = vadd.f32 %v275, 1e-05
    %v285 = vadd.f32 %v276, 1e-05
    %v286 = vadd.f32 %v277, 1e-05
    %v287 = vadd.f32 %v278, 1e-05
    %v288 = vadd.f32 %v279, 1e-05
    %v289 = vadd.f32 %v280, 1e-05
    %v290 = vrsqrt.pop %v281
    %v291 = vrsqrt.pop %v282
    %v292 = vrsqrt.pop %v283
    %v293 = vrsqrt.pop %v284
    %v294 = vrsqrt.pop %v285
    %v295 = vrsqrt.pop %v286
    %v296 = vrsqrt.pop %v287
    %v297 = vrsqrt.pop %v288
    %v298 = vrsqrt.pop %v289
    %v299 = vmul.f32 %v227, %v290
    %v300 = vmul.f32 %v228, %v291
    %v301 = vmul.f32 %v229, %v292
    %v302 = vmul.f32 %v230, %v293
    %v303 = vmul.f32 %v231, %v294
    %v304 = vmul.f32 %v232, %v295
    %v305 = vmul.f32 %v233, %v296
    %v306 = vmul.f32 %v234, %v297
    %v307 = vmul.f32 %v235, %v298
    %v309 = vlaneseq
    %v310 = vshrl.u32 %v309, 7
    %v311 = vsub.s32 0, %v310
    %v312 = vrot.slane %v187, %v311
    %v314 = vmul.f32 %v299, %v312
    %v315 = vmul.f32 %v300, %v312
    %v316 = vmul.f32 %v301, %v312
    %v317 = vmul.f32 %v302, %v312
    %v318 = vmul.f32 %v303, %v312
    %v319 = vmul.f32 %v304, %v312
    %v320 = vmul.f32 %v305, %v312
    %v321 = vmul.f32 %v306, %v312
    %v322 = vmul.f32 %v307, %v312
    %v324 = vlaneseq
    %v325 = vshrl.u32 %v324, 7
    %v326 = vsub.s32 0, %v325
    %v327 = vrot.slane %v188, %v326
    %v329 = vadd.f32 %v314, %v327
    %v330 = vadd.f32 %v315, %v327
    %v331 = vadd.f32 %v316, %v327
    %v332 = vadd.f32 %v317, %v327
    %v333 = vadd.f32 %v318, %v327
    %v334 = vadd.f32 %v319, %v327
    %v335 = vadd.f32 %v320, %v327
    %v336 = vadd.f32 %v321, %v327
    %v337 = vadd.f32 %v322, %v327
    %s338 = sld [smem:[#allocation3]]
    %v339 = vstv %s338
    %v340 = vmul.f32 %v339, %v329
    %s341 = sld [smem:[#allocation3 + $0x1]]
    %v342 = vstv %s341
    %v343 = vmul.f32 %v342, %v330
    %v344 = vadd.f32 %v340, %v343
    %s345 = sld [smem:[#allocation3 + $0x2]]
    %v346 = vstv %s345
    %v347 = vmul.f32 %v346, %v331
    %v348 = vadd.f32 %v344, %v347
    %s349 = sld [smem:[#allocation3 + $0x3]]
    %v350 = vstv %s349
    %v351 = vmul.f32 %v350, %v332
    %v352 = vadd.f32 %v348, %v351
    %s353 = sld [smem:[#allocation3 + $0x4]]
    %v354 = vstv %s353
    %v355 = vmul.f32 %v354, %v333
    %v356 = vadd.f32 %v352, %v355
    %s357 = sld [smem:[#allocation3 + $0x5]]
    %v358 = vstv %s357
    %v359 = vmul.f32 %v358, %v334
    %v360 = vadd.f32 %v356, %v359
    %s361 = sld [smem:[#allocation3 + $0x6]]
    %v362 = vstv %s361
    %v363 = vmul.f32 %v362, %v335
    %v364 = vadd.f32 %v360, %v363
    %s365 = sld [smem:[#allocation3 + $0x7]]
    %v366 = vstv %s365
    %v367 = vmul.f32 %v366, %v336
    %v368 = vadd.f32 %v364, %v367
    %s369 = sld [smem:[#allocation3 + $0x8]]
    %v370 = vstv %s369
    %v371 = vmul.f32 %v370, %v337
    %v372 = vadd.f32 %v368, %v371
    %s373 = sld [smem:[#allocation6]]
    %v374 = vstv %s373
    %v375 = vadd.f32 %v372, %v374
    %v376 = vmul.f32 %v375, %v375
    %v377 = vmul.f32 %v375, %v376
    %v378 = vmul.f32 %v377, 0.044715
    %v379 = vadd.f32 %v375, %v378
    %v380 = vmul.f32 %v379, 0.7978846
    %v381 = vtanh.pop %v380
    %v382 = vadd.f32 %v381, 1.0
    %v383 = vmul.f32 %v382, 0.5
    %v384 = vmul.f32 %v375, %v383
    %s385 = sld [smem:[#allocation3 + $0x80]]
    %v386 = vstv %s385
    %v387 = vmul.f32 %v386, %v329
    %s388 = sld [smem:[#allocation3 + $0x81]]
    %v389 = vstv %s388
    %v390 = vmul.f32 %v389, %v330
    %v391 = vadd.f32 %v387, %v390
    %s392 = sld [smem:[#allocation3 + $0x82]]
    %v393 = vstv %s392
    %v394 = vmul.f32 %v393, %v331
    %v395 = vadd.f32 %v391, %v394
    %s396 = sld [smem:[#allocation3 + $0x83]]
    %v397 = vstv %s396
    %v398 = vmul.f32 %v397, %v332
    %v399 = vadd.f32 %v395, %v398
    %s400 = sld [smem:[#allocation3 + $0x84]]
    %v401 = vstv %s400
    %v402 = vmul.f32 %v401, %v333
    %v403 = vadd.f32 %v399, %v402
    %s404 = sld [smem:[#allocation3 + $0x85]]
    %v405 = vstv %s404
    %v406 = vmul.f32 %v405, %v334
    %v407 = vadd.f32 %v403, %v406
    %s408 = sld [smem:[#allocation3 + $0x86]]
    %v409 = vstv %s408
    %v410 = vmul.f32 %v409, %v335
    %v411 = vadd.f32 %v407, %v410
    %s412 = sld [smem:[#allocation3 + $0x87]]
    %v413 = vstv %s412
    %v414 = vmul.f32 %v413, %v336
    %v415 = vadd.f32 %v411, %v414
    %s416 = sld [smem:[#allocation3 + $0x88]]
    %v417 = vstv %s416
    %v418 = vmul.f32 %v417, %v337
    %v419 = vadd.f32 %v415, %v418
    %s420 = sld [smem:[#allocation6 + $0x80]]
    %v421 = vstv %s420
    %v422 = vadd.f32 %v419, %v421
    %v423 = vmul.f32 %v422, %v422
    %v424 = vmul.f32 %v422, %v423
    %v425 = vmul.f32 %v424, 0.044715
    %v426 = vadd.f32 %v422, %v425
    %v427 = vmul.f32 %v426, 0.7978846
    %v428 = vtanh.pop %v427
    %v429 = vadd.f32 %v428, 1.0
    %v430 = vmul.f32 %v429, 0.5
    %v431 = vmul.f32 %v422, %v430
    %s432 = sld [smem:[#allocation3 + $0x100]]
    %v433 = vstv %s432
    %v434 = vmul.f32 %v433, %v329
    %s435 = sld [smem:[#allocation3 + $0x101]]
    %v436 = vstv %s435
    %v437 = vmul.f32 %v436, %v330
    %v438 = vadd.f32 %v434, %v437
    %s439 = sld [smem:[#allocation3 + $0x102]]
    %v440 = vstv %s439
    %v441 = vmul.f32 %v440, %v331
    %v442 = vadd.f32 %v438, %v441
    %s443 = sld [smem:[#allocation3 + $0x103]]
    %v444 = vstv %s443
    %v445 = vmul.f32 %v444, %v332
    %v446 = vadd.f32 %v442, %v445
    %s447 = sld [smem:[#allocation3 + $0x104]]
    %v448 = vstv %s447
    %v449 = vmul.f32 %v448, %v333
    %v450 = vadd.f32 %v446, %v449
    %s451 = sld [smem:[#allocation3 + $0x105]]
    %v452 = vstv %s451
    %v453 = vmul.f32 %v452, %v334
    %v454 = vadd.f32 %v450, %v453
    %s455 = sld [smem:[#allocation3 + $0x106]]
    %v456 = vstv %s455
    %v457 = vmul.f32 %v456, %v335
    %v458 = vadd.f32 %v454, %v457
    %s459 = sld [smem:[#allocation3 + $0x107]]
    %v460 = vstv %s459
    %v461 = vmul.f32 %v460, %v336
    %v462 = vadd.f32 %v458, %v461
    %s463 = sld [smem:[#allocation3 + $0x108]]
    %v464 = vstv %s463
    %v465 = vmul.f32 %v464, %v337
    %v466 = vadd.f32 %v462, %v465
    %s467 = sld [smem:[#allocation6 + $0x100]]
    %v468 = vstv %s467
    %v469 = vadd.f32 %v466, %v468
    %v470 = vmul.f32 %v469, %v469
    %v471 = vmul.f32 %v469, %v470
    %v472 = vmul.f32 %v471, 0.044715
    %v473 = vadd.f32 %v469, %v472
    %v474 = vmul.f32 %v473, 0.7978846
    %v475 = vtanh.pop %v474
    %v476 = vadd.f32 %v475, 1.0
    %v477 = vmul.f32 %v476, 0.5
    %v478 = vmul.f32 %v469, %v477
    %s479 = sld [smem:[#allocation3 + $0x180]]
    %v480 = vstv %s479
    %v481 = vmul.f32 %v480, %v329
    %s482 = sld [smem:[#allocation3 + $0x181]]
    %v483 = vstv %s482
    %v484 = vmul.f32 %v483, %v330
    %v485 = vadd.f32 %v481, %v484
    %s486 = sld [smem:[#allocation3 + $0x182]]
    %v487 = vstv %s486
    %v488 = vmul.f32 %v487, %v331
    %v489 = vadd.f32 %v485, %v488
    %s490 = sld [smem:[#allocation3 + $0x183]]
    %v491 = vstv %s490
    %v492 = vmul.f32 %v491, %v332
    %v493 = vadd.f32 %v489, %v492
    %s494 = sld [smem:[#allocation3 + $0x184]]
    %v495 = vstv %s494
    %v496 = vmul.f32 %v495, %v333
    %v497 = vadd.f32 %v493, %v496
    %s498 = sld [smem:[#allocation3 + $0x185]]
    %v499 = vstv %s498
    %v500 = vmul.f32 %v499, %v334
    %v501 = vadd.f32 %v497, %v500
    %s502 = sld [smem:[#allocation3 + $0x186]]
    %v503 = vstv %s502
    %v504 = vmul.f32 %v503, %v335
    %v505 = vadd.f32 %v501, %v504
    %s506 = sld [smem:[#allocation3 + $0x187]]
    %v507 = vstv %s506
    %v508 = vmul.f32 %v507, %v336
    %v509 = vadd.f32 %v505, %v508
    %s510 = sld [smem:[#allocation3 + $0x188]]
    %v511 = vstv %s510
    %v512 = vmul.f32 %v511, %v337
    %v513 = vadd.f32 %v509, %v512
    %s514 = sld [smem:[#allocation6 + $0x180]]
    %v515 = vstv %s514
    %v516 = vadd.f32 %v513, %v515
    %v517 = vmul.f32 %v516, %v516
    %v518 = vmul.f32 %v516, %v517
    %v519 = vmul.f32 %v518, 0.044715
    %v520 = vadd.f32 %v516, %v519
    %v521 = vmul.f32 %v520, 0.7978846
    %v522 = vtanh.pop %v521
    %v523 = vadd.f32 %v522, 1.0
    %v524 = vmul.f32 %v523, 0.5
    %v525 = vmul.f32 %v516, %v524
    %s526 = sld [smem:[#allocation8]]
    %v527 = vstv %s526
    %v528 = vmul.f32 %v527, %v384
    %s529 = sld [smem:[#allocation8 + $0x1]]
    %v530 = vstv %s529
    %v531 = vmul.f32 %v530, %v431
    %v532 = vadd.f32 %v528, %v531
    %s533 = sld [smem:[#allocation8 + $0x2]]
    %v534 = vstv %s533
    %v535 = vmul.f32 %v534, %v478
    %v536 = vadd.f32 %v532, %v535
    %s537 = sld [smem:[#allocation8 + $0x3]]
    %v538 = vstv %s537
    %v539 = vmul.f32 %v538, %v525
    %v540 = vadd.f32 %v536, %v539
    %v541 = vadd.f32 %v115, %v540
    %s542 = sld [smem:[#allocation9]]
    %v543 = vstv %s542
    %v544 = vadd.f32 %v541, %v543
    %s545 = sld [smem:[#allocation8 + $0x80]]
    %v546 = vstv %s545
    %v547 = vmul.f32 %v546, %v384
    %s548 = sld [smem:[#allocation8 + $0x81]]
    %v549 = vstv %s548
    %v550 = vmul.f32 %v549, %v431
    %v551 = vadd.f32 %v547, %v550
    %s552 = sld [smem:[#allocation8 + $0x82]]
    %v553 = vstv %s552
    %v554 = vmul.f32 %v553, %v478
    %v555 = vadd.f32 %v551, %v554
    %s556 = sld [smem:[#allocation8 + $0x83]]
    %v557 = vstv %s556
    %v558 = vmul.f32 %v557, %v525
    %v559 = vadd.f32 %v555, %v558
    %v560 = vadd.f32 %v116, %v559
    %s561 = sld [smem:[#allocation9 + $0x80]]
    %v562 = vstv %s561
    %v563 = vadd.f32 %v560, %v562
    %s564 = sld [smem:[#allocation8 + $0x100]]
    %v565 = vstv %s564
    %v566 = vmul.f32 %v565, %v384
    %s567 = sld [smem:[#allocation8 + $0x101]]
    %v568 = vstv %s567
    %v569 = vmul.f32 %v568, %v431
    %v570 = vadd.f32 %v566, %v569
    %s571 = sld [smem:[#allocation8 + $0x102]]
    %v572 = vstv %s571
    %v573 = vmul.f32 %v572, %v478
    %v574 = vadd.f32 %v570, %v573
    %s575 = sld [smem:[#allocation8 + $0x103]]
    %v576 = vstv %s575
    %v577 = vmul.f32 %v576, %v525
    %v578 = vadd.f32 %v574, %v577
    %v579 = vadd.f32 %v117, %v578
    %s580 = sld [smem:[#allocation9 + $0x100]]
    %v581 = vstv %s580
    %v582 = vadd.f32 %v579, %v581
    %s583 = sld [smem:[#allocation8 + $0x180]]
    %v584 = vstv %s583
    %v585 = vmul.f32 %v584, %v384
    %s586 = sld [smem:[#allocation8 + $0x181]]
    %v587 = vstv %s586
    %v588 = vmul.f32 %v587, %v431
    %v589 = vadd.f32 %v585, %v588
    %s590 = sld [smem:[#allocation8 + $0x182]]
    %v591 = vstv %s590
    %v592 = vmul.f32 %v591, %v478
    %v593 = vadd.f32 %v589, %v592
    %s594 = sld [smem:[#allocation8 + $0x183]]
    %v595 = vstv %s594
    %v596 = vmul.f32 %v595, %v525
    %v597 = vadd.f32 %v593, %v596
    %v598 = vadd.f32 %v118, %v597
    %s599 = sld [smem:[#allocation9 + $0x180]]
    %v600 = vstv %s599
    %v601 = vadd.f32 %v598, %v600
    %s602 = sld [smem:[#allocation8 + $0x200]]
    %v603 = vstv %s602
    %v604 = vmul.f32 %v603, %v384
    %s605 = sld [smem:[#allocation8 + $0x201]]
    %v606 = vstv %s605
    %v607 = vmul.f32 %v606, %v431
    %v608 = vadd.f32 %v604, %v607
    %s609 = sld [smem:[#allocation8 + $0x202]]
    %v610 = vstv %s609
    %v611 = vmul.f32 %v610, %v478
    %v612 = vadd.f32 %v608, %v611
    %s613 = sld [smem:[#allocation8 + $0x203]]
    %v614 = vstv %s613
    %v615 = vmul.f32 %v614, %v525
    %v616 = vadd.f32 %v612, %v615
    %v617 = vadd.f32 %v119, %v616
    %s618 = sld [smem:[#allocation9 + $0x200]]
    %v619 = vstv %s618
    %v620 = vadd.f32 %v617, %v619
    %s621 = sld [smem:[#allocation8 + $0x280]]
    %v622 = vstv %s621
    %v623 = vmul.f32 %v622, %v384
    %s624 = sld [smem:[#allocation8 + $0x281]]
    %v625 = vstv %s624
    %v626 = vmul.f32 %v625, %v431
    %v627 = vadd.f32 %v623, %v626
    %s628 = sld [smem:[#allocation8 + $0x282]]
    %v629 = vstv %s628
    %v630 = vmul.f32 %v629, %v478
    %v631 = vadd.f32 %v627, %v630
    %s632 = sld [smem:[#allocation8 + $0x283]]
    %v633 = vstv %s632
    %v634 = vmul.f32 %v633, %v525
    %v635 = vadd.f32 %v631, %v634
    %v636 = vadd.f32 %v120, %v635
    %s637 = sld [smem:[#allocation9 + $0x280]]
    %v638 = vstv %s637
    %v639 = vadd.f32 %v636, %v638
    %s640 = sld [smem:[#allocation8 + $0x300]]
    %v641 = vstv %s640
    %v642 = vmul.f32 %v641, %v384
    %s643 = sld [smem:[#allocation8 + $0x301]]
    %v644 = vstv %s643
    %v645 = vmul.f32 %v644, %v431
    %v646 = vadd.f32 %v642, %v645
    %s647 = sld [smem:[#allocation8 + $0x302]]
    %v648 = vstv %s647
    %v649 = vmul.f32 %v648, %v478
    %v650 = vadd.f32 %v646, %v649
    %s651 = sld [smem:[#allocation8 + $0x303]]
    %v652 = vstv %s651
    %v653 = vmul.f32 %v652, %v525
    %v654 = vadd.f32 %v650, %v653
    %v655 = vadd.f32 %v121, %v654
    %s656 = sld [smem:[#allocation9 + $0x300]]
    %v657 = vstv %s656
    %v658 = vadd.f32 %v655, %v657
    %s659 = sld [smem:[#allocation8 + $0x380]]
    %v660 = vstv %s659
    %v661 = vmul.f32 %v660, %v384
    %s662 = sld [smem:[#allocation8 + $0x381]]
    %v663 = vstv %s662
    %v664 = vmul.f32 %v663, %v431
    %v665 = vadd.f32 %v661, %v664
    %s666 = sld [smem:[#allocation8 + $0x382]]
    %v667 = vstv %s666
    %v668 = vmul.f32 %v667, %v478
    %v669 = vadd.f32 %v665, %v668
    %s670 = sld [smem:[#allocation8 + $0x383]]
    %v671 = vstv %s670
    %v672 = vmul.f32 %v671, %v525
    %v673 = vadd.f32 %v669, %v672
    %v674 = vadd.f32 %v122, %v673
    %s675 = sld [smem:[#allocation9 + $0x380]]
    %v676 = vstv %s675
    %v677 = vadd.f32 %v674, %v676
    %s678 = sld [smem:[#allocation8 + $0x400]]
    %v679 = vstv %s678
    %v680 = vmul.f32 %v679, %v384
    %s681 = sld [smem:[#allocation8 + $0x401]]
    %v682 = vstv %s681
    %v683 = vmul.f32 %v682, %v431
    %v684 = vadd.f32 %v680, %v683
    %s685 = sld [smem:[#allocation8 + $0x402]]
    %v686 = vstv %s685
    %v687 = vmul.f32 %v686, %v478
    %v688 = vadd.f32 %v684, %v687
    %s689 = sld [smem:[#allocation8 + $0x403]]
    %v690 = vstv %s689
    %v691 = vmul.f32 %v690, %v525
    %v692 = vadd.f32 %v688, %v691
    %v693 = vadd.f32 %v123, %v692
    %s694 = sld [smem:[#allocation9 + $0x400]]
    %v695 = vstv %s694
    %v696 = vadd.f32 %v693, %v695
    %v697 = vmul.f32 %v544, %v136
    %v698 = vmul.f32 %v563, %v141
    %v699 = vmul.f32 %v582, %v146
    %v700 = vmul.f32 %v601, %v151
    %v701 = vmul.f32 %v620, %v156
    %v702 = vmul.f32 %v639, %v161
    %v703 = vmul.f32 %v658, %v166
    %v704 = vmul.f32 %v677, %v171
    %v705 = vmul.f32 %v696, %v176
    %v706 = vld [vmem:[%s4] sm:$0x1]
    %v707 = vld [vmem:[%s5] sm:$0x1]
    %v708 = vsel %vm189, %v697, 0.0
    %709 = vadd.xlane.f32.xlu0 %v708
    %v710 = vpop.xlane.xlu0 %709
    %v711 = vsel %vm189, %v698, 0.0
    %712 = vadd.xlane.f32.xlu0 %v711
    %v713 = vpop.xlane.xlu0 %712
    %v714 = vsel %vm189, %v699, 0.0
    %715 = vadd.xlane.f32.xlu0 %v714
    %v716 = vpop.xlane.xlu0 %715
    %v717 = vsel %vm189, %v700, 0.0
    %718 = vadd.xlane.f32.xlu0 %v717
    %v719 = vpop.xlane.xlu0 %718
    %v720 = vsel %vm189, %v701, 0.0
    %721 = vadd.xlane.f32.xlu0 %v720
    %v722 = vpop.xlane.xlu0 %721
    %v723 = vsel %vm189, %v702, 0.0
    %724 = vadd.xlane.f32.xlu0 %v723
    %v725 = vpop.xlane.xlu0 %724
    %v726 = vsel %vm189, %v703, 0.0
    %727 = vadd.xlane.f32.xlu0 %v726
    %v728 = vpop.xlane.xlu0 %727
    %v729 = vsel %vm189, %v704, 0.0
    %730 = vadd.xlane.f32.xlu0 %v729
    %v731 = vpop.xlane.xlu0 %730
    %v732 = vsel %vm189, %v705, 0.0
    %733 = vadd.xlane.f32.xlu0 %v732
    %v734 = vpop.xlane.xlu0 %733
    %v735 = vmul.f32 %v710, %v217
    %v736 = vmul.f32 %v713, %v217
    %v737 = vmul.f32 %v716, %v217
    %v738 = vmul.f32 %v719, %v217
    %v739 = vmul.f32 %v722, %v217
    %v740 = vmul.f32 %v725, %v217
    %v741 = vmul.f32 %v728, %v217
    %v742 = vmul.f32 %v731, %v217
    %v743 = vmul.f32 %v734, %v217
    %v744 = vsub.f32 %v697, %v735
    %v745 = vsub.f32 %v698, %v736
    %v746 = vsub.f32 %v699, %v737
    %v747 = vsub.f32 %v700, %v738
    %v748 = vsub.f32 %v701, %v739
    %v749 = vsub.f32 %v702, %v740
    %v750 = vsub.f32 %v703, %v741
    %v751 = vsub.f32 %v704, %v742
    %v752 = vsub.f32 %v705, %v743
    %v753 = vmul.f32 %v744, %v744
    %v754 = vmul.f32 %v745, %v745
    %v755 = vmul.f32 %v746, %v746
    %v756 = vmul.f32 %v747, %v747
    %v757 = vmul.f32 %v748, %v748
    %v758 = vmul.f32 %v749, %v749
    %v759 = vmul.f32 %v750, %v750
    %v760 = vmul.f32 %v751, %v751
    %v761 = vmul.f32 %v752, %v752
    %v762 = vsel %vm189, %v753, 0.0
    %763 = vadd.xlane.f32.xlu0 %v762
    %v764 = vpop.xlane.xlu0 %763
    %v765 = vsel %vm189, %v754, 0.0
    %766 = vadd.xlane.f32.xlu0 %v765
    %v767 = vpop.xlane.xlu0 %766
    %v768 = vsel %vm189, %v755, 0.0
    %769 = vadd.xlane.f32.xlu0 %v768
    %v770 = vpop.xlane.xlu0 %769
    %v771 = vsel %vm189, %v756, 0.0
    %772 = vadd.xlane.f32.xlu0 %v771
    %v773 = vpop.xlane.xlu0 %772
    %v774 = vsel %vm189, %v757, 0.0
    %775 = vadd.xlane.f32.xlu0 %v774
    %v776 = vpop.xlane.xlu0 %775
    %v777 = vsel %vm189, %v758, 0.0
    %778 = vadd.xlane.f32.xlu0 %v777
    %v779 = vpop.xlane.xlu0 %778
    %v780 = vsel %vm189, %v759, 0.0
    %781 = vadd.xlane.f32.xlu0 %v780
    %v782 = vpop.xlane.xlu0 %781
    %v783 = vsel %vm189, %v760, 0.0
    %784 = vadd.xlane.f32.xlu0 %v783
    %v785 = vpop.xlane.xlu0 %784
    %v786 = vsel %vm189, %v761, 0.0
    %787 = vadd.xlane.f32.xlu0 %v786
    %v788 = vpop.xlane.xlu0 %787
    %v789 = vmul.f32 %v764, %v217
    %v790 = vmul.f32 %v767, %v217
    %v791 = vmul.f32 %v770, %v217
    %v792 = vmul.f32 %v773, %v217
    %v793 = vmul.f32 %v776, %v217
    %v794 = vmul.f32 %v779, %v217
    %v795 = vmul.f32 %v782, %v217
    %v796 = vmul.f32 %v785, %v217
    %v797 = vmul.f32 %v788, %v217
    %v798 = vadd.f32 %v789, 1e-05
    %v799 = vadd.f32 %v790, 1e-05
    %v800 = vadd.f32 %v791, 1e-05
    %v801 = vadd.f32 %v792, 1e-05
    %v802 = vadd.f32 %v793, 1e-05
    %v803 = vadd.f32 %v794, 1e-05
    %v804 = vadd.f32 %v795, 1e-05
    %v805 = vadd.f32 %v796, 1e-05
    %v806 = vadd.f32 %v797, 1e-05
    %v807 = vrsqrt.pop %v798
    %v808 = vrsqrt.pop %v799
    %v809 = vrsqrt.pop %v800
    %v810 = vrsqrt.pop %v801
    %v811 = vrsqrt.pop %v802
    %v812 = vrsqrt.pop %v803
    %v813 = vrsqrt.pop %v804
    %v814 = vrsqrt.pop %v805
    %v815 = vrsqrt.pop %v806
    %v816 = vmul.f32 %v744, %v807
    %v817 = vmul.f32 %v745, %v808
    %v818 = vmul.f32 %v746, %v809
    %v819 = vmul.f32 %v747, %v810
    %v820 = vmul.f32 %v748, %v811
    %v821 = vmul.f32 %v749, %v812
    %v822 = vmul.f32 %v750, %v813
    %v823 = vmul.f32 %v751, %v814
    %v824 = vmul.f32 %v752, %v815
    %v826 = vlaneseq
    %v827 = vshrl.u32 %v826, 7
    %v828 = vsub.s32 0, %v827
    %v829 = vrot.slane %v706, %v828
    %v831 = vmul.f32 %v816, %v829
    %v832 = vmul.f32 %v817, %v829
    %v833 = vmul.f32 %v818, %v829
    %v834 = vmul.f32 %v819, %v829
    %v835 = vmul.f32 %v820, %v829
    %v836 = vmul.f32 %v821, %v829
    %v837 = vmul.f32 %v822, %v829
    %v838 = vmul.f32 %v823, %v829
    %v839 = vmul.f32 %v824, %v829
    %v841 = vlaneseq
    %v842 = vshrl.u32 %v841, 7
    %v843 = vsub.s32 0, %v842
    %v844 = vrot.slane %v707, %v843
    %v846 = vadd.f32 %v831, %v844
    %v847 = vadd.f32 %v832, %v844
    %v848 = vadd.f32 %v833, %v844
    %v849 = vadd.f32 %v834, %v844
    %v850 = vadd.f32 %v835, %v844
    %v851 = vadd.f32 %v836, %v844
    %v852 = vadd.f32 %v837, %v844
    %v853 = vadd.f32 %v838, %v844
    %v854 = vadd.f32 %v839, %v844
    %v855 = vld [vmem:[%s8] sm:$0xff]
    %v856 = vld [vmem:[%s8 + $0x8] sm:$0xff]
    %v857 = vld [vmem:[%s8 + $0x10] sm:$0xff]
    %v858 = vld [vmem:[%s8 + $0x18] sm:$0xff]
    %v859 = vld [vmem:[%s9] sm:$0x1]
    %v861 = vlaneseq
    %v862 = vshrl.u32 %v861, 7
    %v863 = vsub.s32 0, %v862
    %v864 = vrot.slane %v859, %v863
    %v867 = vsel %vm189, %v846, 0
    %v870 = vsel %vm189, %v847, 0
    %v873 = vsel %vm189, %v848, 0
    %v876 = vsel %vm189, %v849, 0
    %v879 = vsel %vm189, %v850, 0
    %v882 = vsel %vm189, %v851, 0
    %v885 = vsel %vm189, %v852, 0
    %v888 = vsel %vm189, %v853, 0
    %v891 = vsel %vm189, %v854, 0
    %893 = vmatprep.subr.mxu0 0.0
    %894 = vmatpush1.msra.mxu0 %v855
    %895 = vmatprep.subr.mxu0 0.0
    %896 = vmatpush1.msra.mxu0 %v856
    %897 = vmatprep.subr.mxu0 0.0
    %898 = vmatpush1.msra.mxu0 %v857
    %899 = vmatprep.subr.mxu0 0.0
    %900 = vmatpush1.msra.mxu0 %v858
    %901 = vmatprep.subr.mxu0 0.0
    %902 = vmatpush1.msra.mxu0 0.0
    %903 = vmatprep.subr.mxu0 0.0
    %904 = vmatpush1.msra.mxu0 0.0
    %905 = vmatprep.subr.mxu0 0.0
    %906 = vmatpush1.msra.mxu0 0.0
    %907 = vmatprep.subr.mxu0 0.0
    %908 = vmatpush1.msra.mxu0 0.0
    %909 = vmatprep.subr.mxu0 0.0
    %910 = vmatpush1.msra.mxu0 0.0
    %911 = vmatprep.subr.mxu0 0.0
    %912 = vmatpush1.msra.mxu0 0.0
    %913 = vmatprep.subr.mxu0 0.0
    %914 = vmatpush1.msra.mxu0 0.0
    %915 = vmatprep.subr.mxu0 0.0
    %916 = vmatpush1.msra.mxu0 0.0
    %917 = vmatprep.subr.mxu0 0.0
    %918 = vmatpush1.msra.mxu0 0.0
    %919 = vmatprep.subr.mxu0 0.0
    %920 = vmatpush1.msra.mxu0 0.0
    %921 = vmatprep.subr.mxu0 0.0
    %922 = vmatpush1.msra.mxu0 0.0
    %923 = vmatprep.subr.mxu0 0.0
    %924 = vmatpush1.msra.mxu0 0.0
    %925 = vmatprep.subr.mxu0 0.0
    %926 = vmatpush1.msra.mxu0 0.0
    %927 = vmatprep.subr.mxu0 0.0
    %928 = vmatpush1.msra.mxu0 0.0
    %929 = vmatprep.subr.mxu0 0.0
    %930 = vmatpush1.msra.mxu0 0.0
    %931 = vmatprep.subr.mxu0 0.0
    %932 = vmatpush1.msra.mxu0 0.0
    %933 = vmatprep.subr.mxu0 0.0
    %934 = vmatpush1.msra.mxu0 0.0
    %935 = vmatprep.subr.mxu0 0.0
    %936 = vmatpush1.msra.mxu0 0.0
    %937 = vmatprep.subr.mxu0 0.0
    %938 = vmatpush1.msra.mxu0 0.0
    %939 = vmatprep.subr.mxu0 0.0
    %940 = vmatpush1.msra.mxu0 0.0
    %941 = vmatprep.subr.mxu0 0.0
    %942 = vmatpush1.msra.mxu0 0.0
    %943 = vmatprep.subr.mxu0 0.0
    %944 = vmatpush1.msra.mxu0 0.0
    %945 = vmatprep.subr.mxu0 0.0
    %946 = vmatpush1.msra.mxu0 0.0
    %947 = vmatprep.subr.mxu0 0.0
    %948 = vmatpush1.msra.mxu0 0.0
    %949 = vmatprep.subr.mxu0 0.0
    %950 = vmatpush1.msra.mxu0 0.0
    %951 = vmatprep.subr.mxu0 0.0
    %952 = vmatpush1.msra.mxu0 0.0
    %953 = vmatprep.subr.mxu0 0.0
    %954 = vmatpush1.msra.mxu0 0.0
    %955 = vmatprep.subr.mxu0 0.0
    %956 = vmatpush1.msra.mxu0 0.0
    %957 = vmatprep.mubr.f32.mxu0 0.0
    %958 = vmatmul.mubr.f32.gmra.mrb[0].mxu0 %v867
    %v959 = vpop.f32.mrb[0].mxu0
    %v960 = vadd.f32 %v864, %v959
    %v961 = vpop.f32.mrb[0].mxu0
    %962 = vmatprep.mubr.f32.mxu0 0.0
    %963 = vmatmul.mubr.f32.gmra.mrb[0].mxu0 %v870
    %v964 = vpop.f32.mrb[0].mxu0
    %v965 = vadd.f32 %v864, %v964
    %v966 = vpop.f32.mrb[0].mxu0
    %967 = vmatprep.mubr.f32.mxu0 0.0
    %968 = vmatmul.mubr.f32.gmra.mrb[0].mxu0 %v873
    %v969 = vpop.f32.mrb[0].mxu0
    %v970 = vadd.f32 %v864, %v969
    %v971 = vpop.f32.mrb[0].mxu0
    %972 = vmatprep.mubr.f32.mxu0 0.0
    %973 = vmatmul.mubr.f32.gmra.mrb[0].mxu0 %v876
    %v974 = vpop.f32.mrb[0].mxu0
    %v975 = vadd.f32 %v864, %v974
    %v976 = vpop.f32.mrb[0].mxu0
    %977 = vmatprep.mubr.f32.mxu0 0.0
    %978 = vmatmul.mubr.f32.gmra.mrb[0].mxu0 %v879
    %v979 = vpop.f32.mrb[0].mxu0
    %v980 = vadd.f32 %v864, %v979
    %v981 = vpop.f32.mrb[0].mxu0
    %982 = vmatprep.mubr.f32.mxu0 0.0
    %983 = vmatmul.mubr.f32.gmra.mrb[0].mxu0 %v882
    %v984 = vpop.f32.mrb[0].mxu0
    %v985 = vadd.f32 %v864, %v984
    %v986 = vpop.f32.mrb[0].mxu0
    %987 = vmatprep.mubr.f32.mxu0 0.0
    %988 = vmatmul.mubr.f32.gmra.mrb[0].mxu0 %v885
    %v989 = vpop.f32.mrb[0].mxu0
    %v990 = vadd.f32 %v864, %v989
    %v991 = vpop.f32.mrb[0].mxu0
    %992 = vmatprep.mubr.f32.mxu0 0.0
    %993 = vmatmul.mubr.f32.gmra.mrb[0].mxu0 %v888
    %v994 = vpop.f32.mrb[0].mxu0
    %v995 = vadd.f32 %v864, %v994
    %v996 = vpop.f32.mrb[0].mxu0
    %997 = vmatprep.mubr.f32.mxu0 0.0
    %998 = vmatmul.mubr.f32.gmra.mrb[0].mxu0 %v891
    %v999 = vpop.f32.mrb[0].mxu0
    %v1000 = vadd.f32 %v864, %v999
    %v1001 = vpop.f32.mrb[0].mxu0
    %1002 = vdwg.mxu0
    %v1003 = vmul.f32 %v960, %v960
    %v1004 = vmul.f32 %v965, %v965
    %v1005 = vmul.f32 %v970, %v970
    %v1006 = vmul.f32 %v975, %v975
    %v1007 = vmul.f32 %v980, %v980
    %v1008 = vmul.f32 %v985, %v985
    %v1009 = vmul.f32 %v990, %v990
    %v1010 = vmul.f32 %v995, %v995
    %v1011 = vmul.f32 %v1000, %v1000
    %v1012 = vmul.f32 %v960, %v1003
    %v1013 = vmul.f32 %v965, %v1004
    %v1014 = vmul.f32 %v970, %v1005
    %v1015 = vmul.f32 %v975, %v1006
    %v1016 = vmul.f32 %v980, %v1007
    %v1017 = vmul.f32 %v985, %v1008
    %v1018 = vmul.f32 %v990, %v1009
    %v1019 = vmul.f32 %v995, %v1010
    %v1020 = vmul.f32 %v1000, %v1011
    %v1021 = vmul.f32 %v1012, 0.044715
    %v1022 = vmul.f32 %v1013, 0.044715
    %v1023 = vmul.f32 %v1014, 0.044715
    %v1024 = vmul.f32 %v1015, 0.044715
    %v1025 = vmul.f32 %v1016, 0.044715
    %v1026 = vmul.f32 %v1017, 0.044715
    %v1027 = vmul.f32 %v1018, 0.044715
    %v1028 = vmul.f32 %v1019, 0.044715
    %v1029 = vmul.f32 %v1020, 0.044715
    %v1030 = vadd.f32 %v960, %v1021
    %v1031 = vadd.f32 %v965, %v1022
    %v1032 = vadd.f32 %v970, %v1023
    %v1033 = vadd.f32 %v975, %v1024
    %v1034 = vadd.f32 %v980, %v1025
    %v1035 = vadd.f32 %v985, %v1026
    %v1036 = vadd.f32 %v990, %v1027
    %v1037 = vadd.f32 %v995, %v1028
    %v1038 = vadd.f32 %v1000, %v1029
    %v1039 = vmul.f32 %v1030, 0.7978846
    %v1040 = vmul.f32 %v1031, 0.7978846
    %v1041 = vmul.f32 %v1032, 0.7978846
    %v1042 = vmul.f32 %v1033, 0.7978846
    %v1043 = vmul.f32 %v1034, 0.7978846
    %v1044 = vmul.f32 %v1035, 0.7978846
    %v1045 = vmul.f32 %v1036, 0.7978846
    %v1046 = vmul.f32 %v1037, 0.7978846
    %v1047 = vmul.f32 %v1038, 0.7978846
    %v1048 = vtanh.pop %v1039
    %v1049 = vtanh.pop %v1040
    %v1050 = vtanh.pop %v1041
    %v1051 = vtanh.pop %v1042
    %v1052 = vtanh.pop %v1043
    %v1053 = vtanh.pop %v1044
    %v1054 = vtanh.pop %v1045
    %v1055 = vtanh.pop %v1046
    %v1056 = vtanh.pop %v1047
    %v1057 = vadd.f32 %v1048, 1.0
    %v1058 = vadd.f32 %v1049, 1.0
    %v1059 = vadd.f32 %v1050, 1.0
    %v1060 = vadd.f32 %v1051, 1.0
    %v1061 = vadd.f32 %v1052, 1.0
    %v1062 = vadd.f32 %v1053, 1.0
    %v1063 = vadd.f32 %v1054, 1.0
    %v1064 = vadd.f32 %v1055, 1.0
    %v1065 = vadd.f32 %v1056, 1.0
    %v1066 = vmul.f32 %v1057, 0.5
    %v1067 = vmul.f32 %v1058, 0.5
    %v1068 = vmul.f32 %v1059, 0.5
    %v1069 = vmul.f32 %v1060, 0.5
    %v1070 = vmul.f32 %v1061, 0.5
    %v1071 = vmul.f32 %v1062, 0.5
    %v1072 = vmul.f32 %v1063, 0.5
    %v1073 = vmul.f32 %v1064, 0.5
    %v1074 = vmul.f32 %v1065, 0.5
    %v1075 = vmul.f32 %v960, %v1066
    %v1076 = vmul.f32 %v965, %v1067
    %v1077 = vmul.f32 %v970, %v1068
    %v1078 = vmul.f32 %v975, %v1069
    %v1079 = vmul.f32 %v980, %v1070
    %v1080 = vmul.f32 %v985, %v1071
    %v1081 = vmul.f32 %v990, %v1072
    %v1082 = vmul.f32 %v995, %v1073
    %v1083 = vmul.f32 %v1000, %v1074
    %v1084 = vld [vmem:[%s10] sm:$0xff]
    %v1085 = vld [vmem:[%s10 + $0x8] sm:$0xff]
    %v1086 = vld [vmem:[%s11] sm:$0x1]
    %v1088 = vlaneseq
    %v1089 = vshrl.u32 %v1088, 7
    %v1090 = vsub.s32 0, %v1089
    %v1091 = vrot.slane %v1086, %v1090
    %vm1093 = vcmask 130048
    %v1095 = vsel %vm1093, %v1075, 0
    %v1098 = vsel %vm1093, %v1076, 0
    %v1101 = vsel %vm1093, %v1077, 0
    %v1104 = vsel %vm1093, %v1078, 0
    %v1107 = vsel %vm1093, %v1079, 0
    %v1110 = vsel %vm1093, %v1080, 0
    %v1113 = vsel %vm1093, %v1081, 0
    %v1116 = vsel %vm1093, %v1082, 0
    %v1119 = vsel %vm1093, %v1083, 0
    %1121 = vmatprep.subr.mxu0 0.0
    %1122 = vmatpush1.msra.mxu0 %v1084
    %1123 = vmatprep.subr.mxu0 0.0
    %1124 = vmatpush1.msra.mxu0 %v1085
    %1125 = vmatprep.subr.mxu0 0.0
    %1126 = vmatpush1.msra.mxu0 0.0
    %1127 = vmatprep.subr.mxu0 0.0
    %1128 = vmatpush1.msra.mxu0 0.0
    %1129 = vmatprep.subr.mxu0 0.0
    %1130 = vmatpush1.msra.mxu0 0.0
    %1131 = vmatprep.subr.mxu0 0.0
    %1132 = vmatpush1.msra.mxu0 0.0
    %1133 = vmatprep.subr.mxu0 0.0
    %1134 = vmatpush1.msra.mxu0 0.0
    %1135 = vmatprep.subr.mxu0 0.0
    %1136 = vmatpush1.msra.mxu0 0.0
    %1137 = vmatprep.subr.mxu0 0.0
    %1138 = vmatpush1.msra.mxu0 0.0
    %1139 = vmatprep.subr.mxu0 0.0
    %1140 = vmatpush1.msra.mxu0 0.0
    %1141 = vmatprep.subr.mxu0 0.0
    %1142 = vmatpush1.msra.mxu0 0.0
    %1143 = vmatprep.subr.mxu0 0.0
    %1144 = vmatpush1.msra.mxu0 0.0
    %1145 = vmatprep.subr.mxu0 0.0
    %1146 = vmatpush1.msra.mxu0 0.0
    %1147 = vmatprep.subr.mxu0 0.0
    %1148 = vmatpush1.msra.mxu0 0.0
    %1149 = vmatprep.subr.mxu0 0.0
    %1150 = vmatpush1.msra.mxu0 0.0
    %1151 = vmatprep.subr.mxu0 0.0
    %1152 = vmatpush1.msra.mxu0 0.0
    %1153 = vmatprep.subr.mxu0 0.0
    %1154 = vmatpush1.msra.mxu0 0.0
    %1155 = vmatprep.subr.mxu0 0.0
    %1156 = vmatpush1.msra.mxu0 0.0
    %1157 = vmatprep.subr.mxu0 0.0
    %1158 = vmatpush1.msra.mxu0 0.0
    %1159 = vmatprep.subr.mxu0 0.0
    %1160 = vmatpush1.msra.mxu0 0.0
    %1161 = vmatprep.subr.mxu0 0.0
    %1162 = vmatpush1.msra.mxu0 0.0
    %1163 = vmatprep.subr.mxu0 0.0
    %1164 = vmatpush1.msra.mxu0 0.0
    %1165 = vmatprep.subr.mxu0 0.0
    %1166 = vmatpush1.msra.mxu0 0.0
    %1167 = vmatprep.subr.mxu0 0.0
    %1168 = vmatpush1.msra.mxu0 0.0
    %1169 = vmatprep.subr.mxu0 0.0
    %1170 = vmatpush1.msra.mxu0 0.0
    %1171 = vmatprep.subr.mxu0 0.0
    %1172 = vmatpush1.msra.mxu0 0.0
    %1173 = vmatprep.subr.mxu0 0.0
    %1174 = vmatpush1.msra.mxu0 0.0
    %1175 = vmatprep.subr.mxu0 0.0
    %1176 = vmatpush1.msra.mxu0 0.0
    %1177 = vmatprep.subr.mxu0 0.0
    %1178 = vmatpush1.msra.mxu0 0.0
    %1179 = vmatprep.subr.mxu0 0.0
    %1180 = vmatpush1.msra.mxu0 0.0
    %1181 = vmatprep.subr.mxu0 0.0
    %1182 = vmatpush1.msra.mxu0 0.0
    %1183 = vmatprep.subr.mxu0 0.0
    %1184 = vmatpush1.msra.mxu0 0.0
    %1185 = vmatprep.mubr.f32.mxu0 0.0
    %1186 = vmatmul.mubr.f32.gmra.mrb[0].mxu0 %v1095
    %v1187 = vpop.f32.mrb[0].mxu0
    %v1188 = vadd.f32 %v1091, %v1187
    %v1189 = vpop.f32.mrb[0].mxu0
    %1190 = vmatprep.mubr.f32.mxu0 0.0
    %1191 = vmatmul.mubr.f32.gmra.mrb[0].mxu0 %v1098
    %v1192 = vpop.f32.mrb[0].mxu0
    %v1193 = vadd.f32 %v1091, %v1192
    %v1194 = vpop.f32.mrb[0].mxu0
    %1195 = vmatprep.mubr.f32.mxu0 0.0
    %1196 = vmatmul.mubr.f32.gmra.mrb[0].mxu0 %v1101
    %v1197 = vpop.f32.mrb[0].mxu0
    %v1198 = vadd.f32 %v1091, %v1197
    %v1199 = vpop.f32.mrb[0].mxu0
    %1200 = vmatprep.mubr.f32.mxu0 0.0
    %1201 = vmatmul.mubr.f32.gmra.mrb[0].mxu0 %v1104
    %v1202 = vpop.f32.mrb[0].mxu0
    %v1203 = vadd.f32 %v1091, %v1202
    %v1204 = vpop.f32.mrb[0].mxu0
    %1205 = vmatprep.mubr.f32.mxu0 0.0
    %1206 = vmatmul.mubr.f32.gmra.mrb[0].mxu0 %v1107
    %v1207 = vpop.f32.mrb[0].mxu0
    %v1208 = vadd.f32 %v1091, %v1207
    %v1209 = vpop.f32.mrb[0].mxu0
    %1210 = vmatprep.mubr.f32.mxu0 0.0
    %1211 = vmatmul.mubr.f32.gmra.mrb[0].mxu0 %v1110
    %v1212 = vpop.f32.mrb[0].mxu0
    %v1213 = vadd.f32 %v1091, %v1212
    %v1214 = vpop.f32.mrb[0].mxu0
    %1215 = vmatprep.mubr.f32.mxu0 0.0
    %1216 = vmatmul.mubr.f32.gmra.mrb[0].mxu0 %v1113
    %v1217 = vpop.f32.mrb[0].mxu0
    %v1218 = vadd.f32 %v1091, %v1217
    %v1219 = vpop.f32.mrb[0].mxu0
    %1220 = vmatprep.mubr.f32.mxu0 0.0
    %1221 = vmatmul.mubr.f32.gmra.mrb[0].mxu0 %v1116
    %v1222 = vpop.f32.mrb[0].mxu0
    %v1223 = vadd.f32 %v1091, %v1222
    %v1224 = vpop.f32.mrb[0].mxu0
    %1225 = vmatprep.mubr.f32.mxu0 0.0
    %1226 = vmatmul.mubr.f32.gmra.mrb[0].mxu0 %v1119
    %v1227 = vpop.f32.mrb[0].mxu0
    %v1228 = vadd.f32 %v1091, %v1227
    %v1229 = vpop.f32.mrb[0].mxu0
    %1230 = vdwg.mxu0
    %v1231 = vadd.f32 %v544, %v1188
    %v1232 = vadd.f32 %v563, %v1193
    %v1233 = vadd.f32 %v582, %v1198
    %v1234 = vadd.f32 %v601, %v1203
    %v1235 = vadd.f32 %v620, %v1208
    %v1236 = vadd.f32 %v639, %v1213
    %v1237 = vadd.f32 %v658, %v1218
    %v1238 = vadd.f32 %v677, %v1223
    %v1239 = vadd.f32 %v696, %v1228
    %v1240 = vld [vmem:[%s6] sm:$0x1]
    %v1241 = vld [vmem:[%s7] sm:$0x1]
    %v1242 = vsel %vm189, %v1231, 0.0
    %1243 = vadd.xlane.f32.xlu0 %v1242
    %v1244 = vpop.xlane.xlu0 %1243
    %v1245 = vsel %vm189, %v1232, 0.0
    %1246 = vadd.xlane.f32.xlu0 %v1245
    %v1247 = vpop.xlane.xlu0 %1246
    %v1248 = vsel %vm189, %v1233, 0.0
    %1249 = vadd.xlane.f32.xlu0 %v1248
    %v1250 = vpop.xlane.xlu0 %1249
    %v1251 = vsel %vm189, %v1234, 0.0
    %1252 = vadd.xlane.f32.xlu0 %v1251
    %v1253 = vpop.xlane.xlu0 %1252
    %v1254 = vsel %vm189, %v1235, 0.0
    %1255 = vadd.xlane.f32.xlu0 %v1254
    %v1256 = vpop.xlane.xlu0 %1255
    %v1257 = vsel %vm189, %v1236, 0.0
    %1258 = vadd.xlane.f32.xlu0 %v1257
    %v1259 = vpop.xlane.xlu0 %1258
    %v1260 = vsel %vm189, %v1237, 0.0
    %1261 = vadd.xlane.f32.xlu0 %v1260
    %v1262 = vpop.xlane.xlu0 %1261
    %v1263 = vsel %vm189, %v1238, 0.0
    %1264 = vadd.xlane.f32.xlu0 %v1263
    %v1265 = vpop.xlane.xlu0 %1264
    %v1266 = vsel %vm189, %v1239, 0.0
    %1267 = vadd.xlane.f32.xlu0 %v1266
    %v1268 = vpop.xlane.xlu0 %1267
    %v1269 = vmul.f32 %v1244, %v217
    %v1270 = vmul.f32 %v1247, %v217
    %v1271 = vmul.f32 %v1250, %v217
    %v1272 = vmul.f32 %v1253, %v217
    %v1273 = vmul.f32 %v1256, %v217
    %v1274 = vmul.f32 %v1259, %v217
    %v1275 = vmul.f32 %v1262, %v217
    %v1276 = vmul.f32 %v1265, %v217
    %v1277 = vmul.f32 %v1268, %v217
    %v1278 = vsub.f32 %v1231, %v1269
    %v1279 = vsub.f32 %v1232, %v1270
    %v1280 = vsub.f32 %v1233, %v1271
    %v1281 = vsub.f32 %v1234, %v1272
    %v1282 = vsub.f32 %v1235, %v1273
    %v1283 = vsub.f32 %v1236, %v1274
    %v1284 = vsub.f32 %v1237, %v1275
    %v1285 = vsub.f32 %v1238, %v1276
    %v1286 = vsub.f32 %v1239, %v1277
    %v1287 = vmul.f32 %v1278, %v1278
    %v1288 = vmul.f32 %v1279, %v1279
    %v1289 = vmul.f32 %v1280, %v1280
    %v1290 = vmul.f32 %v1281, %v1281
    %v1291 = vmul.f32 %v1282, %v1282
    %v1292 = vmul.f32 %v1283, %v1283
    %v1293 = vmul.f32 %v1284, %v1284
    %v1294 = vmul.f32 %v1285, %v1285
    %v1295 = vmul.f32 %v1286, %v1286
    %v1296 = vsel %vm189, %v1287, 0.0
    %1297 = vadd.xlane.f32.xlu0 %v1296
    %v1298 = vpop.xlane.xlu0 %1297
    %v1299 = vsel %vm189, %v1288, 0.0
    %1300 = vadd.xlane.f32.xlu0 %v1299
    %v1301 = vpop.xlane.xlu0 %1300
    %v1302 = vsel %vm189, %v1289, 0.0
    %1303 = vadd.xlane.f32.xlu0 %v1302
    %v1304 = vpop.xlane.xlu0 %1303
    %v1305 = vsel %vm189, %v1290, 0.0
    %1306 = vadd.xlane.f32.xlu0 %v1305
    %v1307 = vpop.xlane.xlu0 %1306
    %v1308 = vsel %vm189, %v1291, 0.0
    %1309 = vadd.xlane.f32.xlu0 %v1308
    %v1310 = vpop.xlane.xlu0 %1309
    %v1311 = vsel %vm189, %v1292, 0.0
    %1312 = vadd.xlane.f32.xlu0 %v1311
    %v1313 = vpop.xlane.xlu0 %1312
    %v1314 = vsel %vm189, %v1293, 0.0
    %1315 = vadd.xlane.f32.xlu0 %v1314
    %v1316 = vpop.xlane.xlu0 %1315
    %v1317 = vsel %vm189, %v1294, 0.0
    %1318 = vadd.xlane.f32.xlu0 %v1317
    %v1319 = vpop.xlane.xlu0 %1318
    %v1320 = vsel %vm189, %v1295, 0.0
    %1321 = vadd.xlane.f32.xlu0 %v1320
    %v1322 = vpop.xlane.xlu0 %1321
    %v1323 = vmul.f32 %v1298, %v217
    %v1324 = vmul.f32 %v1301, %v217
    %v1325 = vmul.f32 %v1304, %v217
    %v1326 = vmul.f32 %v1307, %v217
    %v1327 = vmul.f32 %v1310, %v217
    %v1328 = vmul.f32 %v1313, %v217
    %v1329 = vmul.f32 %v1316, %v217
    %v1330 = vmul.f32 %v1319, %v217
    %v1331 = vmul.f32 %v1322, %v217
    %v1332 = vadd.f32 %v1323, 1e-05
    %v1333 = vadd.f32 %v1324, 1e-05
    %v1334 = vadd.f32 %v1325, 1e-05
    %v1335 = vadd.f32 %v1326, 1e-05
    %v1336 = vadd.f32 %v1327, 1e-05
    %v1337 = vadd.f32 %v1328, 1e-05
    %v1338 = vadd.f32 %v1329, 1e-05
    %v1339 = vadd.f32 %v1330, 1e-05
    %v1340 = vadd.f32 %v1331, 1e-05
    %v1341 = vrsqrt.pop %v1332
    %v1342 = vrsqrt.pop %v1333
    %v1343 = vrsqrt.pop %v1334
    %v1344 = vrsqrt.pop %v1335
    %v1345 = vrsqrt.pop %v1336
    %v1346 = vrsqrt.pop %v1337
    %v1347 = vrsqrt.pop %v1338
    %v1348 = vrsqrt.pop %v1339
    %v1349 = vrsqrt.pop %v1340
    %v1350 = vmul.f32 %v1278, %v1341
    %v1351 = vmul.f32 %v1279, %v1342
    %v1352 = vmul.f32 %v1280, %v1343
    %v1353 = vmul.f32 %v1281, %v1344
    %v1354 = vmul.f32 %v1282, %v1345
    %v1355 = vmul.f32 %v1283, %v1346
    %v1356 = vmul.f32 %v1284, %v1347
    %v1357 = vmul.f32 %v1285, %v1348
    %v1358 = vmul.f32 %v1286, %v1349
    %v1360 = vlaneseq
    %v1361 = vshrl.u32 %v1360, 7
    %v1362 = vsub.s32 0, %v1361
    %v1363 = vrot.slane %v1240, %v1362
    %v1365 = vmul.f32 %v1350, %v1363
    %v1366 = vmul.f32 %v1351, %v1363
    %v1367 = vmul.f32 %v1352, %v1363
    %v1368 = vmul.f32 %v1353, %v1363
    %v1369 = vmul.f32 %v1354, %v1363
    %v1370 = vmul.f32 %v1355, %v1363
    %v1371 = vmul.f32 %v1356, %v1363
    %v1372 = vmul.f32 %v1357, %v1363
    %v1373 = vmul.f32 %v1358, %v1363
    %v1375 = vlaneseq
    %v1376 = vshrl.u32 %v1375, 7
    %v1377 = vsub.s32 0, %v1376
    %v1378 = vrot.slane %v1241, %v1377
    %v1380 = vadd.f32 %v1365, %v1378
    %v1381 = vadd.f32 %v1366, %v1378
    %v1382 = vadd.f32 %v1367, %v1378
    %v1383 = vadd.f32 %v1368, %v1378
    %v1384 = vadd.f32 %v1369, %v1378
    %v1385 = vadd.f32 %v1370, %v1378
    %v1386 = vadd.f32 %v1371, %v1378
    %v1387 = vadd.f32 %v1372, %v1378
    %v1388 = vadd.f32 %v1373, %v1378
    %v1389 = vld [vmem:[%s12] sm:$0x1]
    %v1391 = vlaneseq
    %v1392 = vshrl.u32 %v1391, 7
    %v1393 = vsub.s32 0, %v1392
    %v1394 = vrot.slane %v1389, %v1393
    %v1396 = vmul.f32 %v1380, %v1394
    %v1397 = vsel %vm189, %v1396, 0.0
    %1398 = vadd.xlane.f32.xlu0 %v1397
    %v1399 = vpop.xlane.xlu0 %1398
    %s1400 = sld [smem:[#allocation2]]
    %v1401 = vstv %s1400
    %v1402 = vadd.f32 %v1399, %v1401
    %v1403 = vsub.f32 0.0, %v1402
    %v1404 = vmul.f32 %v1403, 1.442695
    %v1405 = vpow.pop %v1404
    %v1406 = vadd.f32 %v1405, 1.0
    %v1407 = vrcp.pop %v1406
    %v1408 = vmul.f32 1.0, %v1407
    %1409 = vst.msk [vmem:[%s18] sm:$0xff] %vm189, %v1380
    %v1410 = vmul.f32 %v1408, %v1381
    %v1411 = vmul.f32 %v1408, %v1382
    %v1412 = vmul.f32 %v1408, %v1383
    %v1413 = vmul.f32 %v1408, %v1384
    %v1414 = vmul.f32 %v1408, %v1385
    %v1415 = vmul.f32 %v1408, %v1386
    %v1416 = vmul.f32 %v1408, %v1387
    %v1417 = vmul.f32 %v1408, %v1388
    %1418 = vst.msk [vmem:[#allocation11] sm:$0xff] %vm189, %v1410
    %1419 = vst.msk [vmem:[#allocation11 + $0x8] sm:$0xff] %vm189, %v1411
    %1420 = vst.msk [vmem:[#allocation11 + $0x10] sm:$0xff] %vm189, %v1412
    %1421 = vst.msk [vmem:[#allocation11 + $0x18] sm:$0xff] %vm189, %v1413
    %1422 = vst.msk [vmem:[#allocation11 + $0x20] sm:$0xff] %vm189, %v1414
    %1423 = vst.msk [vmem:[#allocation11 + $0x28] sm:$0xff] %vm189, %v1415
    %1424 = vst.msk [vmem:[#allocation11 + $0x30] sm:$0xff] %vm189, %v1416
    %1425 = vst.msk [vmem:[#allocation11 + $0x38] sm:$0xff] %vm189, %v1417
    // Predicated region
    $region90: #{new_model_forward.6} parent=1 // pred_check
      _
    $region91: #{new_model_forward.6} parent=1 // pred_check_branch
      %1427 = sbr.rel (0) target = $region93
    $region92: #{new_model_forward.6} parent=1 // pred_region
      _
    $region93: #{new_model_forward.6} parent=1 // pred_fallthru
      _
    // Predicated region
    $region94: #{new_model_forward.6} parent=1 // pred_check
      _
    $region95: #{new_model_forward.6} parent=1 // pred_check_branch
      %1429 = sbr.rel (0) target = $region97
    $region96: #{new_model_forward.6} parent=1 // pred_region
      %s1431 = ssub.s32 1024, 1024
      %1432 = vsyncadd [#allocation4], %s1431
      %s1433 = sshll.u32 [#allocation11], 4
      %s1434 = int_to_ptr.vmem [resolvable:$true] %s1433
      %1439 = dma.vmem_to_hbm [thread:$0]  %s1434, 1024, %s19, [#allocation4], 128, 128, 8
    $region97: #{new_model_forward.6} parent=1 // pred_fallthru
      _
    // Predicated region
    $region98: #{new_model_forward.6} parent=1 // pred_check
      _
    $region99: #{new_model_forward.6} parent=1 // pred_check_branch
      %1441 = sbr.rel (0) target = $region101
    $region100: #{new_model_forward.6} parent=1 // pred_region
      _
    $region101: #{new_model_forward.6} parent=1 // pred_fallthru
      _
    // Predicated region
    $region102: #{new_model_forward.6} parent=1 // pred_check
      _
    $region103: #{new_model_forward.6} parent=1 // pred_check_branch
      %1443 = sbr.rel (0) target = $region105
    $region104: #{new_model_forward.6} parent=1 // pred_region
      %1444 = dma.done [#allocation4], 1024
    $region105: #{new_model_forward.6} parent=1 // pred_fallthru
      _
    %1445 = vsyncpa [#allocation4], 1
    %1446 = vsyncpa [#allocation5], 1
    %1447 = vsyncpa [#allocation7], 1
    %1448 = vsyncpa [#allocation10], 1

</llo_original>
